<compile_context>
chip_gen: v6e
topology: v6e:2x2x1
jax: 0.10.0
libtpu: 0.0.40
codegen_flags: <defaults>
</compile_context>

<pallas_src>
import functools

import jax
import jax.numpy as jnp
from jax import lax
from jax.experimental import pallas as pl
from jax.experimental.pallas import tpu as pltpu


# ----------------------------- fused Pallas kernel -----------------------------

def _a2c_kernel(patches_ref, w1_ref, b1_ref, w2_ref, b2_ref,
                fc1w_ref, fc1b_ref, fc2w_ref, fc2b_ref,
                headw_ref, headb_ref,
                probs_ref, value_ref,
                act1_ref, act2_ref, *, n_actions):
    """One grid step == one batch element.  Everything stays in VMEM."""
    # ---- conv1 (+bias, ReLU): im2col patches (960,25) @ (25,20) ------------------
    h1 = jnp.dot(patches_ref[0], w1_ref[...], preferred_element_type=jnp.float32)
    h1 = jnp.maximum(h1 + b1_ref[...], 0.0)                       # (960, 20)
    act1_ref[...] = h1.reshape(24, 40, 20)                        # [oh, ow, c]

    # ---- maxpool1 2x2 / stride 2 (sublane-strided reads + leading split) ---------
    t = jnp.maximum(act1_ref[:, pl.ds(0, 20, 2), :],
                    act1_ref[:, pl.ds(1, 20, 2), :])              # (24, 20, 20)
    t = t.reshape(12, 2, 20, 20)
    pooled1 = jnp.maximum(t[:, 0], t[:, 1])                       # (12, 20, 20) [h, w, c]

    # ---- conv2 (+bias, ReLU): 25 shifted matmuls accumulated in f32 --------------
    acc = jnp.zeros((128, 50), jnp.float32)                       # rows = oh*16 + ow
    for di in range(5):
        for dj in range(5):
            xs = pooled1[di:di + 8, dj:dj + 16, :].reshape(128, 20)
            acc = acc + jnp.dot(xs, w2_ref[di * 5 + dj],
                                preferred_element_type=jnp.float32)
    z = jnp.maximum(acc + b2_ref[...], 0.0)                       # (128, 50)
    act2_ref[...] = z.reshape(8, 16, 50)                          # [oh, ow, c]

    # ---- maxpool2 2x2 / stride 2 --------------------------------------------------
    q = jnp.maximum(act2_ref[:, pl.ds(0, 8, 2), :],
                    act2_ref[:, pl.ds(1, 8, 2), :])               # (8, 8, 50)
    q = q.reshape(4, 2, 8, 50)
    pooled2 = jnp.maximum(q[:, 0], q[:, 1])                       # (4, 8, 50) [h, w, c]

    # ---- flatten (h, w, c) -> (1, 1600); fc1 weights were host-permuted to match --
    pieces = [pooled2[h3:h3 + 1, w3, :] for h3 in range(4) for w3 in range(8)]
    flat = jnp.concatenate(pieces, axis=-1)                       # (1, 1600)

    # ---- fc1, fc2 ------------------------------------------------------------------
    g = jnp.dot(flat, fc1w_ref[...], preferred_element_type=jnp.float32)
    g = jnp.maximum(g + fc1b_ref[...], 0.0)                       # (1, 500)
    g = jnp.dot(g, fc2w_ref[...], preferred_element_type=jnp.float32)
    g = jnp.maximum(g + fc2b_ref[...], 0.0)                       # (1, 128)

    # NOTE: the PyTorch module also computes fc3(message)/fc4(concat) ("combined"),
    # but that branch never feeds the returned outputs -> elided (dead code).

    # ---- fused heads: [action_logits | value] in one matmul -------------------------
    hv = jnp.dot(g, headw_ref[...], preferred_element_type=jnp.float32) + headb_ref[...]
    logits = hv[:, :n_actions]                                    # (1, A)
    val = hv[:, n_actions:n_actions + 1]                          # (1, 1)

    zl = logits - jnp.max(logits, axis=-1, keepdims=True)
    e = jnp.exp(zl)
    s = jnp.sum(e, axis=-1, keepdims=True)
    r = pl.reciprocal(s, approx=True)
    r = r * (2.0 - s * r)                                         # one Newton step
    probs = e * r

    probs_ref[...] = probs.reshape(1, 1, n_actions)
    value_ref[...] = val.reshape(1, 1, 1)


# ----------------------------- host-side glue -----------------------------------

def _im2col_conv1(glyphs):
    """(B,1,28,44) NCHW -> (B, 24*40, 25) patches; K ordered (di, dj)."""
    x = glyphs[:, 0]                                              # (B, 28, 44)
    cols = [x[:, di:di + 24, dj:dj + 40] for di in range(5) for dj in range(5)]
    p = jnp.stack(cols, axis=-1)                                  # (B, 24, 40, 25)
    return p.reshape(glyphs.shape[0], 24 * 40, 25)


def a2c_forward(prepared, glyphs, message=None):
    """Mirrors AdvantageActorCritic.forward; returns (action_probs, state_value)."""
    del message  # fc3/fc4 branch does not affect the returned outputs.
    B = glyphs.shape[0]
    A = prepared["head_w"].shape[1] - 1
    patches = _im2col_conv1(glyphs)                               # (B, 960, 25)

    kernel = functools.partial(_a2c_kernel, n_actions=A)
    full = lambda *s: pl.BlockSpec(s, lambda b: (0,) * len(s))    # whole-array block

    in_specs = [
        pl.BlockSpec((1, 960, 25), lambda b: (b, 0, 0)),          # per-batch patches
        full(25, 20), full(1, 20),                                # conv1 w, b
        full(25, 20, 50), full(1, 50),                            # conv2 w, b
        full(1600, 500), full(1, 500),                            # fc1 w, b
        full(500, 128), full(1, 128),                             # fc2 w, b
        full(128, A + 1), full(1, A + 1),                         # fused heads w, b
    ]
    out_specs = [
        pl.BlockSpec((1, 1, A), lambda b: (b, 0, 0)),
        pl.BlockSpec((1, 1, 1), lambda b: (b, 0, 0)),
    ]

    probs3, value3 = pl.pallas_call(
        kernel,
        grid=(B,),
        in_specs=in_specs,
        out_specs=out_specs,
        out_shape=(jax.ShapeDtypeStruct((B, 1, A), jnp.float32),
                   jax.ShapeDtypeStruct((B, 1, 1), jnp.float32)),
        scratch_shapes=[pltpu.VMEM((24, 40, 20), jnp.float32),    # conv1 activation
                        pltpu.VMEM((8, 16, 50), jnp.float32)],    # conv2 activation
        compiler_params=pltpu.CompilerParams(
            dimension_semantics=("parallel",)),                   # v7x: batch across TCs
    )(patches,
      prepared["w1"], prepared["b1"],
      prepared["w2"], prepared["b2"],
      prepared["fc1_w"], prepared["fc1_b"],
      prepared["fc2_w"], prepared["fc2_b"],
      prepared["head_w"], prepared["head_b"])

    return probs3[:, 0, :], value3[:, 0, :]


# ----------------------------- parameters ----------------------------------------

def init_params(key, n_actions):
    """PyTorch-layout parameters, uniform(+-1/sqrt(fan_in)) like torch defaults."""
    def uni(k, shape, fan_in):
        bound = 1.0 / jnp.sqrt(fan_in)
        return jax.random.uniform(k, shape, jnp.float32, -bound, bound)

    ks = jax.random.split(key, 16)
    p = {}
    p["conv1_w"] = uni(ks[0], (20, 1, 5, 5), 25.0);    p["conv1_b"] = uni(ks[1], (20,), 25.0)
    p["conv2_w"] = uni(ks[2], (50, 20, 5, 5), 500.0);  p["conv2_b"] = uni(ks[3], (50,), 500.0)
    p["fc1_w"] = uni(ks[4], (500, 1600), 1600.0);      p["fc1_b"] = uni(ks[5], (500,), 1600.0)
    p["fc2_w"] = uni(ks[6], (128, 500), 500.0);        p["fc2_b"] = uni(ks[7], (128,), 500.0)
    # fc3/fc4 exist in the module but never influence the returned outputs.
    p["fc3_w"] = uni(ks[8], (128, 256), 256.0);        p["fc3_b"] = uni(ks[9], (128,), 256.0)
    p["fc4_w"] = uni(ks[10], (128, 256), 256.0);       p["fc4_b"] = uni(ks[11], (128,), 256.0)
    p["value_w"] = uni(ks[12], (1, 128), 128.0);       p["value_b"] = uni(ks[13], (1,), 128.0)
    p["action_w"] = uni(ks[14], (n_actions, 128), 128.0)
    p["action_b"] = uni(ks[15], (n_actions,), 128.0)
    return p


def prepare_params(p):
    """PyTorch-layout params -> kernel operand layouts (host-side, done once)."""
    a = p["action_w"].shape[0]
    return {
        "w1": p["conv1_w"].reshape(20, 25).T,                                 # (25, 20)  [di*5+dj, co]
        "b1": p["conv1_b"].reshape(1, 20),
        "w2": p["conv2_w"].transpose(2, 3, 1, 0).reshape(25, 20, 50),         # [di*5+dj, ci, co]
        "b2": p["conv2_b"].reshape(1, 50),
        # permute fc1 rows from torch's (c,h,w) flatten order to the kernel's (h,w,c)
        "fc1_w": p["fc1_w"].reshape(500, 50, 4, 8).transpose(2, 3, 1, 0).reshape(1600, 500),
        "fc1_b": p["fc1_b"].reshape(1, 500),
        "fc2_w": p["fc2_w"].T,                                                # (500, 128)
        "fc2_b": p["fc2_b"].reshape(1, 128),
        "head_w": jnp.concatenate([p["action_w"], p["value_w"]], axis=0).T,   # (128, A+1)
        "head_b": jnp.concatenate([p["action_b"], p["value_b"]], axis=0).reshape(1, a + 1),
    }


# ----------------------------- pure-XLA reference (for validation) ----------------

def reference_forward(p, glyphs, message):
    del message
    dn = ("NCHW", "OIHW", "NCHW")
    hi = lax.Precision.HIGHEST
    x = lax.conv_general_dilated(glyphs, p["conv1_w"], (1, 1), "VALID",
                                 dimension_numbers=dn, precision=hi)
    x = jnp.maximum(x + p["conv1_b"][None, :, None, None], 0.0)
    x = lax.reduce_window(x, -jnp.inf, lax.max, (1, 1, 2, 2), (1, 1, 2, 2), "VALID")
    x = lax.conv_general_dilated(x, p["conv2_w"], (1, 1), "VALID",
                                 dimension_numbers=dn, precision=hi)
    x = jnp.maximum(x + p["conv2_b"][None, :, None, None], 0.0)
    x = lax.reduce_window(x, -jnp.inf, lax.max, (1, 1, 2, 2), (1, 1, 2, 2), "VALID")
    g = x.reshape(x.shape[0], -1)                                 # torch (C,H,W) flatten
    g = jnp.maximum(jnp.dot(g, p["fc1_w"].T, precision=hi) + p["fc1_b"], 0.0)
    g = jnp.maximum(jnp.dot(g, p["fc2_w"].T, precision=hi) + p["fc2_b"], 0.0)
    value = jnp.dot(g, p["value_w"].T, precision=hi) + p["value_b"]
    probs = jax.nn.softmax(jnp.dot(g, p["action_w"].T, precision=hi) + p["action_b"], axis=-1)
    return probs, value


# ----------------------------- main -----------------------------------------------

if __name__ == "__main__":
    B = 2
    H, W = 28, 44          # ((28-4)/2 - 4)/2 = 4, ((44-4)/2 - 4)/2 = 8 -> 50*4*8 = 1600
    MSG = 256
    N_ACTIONS = 8

    key = jax.random.PRNGKey(0)
    k_params, k_glyphs, k_msg = jax.random.split(key, 3)

    torch_params = init_params(k_params, N_ACTIONS)
    prepared = prepare_params(torch_params)

    glyphs = jax.random.normal(k_glyphs, (B, 1, H, W), jnp.float32)    # x['glyphs'] (NCHW)
    message = jax.random.normal(k_msg, (B, MSG), jnp.float32)          # x['message']

    fwd = jax.jit(a2c_forward)
    action_probs, state_value = fwd(prepared, glyphs, message)
    action_probs = jax.block_until_ready(action_probs)
    state_value = jax.block_until_ready(state_value)

    assert action_probs.shape == (B, N_ACTIONS)
    assert state_value.shape == (B, 1)
    # softmax rows must sum to 1
    assert bool(jnp.all(jnp.abs(jnp.sum(action_probs, axis=-1) - 1.0) < 1e-3))

    # cross-check against a pure-XLA reference of the same forward pass
    ref_probs, ref_value = reference_forward(torch_params, glyphs, message)
    assert bool(jnp.max(jnp.abs(action_probs - ref_probs)) < 5e-3), "action_probs mismatch"
    assert bool(jnp.max(jnp.abs(state_value - ref_value)) < 5e-3), "state_value mismatch"

    print("KERNEL_OK")
</pallas_src>

<mosaic_0001>
module attributes {stable_mosaic.version = 11 : i64} {
  func.func @_a2c_kernel(%arg0: i32, %arg1: memref<1x960x25xf32, #tpu.memory_space<vmem>>, %arg2: memref<25x20xf32, #tpu.memory_space<vmem>>, %arg3: memref<1x20xf32, #tpu.memory_space<vmem>>, %arg4: memref<25x20x50xf32, #tpu.memory_space<vmem>>, %arg5: memref<1x50xf32, #tpu.memory_space<vmem>>, %arg6: memref<1600x500xf32, #tpu.memory_space<vmem>>, %arg7: memref<1x500xf32, #tpu.memory_space<vmem>>, %arg8: memref<500x128xf32, #tpu.memory_space<vmem>>, %arg9: memref<1x128xf32, #tpu.memory_space<vmem>>, %arg10: memref<128x9xf32, #tpu.memory_space<vmem>>, %arg11: memref<1x9xf32, #tpu.memory_space<vmem>>, %arg12: memref<1x1x8xf32, #tpu.memory_space<vmem>>, %arg13: memref<1x1x1xf32, #tpu.memory_space<vmem>>, %arg14: memref<24x40x20xf32, #tpu.memory_space<vmem>>, %arg15: memref<8x16x50xf32, #tpu.memory_space<vmem>>) attributes {dimension_semantics = [#tpu.dimension_semantics<parallel>], iteration_bounds = array<i64: 2>, scalar_prefetch = 0 : i64, scratch_operands = 2 : i64, tpu.core_type = #tpu.core_type<tc>, window_params = [{transform_indices = @transform_0, window_bounds = array<i64: 1, 960, 25>}, {pipeline_mode = #tpu.pipeline_mode<synchronous>, transform_indices = @transform_1, window_bounds = array<i64: 25, 20>}, {pipeline_mode = #tpu.pipeline_mode<synchronous>, transform_indices = @transform_2, window_bounds = array<i64: 1, 20>}, {pipeline_mode = #tpu.pipeline_mode<synchronous>, transform_indices = @transform_3, window_bounds = array<i64: 25, 20, 50>}, {pipeline_mode = #tpu.pipeline_mode<synchronous>, transform_indices = @transform_4, window_bounds = array<i64: 1, 50>}, {pipeline_mode = #tpu.pipeline_mode<synchronous>, transform_indices = @transform_5, window_bounds = array<i64: 1600, 500>}, {pipeline_mode = #tpu.pipeline_mode<synchronous>, transform_indices = @transform_6, window_bounds = array<i64: 1, 500>}, {pipeline_mode = #tpu.pipeline_mode<synchronous>, transform_indices = @transform_7, window_bounds = array<i64: 500, 128>}, {pipeline_mode = #tpu.pipeline_mode<synchronous>, transform_indices = @transform_8, window_bounds = array<i64: 1, 128>}, {pipeline_mode = #tpu.pipeline_mode<synchronous>, transform_indices = @transform_9, window_bounds = array<i64: 128, 9>}, {pipeline_mode = #tpu.pipeline_mode<synchronous>, transform_indices = @transform_10, window_bounds = array<i64: 1, 9>}, {transform_indices = @transform_11, window_bounds = array<i64: 1, 1, 8>}, {transform_indices = @transform_12, window_bounds = array<i64: 1, 1, 1>}]} {
    %c0 = arith.constant 0 : index
    %c0_0 = arith.constant 0 : index
    %c0_1 = arith.constant 0 : index
    %0 = vector.load %arg1[%c0, %c0_0, %c0_1] : memref<1x960x25xf32, #tpu.memory_space<vmem>>, vector<1x960x25xf32>
    %1 = vector.shape_cast %0 : vector<1x960x25xf32> to vector<960x25xf32>
    %c0_2 = arith.constant 0 : index
    %c0_3 = arith.constant 0 : index
    %2 = vector.load %arg2[%c0_2, %c0_3] : memref<25x20xf32, #tpu.memory_space<vmem>>, vector<25x20xf32>
    %cst = arith.constant dense<0.000000e+00> : vector<960x20xf32>
    %3 = tpu.matmul %1, %2, %cst {dimension_numbers = #tpu.dot_dimension_numbers<[1], [0], [0], [1], [0, 0, 1, 1], [], []>} : vector<960x25xf32>, vector<25x20xf32>, vector<960x20xf32> -> vector<960x20xf32>
    %c0_4 = arith.constant 0 : index
    %c0_5 = arith.constant 0 : index
    %4 = vector.load %arg3[%c0_4, %c0_5] : memref<1x20xf32, #tpu.memory_space<vmem>>, vector<1x20xf32>
    %5 = vector.broadcast %4 : vector<1x20xf32> to vector<960x20xf32>
    %6 = arith.addf %3, %5 : vector<960x20xf32>
    %cst_6 = arith.constant 0.000000e+00 : f32
    %7 = vector.broadcast %cst_6 : f32 to vector<960x20xf32>
    %8 = arith.maximumf %6, %7 : vector<960x20xf32>
    %9 = vector.shape_cast %8 : vector<960x20xf32> to vector<24x40x20xf32>
    %c0_7 = arith.constant 0 : index
    %c0_8 = arith.constant 0 : index
    %c0_9 = arith.constant 0 : index
    %10 = vector.load %arg14[%c0_7, %c0_8, %c0_9] : memref<24x40x20xf32, #tpu.memory_space<vmem>>, vector<24x40x20xf32>
    tpu.vector_store %arg14[%c0_7, %c0_8, %c0_9], %9 {strides = array<i32>} : memref<24x40x20xf32, #tpu.memory_space<vmem>>, vector<24x40x20xf32>,
    %c0_10 = arith.constant 0 : index
    %c0_11 = arith.constant 0 : index
    %c0_12 = arith.constant 0 : index
    %11 = tpu.strided_load %arg14[%c0_10, %c0_11, %c0_12] {strides = array<i32: 1, 2, 1>} : memref<24x40x20xf32, #tpu.memory_space<vmem>>, vector<24x20x20xf32>
    %c0_13 = arith.constant 0 : index
    %c1 = arith.constant 1 : index
    %c0_14 = arith.constant 0 : index
    %12 = tpu.strided_load %arg14[%c0_13, %c1, %c0_14] {strides = array<i32: 1, 2, 1>} : memref<24x40x20xf32, #tpu.memory_space<vmem>>, vector<24x20x20xf32>
    %13 = arith.maximumf %11, %12 : vector<24x20x20xf32>
    %14 = vector.shape_cast %13 : vector<24x20x20xf32> to vector<12x2x20x20xf32>
    %15 = vector.extract_strided_slice %14 {offsets = [0, 0, 0, 0], sizes = [12, 1, 20, 20], strides = [1, 1, 1, 1]} : vector<12x2x20x20xf32> to vector<12x1x20x20xf32>
    %16 = vector.shape_cast %15 : vector<12x1x20x20xf32> to vector<12x20x20xf32>
    %17 = vector.extract_strided_slice %14 {offsets = [0, 1, 0, 0], sizes = [12, 1, 20, 20], strides = [1, 1, 1, 1]} : vector<12x2x20x20xf32> to vector<12x1x20x20xf32>
    %18 = vector.shape_cast %17 : vector<12x1x20x20xf32> to vector<12x20x20xf32>
    %19 = arith.maximumf %16, %18 : vector<12x20x20xf32>
    %cst_15 = arith.constant 0.000000e+00 : f32
    %20 = vector.broadcast %cst_15 : f32 to vector<128x50xf32>
    %21 = vector.extract_strided_slice %19 {offsets = [0, 0, 0], sizes = [8, 16, 20], strides = [1, 1, 1]} : vector<12x20x20xf32> to vector<8x16x20xf32>
    %22 = vector.shape_cast %21 : vector<8x16x20xf32> to vector<128x20xf32>
    %c0_16 = arith.constant 0 : index
    %c0_17 = arith.constant 0 : index
    %c0_18 = arith.constant 0 : index
    %23 = vector.load %arg4[%c0_16, %c0_17, %c0_18] : memref<25x20x50xf32, #tpu.memory_space<vmem>>, vector<1x20x50xf32>
    %24 = vector.shape_cast %23 : vector<1x20x50xf32> to vector<20x50xf32>
    %cst_19 = arith.constant dense<0.000000e+00> : vector<128x50xf32>
    %25 = tpu.matmul %22, %24, %cst_19 {dimension_numbers = #tpu.dot_dimension_numbers<[1], [0], [0], [1], [0, 0, 1, 1], [], []>} : vector<128x20xf32>, vector<20x50xf32>, vector<128x50xf32> -> vector<128x50xf32>
    %26 = arith.addf %20, %25 : vector<128x50xf32>
    %27 = vector.extract_strided_slice %19 {offsets = [0, 1, 0], sizes = [8, 16, 20], strides = [1, 1, 1]} : vector<12x20x20xf32> to vector<8x16x20xf32>
    %28 = vector.shape_cast %27 : vector<8x16x20xf32> to vector<128x20xf32>
    %c1_20 = arith.constant 1 : index
    %c0_21 = arith.constant 0 : index
    %c0_22 = arith.constant 0 : index
    %29 = vector.load %arg4[%c1_20, %c0_21, %c0_22] : memref<25x20x50xf32, #tpu.memory_space<vmem>>, vector<1x20x50xf32>
    %30 = vector.shape_cast %29 : vector<1x20x50xf32> to vector<20x50xf32>
    %cst_23 = arith.constant dense<0.000000e+00> : vector<128x50xf32>
    %31 = tpu.matmul %28, %30, %cst_23 {dimension_numbers = #tpu.dot_dimension_numbers<[1], [0], [0], [1], [0, 0, 1, 1], [], []>} : vector<128x20xf32>, vector<20x50xf32>, vector<128x50xf32> -> vector<128x50xf32>
    %32 = arith.addf %26, %31 : vector<128x50xf32>
    %33 = vector.extract_strided_slice %19 {offsets = [0, 2, 0], sizes = [8, 16, 20], strides = [1, 1, 1]} : vector<12x20x20xf32> to vector<8x16x20xf32>
    %34 = vector.shape_cast %33 : vector<8x16x20xf32> to vector<128x20xf32>
    %c2 = arith.constant 2 : index
    %c0_24 = arith.constant 0 : index
    %c0_25 = arith.constant 0 : index
    %35 = vector.load %arg4[%c2, %c0_24, %c0_25] : memref<25x20x50xf32, #tpu.memory_space<vmem>>, vector<1x20x50xf32>
    %36 = vector.shape_cast %35 : vector<1x20x50xf32> to vector<20x50xf32>
    %cst_26 = arith.constant dense<0.000000e+00> : vector<128x50xf32>
    %37 = tpu.matmul %34, %36, %cst_26 {dimension_numbers = #tpu.dot_dimension_numbers<[1], [0], [0], [1], [0, 0, 1, 1], [], []>} : vector<128x20xf32>, vector<20x50xf32>, vector<128x50xf32> -> vector<128x50xf32>
    %38 = arith.addf %32, %37 : vector<128x50xf32>
    %39 = vector.extract_strided_slice %19 {offsets = [0, 3, 0], sizes = [8, 16, 20], strides = [1, 1, 1]} : vector<12x20x20xf32> to vector<8x16x20xf32>
    %40 = vector.shape_cast %39 : vector<8x16x20xf32> to vector<128x20xf32>
    %c3 = arith.constant 3 : index
    %c0_27 = arith.constant 0 : index
    %c0_28 = arith.constant 0 : index
    %41 = vector.load %arg4[%c3, %c0_27, %c0_28] : memref<25x20x50xf32, #tpu.memory_space<vmem>>, vector<1x20x50xf32>
    %42 = vector.shape_cast %41 : vector<1x20x50xf32> to vector<20x50xf32>
    %cst_29 = arith.constant dense<0.000000e+00> : vector<128x50xf32>
    %43 = tpu.matmul %40, %42, %cst_29 {dimension_numbers = #tpu.dot_dimension_numbers<[1], [0], [0], [1], [0, 0, 1, 1], [], []>} : vector<128x20xf32>, vector<20x50xf32>, vector<128x50xf32> -> vector<128x50xf32>
    %44 = arith.addf %38, %43 : vector<128x50xf32>
    %45 = vector.extract_strided_slice %19 {offsets = [0, 4, 0], sizes = [8, 16, 20], strides = [1, 1, 1]} : vector<12x20x20xf32> to vector<8x16x20xf32>
    %46 = vector.shape_cast %45 : vector<8x16x20xf32> to vector<128x20xf32>
    %c4 = arith.constant 4 : index
    %c0_30 = arith.constant 0 : index
    %c0_31 = arith.constant 0 : index
    %47 = vector.load %arg4[%c4, %c0_30, %c0_31] : memref<25x20x50xf32, #tpu.memory_space<vmem>>, vector<1x20x50xf32>
    %48 = vector.shape_cast %47 : vector<1x20x50xf32> to vector<20x50xf32>
    %cst_32 = arith.constant dense<0.000000e+00> : vector<128x50xf32>
    %49 = tpu.matmul %46, %48, %cst_32 {dimension_numbers = #tpu.dot_dimension_numbers<[1], [0], [0], [1], [0, 0, 1, 1], [], []>} : vector<128x20xf32>, vector<20x50xf32>, vector<128x50xf32> -> vector<128x50xf32>
    %50 = arith.addf %44, %49 : vector<128x50xf32>
    %51 = vector.extract_strided_slice %19 {offsets = [1, 0, 0], sizes = [8, 16, 20], strides = [1, 1, 1]} : vector<12x20x20xf32> to vector<8x16x20xf32>
    %52 = vector.shape_cast %51 : vector<8x16x20xf32> to vector<128x20xf32>
    %c5 = arith.constant 5 : index
    %c0_33 = arith.constant 0 : index
    %c0_34 = arith.constant 0 : index
    %53 = vector.load %arg4[%c5, %c0_33, %c0_34] : memref<25x20x50xf32, #tpu.memory_space<vmem>>, vector<1x20x50xf32>
    %54 = vector.shape_cast %53 : vector<1x20x50xf32> to vector<20x50xf32>
    %cst_35 = arith.constant dense<0.000000e+00> : vector<128x50xf32>
    %55 = tpu.matmul %52, %54, %cst_35 {dimension_numbers = #tpu.dot_dimension_numbers<[1], [0], [0], [1], [0, 0, 1, 1], [], []>} : vector<128x20xf32>, vector<20x50xf32>, vector<128x50xf32> -> vector<128x50xf32>
    %56 = arith.addf %50, %55 : vector<128x50xf32>
    %57 = vector.extract_strided_slice %19 {offsets = [1, 1, 0], sizes = [8, 16, 20], strides = [1, 1, 1]} : vector<12x20x20xf32> to vector<8x16x20xf32>
    %58 = vector.shape_cast %57 : vector<8x16x20xf32> to vector<128x20xf32>
    %c6 = arith.constant 6 : index
    %c0_36 = arith.constant 0 : index
    %c0_37 = arith.constant 0 : index
    %59 = vector.load %arg4[%c6, %c0_36, %c0_37] : memref<25x20x50xf32, #tpu.memory_space<vmem>>, vector<1x20x50xf32>
    %60 = vector.shape_cast %59 : vector<1x20x50xf32> to vector<20x50xf32>
    %cst_38 = arith.constant dense<0.000000e+00> : vector<128x50xf32>
    %61 = tpu.matmul %58, %60, %cst_38 {dimension_numbers = #tpu.dot_dimension_numbers<[1], [0], [0], [1], [0, 0, 1, 1], [], []>} : vector<128x20xf32>, vector<20x50xf32>, vector<128x50xf32> -> vector<128x50xf32>
    %62 = arith.addf %56, %61 : vector<128x50xf32>
    %63 = vector.extract_strided_slice %19 {offsets = [1, 2, 0], sizes = [8, 16, 20], strides = [1, 1, 1]} : vector<12x20x20xf32> to vector<8x16x20xf32>
    %64 = vector.shape_cast %63 : vector<8x16x20xf32> to vector<128x20xf32>
    %c7 = arith.constant 7 : index
    %c0_39 = arith.constant 0 : index
    %c0_40 = arith.constant 0 : index
    %65 = vector.load %arg4[%c7, %c0_39, %c0_40] : memref<25x20x50xf32, #tpu.memory_space<vmem>>, vector<1x20x50xf32>
    %66 = vector.shape_cast %65 : vector<1x20x50xf32> to vector<20x50xf32>
    %cst_41 = arith.constant dense<0.000000e+00> : vector<128x50xf32>
    %67 = tpu.matmul %64, %66, %cst_41 {dimension_numbers = #tpu.dot_dimension_numbers<[1], [0], [0], [1], [0, 0, 1, 1], [], []>} : vector<128x20xf32>, vector<20x50xf32>, vector<128x50xf32> -> vector<128x50xf32>
    %68 = arith.addf %62, %67 : vector<128x50xf32>
    %69 = vector.extract_strided_slice %19 {offsets = [1, 3, 0], sizes = [8, 16, 20], strides = [1, 1, 1]} : vector<12x20x20xf32> to vector<8x16x20xf32>
    %70 = vector.shape_cast %69 : vector<8x16x20xf32> to vector<128x20xf32>
    %c8 = arith.constant 8 : index
    %c0_42 = arith.constant 0 : index
    %c0_43 = arith.constant 0 : index
    %71 = vector.load %arg4[%c8, %c0_42, %c0_43] : memref<25x20x50xf32, #tpu.memory_space<vmem>>, vector<1x20x50xf32>
    %72 = vector.shape_cast %71 : vector<1x20x50xf32> to vector<20x50xf32>
    %cst_44 = arith.constant dense<0.000000e+00> : vector<128x50xf32>
    %73 = tpu.matmul %70, %72, %cst_44 {dimension_numbers = #tpu.dot_dimension_numbers<[1], [0], [0], [1], [0, 0, 1, 1], [], []>} : vector<128x20xf32>, vector<20x50xf32>, vector<128x50xf32> -> vector<128x50xf32>
    %74 = arith.addf %68, %73 : vector<128x50xf32>
    %75 = vector.extract_strided_slice %19 {offsets = [1, 4, 0], sizes = [8, 16, 20], strides = [1, 1, 1]} : vector<12x20x20xf32> to vector<8x16x20xf32>
    %76 = vector.shape_cast %75 : vector<8x16x20xf32> to vector<128x20xf32>
    %c9 = arith.constant 9 : index
    %c0_45 = arith.constant 0 : index
    %c0_46 = arith.constant 0 : index
    %77 = vector.load %arg4[%c9, %c0_45, %c0_46] : memref<25x20x50xf32, #tpu.memory_space<vmem>>, vector<1x20x50xf32>
    %78 = vector.shape_cast %77 : vector<1x20x50xf32> to vector<20x50xf32>
    %cst_47 = arith.constant dense<0.000000e+00> : vector<128x50xf32>
    %79 = tpu.matmul %76, %78, %cst_47 {dimension_numbers = #tpu.dot_dimension_numbers<[1], [0], [0], [1], [0, 0, 1, 1], [], []>} : vector<128x20xf32>, vector<20x50xf32>, vector<128x50xf32> -> vector<128x50xf32>
    %80 = arith.addf %74, %79 : vector<128x50xf32>
    %81 = vector.extract_strided_slice %19 {offsets = [2, 0, 0], sizes = [8, 16, 20], strides = [1, 1, 1]} : vector<12x20x20xf32> to vector<8x16x20xf32>
    %82 = vector.shape_cast %81 : vector<8x16x20xf32> to vector<128x20xf32>
    %c10 = arith.constant 10 : index
    %c0_48 = arith.constant 0 : index
    %c0_49 = arith.constant 0 : index
    %83 = vector.load %arg4[%c10, %c0_48, %c0_49] : memref<25x20x50xf32, #tpu.memory_space<vmem>>, vector<1x20x50xf32>
    %84 = vector.shape_cast %83 : vector<1x20x50xf32> to vector<20x50xf32>
    %cst_50 = arith.constant dense<0.000000e+00> : vector<128x50xf32>
    %85 = tpu.matmul %82, %84, %cst_50 {dimension_numbers = #tpu.dot_dimension_numbers<[1], [0], [0], [1], [0, 0, 1, 1], [], []>} : vector<128x20xf32>, vector<20x50xf32>, vector<128x50xf32> -> vector<128x50xf32>
    %86 = arith.addf %80, %85 : vector<128x50xf32>
    %87 = vector.extract_strided_slice %19 {offsets = [2, 1, 0], sizes = [8, 16, 20], strides = [1, 1, 1]} : vector<12x20x20xf32> to vector<8x16x20xf32>
    %88 = vector.shape_cast %87 : vector<8x16x20xf32> to vector<128x20xf32>
    %c11 = arith.constant 11 : index
    %c0_51 = arith.constant 0 : index
    %c0_52 = arith.constant 0 : index
    %89 = vector.load %arg4[%c11, %c0_51, %c0_52] : memref<25x20x50xf32, #tpu.memory_space<vmem>>, vector<1x20x50xf32>
    %90 = vector.shape_cast %89 : vector<1x20x50xf32> to vector<20x50xf32>
    %cst_53 = arith.constant dense<0.000000e+00> : vector<128x50xf32>
    %91 = tpu.matmul %88, %90, %cst_53 {dimension_numbers = #tpu.dot_dimension_numbers<[1], [0], [0], [1], [0, 0, 1, 1], [], []>} : vector<128x20xf32>, vector<20x50xf32>, vector<128x50xf32> -> vector<128x50xf32>
    %92 = arith.addf %86, %91 : vector<128x50xf32>
    %93 = vector.extract_strided_slice %19 {offsets = [2, 2, 0], sizes = [8, 16, 20], strides = [1, 1, 1]} : vector<12x20x20xf32> to vector<8x16x20xf32>
    %94 = vector.shape_cast %93 : vector<8x16x20xf32> to vector<128x20xf32>
    %c12 = arith.constant 12 : index
    %c0_54 = arith.constant 0 : index
    %c0_55 = arith.constant 0 : index
    %95 = vector.load %arg4[%c12, %c0_54, %c0_55] : memref<25x20x50xf32, #tpu.memory_space<vmem>>, vector<1x20x50xf32>
    %96 = vector.shape_cast %95 : vector<1x20x50xf32> to vector<20x50xf32>
    %cst_56 = arith.constant dense<0.000000e+00> : vector<128x50xf32>
    %97 = tpu.matmul %94, %96, %cst_56 {dimension_numbers = #tpu.dot_dimension_numbers<[1], [0], [0], [1], [0, 0, 1, 1], [], []>} : vector<128x20xf32>, vector<20x50xf32>, vector<128x50xf32> -> vector<128x50xf32>
    %98 = arith.addf %92, %97 : vector<128x50xf32>
    %99 = vector.extract_strided_slice %19 {offsets = [2, 3, 0], sizes = [8, 16, 20], strides = [1, 1, 1]} : vector<12x20x20xf32> to vector<8x16x20xf32>
    %100 = vector.shape_cast %99 : vector<8x16x20xf32> to vector<128x20xf32>
    %c13 = arith.constant 13 : index
    %c0_57 = arith.constant 0 : index
    %c0_58 = arith.constant 0 : index
    %101 = vector.load %arg4[%c13, %c0_57, %c0_58] : memref<25x20x50xf32, #tpu.memory_space<vmem>>, vector<1x20x50xf32>
    %102 = vector.shape_cast %101 : vector<1x20x50xf32> to vector<20x50xf32>
    %cst_59 = arith.constant dense<0.000000e+00> : vector<128x50xf32>
    %103 = tpu.matmul %100, %102, %cst_59 {dimension_numbers = #tpu.dot_dimension_numbers<[1], [0], [0], [1], [0, 0, 1, 1], [], []>} : vector<128x20xf32>, vector<20x50xf32>, vector<128x50xf32> -> vector<128x50xf32>
    %104 = arith.addf %98, %103 : vector<128x50xf32>
    %105 = vector.extract_strided_slice %19 {offsets = [2, 4, 0], sizes = [8, 16, 20], strides = [1, 1, 1]} : vector<12x20x20xf32> to vector<8x16x20xf32>
    %106 = vector.shape_cast %105 : vector<8x16x20xf32> to vector<128x20xf32>
    %c14 = arith.constant 14 : index
    %c0_60 = arith.constant 0 : index
    %c0_61 = arith.constant 0 : index
    %107 = vector.load %arg4[%c14, %c0_60, %c0_61] : memref<25x20x50xf32, #tpu.memory_space<vmem>>, vector<1x20x50xf32>
    %108 = vector.shape_cast %107 : vector<1x20x50xf32> to vector<20x50xf32>
    %cst_62 = arith.constant dense<0.000000e+00> : vector<128x50xf32>
    %109 = tpu.matmul %106, %108, %cst_62 {dimension_numbers = #tpu.dot_dimension_numbers<[1], [0], [0], [1], [0, 0, 1, 1], [], []>} : vector<128x20xf32>, vector<20x50xf32>, vector<128x50xf32> -> vector<128x50xf32>
    %110 = arith.addf %104, %109 : vector<128x50xf32>
    %111 = vector.extract_strided_slice %19 {offsets = [3, 0, 0], sizes = [8, 16, 20], strides = [1, 1, 1]} : vector<12x20x20xf32> to vector<8x16x20xf32>
    %112 = vector.shape_cast %111 : vector<8x16x20xf32> to vector<128x20xf32>
    %c15 = arith.constant 15 : index
    %c0_63 = arith.constant 0 : index
    %c0_64 = arith.constant 0 : index
    %113 = vector.load %arg4[%c15, %c0_63, %c0_64] : memref<25x20x50xf32, #tpu.memory_space<vmem>>, vector<1x20x50xf32>
    %114 = vector.shape_cast %113 : vector<1x20x50xf32> to vector<20x50xf32>
    %cst_65 = arith.constant dense<0.000000e+00> : vector<128x50xf32>
    %115 = tpu.matmul %112, %114, %cst_65 {dimension_numbers = #tpu.dot_dimension_numbers<[1], [0], [0], [1], [0, 0, 1, 1], [], []>} : vector<128x20xf32>, vector<20x50xf32>, vector<128x50xf32> -> vector<128x50xf32>
    %116 = arith.addf %110, %115 : vector<128x50xf32>
    %117 = vector.extract_strided_slice %19 {offsets = [3, 1, 0], sizes = [8, 16, 20], strides = [1, 1, 1]} : vector<12x20x20xf32> to vector<8x16x20xf32>
    %118 = vector.shape_cast %117 : vector<8x16x20xf32> to vector<128x20xf32>
    %c16 = arith.constant 16 : index
    %c0_66 = arith.constant 0 : index
    %c0_67 = arith.constant 0 : index
    %119 = vector.load %arg4[%c16, %c0_66, %c0_67] : memref<25x20x50xf32, #tpu.memory_space<vmem>>, vector<1x20x50xf32>
    %120 = vector.shape_cast %119 : vector<1x20x50xf32> to vector<20x50xf32>
    %cst_68 = arith.constant dense<0.000000e+00> : vector<128x50xf32>
    %121 = tpu.matmul %118, %120, %cst_68 {dimension_numbers = #tpu.dot_dimension_numbers<[1], [0], [0], [1], [0, 0, 1, 1], [], []>} : vector<128x20xf32>, vector<20x50xf32>, vector<128x50xf32> -> vector<128x50xf32>
    %122 = arith.addf %116, %121 : vector<128x50xf32>
    %123 = vector.extract_strided_slice %19 {offsets = [3, 2, 0], sizes = [8, 16, 20], strides = [1, 1, 1]} : vector<12x20x20xf32> to vector<8x16x20xf32>
    %124 = vector.shape_cast %123 : vector<8x16x20xf32> to vector<128x20xf32>
    %c17 = arith.constant 17 : index
    %c0_69 = arith.constant 0 : index
    %c0_70 = arith.constant 0 : index
    %125 = vector.load %arg4[%c17, %c0_69, %c0_70] : memref<25x20x50xf32, #tpu.memory_space<vmem>>, vector<1x20x50xf32>
    %126 = vector.shape_cast %125 : vector<1x20x50xf32> to vector<20x50xf32>
    %cst_71 = arith.constant dense<0.000000e+00> : vector<128x50xf32>
    %127 = tpu.matmul %124, %126, %cst_71 {dimension_numbers = #tpu.dot_dimension_numbers<[1], [0], [0], [1], [0, 0, 1, 1], [], []>} : vector<128x20xf32>, vector<20x50xf32>, vector<128x50xf32> -> vector<128x50xf32>
    %128 = arith.addf %122, %127 : vector<128x50xf32>
    %129 = vector.extract_strided_slice %19 {offsets = [3, 3, 0], sizes = [8, 16, 20], strides = [1, 1, 1]} : vector<12x20x20xf32> to vector<8x16x20xf32>
    %130 = vector.shape_cast %129 : vector<8x16x20xf32> to vector<128x20xf32>
    %c18 = arith.constant 18 : index
    %c0_72 = arith.constant 0 : index
    %c0_73 = arith.constant 0 : index
    %131 = vector.load %arg4[%c18, %c0_72, %c0_73] : memref<25x20x50xf32, #tpu.memory_space<vmem>>, vector<1x20x50xf32>
    %132 = vector.shape_cast %131 : vector<1x20x50xf32> to vector<20x50xf32>
    %cst_74 = arith.constant dense<0.000000e+00> : vector<128x50xf32>
    %133 = tpu.matmul %130, %132, %cst_74 {dimension_numbers = #tpu.dot_dimension_numbers<[1], [0], [0], [1], [0, 0, 1, 1], [], []>} : vector<128x20xf32>, vector<20x50xf32>, vector<128x50xf32> -> vector<128x50xf32>
    %134 = arith.addf %128, %133 : vector<128x50xf32>
    %135 = vector.extract_strided_slice %19 {offsets = [3, 4, 0], sizes = [8, 16, 20], strides = [1, 1, 1]} : vector<12x20x20xf32> to vector<8x16x20xf32>
    %136 = vector.shape_cast %135 : vector<8x16x20xf32> to vector<128x20xf32>
    %c19 = arith.constant 19 : index
    %c0_75 = arith.constant 0 : index
    %c0_76 = arith.constant 0 : index
    %137 = vector.load %arg4[%c19, %c0_75, %c0_76] : memref<25x20x50xf32, #tpu.memory_space<vmem>>, vector<1x20x50xf32>
    %138 = vector.shape_cast %137 : vector<1x20x50xf32> to vector<20x50xf32>
    %cst_77 = arith.constant dense<0.000000e+00> : vector<128x50xf32>
    %139 = tpu.matmul %136, %138, %cst_77 {dimension_numbers = #tpu.dot_dimension_numbers<[1], [0], [0], [1], [0, 0, 1, 1], [], []>} : vector<128x20xf32>, vector<20x50xf32>, vector<128x50xf32> -> vector<128x50xf32>
    %140 = arith.addf %134, %139 : vector<128x50xf32>
    %141 = vector.extract_strided_slice %19 {offsets = [4, 0, 0], sizes = [8, 16, 20], strides = [1, 1, 1]} : vector<12x20x20xf32> to vector<8x16x20xf32>
    %142 = vector.shape_cast %141 : vector<8x16x20xf32> to vector<128x20xf32>
    %c20 = arith.constant 20 : index
    %c0_78 = arith.constant 0 : index
    %c0_79 = arith.constant 0 : index
    %143 = vector.load %arg4[%c20, %c0_78, %c0_79] : memref<25x20x50xf32, #tpu.memory_space<vmem>>, vector<1x20x50xf32>
    %144 = vector.shape_cast %143 : vector<1x20x50xf32> to vector<20x50xf32>
    %cst_80 = arith.constant dense<0.000000e+00> : vector<128x50xf32>
    %145 = tpu.matmul %142, %144, %cst_80 {dimension_numbers = #tpu.dot_dimension_numbers<[1], [0], [0], [1], [0, 0, 1, 1], [], []>} : vector<128x20xf32>, vector<20x50xf32>, vector<128x50xf32> -> vector<128x50xf32>
    %146 = arith.addf %140, %145 : vector<128x50xf32>
    %147 = vector.extract_strided_slice %19 {offsets = [4, 1, 0], sizes = [8, 16, 20], strides = [1, 1, 1]} : vector<12x20x20xf32> to vector<8x16x20xf32>
    %148 = vector.shape_cast %147 : vector<8x16x20xf32> to vector<128x20xf32>
    %c21 = arith.constant 21 : index
    %c0_81 = arith.constant 0 : index
    %c0_82 = arith.constant 0 : index
    %149 = vector.load %arg4[%c21, %c0_81, %c0_82] : memref<25x20x50xf32, #tpu.memory_space<vmem>>, vector<1x20x50xf32>
    %150 = vector.shape_cast %149 : vector<1x20x50xf32> to vector<20x50xf32>
    %cst_83 = arith.constant dense<0.000000e+00> : vector<128x50xf32>
    %151 = tpu.matmul %148, %150, %cst_83 {dimension_numbers = #tpu.dot_dimension_numbers<[1], [0], [0], [1], [0, 0, 1, 1], [], []>} : vector<128x20xf32>, vector<20x50xf32>, vector<128x50xf32> -> vector<128x50xf32>
    %152 = arith.addf %146, %151 : vector<128x50xf32>
    %153 = vector.extract_strided_slice %19 {offsets = [4, 2, 0], sizes = [8, 16, 20], strides = [1, 1, 1]} : vector<12x20x20xf32> to vector<8x16x20xf32>
    %154 = vector.shape_cast %153 : vector<8x16x20xf32> to vector<128x20xf32>
    %c22 = arith.constant 22 : index
    %c0_84 = arith.constant 0 : index
    %c0_85 = arith.constant 0 : index
    %155 = vector.load %arg4[%c22, %c0_84, %c0_85] : memref<25x20x50xf32, #tpu.memory_space<vmem>>, vector<1x20x50xf32>
    %156 = vector.shape_cast %155 : vector<1x20x50xf32> to vector<20x50xf32>
    %cst_86 = arith.constant dense<0.000000e+00> : vector<128x50xf32>
    %157 = tpu.matmul %154, %156, %cst_86 {dimension_numbers = #tpu.dot_dimension_numbers<[1], [0], [0], [1], [0, 0, 1, 1], [], []>} : vector<128x20xf32>, vector<20x50xf32>, vector<128x50xf32> -> vector<128x50xf32>
    %158 = arith.addf %152, %157 : vector<128x50xf32>
    %159 = vector.extract_strided_slice %19 {offsets = [4, 3, 0], sizes = [8, 16, 20], strides = [1, 1, 1]} : vector<12x20x20xf32> to vector<8x16x20xf32>
    %160 = vector.shape_cast %159 : vector<8x16x20xf32> to vector<128x20xf32>
    %c23 = arith.constant 23 : index
    %c0_87 = arith.constant 0 : index
    %c0_88 = arith.constant 0 : index
    %161 = vector.load %arg4[%c23, %c0_87, %c0_88] : memref<25x20x50xf32, #tpu.memory_space<vmem>>, vector<1x20x50xf32>
    %162 = vector.shape_cast %161 : vector<1x20x50xf32> to vector<20x50xf32>
    %cst_89 = arith.constant dense<0.000000e+00> : vector<128x50xf32>
    %163 = tpu.matmul %160, %162, %cst_89 {dimension_numbers = #tpu.dot_dimension_numbers<[1], [0], [0], [1], [0, 0, 1, 1], [], []>} : vector<128x20xf32>, vector<20x50xf32>, vector<128x50xf32> -> vector<128x50xf32>
    %164 = arith.addf %158, %163 : vector<128x50xf32>
    %165 = vector.extract_strided_slice %19 {offsets = [4, 4, 0], sizes = [8, 16, 20], strides = [1, 1, 1]} : vector<12x20x20xf32> to vector<8x16x20xf32>
    %166 = vector.shape_cast %165 : vector<8x16x20xf32> to vector<128x20xf32>
    %c24 = arith.constant 24 : index
    %c0_90 = arith.constant 0 : index
    %c0_91 = arith.constant 0 : index
    %167 = vector.load %arg4[%c24, %c0_90, %c0_91] : memref<25x20x50xf32, #tpu.memory_space<vmem>>, vector<1x20x50xf32>
    %168 = vector.shape_cast %167 : vector<1x20x50xf32> to vector<20x50xf32>
    %cst_92 = arith.constant dense<0.000000e+00> : vector<128x50xf32>
    %169 = tpu.matmul %166, %168, %cst_92 {dimension_numbers = #tpu.dot_dimension_numbers<[1], [0], [0], [1], [0, 0, 1, 1], [], []>} : vector<128x20xf32>, vector<20x50xf32>, vector<128x50xf32> -> vector<128x50xf32>
    %170 = arith.addf %164, %169 : vector<128x50xf32>
    %c0_93 = arith.constant 0 : index
    %c0_94 = arith.constant 0 : index
    %171 = vector.load %arg5[%c0_93, %c0_94] : memref<1x50xf32, #tpu.memory_space<vmem>>, vector<1x50xf32>
    %172 = vector.broadcast %171 : vector<1x50xf32> to vector<128x50xf32>
    %173 = arith.addf %170, %172 : vector<128x50xf32>
    %cst_95 = arith.constant 0.000000e+00 : f32
    %174 = vector.broadcast %cst_95 : f32 to vector<128x50xf32>
    %175 = arith.maximumf %173, %174 : vector<128x50xf32>
    %176 = vector.shape_cast %175 : vector<128x50xf32> to vector<8x16x50xf32>
    %c0_96 = arith.constant 0 : index
    %c0_97 = arith.constant 0 : index
    %c0_98 = arith.constant 0 : index
    %177 = vector.load %arg15[%c0_96, %c0_97, %c0_98] : memref<8x16x50xf32, #tpu.memory_space<vmem>>, vector<8x16x50xf32>
    tpu.vector_store %arg15[%c0_96, %c0_97, %c0_98], %176 {strides = array<i32>} : memref<8x16x50xf32, #tpu.memory_space<vmem>>, vector<8x16x50xf32>,
    %c0_99 = arith.constant 0 : index
    %c0_100 = arith.constant 0 : index
    %c0_101 = arith.constant 0 : index
    %178 = tpu.strided_load %arg15[%c0_99, %c0_100, %c0_101] {strides = array<i32: 1, 2, 1>} : memref<8x16x50xf32, #tpu.memory_space<vmem>>, vector<8x8x50xf32>
    %c0_102 = arith.constant 0 : index
    %c1_103 = arith.constant 1 : index
    %c0_104 = arith.constant 0 : index
    %179 = tpu.strided_load %arg15[%c0_102, %c1_103, %c0_104] {strides = array<i32: 1, 2, 1>} : memref<8x16x50xf32, #tpu.memory_space<vmem>>, vector<8x8x50xf32>
    %180 = arith.maximumf %178, %179 : vector<8x8x50xf32>
    %181 = vector.shape_cast %180 : vector<8x8x50xf32> to vector<4x2x8x50xf32>
    %182 = vector.extract_strided_slice %181 {offsets = [0, 0, 0, 0], sizes = [4, 1, 8, 50], strides = [1, 1, 1, 1]} : vector<4x2x8x50xf32> to vector<4x1x8x50xf32>
    %183 = vector.shape_cast %182 : vector<4x1x8x50xf32> to vector<4x8x50xf32>
    %184 = vector.extract_strided_slice %181 {offsets = [0, 1, 0, 0], sizes = [4, 1, 8, 50], strides = [1, 1, 1, 1]} : vector<4x2x8x50xf32> to vector<4x1x8x50xf32>
    %185 = vector.shape_cast %184 : vector<4x1x8x50xf32> to vector<4x8x50xf32>
    %186 = arith.maximumf %183, %185 : vector<4x8x50xf32>
    %187 = vector.extract_strided_slice %186 {offsets = [0, 0, 0], sizes = [1, 1, 50], strides = [1, 1, 1]} : vector<4x8x50xf32> to vector<1x1x50xf32>
    %188 = vector.shape_cast %187 : vector<1x1x50xf32> to vector<1x50xf32>
    %189 = vector.extract_strided_slice %186 {offsets = [0, 1, 0], sizes = [1, 1, 50], strides = [1, 1, 1]} : vector<4x8x50xf32> to vector<1x1x50xf32>
    %190 = vector.shape_cast %189 : vector<1x1x50xf32> to vector<1x50xf32>
    %191 = vector.extract_strided_slice %186 {offsets = [0, 2, 0], sizes = [1, 1, 50], strides = [1, 1, 1]} : vector<4x8x50xf32> to vector<1x1x50xf32>
    %192 = vector.shape_cast %191 : vector<1x1x50xf32> to vector<1x50xf32>
    %193 = vector.extract_strided_slice %186 {offsets = [0, 3, 0], sizes = [1, 1, 50], strides = [1, 1, 1]} : vector<4x8x50xf32> to vector<1x1x50xf32>
    %194 = vector.shape_cast %193 : vector<1x1x50xf32> to vector<1x50xf32>
    %195 = vector.extract_strided_slice %186 {offsets = [0, 4, 0], sizes = [1, 1, 50], strides = [1, 1, 1]} : vector<4x8x50xf32> to vector<1x1x50xf32>
    %196 = vector.shape_cast %195 : vector<1x1x50xf32> to vector<1x50xf32>
    %197 = vector.extract_strided_slice %186 {offsets = [0, 5, 0], sizes = [1, 1, 50], strides = [1, 1, 1]} : vector<4x8x50xf32> to vector<1x1x50xf32>
    %198 = vector.shape_cast %197 : vector<1x1x50xf32> to vector<1x50xf32>
    %199 = vector.extract_strided_slice %186 {offsets = [0, 6, 0], sizes = [1, 1, 50], strides = [1, 1, 1]} : vector<4x8x50xf32> to vector<1x1x50xf32>
    %200 = vector.shape_cast %199 : vector<1x1x50xf32> to vector<1x50xf32>
    %201 = vector.extract_strided_slice %186 {offsets = [0, 7, 0], sizes = [1, 1, 50], strides = [1, 1, 1]} : vector<4x8x50xf32> to vector<1x1x50xf32>
    %202 = vector.shape_cast %201 : vector<1x1x50xf32> to vector<1x50xf32>
    %203 = vector.extract_strided_slice %186 {offsets = [1, 0, 0], sizes = [1, 1, 50], strides = [1, 1, 1]} : vector<4x8x50xf32> to vector<1x1x50xf32>
    %204 = vector.shape_cast %203 : vector<1x1x50xf32> to vector<1x50xf32>
    %205 = vector.extract_strided_slice %186 {offsets = [1, 1, 0], sizes = [1, 1, 50], strides = [1, 1, 1]} : vector<4x8x50xf32> to vector<1x1x50xf32>
    %206 = vector.shape_cast %205 : vector<1x1x50xf32> to vector<1x50xf32>
    %207 = vector.extract_strided_slice %186 {offsets = [1, 2, 0], sizes = [1, 1, 50], strides = [1, 1, 1]} : vector<4x8x50xf32> to vector<1x1x50xf32>
    %208 = vector.shape_cast %207 : vector<1x1x50xf32> to vector<1x50xf32>
    %209 = vector.extract_strided_slice %186 {offsets = [1, 3, 0], sizes = [1, 1, 50], strides = [1, 1, 1]} : vector<4x8x50xf32> to vector<1x1x50xf32>
    %210 = vector.shape_cast %209 : vector<1x1x50xf32> to vector<1x50xf32>
    %211 = vector.extract_strided_slice %186 {offsets = [1, 4, 0], sizes = [1, 1, 50], strides = [1, 1, 1]} : vector<4x8x50xf32> to vector<1x1x50xf32>
    %212 = vector.shape_cast %211 : vector<1x1x50xf32> to vector<1x50xf32>
    %213 = vector.extract_strided_slice %186 {offsets = [1, 5, 0], sizes = [1, 1, 50], strides = [1, 1, 1]} : vector<4x8x50xf32> to vector<1x1x50xf32>
    %214 = vector.shape_cast %213 : vector<1x1x50xf32> to vector<1x50xf32>
    %215 = vector.extract_strided_slice %186 {offsets = [1, 6, 0], sizes = [1, 1, 50], strides = [1, 1, 1]} : vector<4x8x50xf32> to vector<1x1x50xf32>
    %216 = vector.shape_cast %215 : vector<1x1x50xf32> to vector<1x50xf32>
    %217 = vector.extract_strided_slice %186 {offsets = [1, 7, 0], sizes = [1, 1, 50], strides = [1, 1, 1]} : vector<4x8x50xf32> to vector<1x1x50xf32>
    %218 = vector.shape_cast %217 : vector<1x1x50xf32> to vector<1x50xf32>
    %219 = vector.extract_strided_slice %186 {offsets = [2, 0, 0], sizes = [1, 1, 50], strides = [1, 1, 1]} : vector<4x8x50xf32> to vector<1x1x50xf32>
    %220 = vector.shape_cast %219 : vector<1x1x50xf32> to vector<1x50xf32>
    %221 = vector.extract_strided_slice %186 {offsets = [2, 1, 0], sizes = [1, 1, 50], strides = [1, 1, 1]} : vector<4x8x50xf32> to vector<1x1x50xf32>
    %222 = vector.shape_cast %221 : vector<1x1x50xf32> to vector<1x50xf32>
    %223 = vector.extract_strided_slice %186 {offsets = [2, 2, 0], sizes = [1, 1, 50], strides = [1, 1, 1]} : vector<4x8x50xf32> to vector<1x1x50xf32>
    %224 = vector.shape_cast %223 : vector<1x1x50xf32> to vector<1x50xf32>
    %225 = vector.extract_strided_slice %186 {offsets = [2, 3, 0], sizes = [1, 1, 50], strides = [1, 1, 1]} : vector<4x8x50xf32> to vector<1x1x50xf32>
    %226 = vector.shape_cast %225 : vector<1x1x50xf32> to vector<1x50xf32>
    %227 = vector.extract_strided_slice %186 {offsets = [2, 4, 0], sizes = [1, 1, 50], strides = [1, 1, 1]} : vector<4x8x50xf32> to vector<1x1x50xf32>
    %228 = vector.shape_cast %227 : vector<1x1x50xf32> to vector<1x50xf32>
    %229 = vector.extract_strided_slice %186 {offsets = [2, 5, 0], sizes = [1, 1, 50], strides = [1, 1, 1]} : vector<4x8x50xf32> to vector<1x1x50xf32>
    %230 = vector.shape_cast %229 : vector<1x1x50xf32> to vector<1x50xf32>
    %231 = vector.extract_strided_slice %186 {offsets = [2, 6, 0], sizes = [1, 1, 50], strides = [1, 1, 1]} : vector<4x8x50xf32> to vector<1x1x50xf32>
    %232 = vector.shape_cast %231 : vector<1x1x50xf32> to vector<1x50xf32>
    %233 = vector.extract_strided_slice %186 {offsets = [2, 7, 0], sizes = [1, 1, 50], strides = [1, 1, 1]} : vector<4x8x50xf32> to vector<1x1x50xf32>
    %234 = vector.shape_cast %233 : vector<1x1x50xf32> to vector<1x50xf32>
    %235 = vector.extract_strided_slice %186 {offsets = [3, 0, 0], sizes = [1, 1, 50], strides = [1, 1, 1]} : vector<4x8x50xf32> to vector<1x1x50xf32>
    %236 = vector.shape_cast %235 : vector<1x1x50xf32> to vector<1x50xf32>
    %237 = vector.extract_strided_slice %186 {offsets = [3, 1, 0], sizes = [1, 1, 50], strides = [1, 1, 1]} : vector<4x8x50xf32> to vector<1x1x50xf32>
    %238 = vector.shape_cast %237 : vector<1x1x50xf32> to vector<1x50xf32>
    %239 = vector.extract_strided_slice %186 {offsets = [3, 2, 0], sizes = [1, 1, 50], strides = [1, 1, 1]} : vector<4x8x50xf32> to vector<1x1x50xf32>
    %240 = vector.shape_cast %239 : vector<1x1x50xf32> to vector<1x50xf32>
    %241 = vector.extract_strided_slice %186 {offsets = [3, 3, 0], sizes = [1, 1, 50], strides = [1, 1, 1]} : vector<4x8x50xf32> to vector<1x1x50xf32>
    %242 = vector.shape_cast %241 : vector<1x1x50xf32> to vector<1x50xf32>
    %243 = vector.extract_strided_slice %186 {offsets = [3, 4, 0], sizes = [1, 1, 50], strides = [1, 1, 1]} : vector<4x8x50xf32> to vector<1x1x50xf32>
    %244 = vector.shape_cast %243 : vector<1x1x50xf32> to vector<1x50xf32>
    %245 = vector.extract_strided_slice %186 {offsets = [3, 5, 0], sizes = [1, 1, 50], strides = [1, 1, 1]} : vector<4x8x50xf32> to vector<1x1x50xf32>
    %246 = vector.shape_cast %245 : vector<1x1x50xf32> to vector<1x50xf32>
    %247 = vector.extract_strided_slice %186 {offsets = [3, 6, 0], sizes = [1, 1, 50], strides = [1, 1, 1]} : vector<4x8x50xf32> to vector<1x1x50xf32>
    %248 = vector.shape_cast %247 : vector<1x1x50xf32> to vector<1x50xf32>
    %249 = vector.extract_strided_slice %186 {offsets = [3, 7, 0], sizes = [1, 1, 50], strides = [1, 1, 1]} : vector<4x8x50xf32> to vector<1x1x50xf32>
    %250 = vector.shape_cast %249 : vector<1x1x50xf32> to vector<1x50xf32>
    %251 = tpu.concatenate %188, %190, %192, %194, %196, %198, %200, %202, %204, %206, %208, %210, %212, %214, %216, %218 in 1 : vector<1x50xf32>, vector<1x50xf32>, vector<1x50xf32>, vector<1x50xf32>, vector<1x50xf32>, vector<1x50xf32>, vector<1x50xf32>, vector<1x50xf32>, vector<1x50xf32>, vector<1x50xf32>, vector<1x50xf32>, vector<1x50xf32>, vector<1x50xf32>, vector<1x50xf32>, vector<1x50xf32>, vector<1x50xf32> -> vector<1x800xf32>
    %252 = tpu.concatenate %220, %222, %224, %226, %228, %230, %232, %234, %236, %238, %240, %242, %244, %246, %248, %250 in 1 : vector<1x50xf32>, vector<1x50xf32>, vector<1x50xf32>, vector<1x50xf32>, vector<1x50xf32>, vector<1x50xf32>, vector<1x50xf32>, vector<1x50xf32>, vector<1x50xf32>, vector<1x50xf32>, vector<1x50xf32>, vector<1x50xf32>, vector<1x50xf32>, vector<1x50xf32>, vector<1x50xf32>, vector<1x50xf32> -> vector<1x800xf32>
    %253 = tpu.concatenate %251, %252 in 1 : vector<1x800xf32>, vector<1x800xf32> -> vector<1x1600xf32>
    %c0_105 = arith.constant 0 : index
    %c0_106 = arith.constant 0 : index
    %254 = vector.load %arg6[%c0_105, %c0_106] : memref<1600x500xf32, #tpu.memory_space<vmem>>, vector<1600x500xf32>
    %cst_107 = arith.constant dense<0.000000e+00> : vector<1x500xf32>
    %255 = tpu.matmul %253, %254, %cst_107 {dimension_numbers = #tpu.dot_dimension_numbers<[1], [0], [0], [1], [0, 0, 1, 1], [], []>} : vector<1x1600xf32>, vector<1600x500xf32>, vector<1x500xf32> -> vector<1x500xf32>
    %c0_108 = arith.constant 0 : index
    %c0_109 = arith.constant 0 : index
    %256 = vector.load %arg7[%c0_108, %c0_109] : memref<1x500xf32, #tpu.memory_space<vmem>>, vector<1x500xf32>
    %257 = arith.addf %255, %256 : vector<1x500xf32>
    %cst_110 = arith.constant 0.000000e+00 : f32
    %258 = vector.broadcast %cst_110 : f32 to vector<1x500xf32>
    %259 = arith.maximumf %257, %258 : vector<1x500xf32>
    %c0_111 = arith.constant 0 : index
    %c0_112 = arith.constant 0 : index
    %260 = vector.load %arg8[%c0_111, %c0_112] : memref<500x128xf32, #tpu.memory_space<vmem>>, vector<500x128xf32>
    %cst_113 = arith.constant dense<0.000000e+00> : vector<1x128xf32>
    %261 = tpu.matmul %259, %260, %cst_113 {dimension_numbers = #tpu.dot_dimension_numbers<[1], [0], [0], [1], [0, 0, 1, 1], [], []>} : vector<1x500xf32>, vector<500x128xf32>, vector<1x128xf32> -> vector<1x128xf32>
    %c0_114 = arith.constant 0 : index
    %c0_115 = arith.constant 0 : index
    %262 = vector.load %arg9[%c0_114, %c0_115] : memref<1x128xf32, #tpu.memory_space<vmem>>, vector<1x128xf32>
    %263 = arith.addf %261, %262 : vector<1x128xf32>
    %cst_116 = arith.constant 0.000000e+00 : f32
    %264 = vector.broadcast %cst_116 : f32 to vector<1x128xf32>
    %265 = arith.maximumf %263, %264 : vector<1x128xf32>
    %c0_117 = arith.constant 0 : index
    %c0_118 = arith.constant 0 : index
    %266 = vector.load %arg10[%c0_117, %c0_118] : memref<128x9xf32, #tpu.memory_space<vmem>>, vector<128x9xf32>
    %cst_119 = arith.constant dense<0.000000e+00> : vector<1x9xf32>
    %267 = tpu.matmul %265, %266, %cst_119 {dimension_numbers = #tpu.dot_dimension_numbers<[1], [0], [0], [1], [0, 0, 1, 1], [], []>} : vector<1x128xf32>, vector<128x9xf32>, vector<1x9xf32> -> vector<1x9xf32>
    %c0_120 = arith.constant 0 : index
    %c0_121 = arith.constant 0 : index
    %268 = vector.load %arg11[%c0_120, %c0_121] : memref<1x9xf32, #tpu.memory_space<vmem>>, vector<1x9xf32>
    %269 = arith.addf %267, %268 : vector<1x9xf32>
    %270 = vector.extract_strided_slice %269 {offsets = [0, 0], sizes = [1, 8], strides = [1, 1]} : vector<1x9xf32> to vector<1x8xf32>
    %271 = vector.extract_strided_slice %269 {offsets = [0, 8], sizes = [1, 1], strides = [1, 1]} : vector<1x9xf32> to vector<1x1xf32>
    %cst_122 = arith.constant dense<0xFF800000> : vector<1xf32>
    %272 = vector.multi_reduction <maximumf>, %270, %cst_122 [1] : vector<1x8xf32> to vector<1xf32>
    %273 = vector.shape_cast %272 : vector<1xf32> to vector<1x1xf32>
    %274 = vector.broadcast %273 : vector<1x1xf32> to vector<1x8xf32>
    %275 = arith.subf %270, %274 : vector<1x8xf32>
    %276 = math.exp %275 : vector<1x8xf32>
    %cst_123 = arith.constant dense<0.000000e+00> : vector<1xf32>
    %277 = vector.multi_reduction <add>, %276, %cst_123 [1] : vector<1x8xf32> to vector<1xf32>
    %278 = vector.shape_cast %277 : vector<1xf32> to vector<1x1xf32>
    %279 = tpu.reciprocal %278 {approx = true} : vector<1x1xf32> -> vector<1x1xf32>
    %280 = arith.mulf %278, %279 : vector<1x1xf32>
    %cst_124 = arith.constant 2.000000e+00 : f32
    %281 = vector.broadcast %cst_124 : f32 to vector<1x1xf32>
    %282 = arith.subf %281, %280 : vector<1x1xf32>
    %283 = arith.mulf %279, %282 : vector<1x1xf32>
    %284 = vector.broadcast %283 : vector<1x1xf32> to vector<1x8xf32>
    %285 = arith.mulf %276, %284 : vector<1x8xf32>
    %286 = vector.shape_cast %285 : vector<1x8xf32> to vector<1x1x8xf32>
    %c0_125 = arith.constant 0 : index
    %c0_126 = arith.constant 0 : index
    %c0_127 = arith.constant 0 : index
    %287 = vector.load %arg12[%c0_125, %c0_126, %c0_127] : memref<1x1x8xf32, #tpu.memory_space<vmem>>, vector<1x1x8xf32>
    tpu.vector_store %arg12[%c0_125, %c0_126, %c0_127], %286 {strides = array<i32>} : memref<1x1x8xf32, #tpu.memory_space<vmem>>, vector<1x1x8xf32>,
    %288 = vector.shape_cast %271 : vector<1x1xf32> to vector<1x1x1xf32>
    %c0_128 = arith.constant 0 : index
    %c0_129 = arith.constant 0 : index
    %c0_130 = arith.constant 0 : index
    %289 = vector.load %arg13[%c0_128, %c0_129, %c0_130] : memref<1x1x1xf32, #tpu.memory_space<vmem>>, vector<1x1x1xf32>
    tpu.vector_store %arg13[%c0_128, %c0_129, %c0_130], %288 {strides = array<i32>} : memref<1x1x1xf32, #tpu.memory_space<vmem>>, vector<1x1x1xf32>,
    return
  }
  func.func @transform_0(%arg0: i32) -> (i32, i32, i32) {
    %c0_i32 = arith.constant 0 : i32
    %c0_i32_0 = arith.constant 0 : i32
    %c0_i32_1 = arith.constant 0 : i32
    return %arg0, %c0_i32, %c0_i32_0 : i32, i32, i32
  }
  func.func @transform_1(%arg0: i32) -> (i32, i32) {
    %c0_i32 = arith.constant 0 : i32
    %c0_i32_0 = arith.constant 0 : i32
    %c0_i32_1 = arith.constant 0 : i32
    return %c0_i32, %c0_i32_0 : i32, i32
  }
  func.func @transform_2(%arg0: i32) -> (i32, i32) {
    %c0_i32 = arith.constant 0 : i32
    %c0_i32_0 = arith.constant 0 : i32
    %c0_i32_1 = arith.constant 0 : i32
    return %c0_i32, %c0_i32_0 : i32, i32
  }
  func.func @transform_3(%arg0: i32) -> (i32, i32, i32) {
    %c0_i32 = arith.constant 0 : i32
    %c0_i32_0 = arith.constant 0 : i32
    %c0_i32_1 = arith.constant 0 : i32
    %c0_i32_2 = arith.constant 0 : i32
    return %c0_i32, %c0_i32_0, %c0_i32_1 : i32, i32, i32
  }
  func.func @transform_4(%arg0: i32) -> (i32, i32) {
    %c0_i32 = arith.constant 0 : i32
    %c0_i32_0 = arith.constant 0 : i32
    %c0_i32_1 = arith.constant 0 : i32
    return %c0_i32, %c0_i32_0 : i32, i32
  }
  func.func @transform_5(%arg0: i32) -> (i32, i32) {
    %c0_i32 = arith.constant 0 : i32
    %c0_i32_0 = arith.constant 0 : i32
    %c0_i32_1 = arith.constant 0 : i32
    return %c0_i32, %c0_i32_0 : i32, i32
  }
  func.func @transform_6(%arg0: i32) -> (i32, i32) {
    %c0_i32 = arith.constant 0 : i32
    %c0_i32_0 = arith.constant 0 : i32
    %c0_i32_1 = arith.constant 0 : i32
    return %c0_i32, %c0_i32_0 : i32, i32
  }
  func.func @transform_7(%arg0: i32) -> (i32, i32) {
    %c0_i32 = arith.constant 0 : i32
    %c0_i32_0 = arith.constant 0 : i32
    %c0_i32_1 = arith.constant 0 : i32
    return %c0_i32, %c0_i32_0 : i32, i32
  }
  func.func @transform_8(%arg0: i32) -> (i32, i32) {
    %c0_i32 = arith.constant 0 : i32
    %c0_i32_0 = arith.constant 0 : i32
    %c0_i32_1 = arith.constant 0 : i32
    return %c0_i32, %c0_i32_0 : i32, i32
  }
  func.func @transform_9(%arg0: i32) -> (i32, i32) {
    %c0_i32 = arith.constant 0 : i32
    %c0_i32_0 = arith.constant 0 : i32
    %c0_i32_1 = arith.constant 0 : i32
    return %c0_i32, %c0_i32_0 : i32, i32
  }
  func.func @transform_10(%arg0: i32) -> (i32, i32) {
    %c0_i32 = arith.constant 0 : i32
    %c0_i32_0 = arith.constant 0 : i32
    %c0_i32_1 = arith.constant 0 : i32
    return %c0_i32, %c0_i32_0 : i32, i32
  }
  func.func @transform_11(%arg0: i32) -> (i32, i32, i32) {
    %c0_i32 = arith.constant 0 : i32
    %c0_i32_0 = arith.constant 0 : i32
    %c0_i32_1 = arith.constant 0 : i32
    return %arg0, %c0_i32, %c0_i32_0 : i32, i32, i32
  }
  func.func @transform_12(%arg0: i32) -> (i32, i32, i32) {
    %c0_i32 = arith.constant 0 : i32
    %c0_i32_0 = arith.constant 0 : i32
    %c0_i32_1 = arith.constant 0 : i32
    return %arg0, %c0_i32, %c0_i32_0 : i32, i32, i32
  }
}

</mosaic_0001>

<llo_original>
// kernel: a2c_forward.1
$region0: #{a2c_forward.1}
  #allocation0 [shape = 'u32[]', space=smem, size = 0x4, offset = 0x4, fixed_abs, tag = 'smem constant byte address 0x4 - core index']
  #allocation1 [shape = 'u32[144,128]{1,0:T(1,128)}', space=vmem, size = 0x12000, scoped, tag = 'internal scratch']
  #allocation2 [shape = 'f32[24,40,20]{2,1,0:T(8,128)}', space=vmem, size = 0x78000, scoped, tag = 'scratch operand']
  #allocation3 [shape = 'f32[8,16,50]{2,1,0:T(8,128)}', space=vmem, size = 0x10000, scoped, tag = 'scratch operand']
  %s0 = inlined_call_operand.vmem [shape: f32[2,960,25], index: 0, kind: input, shape index: {}]
  %s1 = inlined_call_operand.vmem [shape: f32[25,20], index: 1, kind: input, shape index: {}]
  %s2 = inlined_call_operand.vmem [shape: f32[1,20], index: 2, kind: input, shape index: {}]
  %s3 = inlined_call_operand.vmem [shape: f32[25,20,50], index: 3, kind: input, shape index: {}]
  %s4 = inlined_call_operand.vmem [shape: f32[1,50], index: 4, kind: input, shape index: {}]
  %s5 = inlined_call_operand.vmem [shape: f32[1600,500], index: 5, kind: input, shape index: {}]
  %s6 = inlined_call_operand.vmem [shape: f32[1,500], index: 6, kind: input, shape index: {}]
  %s7 = inlined_call_operand.vmem [shape: f32[500,128], index: 7, kind: input, shape index: {}]
  %s8 = inlined_call_operand.vmem [shape: f32[1,128], index: 8, kind: input, shape index: {}]
  %s9 = inlined_call_operand.vmem [shape: f32[128,9], index: 9, kind: input, shape index: {}]
  %s10 = inlined_call_operand.vmem [shape: f32[1,9], index: 10, kind: input, shape index: {}]
  %s11 = inlined_call_operand.hbm [shape: f32[2,1,8], index: 11, kind: output, shape index: {0}]
  %s12 = inlined_call_operand.vmem [shape: f32[2,1,1], index: 12, kind: output, shape index: {1}]
  %13 = xla_tuple %s11, %s12
  %s14 = sld [smem:[#allocation0]]
  $region85: #{a2c_forward.1} parent=0
    _
  %s16 = ssub.s32 1, %s14
  %s17 = scalar_select 0, %s16, %s14
  $region1: #{a2c_forward.1} parent=0
    #allocation4 [shape = 'u8[1024]{0}', space=vmem, size = 0x400, scoped, tag = 'output window, operand 0']
    #allocation5 [shape = 's32[2]{0}', space=sflag, size = 0x8, scoped, tag = 'scoped memory for a2c_forward.1']
    %18 = vsyncpa [#allocation5], 0
    %s19 = scalar_lea.sflag [#allocation5], 1
    %20 = vsyncpa %s19, 0
    loop: start=0, step=1, limit=4
    $region2: #{a2c_forward.1} parent=1 // loop_pre_header
      _
    $region3: #{a2c_forward.1} parent=1 // loop_header
      %s22 = sphi 0, %s26
      %p23 = scmp.ge.s32.totalorder %s22, 4
      %s32 = sphi 0, %s34
      %s35 = sphi 0, %s32
      %s36 = sphi 0, %s35
      %s52 = sphi 0, %s36
      %s56 = sphi 0, %s56
      %s58 = sphi 0, %s56
      %s59 = sphi 0, %s58
      %s73 = sphi 0, %s59
      %s77 = sphi 0, %s77
      %s79 = sphi 0, %s77
      %s80 = sphi 0, %s79
      %s94 = sphi 0, %s80
      %s98 = sphi 0, %s98
      %s100 = sphi 0, %s98
      %s101 = sphi 0, %s100
      %s115 = sphi 0, %s101
      %s119 = sphi 0, %s119
      %s121 = sphi 0, %s119
      %s122 = sphi 0, %s121
      %s136 = sphi 0, %s122
      %s140 = sphi 0, %s140
      %s142 = sphi 0, %s140
      %s143 = sphi 0, %s142
      %s157 = sphi 0, %s143
      %s161 = sphi 0, %s161
      %s163 = sphi 0, %s161
      %s164 = sphi 0, %s163
      %s178 = sphi 0, %s164
      %s182 = sphi 0, %s182
      %s184 = sphi 0, %s182
      %s185 = sphi 0, %s184
      %s199 = sphi 0, %s185
      %s203 = sphi 0, %s203
      %s205 = sphi 0, %s203
      %s206 = sphi 0, %s205
      %s220 = sphi 0, %s206
      %s224 = sphi 0, %s224
      %s226 = sphi 0, %s224
      %s227 = sphi 0, %s226
      %s241 = sphi 0, %s227
      %s245 = sphi 0, %s245
      %s247 = sphi 0, %s245
      %s248 = sphi 0, %s247
      %s262 = sphi 0, %s248
      %s268 = sphi 0, %s270
      %s271 = sphi 0, %s268
      %s272 = sphi 0, %s271
      %s288 = sphi 0, %s272
      %s294 = sphi 0, %s296
      %s297 = sphi 0, %s294
      %s298 = sphi 0, %s297
      %s314 = sphi 0, %s298
    $region4: #{a2c_forward.1} parent=1 // loop_header_branch
      %25 = sbr.rel (%p23) target = $region8
    $region5: #{a2c_forward.1} parent=1 // loop_body
      %s27 = ssub.s32 %s22, 1
      %s28 = ssub.s32 %s22, 2
      %s29 = sadd.s32 %s22, 1
      %s30 = ssub.s32 %s22, %s29
      %p31 = scmp.eq.s32.totalorder %s30, 0
      %s33 = sadd.s32 %s32, 1
      %s34 = scalar_select %p31, %s32, %s33
      %p37 = pneg %p31
      %p38 = scmp.eq.s32.totalorder %s22, 1
      %p39 = por %p37, %p38
      %p40 = scmp.ne.s32.totalorder %s32, %s35
      %p41 = scmp.eq.s32.totalorder %s22, 0
      %p42 = por %p40, %p41
      %p43 = scmp.ne.s32.totalorder %s32, %s35
      %p44 = scmp.eq.s32.totalorder %s27, 1
      %p45 = por %p43, %p44
      %p46 = scmp.ne.s32.totalorder %s35, %s36
      %p47 = scmp.eq.s32.totalorder %s27, 0
      %p48 = por %p46, %p47
      %p49 = scmp.ne.s32.totalorder %s35, %s36
      %p50 = scmp.eq.s32.totalorder %s28, 1
      %p51 = por %p49, %p50
      %p53 = scmp.ne.s32.totalorder %s36, %s52
      %p54 = scmp.eq.s32.totalorder %s28, 0
      %p55 = por %p53, %p54
      %s57 = sadd.s32 %s56, 1
      %p60 = scmp.eq.s32.totalorder %s22, 1
      %p61 = scmp.ne.s32.totalorder %s56, %s58
      %p62 = scmp.eq.s32.totalorder %s22, 0
      %p63 = por %p61, %p62
      %p64 = scmp.ne.s32.totalorder %s56, %s58
      %p65 = scmp.eq.s32.totalorder %s27, 1
      %p66 = por %p64, %p65
      %p67 = scmp.ne.s32.totalorder %s58, %s59
      %p68 = scmp.eq.s32.totalorder %s27, 0
      %p69 = por %p67, %p68
      %p70 = scmp.ne.s32.totalorder %s58, %s59
      %p71 = scmp.eq.s32.totalorder %s28, 1
      %p72 = por %p70, %p71
      %p74 = scmp.ne.s32.totalorder %s59, %s73
      %p75 = scmp.eq.s32.totalorder %s28, 0
      %p76 = por %p74, %p75
      %s78 = sadd.s32 %s77, 1
      %p81 = scmp.eq.s32.totalorder %s22, 1
      %p82 = scmp.ne.s32.totalorder %s77, %s79
      %p83 = scmp.eq.s32.totalorder %s22, 0
      %p84 = por %p82, %p83
      %p85 = scmp.ne.s32.totalorder %s77, %s79
      %p86 = scmp.eq.s32.totalorder %s27, 1
      %p87 = por %p85, %p86
      %p88 = scmp.ne.s32.totalorder %s79, %s80
      %p89 = scmp.eq.s32.totalorder %s27, 0
      %p90 = por %p88, %p89
      %p91 = scmp.ne.s32.totalorder %s79, %s80
      %p92 = scmp.eq.s32.totalorder %s28, 1
      %p93 = por %p91, %p92
      %p95 = scmp.ne.s32.totalorder %s80, %s94
      %p96 = scmp.eq.s32.totalorder %s28, 0
      %p97 = por %p95, %p96
      %s99 = sadd.s32 %s98, 1
      %p102 = scmp.eq.s32.totalorder %s22, 1
      %p103 = scmp.ne.s32.totalorder %s98, %s100
      %p104 = scmp.eq.s32.totalorder %s22, 0
      %p105 = por %p103, %p104
      %p106 = scmp.ne.s32.totalorder %s98, %s100
      %p107 = scmp.eq.s32.totalorder %s27, 1
      %p108 = por %p106, %p107
      %p109 = scmp.ne.s32.totalorder %s100, %s101
      %p110 = scmp.eq.s32.totalorder %s27, 0
      %p111 = por %p109, %p110
      %p112 = scmp.ne.s32.totalorder %s100, %s101
      %p113 = scmp.eq.s32.totalorder %s28, 1
      %p114 = por %p112, %p113
      %p116 = scmp.ne.s32.totalorder %s101, %s115
      %p117 = scmp.eq.s32.totalorder %s28, 0
      %p118 = por %p116, %p117
      %s120 = sadd.s32 %s119, 1
      %p123 = scmp.eq.s32.totalorder %s22, 1
      %p124 = scmp.ne.s32.totalorder %s119, %s121
      %p125 = scmp.eq.s32.totalorder %s22, 0
      %p126 = por %p124, %p125
      %p127 = scmp.ne.s32.totalorder %s119, %s121
      %p128 = scmp.eq.s32.totalorder %s27, 1
      %p129 = por %p127, %p128
      %p130 = scmp.ne.s32.totalorder %s121, %s122
      %p131 = scmp.eq.s32.totalorder %s27, 0
      %p132 = por %p130, %p131
      %p133 = scmp.ne.s32.totalorder %s121, %s122
      %p134 = scmp.eq.s32.totalorder %s28, 1
      %p135 = por %p133, %p134
      %p137 = scmp.ne.s32.totalorder %s122, %s136
      %p138 = scmp.eq.s32.totalorder %s28, 0
      %p139 = por %p137, %p138
      %s141 = sadd.s32 %s140, 1
      %p144 = scmp.eq.s32.totalorder %s22, 1
      %p145 = scmp.ne.s32.totalorder %s140, %s142
      %p146 = scmp.eq.s32.totalorder %s22, 0
      %p147 = por %p145, %p146
      %p148 = scmp.ne.s32.totalorder %s140, %s142
      %p149 = scmp.eq.s32.totalorder %s27, 1
      %p150 = por %p148, %p149
      %p151 = scmp.ne.s32.totalorder %s142, %s143
      %p152 = scmp.eq.s32.totalorder %s27, 0
      %p153 = por %p151, %p152
      %p154 = scmp.ne.s32.totalorder %s142, %s143
      %p155 = scmp.eq.s32.totalorder %s28, 1
      %p156 = por %p154, %p155
      %p158 = scmp.ne.s32.totalorder %s143, %s157
      %p159 = scmp.eq.s32.totalorder %s28, 0
      %p160 = por %p158, %p159
      %s162 = sadd.s32 %s161, 1
      %p165 = scmp.eq.s32.totalorder %s22, 1
      %p166 = scmp.ne.s32.totalorder %s161, %s163
      %p167 = scmp.eq.s32.totalorder %s22, 0
      %p168 = por %p166, %p167
      %p169 = scmp.ne.s32.totalorder %s161, %s163
      %p170 = scmp.eq.s32.totalorder %s27, 1
      %p171 = por %p169, %p170
      %p172 = scmp.ne.s32.totalorder %s163, %s164
      %p173 = scmp.eq.s32.totalorder %s27, 0
      %p174 = por %p172, %p173
      %p175 = scmp.ne.s32.totalorder %s163, %s164
      %p176 = scmp.eq.s32.totalorder %s28, 1
      %p177 = por %p175, %p176
      %p179 = scmp.ne.s32.totalorder %s164, %s178
      %p180 = scmp.eq.s32.totalorder %s28, 0
      %p181 = por %p179, %p180
      %s183 = sadd.s32 %s182, 1
      %p186 = scmp.eq.s32.totalorder %s22, 1
      %p187 = scmp.ne.s32.totalorder %s182, %s184
      %p188 = scmp.eq.s32.totalorder %s22, 0
      %p189 = por %p187, %p188
      %p190 = scmp.ne.s32.totalorder %s182, %s184
      %p191 = scmp.eq.s32.totalorder %s27, 1
      %p192 = por %p190, %p191
      %p193 = scmp.ne.s32.totalorder %s184, %s185
      %p194 = scmp.eq.s32.totalorder %s27, 0
      %p195 = por %p193, %p194
      %p196 = scmp.ne.s32.totalorder %s184, %s185
      %p197 = scmp.eq.s32.totalorder %s28, 1
      %p198 = por %p196, %p197
      %p200 = scmp.ne.s32.totalorder %s185, %s199
      %p201 = scmp.eq.s32.totalorder %s28, 0
      %p202 = por %p200, %p201
      %s204 = sadd.s32 %s203, 1
      %p207 = scmp.eq.s32.totalorder %s22, 1
      %p208 = scmp.ne.s32.totalorder %s203, %s205
      %p209 = scmp.eq.s32.totalorder %s22, 0
      %p210 = por %p208, %p209
      %p211 = scmp.ne.s32.totalorder %s203, %s205
      %p212 = scmp.eq.s32.totalorder %s27, 1
      %p213 = por %p211, %p212
      %p214 = scmp.ne.s32.totalorder %s205, %s206
      %p215 = scmp.eq.s32.totalorder %s27, 0
      %p216 = por %p214, %p215
      %p217 = scmp.ne.s32.totalorder %s205, %s206
      %p218 = scmp.eq.s32.totalorder %s28, 1
      %p219 = por %p217, %p218
      %p221 = scmp.ne.s32.totalorder %s206, %s220
      %p222 = scmp.eq.s32.totalorder %s28, 0
      %p223 = por %p221, %p222
      %s225 = sadd.s32 %s224, 1
      %p228 = scmp.eq.s32.totalorder %s22, 1
      %p229 = scmp.ne.s32.totalorder %s224, %s226
      %p230 = scmp.eq.s32.totalorder %s22, 0
      %p231 = por %p229, %p230
      %p232 = scmp.ne.s32.totalorder %s224, %s226
      %p233 = scmp.eq.s32.totalorder %s27, 1
      %p234 = por %p232, %p233
      %p235 = scmp.ne.s32.totalorder %s226, %s227
      %p236 = scmp.eq.s32.totalorder %s27, 0
      %p237 = por %p235, %p236
      %p238 = scmp.ne.s32.totalorder %s226, %s227
      %p239 = scmp.eq.s32.totalorder %s28, 1
      %p240 = por %p238, %p239
      %p242 = scmp.ne.s32.totalorder %s227, %s241
      %p243 = scmp.eq.s32.totalorder %s28, 0
      %p244 = por %p242, %p243
      %s246 = sadd.s32 %s245, 1
      %p249 = scmp.eq.s32.totalorder %s22, 1
      %p250 = scmp.ne.s32.totalorder %s245, %s247
      %p251 = scmp.eq.s32.totalorder %s22, 0
      %p252 = por %p250, %p251
      %p253 = scmp.ne.s32.totalorder %s245, %s247
      %p254 = scmp.eq.s32.totalorder %s27, 1
      %p255 = por %p253, %p254
      %p256 = scmp.ne.s32.totalorder %s247, %s248
      %p257 = scmp.eq.s32.totalorder %s27, 0
      %p258 = por %p256, %p257
      %p259 = scmp.ne.s32.totalorder %s247, %s248
      %p260 = scmp.eq.s32.totalorder %s28, 1
      %p261 = por %p259, %p260
      %p263 = scmp.ne.s32.totalorder %s248, %s262
      %p264 = scmp.eq.s32.totalorder %s28, 0
      %p265 = por %p263, %p264
      %s266 = ssub.s32 %s22, %s29
      %p267 = scmp.eq.s32.totalorder %s266, 0
      %s269 = sadd.s32 %s268, 1
      %s270 = scalar_select %p267, %s268, %s269
      %p273 = pneg %p267
      %p274 = scmp.eq.s32.totalorder %s22, 1
      %p275 = por %p273, %p274
      %p276 = scmp.ne.s32.totalorder %s268, %s271
      %p277 = scmp.eq.s32.totalorder %s22, 0
      %p278 = por %p276, %p277
      %p279 = scmp.ne.s32.totalorder %s268, %s271
      %p280 = scmp.eq.s32.totalorder %s27, 1
      %p281 = por %p279, %p280
      %p282 = scmp.ne.s32.totalorder %s271, %s272
      %p283 = scmp.eq.s32.totalorder %s27, 0
      %p284 = por %p282, %p283
      %p285 = scmp.ne.s32.totalorder %s271, %s272
      %p286 = scmp.eq.s32.totalorder %s28, 1
      %p287 = por %p285, %p286
      %p289 = scmp.ne.s32.totalorder %s272, %s288
      %p290 = scmp.eq.s32.totalorder %s28, 0
      %p291 = por %p289, %p290
      %s292 = ssub.s32 %s22, %s29
      %p293 = scmp.eq.s32.totalorder %s292, 0
      %s295 = sadd.s32 %s294, 1
      %s296 = scalar_select %p293, %s294, %s295
      %p299 = pneg %p293
      %p300 = scmp.eq.s32.totalorder %s22, 1
      %p301 = por %p299, %p300
      %p302 = scmp.ne.s32.totalorder %s294, %s297
      %p303 = scmp.eq.s32.totalorder %s22, 0
      %p304 = por %p302, %p303
      %p305 = scmp.ne.s32.totalorder %s294, %s297
      %p306 = scmp.eq.s32.totalorder %s27, 1
      %p307 = por %p305, %p306
      %p308 = scmp.ne.s32.totalorder %s297, %s298
      %p309 = scmp.eq.s32.totalorder %s27, 0
      %p310 = por %p308, %p309
      %p311 = scmp.ne.s32.totalorder %s297, %s298
      %p312 = scmp.eq.s32.totalorder %s28, 1
      %p313 = por %p311, %p312
      %p315 = scmp.ne.s32.totalorder %s298, %s314
      %p316 = scmp.eq.s32.totalorder %s28, 0
      %p317 = por %p315, %p316
      %p318 = scmp.le.s32.totalorder 1, %s22
      %p319 = scmp.lt.s32.totalorder %s22, 3
      %p320 = pnand %p318, %p319
      %p321 = pneg %p320
      // Predicated region
      $region9: #{a2c_forward.1} parent=5 // pred_check
        _
      $region10: #{a2c_forward.1} parent=5 // pred_check_branch
        %323 = sbr.rel (%p320) target = $region12
      $region11: #{a2c_forward.1} parent=5 // pred_region
        %s324 = ssub.s32 %s22, 1
        // Predicated region
        $region13: #{a2c_forward.1} parent=11 // pred_check
          %p325 = pneg %p69
        $region14: #{a2c_forward.1} parent=11 // pred_check_branch
          %327 = sbr.rel (%p325) target = $region16
        $region15: #{a2c_forward.1} parent=11 // pred_region
          _
        $region16: #{a2c_forward.1} parent=11 // pred_fallthru
          _
        // Predicated region
        $region17: #{a2c_forward.1} parent=11 // pred_check
          %p328 = pneg %p90
        $region18: #{a2c_forward.1} parent=11 // pred_check_branch
          %330 = sbr.rel (%p328) target = $region20
        $region19: #{a2c_forward.1} parent=11 // pred_region
          _
        $region20: #{a2c_forward.1} parent=11 // pred_fallthru
          _
        // Predicated region
        $region21: #{a2c_forward.1} parent=11 // pred_check
          %p331 = pneg %p111
        $region22: #{a2c_forward.1} parent=11 // pred_check_branch
          %333 = sbr.rel (%p331) target = $region24
        $region23: #{a2c_forward.1} parent=11 // pred_region
          _
        $region24: #{a2c_forward.1} parent=11 // pred_fallthru
          _
        // Predicated region
        $region25: #{a2c_forward.1} parent=11 // pred_check
          %p334 = pneg %p132
        $region26: #{a2c_forward.1} parent=11 // pred_check_branch
          %336 = sbr.rel (%p334) target = $region28
        $region27: #{a2c_forward.1} parent=11 // pred_region
          _
        $region28: #{a2c_forward.1} parent=11 // pred_fallthru
          _
        // Predicated region
        $region29: #{a2c_forward.1} parent=11 // pred_check
          %p337 = pneg %p153
        $region30: #{a2c_forward.1} parent=11 // pred_check_branch
          %339 = sbr.rel (%p337) target = $region32
        $region31: #{a2c_forward.1} parent=11 // pred_region
          _
        $region32: #{a2c_forward.1} parent=11 // pred_fallthru
          _
        // Predicated region
        $region33: #{a2c_forward.1} parent=11 // pred_check
          %p340 = pneg %p174
        $region34: #{a2c_forward.1} parent=11 // pred_check_branch
          %342 = sbr.rel (%p340) target = $region36
        $region35: #{a2c_forward.1} parent=11 // pred_region
          _
        $region36: #{a2c_forward.1} parent=11 // pred_fallthru
          _
        // Predicated region
        $region37: #{a2c_forward.1} parent=11 // pred_check
          %p343 = pneg %p195
        $region38: #{a2c_forward.1} parent=11 // pred_check_branch
          %345 = sbr.rel (%p343) target = $region40
        $region39: #{a2c_forward.1} parent=11 // pred_region
          _
        $region40: #{a2c_forward.1} parent=11 // pred_fallthru
          _
        // Predicated region
        $region41: #{a2c_forward.1} parent=11 // pred_check
          %p346 = pneg %p216
        $region42: #{a2c_forward.1} parent=11 // pred_check_branch
          %348 = sbr.rel (%p346) target = $region44
        $region43: #{a2c_forward.1} parent=11 // pred_region
          _
        $region44: #{a2c_forward.1} parent=11 // pred_fallthru
          _
        // Predicated region
        $region45: #{a2c_forward.1} parent=11 // pred_check
          %p349 = pneg %p237
        $region46: #{a2c_forward.1} parent=11 // pred_check_branch
          %351 = sbr.rel (%p349) target = $region48
        $region47: #{a2c_forward.1} parent=11 // pred_region
          _
        $region48: #{a2c_forward.1} parent=11 // pred_fallthru
          _
        // Predicated region
        $region49: #{a2c_forward.1} parent=11 // pred_check
          %p352 = pneg %p258
        $region50: #{a2c_forward.1} parent=11 // pred_check_branch
          %354 = sbr.rel (%p352) target = $region52
        $region51: #{a2c_forward.1} parent=11 // pred_region
          _
        $region52: #{a2c_forward.1} parent=11 // pred_fallthru
          _
      $region12: #{a2c_forward.1} parent=5 // pred_fallthru
        _
      %p355 = scmp.lt.s32.totalorder %s22, 2
      // Predicated region
      $region53: #{a2c_forward.1} parent=5 // pred_check
        %p356 = pneg %p355
      $region54: #{a2c_forward.1} parent=5 // pred_check_branch
        %358 = sbr.rel (%p356) target = $region56
      $region55: #{a2c_forward.1} parent=5 // pred_region
        // Predicated region
        $region57: #{a2c_forward.1} parent=55 // pred_check
          %p359 = pneg %p42
        $region58: #{a2c_forward.1} parent=55 // pred_check_branch
          %361 = sbr.rel (%p359) target = $region60
        $region59: #{a2c_forward.1} parent=55 // pred_region
          %p362 = scmp.lt.s32.totalorder %s22, 1
          %s363 = scalar_select %p362, %s22, 1
          %s364 = smul.addr %s363, 120
          %s365 = smul.addr %s364, 8
          %s366 = scalar_lea.vmem %s0, %s365
        $region60: #{a2c_forward.1} parent=55 // pred_fallthru
          _
      $region56: #{a2c_forward.1} parent=5 // pred_fallthru
        _
      %p367 = scmp.le.s32.totalorder 1, %s22
      %p368 = scmp.lt.s32.totalorder %s22, 3
      %p369 = pnand %p367, %p368
      %p370 = pneg %p369
      // Predicated region
      $region61: #{a2c_forward.1} parent=5 // pred_check
        _
      $region62: #{a2c_forward.1} parent=5 // pred_check_branch
        %372 = sbr.rel (%p369) target = $region64
      $region63: #{a2c_forward.1} parent=5 // pred_region
        %s373 = ssub.s32 %s22, 1
        %p374 = scmp.lt.s32.totalorder %s27, 1
        %s375 = scalar_select %p374, %s27, 1
        %s376 = smul.addr %s375, 120
        %s377 = smul.addr %s376, 8
        %s378 = scalar_lea.vmem %s0, %s377
        %p379 = pneg %p48
        %p380 = pneg %p45
        %p381 = pneg %p69
        %p382 = pneg %p66
        %p383 = pneg %p90
        %p384 = pneg %p87
        %p385 = pneg %p111
        %p386 = pneg %p108
        %p387 = pneg %p132
        %p388 = pneg %p129
        %p389 = pneg %p153
        %p390 = pneg %p150
        %p391 = pneg %p174
        %p392 = pneg %p171
        %p393 = pneg %p195
        %p394 = pneg %p192
        %p395 = pneg %p216
        %p396 = pneg %p213
        %p397 = pneg %p237
        %p398 = pneg %p234
        %p399 = pneg %p258
        %p400 = pneg %p255
        %p401 = pneg %p284
        %p402 = pneg %p281
        %s403 = sand.u32 %s271, 1
        %s404 = scalar_lea.sflag [#allocation5], %s403
        %s405 = sand.u32 %s271, 1
        %s406 = scalar_lea.vmem [#allocation4], %s405
        %p407 = pneg %p310
        %p408 = pneg %p307
        %p409 = scmp.lt.s32.totalorder %s27, 1
        %s410 = scalar_select %p409, %s27, 1
        %s411 = scalar_lea.vmem %s12, %s410
        %p412 = scmp.lt.s32.totalorder %s27, 1
        %s413 = scalar_select %p412, %s27, 1
        %s414 = smul.addr %s413, 120
        %s415 = smul.addr %s414, 8
        %s416 = scalar_lea.vmem %s0, %s415
        %p417 = scmp.lt.s32.totalorder %s27, 1
        %s418 = scalar_select %p417, %s27, 1
        %s419 = scalar_lea.vmem %s12, %s418
        %v420 = vld [vmem:[%s416] sm:$0xff]
        %v421 = vld [vmem:[%s416 + $0x8] sm:$0xff]
        %v422 = vld [vmem:[%s416 + $0x10] sm:$0xff]
        %v423 = vld [vmem:[%s416 + $0x18] sm:$0xff]
        %v424 = vld [vmem:[%s416 + $0x20] sm:$0xff]
        %v425 = vld [vmem:[%s416 + $0x28] sm:$0xff]
        %v426 = vld [vmem:[%s416 + $0x30] sm:$0xff]
        %v427 = vld [vmem:[%s416 + $0x38] sm:$0xff]
        %v428 = vld [vmem:[%s416 + $0x40] sm:$0xff]
        %v429 = vld [vmem:[%s416 + $0x48] sm:$0xff]
        %v430 = vld [vmem:[%s416 + $0x50] sm:$0xff]
        %v431 = vld [vmem:[%s416 + $0x58] sm:$0xff]
        %v432 = vld [vmem:[%s416 + $0x60] sm:$0xff]
        %v433 = vld [vmem:[%s416 + $0x68] sm:$0xff]
        %v434 = vld [vmem:[%s416 + $0x70] sm:$0xff]
        %v435 = vld [vmem:[%s416 + $0x78] sm:$0xff]
        %v436 = vld [vmem:[%s416 + $0x80] sm:$0xff]
        %v437 = vld [vmem:[%s416 + $0x88] sm:$0xff]
        %v438 = vld [vmem:[%s416 + $0x90] sm:$0xff]
        %v439 = vld [vmem:[%s416 + $0x98] sm:$0xff]
        %v440 = vld [vmem:[%s416 + $0xa0] sm:$0xff]
        %v441 = vld [vmem:[%s416 + $0xa8] sm:$0xff]
        %v442 = vld [vmem:[%s416 + $0xb0] sm:$0xff]
        %v443 = vld [vmem:[%s416 + $0xb8] sm:$0xff]
        %v444 = vld [vmem:[%s416 + $0xc0] sm:$0xff]
        %v445 = vld [vmem:[%s416 + $0xc8] sm:$0xff]
        %v446 = vld [vmem:[%s416 + $0xd0] sm:$0xff]
        %v447 = vld [vmem:[%s416 + $0xd8] sm:$0xff]
        %v448 = vld [vmem:[%s416 + $0xe0] sm:$0xff]
        %v449 = vld [vmem:[%s416 + $0xe8] sm:$0xff]
        %v450 = vld [vmem:[%s416 + $0xf0] sm:$0xff]
        %v451 = vld [vmem:[%s416 + $0xf8] sm:$0xff]
        %v452 = vld [vmem:[%s416 + $0x100] sm:$0xff]
        %v453 = vld [vmem:[%s416 + $0x108] sm:$0xff]
        %v454 = vld [vmem:[%s416 + $0x110] sm:$0xff]
        %v455 = vld [vmem:[%s416 + $0x118] sm:$0xff]
        %v456 = vld [vmem:[%s416 + $0x120] sm:$0xff]
        %v457 = vld [vmem:[%s416 + $0x128] sm:$0xff]
        %v458 = vld [vmem:[%s416 + $0x130] sm:$0xff]
        %v459 = vld [vmem:[%s416 + $0x138] sm:$0xff]
        %v460 = vld [vmem:[%s416 + $0x140] sm:$0xff]
        %v461 = vld [vmem:[%s416 + $0x148] sm:$0xff]
        %v462 = vld [vmem:[%s416 + $0x150] sm:$0xff]
        %v463 = vld [vmem:[%s416 + $0x158] sm:$0xff]
        %v464 = vld [vmem:[%s416 + $0x160] sm:$0xff]
        %v465 = vld [vmem:[%s416 + $0x168] sm:$0xff]
        %v466 = vld [vmem:[%s416 + $0x170] sm:$0xff]
        %v467 = vld [vmem:[%s416 + $0x178] sm:$0xff]
        %v468 = vld [vmem:[%s416 + $0x180] sm:$0xff]
        %v469 = vld [vmem:[%s416 + $0x188] sm:$0xff]
        %v470 = vld [vmem:[%s416 + $0x190] sm:$0xff]
        %v471 = vld [vmem:[%s416 + $0x198] sm:$0xff]
        %v472 = vld [vmem:[%s416 + $0x1a0] sm:$0xff]
        %v473 = vld [vmem:[%s416 + $0x1a8] sm:$0xff]
        %v474 = vld [vmem:[%s416 + $0x1b0] sm:$0xff]
        %v475 = vld [vmem:[%s416 + $0x1b8] sm:$0xff]
        %v476 = vld [vmem:[%s416 + $0x1c0] sm:$0xff]
        %v477 = vld [vmem:[%s416 + $0x1c8] sm:$0xff]
        %v478 = vld [vmem:[%s416 + $0x1d0] sm:$0xff]
        %v479 = vld [vmem:[%s416 + $0x1d8] sm:$0xff]
        %v480 = vld [vmem:[%s416 + $0x1e0] sm:$0xff]
        %v481 = vld [vmem:[%s416 + $0x1e8] sm:$0xff]
        %v482 = vld [vmem:[%s416 + $0x1f0] sm:$0xff]
        %v483 = vld [vmem:[%s416 + $0x1f8] sm:$0xff]
        %v484 = vld [vmem:[%s416 + $0x200] sm:$0xff]
        %v485 = vld [vmem:[%s416 + $0x208] sm:$0xff]
        %v486 = vld [vmem:[%s416 + $0x210] sm:$0xff]
        %v487 = vld [vmem:[%s416 + $0x218] sm:$0xff]
        %v488 = vld [vmem:[%s416 + $0x220] sm:$0xff]
        %v489 = vld [vmem:[%s416 + $0x228] sm:$0xff]
        %v490 = vld [vmem:[%s416 + $0x230] sm:$0xff]
        %v491 = vld [vmem:[%s416 + $0x238] sm:$0xff]
        %v492 = vld [vmem:[%s416 + $0x240] sm:$0xff]
        %v493 = vld [vmem:[%s416 + $0x248] sm:$0xff]
        %v494 = vld [vmem:[%s416 + $0x250] sm:$0xff]
        %v495 = vld [vmem:[%s416 + $0x258] sm:$0xff]
        %v496 = vld [vmem:[%s416 + $0x260] sm:$0xff]
        %v497 = vld [vmem:[%s416 + $0x268] sm:$0xff]
        %v498 = vld [vmem:[%s416 + $0x270] sm:$0xff]
        %v499 = vld [vmem:[%s416 + $0x278] sm:$0xff]
        %v500 = vld [vmem:[%s416 + $0x280] sm:$0xff]
        %v501 = vld [vmem:[%s416 + $0x288] sm:$0xff]
        %v502 = vld [vmem:[%s416 + $0x290] sm:$0xff]
        %v503 = vld [vmem:[%s416 + $0x298] sm:$0xff]
        %v504 = vld [vmem:[%s416 + $0x2a0] sm:$0xff]
        %v505 = vld [vmem:[%s416 + $0x2a8] sm:$0xff]
        %v506 = vld [vmem:[%s416 + $0x2b0] sm:$0xff]
        %v507 = vld [vmem:[%s416 + $0x2b8] sm:$0xff]
        %v508 = vld [vmem:[%s416 + $0x2c0] sm:$0xff]
        %v509 = vld [vmem:[%s416 + $0x2c8] sm:$0xff]
        %v510 = vld [vmem:[%s416 + $0x2d0] sm:$0xff]
        %v511 = vld [vmem:[%s416 + $0x2d8] sm:$0xff]
        %v512 = vld [vmem:[%s416 + $0x2e0] sm:$0xff]
        %v513 = vld [vmem:[%s416 + $0x2e8] sm:$0xff]
        %v514 = vld [vmem:[%s416 + $0x2f0] sm:$0xff]
        %v515 = vld [vmem:[%s416 + $0x2f8] sm:$0xff]
        %v516 = vld [vmem:[%s416 + $0x300] sm:$0xff]
        %v517 = vld [vmem:[%s416 + $0x308] sm:$0xff]
        %v518 = vld [vmem:[%s416 + $0x310] sm:$0xff]
        %v519 = vld [vmem:[%s416 + $0x318] sm:$0xff]
        %v520 = vld [vmem:[%s416 + $0x320] sm:$0xff]
        %v521 = vld [vmem:[%s416 + $0x328] sm:$0xff]
        %v522 = vld [vmem:[%s416 + $0x330] sm:$0xff]
        %v523 = vld [vmem:[%s416 + $0x338] sm:$0xff]
        %v524 = vld [vmem:[%s416 + $0x340] sm:$0xff]
        %v525 = vld [vmem:[%s416 + $0x348] sm:$0xff]
        %v526 = vld [vmem:[%s416 + $0x350] sm:$0xff]
        %v527 = vld [vmem:[%s416 + $0x358] sm:$0xff]
        %v528 = vld [vmem:[%s416 + $0x360] sm:$0xff]
        %v529 = vld [vmem:[%s416 + $0x368] sm:$0xff]
        %v530 = vld [vmem:[%s416 + $0x370] sm:$0xff]
        %v531 = vld [vmem:[%s416 + $0x378] sm:$0xff]
        %v532 = vld [vmem:[%s416 + $0x380] sm:$0xff]
        %v533 = vld [vmem:[%s416 + $0x388] sm:$0xff]
        %v534 = vld [vmem:[%s416 + $0x390] sm:$0xff]
        %v535 = vld [vmem:[%s416 + $0x398] sm:$0xff]
        %v536 = vld [vmem:[%s416 + $0x3a0] sm:$0xff]
        %v537 = vld [vmem:[%s416 + $0x3a8] sm:$0xff]
        %v538 = vld [vmem:[%s416 + $0x3b0] sm:$0xff]
        %v539 = vld [vmem:[%s416 + $0x3b8] sm:$0xff]
        %v540 = vld [vmem:[%s1] sm:$0xff]
        %v541 = vld [vmem:[%s1 + $0x8] sm:$0xff]
        %v542 = vld [vmem:[%s1 + $0x10] sm:$0xff]
        %v543 = vld [vmem:[%s1 + $0x18] sm:$0x1]
        %v544 = vld [vmem:[%s2] sm:$0x1]
        %v546 = vlaneseq
        %v547 = vshrl.u32 %v546, 7
        %v548 = vsub.s32 0, %v547
        %v549 = vrot.slane %v544, %v548
        %vm551 = vcmask 203776
        %v553 = vsel %vm551, %v420, 0
        %v556 = vsel %vm551, %v421, 0
        %v559 = vsel %vm551, %v422, 0
        %v562 = vsel %vm551, %v423, 0
        %v565 = vsel %vm551, %v424, 0
        %v568 = vsel %vm551, %v425, 0
        %v571 = vsel %vm551, %v426, 0
        %v574 = vsel %vm551, %v427, 0
        %v577 = vsel %vm551, %v428, 0
        %v580 = vsel %vm551, %v429, 0
        %v583 = vsel %vm551, %v430, 0
        %v586 = vsel %vm551, %v431, 0
        %v589 = vsel %vm551, %v432, 0
        %v592 = vsel %vm551, %v433, 0
        %v595 = vsel %vm551, %v434, 0
        %v598 = vsel %vm551, %v435, 0
        %v601 = vsel %vm551, %v436, 0
        %v604 = vsel %vm551, %v437, 0
        %v607 = vsel %vm551, %v438, 0
        %v610 = vsel %vm551, %v439, 0
        %v613 = vsel %vm551, %v440, 0
        %v616 = vsel %vm551, %v441, 0
        %v619 = vsel %vm551, %v442, 0
        %v622 = vsel %vm551, %v443, 0
        %v625 = vsel %vm551, %v444, 0
        %v628 = vsel %vm551, %v445, 0
        %v631 = vsel %vm551, %v446, 0
        %v634 = vsel %vm551, %v447, 0
        %v637 = vsel %vm551, %v448, 0
        %v640 = vsel %vm551, %v449, 0
        %v643 = vsel %vm551, %v450, 0
        %v646 = vsel %vm551, %v451, 0
        %v649 = vsel %vm551, %v452, 0
        %v652 = vsel %vm551, %v453, 0
        %v655 = vsel %vm551, %v454, 0
        %v658 = vsel %vm551, %v455, 0
        %v661 = vsel %vm551, %v456, 0
        %v664 = vsel %vm551, %v457, 0
        %v667 = vsel %vm551, %v458, 0
        %v670 = vsel %vm551, %v459, 0
        %v673 = vsel %vm551, %v460, 0
        %v676 = vsel %vm551, %v461, 0
        %v679 = vsel %vm551, %v462, 0
        %v682 = vsel %vm551, %v463, 0
        %v685 = vsel %vm551, %v464, 0
        %v688 = vsel %vm551, %v465, 0
        %v691 = vsel %vm551, %v466, 0
        %v694 = vsel %vm551, %v467, 0
        %v697 = vsel %vm551, %v468, 0
        %v700 = vsel %vm551, %v469, 0
        %v703 = vsel %vm551, %v470, 0
        %v706 = vsel %vm551, %v471, 0
        %v709 = vsel %vm551, %v472, 0
        %v712 = vsel %vm551, %v473, 0
        %v715 = vsel %vm551, %v474, 0
        %v718 = vsel %vm551, %v475, 0
        %v721 = vsel %vm551, %v476, 0
        %v724 = vsel %vm551, %v477, 0
        %v727 = vsel %vm551, %v478, 0
        %v730 = vsel %vm551, %v479, 0
        %v733 = vsel %vm551, %v480, 0
        %v736 = vsel %vm551, %v481, 0
        %v739 = vsel %vm551, %v482, 0
        %v742 = vsel %vm551, %v483, 0
        %v745 = vsel %vm551, %v484, 0
        %v748 = vsel %vm551, %v485, 0
        %v751 = vsel %vm551, %v486, 0
        %v754 = vsel %vm551, %v487, 0
        %v757 = vsel %vm551, %v488, 0
        %v760 = vsel %vm551, %v489, 0
        %v763 = vsel %vm551, %v490, 0
        %v766 = vsel %vm551, %v491, 0
        %v769 = vsel %vm551, %v492, 0
        %v772 = vsel %vm551, %v493, 0
        %v775 = vsel %vm551, %v494, 0
        %v778 = vsel %vm551, %v495, 0
        %v781 = vsel %vm551, %v496, 0
        %v784 = vsel %vm551, %v497, 0
        %v787 = vsel %vm551, %v498, 0
        %v790 = vsel %vm551, %v499, 0
        %v793 = vsel %vm551, %v500, 0
        %v796 = vsel %vm551, %v501, 0
        %v799 = vsel %vm551, %v502, 0
        %v802 = vsel %vm551, %v503, 0
        %v805 = vsel %vm551, %v504, 0
        %v808 = vsel %vm551, %v505, 0
        %v811 = vsel %vm551, %v506, 0
        %v814 = vsel %vm551, %v507, 0
        %v817 = vsel %vm551, %v508, 0
        %v820 = vsel %vm551, %v509, 0
        %v823 = vsel %vm551, %v510, 0
        %v826 = vsel %vm551, %v511, 0
        %v829 = vsel %vm551, %v512, 0
        %v832 = vsel %vm551, %v513, 0
        %v835 = vsel %vm551, %v514, 0
        %v838 = vsel %vm551, %v515, 0
        %v841 = vsel %vm551, %v516, 0
        %v844 = vsel %vm551, %v517, 0
        %v847 = vsel %vm551, %v518, 0
        %v850 = vsel %vm551, %v519, 0
        %v853 = vsel %vm551, %v520, 0
        %v856 = vsel %vm551, %v521, 0
        %v859 = vsel %vm551, %v522, 0
        %v862 = vsel %vm551, %v523, 0
        %v865 = vsel %vm551, %v524, 0
        %v868 = vsel %vm551, %v525, 0
        %v871 = vsel %vm551, %v526, 0
        %v874 = vsel %vm551, %v527, 0
        %v877 = vsel %vm551, %v528, 0
        %v880 = vsel %vm551, %v529, 0
        %v883 = vsel %vm551, %v530, 0
        %v886 = vsel %vm551, %v531, 0
        %v889 = vsel %vm551, %v532, 0
        %v892 = vsel %vm551, %v533, 0
        %v895 = vsel %vm551, %v534, 0
        %v898 = vsel %vm551, %v535, 0
        %v901 = vsel %vm551, %v536, 0
        %v904 = vsel %vm551, %v537, 0
        %v907 = vsel %vm551, %v538, 0
        %v910 = vsel %vm551, %v539, 0
        %vm912 = vcmask 1040384
        %v914 = vsel %vm912, %v543, 0
        %916 = vmatprep.subr.mxu0 0.0
        %917 = vmatpush1.msra.mxu0 0.0
        %918 = vmatprep.subr.mxu0 0.0
        %919 = vmatpush1.msra.mxu0 0.0
        %920 = vmatprep.subr.mxu0 0.0
        %921 = vmatpush1.msra.mxu0 0.0
        %922 = vmatprep.subr.mxu0 0.0
        %923 = vmatpush1.msra.mxu0 0.0
        %924 = vmatprep.subr.mxu0 0.0
        %925 = vmatpush1.msra.mxu0 0.0
        %926 = vmatprep.subr.mxu0 0.0
        %927 = vmatpush1.msra.mxu0 0.0
        %928 = vmatprep.subr.mxu0 0.0
        %929 = vmatpush1.msra.mxu0 0.0
        %930 = vmatprep.subr.mxu0 0.0
        %931 = vmatpush1.msra.mxu0 0.0
        %932 = vmatprep.subr.mxu0 0.0
        %933 = vmatpush1.msra.mxu0 0.0
        %934 = vmatprep.subr.mxu0 0.0
        %935 = vmatpush1.msra.mxu0 0.0
        %936 = vmatprep.subr.mxu0 0.0
        %937 = vmatpush1.msra.mxu0 0.0
        %938 = vmatprep.subr.mxu0 0.0
        %939 = vmatpush1.msra.mxu0 0.0
        %940 = vmatprep.subr.mxu0 0.0
        %941 = vmatpush1.msra.mxu0 %v914
        %942 = vmatprep.subr.mxu0 0.0
        %943 = vmatpush1.msra.mxu0 %v542
        %944 = vmatprep.subr.mxu0 0.0
        %945 = vmatpush1.msra.mxu0 %v541
        %946 = vmatprep.subr.mxu0 0.0
        %947 = vmatpush1.msra.mxu0 %v540
        %948 = vmatprep.subr.mxu0 0.0
        %949 = vmatpush2.msra.mxu0 0.0
        %950 = vmatprep.subr.mxu0 0.0
        %951 = vmatpush2.msra.mxu0 0.0
        %952 = vmatprep.subr.mxu0 0.0
        %953 = vmatpush2.msra.mxu0 0.0
        %954 = vmatprep.subr.mxu0 0.0
        %955 = vmatpush2.msra.mxu0 0.0
        %956 = vmatprep.subr.mxu0 0.0
        %957 = vmatpush2.msra.mxu0 0.0
        %958 = vmatprep.subr.mxu0 0.0
        %959 = vmatpush2.msra.mxu0 0.0
        %960 = vmatprep.subr.mxu0 0.0
        %961 = vmatpush2.msra.mxu0 0.0
        %962 = vmatprep.subr.mxu0 0.0
        %963 = vmatpush2.msra.mxu0 0.0
        %964 = vmatprep.subr.mxu0 0.0
        %965 = vmatpush2.msra.mxu0 0.0
        %966 = vmatprep.subr.mxu0 0.0
        %967 = vmatpush2.msra.mxu0 0.0
        %968 = vmatprep.subr.mxu0 0.0
        %969 = vmatpush2.msra.mxu0 0.0
        %970 = vmatprep.subr.mxu0 0.0
        %971 = vmatpush2.msra.mxu0 0.0
        %972 = vmatprep.subr.mxu0 0.0
        %973 = vmatpush2.msra.mxu0 0.0
        %974 = vmatprep.subr.mxu0 0.0
        %975 = vmatpush2.msra.mxu0 0.0
        %976 = vmatprep.subr.mxu0 0.0
        %977 = vmatpush2.msra.mxu0 0.0
        %978 = vmatprep.subr.mxu0 0.0
        %979 = vmatpush2.msra.mxu0 0.0
        %980 = vmatprep.mubr.f32.mxu0 0.0
        %981 = vmatmul.mubr.f32.gmra.mxu0 %v553
        %v982 = vpop.f32.mrf.mxu0
        %v983 = vadd.f32 %v549, %v982
        %v984 = vpop.f32.mrf.mxu0
        %985 = vmatprep.mubr.f32.mxu0 0.0
        %986 = vmatmul.mubr.f32.gmra.mxu0 %v556
        %v987 = vpop.f32.mrf.mxu0
        %v988 = vadd.f32 %v549, %v987
        %v989 = vpop.f32.mrf.mxu0
        %990 = vmatprep.mubr.f32.mxu0 0.0
        %991 = vmatmul.mubr.f32.gmra.mxu0 %v559
        %v992 = vpop.f32.mrf.mxu0
        %v993 = vadd.f32 %v549, %v992
        %v994 = vpop.f32.mrf.mxu0
        %995 = vmatprep.mubr.f32.mxu0 0.0
        %996 = vmatmul.mubr.f32.gmra.mxu0 %v562
        %v997 = vpop.f32.mrf.mxu0
        %v998 = vadd.f32 %v549, %v997
        %v999 = vpop.f32.mrf.mxu0
        %1000 = vmatprep.mubr.f32.mxu0 0.0
        %1001 = vmatmul.mubr.f32.gmra.mxu0 %v565
        %v1002 = vpop.f32.mrf.mxu0
        %v1003 = vadd.f32 %v549, %v1002
        %v1004 = vpop.f32.mrf.mxu0
        %1005 = vmatprep.mubr.f32.mxu0 0.0
        %1006 = vmatmul.mubr.f32.gmra.mxu0 %v568
        %v1007 = vpop.f32.mrf.mxu0
        %v1008 = vadd.f32 %v549, %v1007
        %v1009 = vpop.f32.mrf.mxu0
        %1010 = vmatprep.mubr.f32.mxu0 0.0
        %1011 = vmatmul.mubr.f32.gmra.mxu0 %v571
        %v1012 = vpop.f32.mrf.mxu0
        %v1013 = vadd.f32 %v549, %v1012
        %v1014 = vpop.f32.mrf.mxu0
        %1015 = vmatprep.mubr.f32.mxu0 0.0
        %1016 = vmatmul.mubr.f32.gmra.mxu0 %v574
        %v1017 = vpop.f32.mrf.mxu0
        %v1018 = vadd.f32 %v549, %v1017
        %v1019 = vpop.f32.mrf.mxu0
        %1020 = vmatprep.mubr.f32.mxu0 0.0
        %1021 = vmatmul.mubr.f32.gmra.mxu0 %v577
        %v1022 = vpop.f32.mrf.mxu0
        %v1023 = vadd.f32 %v549, %v1022
        %v1024 = vpop.f32.mrf.mxu0
        %1025 = vmatprep.mubr.f32.mxu0 0.0
        %1026 = vmatmul.mubr.f32.gmra.mxu0 %v580
        %v1027 = vpop.f32.mrf.mxu0
        %v1028 = vadd.f32 %v549, %v1027
        %v1029 = vpop.f32.mrf.mxu0
        %1030 = vmatprep.mubr.f32.mxu0 0.0
        %1031 = vmatmul.mubr.f32.gmra.mxu0 %v583
        %v1032 = vpop.f32.mrf.mxu0
        %v1033 = vadd.f32 %v549, %v1032
        %v1034 = vpop.f32.mrf.mxu0
        %1035 = vmatprep.mubr.f32.mxu0 0.0
        %1036 = vmatmul.mubr.f32.gmra.mxu0 %v586
        %v1037 = vpop.f32.mrf.mxu0
        %v1038 = vadd.f32 %v549, %v1037
        %v1039 = vpop.f32.mrf.mxu0
        %1040 = vmatprep.mubr.f32.mxu0 0.0
        %1041 = vmatmul.mubr.f32.gmra.mxu0 %v589
        %v1042 = vpop.f32.mrf.mxu0
        %v1043 = vadd.f32 %v549, %v1042
        %v1044 = vpop.f32.mrf.mxu0
        %1045 = vmatprep.mubr.f32.mxu0 0.0
        %1046 = vmatmul.mubr.f32.gmra.mxu0 %v592
        %v1047 = vpop.f32.mrf.mxu0
        %v1048 = vadd.f32 %v549, %v1047
        %v1049 = vpop.f32.mrf.mxu0
        %1050 = vmatprep.mubr.f32.mxu0 0.0
        %1051 = vmatmul.mubr.f32.gmra.mxu0 %v595
        %v1052 = vpop.f32.mrf.mxu0
        %v1053 = vadd.f32 %v549, %v1052
        %v1054 = vpop.f32.mrf.mxu0
        %1055 = vmatprep.mubr.f32.mxu0 0.0
        %1056 = vmatmul.mubr.f32.gmra.mxu0 %v598
        %v1057 = vpop.f32.mrf.mxu0
        %v1058 = vadd.f32 %v549, %v1057
        %v1059 = vpop.f32.mrf.mxu0
        %1060 = vmatprep.mubr.f32.mxu0 0.0
        %1061 = vmatmul.mubr.f32.gmra.mxu0 %v601
        %v1062 = vpop.f32.mrf.mxu0
        %v1063 = vadd.f32 %v549, %v1062
        %v1064 = vpop.f32.mrf.mxu0
        %1065 = vmatprep.mubr.f32.mxu0 0.0
        %1066 = vmatmul.mubr.f32.gmra.mxu0 %v604
        %v1067 = vpop.f32.mrf.mxu0
        %v1068 = vadd.f32 %v549, %v1067
        %v1069 = vpop.f32.mrf.mxu0
        %1070 = vmatprep.mubr.f32.mxu0 0.0
        %1071 = vmatmul.mubr.f32.gmra.mxu0 %v607
        %v1072 = vpop.f32.mrf.mxu0
        %v1073 = vadd.f32 %v549, %v1072
        %v1074 = vpop.f32.mrf.mxu0
        %1075 = vmatprep.mubr.f32.mxu0 0.0
        %1076 = vmatmul.mubr.f32.gmra.mxu0 %v610
        %v1077 = vpop.f32.mrf.mxu0
        %v1078 = vadd.f32 %v549, %v1077
        %v1079 = vpop.f32.mrf.mxu0
        %1080 = vmatprep.mubr.f32.mxu0 0.0
        %1081 = vmatmul.mubr.f32.gmra.mxu0 %v613
        %v1082 = vpop.f32.mrf.mxu0
        %v1083 = vadd.f32 %v549, %v1082
        %v1084 = vpop.f32.mrf.mxu0
        %1085 = vmatprep.mubr.f32.mxu0 0.0
        %1086 = vmatmul.mubr.f32.gmra.mxu0 %v616
        %v1087 = vpop.f32.mrf.mxu0
        %v1088 = vadd.f32 %v549, %v1087
        %v1089 = vpop.f32.mrf.mxu0
        %1090 = vmatprep.mubr.f32.mxu0 0.0
        %1091 = vmatmul.mubr.f32.gmra.mxu0 %v619
        %v1092 = vpop.f32.mrf.mxu0
        %v1093 = vadd.f32 %v549, %v1092
        %v1094 = vpop.f32.mrf.mxu0
        %1095 = vmatprep.mubr.f32.mxu0 0.0
        %1096 = vmatmul.mubr.f32.gmra.mxu0 %v622
        %v1097 = vpop.f32.mrf.mxu0
        %v1098 = vadd.f32 %v549, %v1097
        %v1099 = vpop.f32.mrf.mxu0
        %1100 = vmatprep.mubr.f32.mxu0 0.0
        %1101 = vmatmul.mubr.f32.gmra.mxu0 %v625
        %v1102 = vpop.f32.mrf.mxu0
        %v1103 = vadd.f32 %v549, %v1102
        %v1104 = vpop.f32.mrf.mxu0
        %1105 = vmatprep.mubr.f32.mxu0 0.0
        %1106 = vmatmul.mubr.f32.gmra.mxu0 %v628
        %v1107 = vpop.f32.mrf.mxu0
        %v1108 = vadd.f32 %v549, %v1107
        %v1109 = vpop.f32.mrf.mxu0
        %1110 = vmatprep.mubr.f32.mxu0 0.0
        %1111 = vmatmul.mubr.f32.gmra.mxu0 %v631
        %v1112 = vpop.f32.mrf.mxu0
        %v1113 = vadd.f32 %v549, %v1112
        %v1114 = vpop.f32.mrf.mxu0
        %1115 = vmatprep.mubr.f32.mxu0 0.0
        %1116 = vmatmul.mubr.f32.gmra.mxu0 %v634
        %v1117 = vpop.f32.mrf.mxu0
        %v1118 = vadd.f32 %v549, %v1117
        %v1119 = vpop.f32.mrf.mxu0
        %1120 = vmatprep.mubr.f32.mxu0 0.0
        %1121 = vmatmul.mubr.f32.gmra.mxu0 %v637
        %v1122 = vpop.f32.mrf.mxu0
        %v1123 = vadd.f32 %v549, %v1122
        %v1124 = vpop.f32.mrf.mxu0
        %1125 = vmatprep.mubr.f32.mxu0 0.0
        %1126 = vmatmul.mubr.f32.gmra.mxu0 %v640
        %v1127 = vpop.f32.mrf.mxu0
        %v1128 = vadd.f32 %v549, %v1127
        %v1129 = vpop.f32.mrf.mxu0
        %1130 = vmatprep.mubr.f32.mxu0 0.0
        %1131 = vmatmul.mubr.f32.gmra.mxu0 %v643
        %v1132 = vpop.f32.mrf.mxu0
        %v1133 = vadd.f32 %v549, %v1132
        %v1134 = vpop.f32.mrf.mxu0
        %1135 = vmatprep.mubr.f32.mxu0 0.0
        %1136 = vmatmul.mubr.f32.gmra.mxu0 %v646
        %v1137 = vpop.f32.mrf.mxu0
        %v1138 = vadd.f32 %v549, %v1137
        %v1139 = vpop.f32.mrf.mxu0
        %1140 = vmatprep.mubr.f32.mxu0 0.0
        %1141 = vmatmul.mubr.f32.gmra.mxu0 %v649
        %v1142 = vpop.f32.mrf.mxu0
        %v1143 = vadd.f32 %v549, %v1142
        %v1144 = vpop.f32.mrf.mxu0
        %1145 = vmatprep.mubr.f32.mxu0 0.0
        %1146 = vmatmul.mubr.f32.gmra.mxu0 %v652
        %v1147 = vpop.f32.mrf.mxu0
        %v1148 = vadd.f32 %v549, %v1147
        %v1149 = vpop.f32.mrf.mxu0
        %1150 = vmatprep.mubr.f32.mxu0 0.0
        %1151 = vmatmul.mubr.f32.gmra.mxu0 %v655
        %v1152 = vpop.f32.mrf.mxu0
        %v1153 = vadd.f32 %v549, %v1152
        %v1154 = vpop.f32.mrf.mxu0
        %1155 = vmatprep.mubr.f32.mxu0 0.0
        %1156 = vmatmul.mubr.f32.gmra.mxu0 %v658
        %v1157 = vpop.f32.mrf.mxu0
        %v1158 = vadd.f32 %v549, %v1157
        %v1159 = vpop.f32.mrf.mxu0
        %1160 = vmatprep.mubr.f32.mxu0 0.0
        %1161 = vmatmul.mubr.f32.gmra.mxu0 %v661
        %v1162 = vpop.f32.mrf.mxu0
        %v1163 = vadd.f32 %v549, %v1162
        %v1164 = vpop.f32.mrf.mxu0
        %1165 = vmatprep.mubr.f32.mxu0 0.0
        %1166 = vmatmul.mubr.f32.gmra.mxu0 %v664
        %v1167 = vpop.f32.mrf.mxu0
        %v1168 = vadd.f32 %v549, %v1167
        %v1169 = vpop.f32.mrf.mxu0
        %1170 = vmatprep.mubr.f32.mxu0 0.0
        %1171 = vmatmul.mubr.f32.gmra.mxu0 %v667
        %v1172 = vpop.f32.mrf.mxu0
        %v1173 = vadd.f32 %v549, %v1172
        %v1174 = vpop.f32.mrf.mxu0
        %1175 = vmatprep.mubr.f32.mxu0 0.0
        %1176 = vmatmul.mubr.f32.gmra.mxu0 %v670
        %v1177 = vpop.f32.mrf.mxu0
        %v1178 = vadd.f32 %v549, %v1177
        %v1179 = vpop.f32.mrf.mxu0
        %1180 = vmatprep.mubr.f32.mxu0 0.0
        %1181 = vmatmul.mubr.f32.gmra.mxu0 %v673
        %v1182 = vpop.f32.mrf.mxu0
        %v1183 = vadd.f32 %v549, %v1182
        %v1184 = vpop.f32.mrf.mxu0
        %1185 = vmatprep.mubr.f32.mxu0 0.0
        %1186 = vmatmul.mubr.f32.gmra.mxu0 %v676
        %v1187 = vpop.f32.mrf.mxu0
        %v1188 = vadd.f32 %v549, %v1187
        %v1189 = vpop.f32.mrf.mxu0
        %1190 = vmatprep.mubr.f32.mxu0 0.0
        %1191 = vmatmul.mubr.f32.gmra.mxu0 %v679
        %v1192 = vpop.f32.mrf.mxu0
        %v1193 = vadd.f32 %v549, %v1192
        %v1194 = vpop.f32.mrf.mxu0
        %1195 = vmatprep.mubr.f32.mxu0 0.0
        %1196 = vmatmul.mubr.f32.gmra.mxu0 %v682
        %v1197 = vpop.f32.mrf.mxu0
        %v1198 = vadd.f32 %v549, %v1197
        %v1199 = vpop.f32.mrf.mxu0
        %1200 = vmatprep.mubr.f32.mxu0 0.0
        %1201 = vmatmul.mubr.f32.gmra.mxu0 %v685
        %v1202 = vpop.f32.mrf.mxu0
        %v1203 = vadd.f32 %v549, %v1202
        %v1204 = vpop.f32.mrf.mxu0
        %1205 = vmatprep.mubr.f32.mxu0 0.0
        %1206 = vmatmul.mubr.f32.gmra.mxu0 %v688
        %v1207 = vpop.f32.mrf.mxu0
        %v1208 = vadd.f32 %v549, %v1207
        %v1209 = vpop.f32.mrf.mxu0
        %1210 = vmatprep.mubr.f32.mxu0 0.0
        %1211 = vmatmul.mubr.f32.gmra.mxu0 %v691
        %v1212 = vpop.f32.mrf.mxu0
        %v1213 = vadd.f32 %v549, %v1212
        %v1214 = vpop.f32.mrf.mxu0
        %1215 = vmatprep.mubr.f32.mxu0 0.0
        %1216 = vmatmul.mubr.f32.gmra.mxu0 %v694
        %v1217 = vpop.f32.mrf.mxu0
        %v1218 = vadd.f32 %v549, %v1217
        %v1219 = vpop.f32.mrf.mxu0
        %1220 = vmatprep.mubr.f32.mxu0 0.0
        %1221 = vmatmul.mubr.f32.gmra.mxu0 %v697
        %v1222 = vpop.f32.mrf.mxu0
        %v1223 = vadd.f32 %v549, %v1222
        %v1224 = vpop.f32.mrf.mxu0
        %1225 = vmatprep.mubr.f32.mxu0 0.0
        %1226 = vmatmul.mubr.f32.gmra.mxu0 %v700
        %v1227 = vpop.f32.mrf.mxu0
        %v1228 = vadd.f32 %v549, %v1227
        %v1229 = vpop.f32.mrf.mxu0
        %1230 = vmatprep.mubr.f32.mxu0 0.0
        %1231 = vmatmul.mubr.f32.gmra.mxu0 %v703
        %v1232 = vpop.f32.mrf.mxu0
        %v1233 = vadd.f32 %v549, %v1232
        %v1234 = vpop.f32.mrf.mxu0
        %1235 = vmatprep.mubr.f32.mxu0 0.0
        %1236 = vmatmul.mubr.f32.gmra.mxu0 %v706
        %v1237 = vpop.f32.mrf.mxu0
        %v1238 = vadd.f32 %v549, %v1237
        %v1239 = vpop.f32.mrf.mxu0
        %1240 = vmatprep.mubr.f32.mxu0 0.0
        %1241 = vmatmul.mubr.f32.gmra.mxu0 %v709
        %v1242 = vpop.f32.mrf.mxu0
        %v1243 = vadd.f32 %v549, %v1242
        %v1244 = vpop.f32.mrf.mxu0
        %1245 = vmatprep.mubr.f32.mxu0 0.0
        %1246 = vmatmul.mubr.f32.gmra.mxu0 %v712
        %v1247 = vpop.f32.mrf.mxu0
        %v1248 = vadd.f32 %v549, %v1247
        %v1249 = vpop.f32.mrf.mxu0
        %1250 = vmatprep.mubr.f32.mxu0 0.0
        %1251 = vmatmul.mubr.f32.gmra.mxu0 %v715
        %v1252 = vpop.f32.mrf.mxu0
        %v1253 = vadd.f32 %v549, %v1252
        %v1254 = vpop.f32.mrf.mxu0
        %1255 = vmatprep.mubr.f32.mxu0 0.0
        %1256 = vmatmul.mubr.f32.gmra.mxu0 %v718
        %v1257 = vpop.f32.mrf.mxu0
        %v1258 = vadd.f32 %v549, %v1257
        %v1259 = vpop.f32.mrf.mxu0
        %1260 = vmatprep.mubr.f32.mxu0 0.0
        %1261 = vmatmul.mubr.f32.gmra.mxu0 %v721
        %v1262 = vpop.f32.mrf.mxu0
        %v1263 = vadd.f32 %v549, %v1262
        %v1264 = vpop.f32.mrf.mxu0
        %1265 = vmatprep.mubr.f32.mxu0 0.0
        %1266 = vmatmul.mubr.f32.gmra.mxu0 %v724
        %v1267 = vpop.f32.mrf.mxu0
        %v1268 = vadd.f32 %v549, %v1267
        %v1269 = vpop.f32.mrf.mxu0
        %1270 = vmatprep.mubr.f32.mxu0 0.0
        %1271 = vmatmul.mubr.f32.gmra.mxu0 %v727
        %v1272 = vpop.f32.mrf.mxu0
        %v1273 = vadd.f32 %v549, %v1272
        %v1274 = vpop.f32.mrf.mxu0
        %1275 = vmatprep.mubr.f32.mxu0 0.0
        %1276 = vmatmul.mubr.f32.gmra.mxu0 %v730
        %v1277 = vpop.f32.mrf.mxu0
        %v1278 = vadd.f32 %v549, %v1277
        %v1279 = vpop.f32.mrf.mxu0
        %1280 = vmatprep.mubr.f32.mxu0 0.0
        %1281 = vmatmul.mubr.f32.gmra.mxu0 %v733
        %v1282 = vpop.f32.mrf.mxu0
        %v1283 = vadd.f32 %v549, %v1282
        %v1284 = vpop.f32.mrf.mxu0
        %1285 = vmatprep.mubr.f32.mxu0 0.0
        %1286 = vmatmul.mubr.f32.gmra.mxu0 %v736
        %v1287 = vpop.f32.mrf.mxu0
        %v1288 = vadd.f32 %v549, %v1287
        %v1289 = vpop.f32.mrf.mxu0
        %1290 = vmatprep.mubr.f32.mxu0 0.0
        %1291 = vmatmul.mubr.f32.gmra.mxu0 %v739
        %v1292 = vpop.f32.mrf.mxu0
        %v1293 = vadd.f32 %v549, %v1292
        %v1294 = vpop.f32.mrf.mxu0
        %1295 = vmatprep.mubr.f32.mxu0 0.0
        %1296 = vmatmul.mubr.f32.gmra.mxu0 %v742
        %v1297 = vpop.f32.mrf.mxu0
        %v1298 = vadd.f32 %v549, %v1297
        %v1299 = vpop.f32.mrf.mxu0
        %1300 = vmatprep.mubr.f32.mxu0 0.0
        %1301 = vmatmul.mubr.f32.gmra.mxu0 %v745
        %v1302 = vpop.f32.mrf.mxu0
        %v1303 = vadd.f32 %v549, %v1302
        %v1304 = vpop.f32.mrf.mxu0
        %1305 = vmatprep.mubr.f32.mxu0 0.0
        %1306 = vmatmul.mubr.f32.gmra.mxu0 %v748
        %v1307 = vpop.f32.mrf.mxu0
        %v1308 = vadd.f32 %v549, %v1307
        %v1309 = vpop.f32.mrf.mxu0
        %1310 = vmatprep.mubr.f32.mxu0 0.0
        %1311 = vmatmul.mubr.f32.gmra.mxu0 %v751
        %v1312 = vpop.f32.mrf.mxu0
        %v1313 = vadd.f32 %v549, %v1312
        %v1314 = vpop.f32.mrf.mxu0
        %1315 = vmatprep.mubr.f32.mxu0 0.0
        %1316 = vmatmul.mubr.f32.gmra.mxu0 %v754
        %v1317 = vpop.f32.mrf.mxu0
        %v1318 = vadd.f32 %v549, %v1317
        %v1319 = vpop.f32.mrf.mxu0
        %1320 = vmatprep.mubr.f32.mxu0 0.0
        %1321 = vmatmul.mubr.f32.gmra.mxu0 %v757
        %v1322 = vpop.f32.mrf.mxu0
        %v1323 = vadd.f32 %v549, %v1322
        %v1324 = vpop.f32.mrf.mxu0
        %1325 = vmatprep.mubr.f32.mxu0 0.0
        %1326 = vmatmul.mubr.f32.gmra.mxu0 %v760
        %v1327 = vpop.f32.mrf.mxu0
        %v1328 = vadd.f32 %v549, %v1327
        %v1329 = vpop.f32.mrf.mxu0
        %1330 = vmatprep.mubr.f32.mxu0 0.0
        %1331 = vmatmul.mubr.f32.gmra.mxu0 %v763
        %v1332 = vpop.f32.mrf.mxu0
        %v1333 = vadd.f32 %v549, %v1332
        %v1334 = vpop.f32.mrf.mxu0
        %1335 = vmatprep.mubr.f32.mxu0 0.0
        %1336 = vmatmul.mubr.f32.gmra.mxu0 %v766
        %v1337 = vpop.f32.mrf.mxu0
        %v1338 = vadd.f32 %v549, %v1337
        %v1339 = vpop.f32.mrf.mxu0
        %1340 = vmatprep.mubr.f32.mxu0 0.0
        %1341 = vmatmul.mubr.f32.gmra.mxu0 %v769
        %v1342 = vpop.f32.mrf.mxu0
        %v1343 = vadd.f32 %v549, %v1342
        %v1344 = vpop.f32.mrf.mxu0
        %1345 = vmatprep.mubr.f32.mxu0 0.0
        %1346 = vmatmul.mubr.f32.gmra.mxu0 %v772
        %v1347 = vpop.f32.mrf.mxu0
        %v1348 = vadd.f32 %v549, %v1347
        %v1349 = vpop.f32.mrf.mxu0
        %1350 = vmatprep.mubr.f32.mxu0 0.0
        %1351 = vmatmul.mubr.f32.gmra.mxu0 %v775
        %v1352 = vpop.f32.mrf.mxu0
        %v1353 = vadd.f32 %v549, %v1352
        %v1354 = vpop.f32.mrf.mxu0
        %1355 = vmatprep.mubr.f32.mxu0 0.0
        %1356 = vmatmul.mubr.f32.gmra.mxu0 %v778
        %v1357 = vpop.f32.mrf.mxu0
        %v1358 = vadd.f32 %v549, %v1357
        %v1359 = vpop.f32.mrf.mxu0
        %1360 = vmatprep.mubr.f32.mxu0 0.0
        %1361 = vmatmul.mubr.f32.gmra.mxu0 %v781
        %v1362 = vpop.f32.mrf.mxu0
        %v1363 = vadd.f32 %v549, %v1362
        %v1364 = vpop.f32.mrf.mxu0
        %1365 = vmatprep.mubr.f32.mxu0 0.0
        %1366 = vmatmul.mubr.f32.gmra.mxu0 %v784
        %v1367 = vpop.f32.mrf.mxu0
        %v1368 = vadd.f32 %v549, %v1367
        %v1369 = vpop.f32.mrf.mxu0
        %1370 = vmatprep.mubr.f32.mxu0 0.0
        %1371 = vmatmul.mubr.f32.gmra.mxu0 %v787
        %v1372 = vpop.f32.mrf.mxu0
        %v1373 = vadd.f32 %v549, %v1372
        %v1374 = vpop.f32.mrf.mxu0
        %1375 = vmatprep.mubr.f32.mxu0 0.0
        %1376 = vmatmul.mubr.f32.gmra.mxu0 %v790
        %v1377 = vpop.f32.mrf.mxu0
        %v1378 = vadd.f32 %v549, %v1377
        %v1379 = vpop.f32.mrf.mxu0
        %1380 = vmatprep.mubr.f32.mxu0 0.0
        %1381 = vmatmul.mubr.f32.gmra.mxu0 %v793
        %v1382 = vpop.f32.mrf.mxu0
        %v1383 = vadd.f32 %v549, %v1382
        %v1384 = vpop.f32.mrf.mxu0
        %1385 = vmatprep.mubr.f32.mxu0 0.0
        %1386 = vmatmul.mubr.f32.gmra.mxu0 %v796
        %v1387 = vpop.f32.mrf.mxu0
        %v1388 = vadd.f32 %v549, %v1387
        %v1389 = vpop.f32.mrf.mxu0
        %1390 = vmatprep.mubr.f32.mxu0 0.0
        %1391 = vmatmul.mubr.f32.gmra.mxu0 %v799
        %v1392 = vpop.f32.mrf.mxu0
        %v1393 = vadd.f32 %v549, %v1392
        %v1394 = vpop.f32.mrf.mxu0
        %1395 = vmatprep.mubr.f32.mxu0 0.0
        %1396 = vmatmul.mubr.f32.gmra.mxu0 %v802
        %v1397 = vpop.f32.mrf.mxu0
        %v1398 = vadd.f32 %v549, %v1397
        %v1399 = vpop.f32.mrf.mxu0
        %1400 = vmatprep.mubr.f32.mxu0 0.0
        %1401 = vmatmul.mubr.f32.gmra.mxu0 %v805
        %v1402 = vpop.f32.mrf.mxu0
        %v1403 = vadd.f32 %v549, %v1402
        %v1404 = vpop.f32.mrf.mxu0
        %1405 = vmatprep.mubr.f32.mxu0 0.0
        %1406 = vmatmul.mubr.f32.gmra.mxu0 %v808
        %v1407 = vpop.f32.mrf.mxu0
        %v1408 = vadd.f32 %v549, %v1407
        %v1409 = vpop.f32.mrf.mxu0
        %1410 = vmatprep.mubr.f32.mxu0 0.0
        %1411 = vmatmul.mubr.f32.gmra.mxu0 %v811
        %v1412 = vpop.f32.mrf.mxu0
        %v1413 = vadd.f32 %v549, %v1412
        %v1414 = vpop.f32.mrf.mxu0
        %1415 = vmatprep.mubr.f32.mxu0 0.0
        %1416 = vmatmul.mubr.f32.gmra.mxu0 %v814
        %v1417 = vpop.f32.mrf.mxu0
        %v1418 = vadd.f32 %v549, %v1417
        %v1419 = vpop.f32.mrf.mxu0
        %1420 = vmatprep.mubr.f32.mxu0 0.0
        %1421 = vmatmul.mubr.f32.gmra.mxu0 %v817
        %v1422 = vpop.f32.mrf.mxu0
        %v1423 = vadd.f32 %v549, %v1422
        %v1424 = vpop.f32.mrf.mxu0
        %1425 = vmatprep.mubr.f32.mxu0 0.0
        %1426 = vmatmul.mubr.f32.gmra.mxu0 %v820
        %v1427 = vpop.f32.mrf.mxu0
        %v1428 = vadd.f32 %v549, %v1427
        %v1429 = vpop.f32.mrf.mxu0
        %1430 = vmatprep.mubr.f32.mxu0 0.0
        %1431 = vmatmul.mubr.f32.gmra.mxu0 %v823
        %v1432 = vpop.f32.mrf.mxu0
        %v1433 = vadd.f32 %v549, %v1432
        %v1434 = vpop.f32.mrf.mxu0
        %1435 = vmatprep.mubr.f32.mxu0 0.0
        %1436 = vmatmul.mubr.f32.gmra.mxu0 %v826
        %v1437 = vpop.f32.mrf.mxu0
        %v1438 = vadd.f32 %v549, %v1437
        %v1439 = vpop.f32.mrf.mxu0
        %1440 = vmatprep.mubr.f32.mxu0 0.0
        %1441 = vmatmul.mubr.f32.gmra.mxu0 %v829
        %v1442 = vpop.f32.mrf.mxu0
        %v1443 = vadd.f32 %v549, %v1442
        %v1444 = vpop.f32.mrf.mxu0
        %1445 = vmatprep.mubr.f32.mxu0 0.0
        %1446 = vmatmul.mubr.f32.gmra.mxu0 %v832
        %v1447 = vpop.f32.mrf.mxu0
        %v1448 = vadd.f32 %v549, %v1447
        %v1449 = vpop.f32.mrf.mxu0
        %1450 = vmatprep.mubr.f32.mxu0 0.0
        %1451 = vmatmul.mubr.f32.gmra.mxu0 %v835
        %v1452 = vpop.f32.mrf.mxu0
        %v1453 = vadd.f32 %v549, %v1452
        %v1454 = vpop.f32.mrf.mxu0
        %1455 = vmatprep.mubr.f32.mxu0 0.0
        %1456 = vmatmul.mubr.f32.gmra.mxu0 %v838
        %v1457 = vpop.f32.mrf.mxu0
        %v1458 = vadd.f32 %v549, %v1457
        %v1459 = vpop.f32.mrf.mxu0
        %1460 = vmatprep.mubr.f32.mxu0 0.0
        %1461 = vmatmul.mubr.f32.gmra.mxu0 %v841
        %v1462 = vpop.f32.mrf.mxu0
        %v1463 = vadd.f32 %v549, %v1462
        %v1464 = vpop.f32.mrf.mxu0
        %1465 = vmatprep.mubr.f32.mxu0 0.0
        %1466 = vmatmul.mubr.f32.gmra.mxu0 %v844
        %v1467 = vpop.f32.mrf.mxu0
        %v1468 = vadd.f32 %v549, %v1467
        %v1469 = vpop.f32.mrf.mxu0
        %1470 = vmatprep.mubr.f32.mxu0 0.0
        %1471 = vmatmul.mubr.f32.gmra.mxu0 %v847
        %v1472 = vpop.f32.mrf.mxu0
        %v1473 = vadd.f32 %v549, %v1472
        %v1474 = vpop.f32.mrf.mxu0
        %1475 = vmatprep.mubr.f32.mxu0 0.0
        %1476 = vmatmul.mubr.f32.gmra.mxu0 %v850
        %v1477 = vpop.f32.mrf.mxu0
        %v1478 = vadd.f32 %v549, %v1477
        %v1479 = vpop.f32.mrf.mxu0
        %1480 = vmatprep.mubr.f32.mxu0 0.0
        %1481 = vmatmul.mubr.f32.gmra.mxu0 %v853
        %v1482 = vpop.f32.mrf.mxu0
        %v1483 = vadd.f32 %v549, %v1482
        %v1484 = vpop.f32.mrf.mxu0
        %1485 = vmatprep.mubr.f32.mxu0 0.0
        %1486 = vmatmul.mubr.f32.gmra.mxu0 %v856
        %v1487 = vpop.f32.mrf.mxu0
        %v1488 = vadd.f32 %v549, %v1487
        %v1489 = vpop.f32.mrf.mxu0
        %1490 = vmatprep.mubr.f32.mxu0 0.0
        %1491 = vmatmul.mubr.f32.gmra.mxu0 %v859
        %v1492 = vpop.f32.mrf.mxu0
        %v1493 = vadd.f32 %v549, %v1492
        %v1494 = vpop.f32.mrf.mxu0
        %1495 = vmatprep.mubr.f32.mxu0 0.0
        %1496 = vmatmul.mubr.f32.gmra.mxu0 %v862
        %v1497 = vpop.f32.mrf.mxu0
        %v1498 = vadd.f32 %v549, %v1497
        %v1499 = vpop.f32.mrf.mxu0
        %1500 = vmatprep.mubr.f32.mxu0 0.0
        %1501 = vmatmul.mubr.f32.gmra.mxu0 %v865
        %v1502 = vpop.f32.mrf.mxu0
        %v1503 = vadd.f32 %v549, %v1502
        %v1504 = vpop.f32.mrf.mxu0
        %1505 = vmatprep.mubr.f32.mxu0 0.0
        %1506 = vmatmul.mubr.f32.gmra.mxu0 %v868
        %v1507 = vpop.f32.mrf.mxu0
        %v1508 = vadd.f32 %v549, %v1507
        %v1509 = vpop.f32.mrf.mxu0
        %1510 = vmatprep.mubr.f32.mxu0 0.0
        %1511 = vmatmul.mubr.f32.gmra.mxu0 %v871
        %v1512 = vpop.f32.mrf.mxu0
        %v1513 = vadd.f32 %v549, %v1512
        %v1514 = vpop.f32.mrf.mxu0
        %1515 = vmatprep.mubr.f32.mxu0 0.0
        %1516 = vmatmul.mubr.f32.gmra.mxu0 %v874
        %v1517 = vpop.f32.mrf.mxu0
        %v1518 = vadd.f32 %v549, %v1517
        %v1519 = vpop.f32.mrf.mxu0
        %1520 = vmatprep.mubr.f32.mxu0 0.0
        %1521 = vmatmul.mubr.f32.gmra.mxu0 %v877
        %v1522 = vpop.f32.mrf.mxu0
        %v1523 = vadd.f32 %v549, %v1522
        %v1524 = vpop.f32.mrf.mxu0
        %1525 = vmatprep.mubr.f32.mxu0 0.0
        %1526 = vmatmul.mubr.f32.gmra.mxu0 %v880
        %v1527 = vpop.f32.mrf.mxu0
        %v1528 = vadd.f32 %v549, %v1527
        %v1529 = vpop.f32.mrf.mxu0
        %1530 = vmatprep.mubr.f32.mxu0 0.0
        %1531 = vmatmul.mubr.f32.gmra.mxu0 %v883
        %v1532 = vpop.f32.mrf.mxu0
        %v1533 = vadd.f32 %v549, %v1532
        %v1534 = vpop.f32.mrf.mxu0
        %1535 = vmatprep.mubr.f32.mxu0 0.0
        %1536 = vmatmul.mubr.f32.gmra.mxu0 %v886
        %v1537 = vpop.f32.mrf.mxu0
        %v1538 = vadd.f32 %v549, %v1537
        %v1539 = vpop.f32.mrf.mxu0
        %1540 = vmatprep.mubr.f32.mxu0 0.0
        %1541 = vmatmul.mubr.f32.gmra.mxu0 %v889
        %v1542 = vpop.f32.mrf.mxu0
        %v1543 = vadd.f32 %v549, %v1542
        %v1544 = vpop.f32.mrf.mxu0
        %1545 = vmatprep.mubr.f32.mxu0 0.0
        %1546 = vmatmul.mubr.f32.gmra.mxu0 %v892
        %v1547 = vpop.f32.mrf.mxu0
        %v1548 = vadd.f32 %v549, %v1547
        %v1549 = vpop.f32.mrf.mxu0
        %1550 = vmatprep.mubr.f32.mxu0 0.0
        %1551 = vmatmul.mubr.f32.gmra.mxu0 %v895
        %v1552 = vpop.f32.mrf.mxu0
        %v1553 = vadd.f32 %v549, %v1552
        %v1554 = vpop.f32.mrf.mxu0
        %1555 = vmatprep.mubr.f32.mxu0 0.0
        %1556 = vmatmul.mubr.f32.gmra.mxu0 %v898
        %v1557 = vpop.f32.mrf.mxu0
        %v1558 = vadd.f32 %v549, %v1557
        %v1559 = vpop.f32.mrf.mxu0
        %1560 = vmatprep.mubr.f32.mxu0 0.0
        %1561 = vmatmul.mubr.f32.gmra.mxu0 %v901
        %v1562 = vpop.f32.mrf.mxu0
        %v1563 = vadd.f32 %v549, %v1562
        %v1564 = vpop.f32.mrf.mxu0
        %1565 = vmatprep.mubr.f32.mxu0 0.0
        %1566 = vmatmul.mubr.f32.gmra.mxu0 %v904
        %v1567 = vpop.f32.mrf.mxu0
        %v1568 = vadd.f32 %v549, %v1567
        %v1569 = vpop.f32.mrf.mxu0
        %1570 = vmatprep.mubr.f32.mxu0 0.0
        %1571 = vmatmul.mubr.f32.gmra.mxu0 %v907
        %v1572 = vpop.f32.mrf.mxu0
        %v1573 = vadd.f32 %v549, %v1572
        %v1574 = vpop.f32.mrf.mxu0
        %1575 = vmatprep.mubr.f32.mxu0 0.0
        %1576 = vmatmul.mubr.f32.gmra.mxu0 %v910
        %v1577 = vpop.f32.mrf.mxu0
        %v1578 = vadd.f32 %v549, %v1577
        %v1579 = vpop.f32.mrf.mxu0
        %1580 = vdwg.mxu0
        %v1581 = vmax.f32 %v983, 0.0
        %v1582 = vmax.f32 %v988, 0.0
        %v1583 = vmax.f32 %v993, 0.0
        %v1584 = vmax.f32 %v998, 0.0
        %v1585 = vmax.f32 %v1003, 0.0
        %v1586 = vmax.f32 %v1008, 0.0
        %v1587 = vmax.f32 %v1013, 0.0
        %v1588 = vmax.f32 %v1018, 0.0
        %v1589 = vmax.f32 %v1023, 0.0
        %v1590 = vmax.f32 %v1028, 0.0
        %v1591 = vmax.f32 %v1033, 0.0
        %v1592 = vmax.f32 %v1038, 0.0
        %v1593 = vmax.f32 %v1043, 0.0
        %v1594 = vmax.f32 %v1048, 0.0
        %v1595 = vmax.f32 %v1053, 0.0
        %v1596 = vmax.f32 %v1058, 0.0
        %v1597 = vmax.f32 %v1063, 0.0
        %v1598 = vmax.f32 %v1068, 0.0
        %v1599 = vmax.f32 %v1073, 0.0
        %v1600 = vmax.f32 %v1078, 0.0
        %v1601 = vmax.f32 %v1083, 0.0
        %v1602 = vmax.f32 %v1088, 0.0
        %v1603 = vmax.f32 %v1093, 0.0
        %v1604 = vmax.f32 %v1098, 0.0
        %v1605 = vmax.f32 %v1103, 0.0
        %v1606 = vmax.f32 %v1108, 0.0
        %v1607 = vmax.f32 %v1113, 0.0
        %v1608 = vmax.f32 %v1118, 0.0
        %v1609 = vmax.f32 %v1123, 0.0
        %v1610 = vmax.f32 %v1128, 0.0
        %v1611 = vmax.f32 %v1133, 0.0
        %v1612 = vmax.f32 %v1138, 0.0
        %v1613 = vmax.f32 %v1143, 0.0
        %v1614 = vmax.f32 %v1148, 0.0
        %v1615 = vmax.f32 %v1153, 0.0
        %v1616 = vmax.f32 %v1158, 0.0
        %v1617 = vmax.f32 %v1163, 0.0
        %v1618 = vmax.f32 %v1168, 0.0
        %v1619 = vmax.f32 %v1173, 0.0
        %v1620 = vmax.f32 %v1178, 0.0
        %v1621 = vmax.f32 %v1183, 0.0
        %v1622 = vmax.f32 %v1188, 0.0
        %v1623 = vmax.f32 %v1193, 0.0
        %v1624 = vmax.f32 %v1198, 0.0
        %v1625 = vmax.f32 %v1203, 0.0
        %v1626 = vmax.f32 %v1208, 0.0
        %v1627 = vmax.f32 %v1213, 0.0
        %v1628 = vmax.f32 %v1218, 0.0
        %v1629 = vmax.f32 %v1223, 0.0
        %v1630 = vmax.f32 %v1228, 0.0
        %v1631 = vmax.f32 %v1233, 0.0
        %v1632 = vmax.f32 %v1238, 0.0
        %v1633 = vmax.f32 %v1243, 0.0
        %v1634 = vmax.f32 %v1248, 0.0
        %v1635 = vmax.f32 %v1253, 0.0
        %v1636 = vmax.f32 %v1258, 0.0
        %v1637 = vmax.f32 %v1263, 0.0
        %v1638 = vmax.f32 %v1268, 0.0
        %v1639 = vmax.f32 %v1273, 0.0
        %v1640 = vmax.f32 %v1278, 0.0
        %v1641 = vmax.f32 %v1283, 0.0
        %v1642 = vmax.f32 %v1288, 0.0
        %v1643 = vmax.f32 %v1293, 0.0
        %v1644 = vmax.f32 %v1298, 0.0
        %v1645 = vmax.f32 %v1303, 0.0
        %v1646 = vmax.f32 %v1308, 0.0
        %v1647 = vmax.f32 %v1313, 0.0
        %v1648 = vmax.f32 %v1318, 0.0
        %v1649 = vmax.f32 %v1323, 0.0
        %v1650 = vmax.f32 %v1328, 0.0
        %v1651 = vmax.f32 %v1333, 0.0
        %v1652 = vmax.f32 %v1338, 0.0
        %v1653 = vmax.f32 %v1343, 0.0
        %v1654 = vmax.f32 %v1348, 0.0
        %v1655 = vmax.f32 %v1353, 0.0
        %v1656 = vmax.f32 %v1358, 0.0
        %v1657 = vmax.f32 %v1363, 0.0
        %v1658 = vmax.f32 %v1368, 0.0
        %v1659 = vmax.f32 %v1373, 0.0
        %v1660 = vmax.f32 %v1378, 0.0
        %v1661 = vmax.f32 %v1383, 0.0
        %v1662 = vmax.f32 %v1388, 0.0
        %v1663 = vmax.f32 %v1393, 0.0
        %v1664 = vmax.f32 %v1398, 0.0
        %v1665 = vmax.f32 %v1403, 0.0
        %v1666 = vmax.f32 %v1408, 0.0
        %v1667 = vmax.f32 %v1413, 0.0
        %v1668 = vmax.f32 %v1418, 0.0
        %v1669 = vmax.f32 %v1423, 0.0
        %v1670 = vmax.f32 %v1428, 0.0
        %v1671 = vmax.f32 %v1433, 0.0
        %v1672 = vmax.f32 %v1438, 0.0
        %v1673 = vmax.f32 %v1443, 0.0
        %v1674 = vmax.f32 %v1448, 0.0
        %v1675 = vmax.f32 %v1453, 0.0
        %v1676 = vmax.f32 %v1458, 0.0
        %v1677 = vmax.f32 %v1463, 0.0
        %v1678 = vmax.f32 %v1468, 0.0
        %v1679 = vmax.f32 %v1473, 0.0
        %v1680 = vmax.f32 %v1478, 0.0
        %v1681 = vmax.f32 %v1483, 0.0
        %v1682 = vmax.f32 %v1488, 0.0
        %v1683 = vmax.f32 %v1493, 0.0
        %v1684 = vmax.f32 %v1498, 0.0
        %v1685 = vmax.f32 %v1503, 0.0
        %v1686 = vmax.f32 %v1508, 0.0
        %v1687 = vmax.f32 %v1513, 0.0
        %v1688 = vmax.f32 %v1518, 0.0
        %v1689 = vmax.f32 %v1523, 0.0
        %v1690 = vmax.f32 %v1528, 0.0
        %v1691 = vmax.f32 %v1533, 0.0
        %v1692 = vmax.f32 %v1538, 0.0
        %v1693 = vmax.f32 %v1543, 0.0
        %v1694 = vmax.f32 %v1548, 0.0
        %v1695 = vmax.f32 %v1553, 0.0
        %v1696 = vmax.f32 %v1558, 0.0
        %v1697 = vmax.f32 %v1563, 0.0
        %v1698 = vmax.f32 %v1568, 0.0
        %v1699 = vmax.f32 %v1573, 0.0
        %v1700 = vmax.f32 %v1578, 0.0
        %vm1701 = vcmask 162816
        %1702 = vst.msk [vmem:[#allocation2] sm:$0xff] %vm1701, %v1581
        %1703 = vst.msk [vmem:[#allocation2 + $0x8] sm:$0xff] %vm1701, %v1582
        %1704 = vst.msk [vmem:[#allocation2 + $0x10] sm:$0xff] %vm1701, %v1583
        %1705 = vst.msk [vmem:[#allocation2 + $0x18] sm:$0xff] %vm1701, %v1584
        %1706 = vst.msk [vmem:[#allocation2 + $0x20] sm:$0xff] %vm1701, %v1585
        %1707 = vst.msk [vmem:[#allocation2 + $0x28] sm:$0xff] %vm1701, %v1586
        %1708 = vst.msk [vmem:[#allocation2 + $0x30] sm:$0xff] %vm1701, %v1587
        %1709 = vst.msk [vmem:[#allocation2 + $0x38] sm:$0xff] %vm1701, %v1588
        %1710 = vst.msk [vmem:[#allocation2 + $0x40] sm:$0xff] %vm1701, %v1589
        %1711 = vst.msk [vmem:[#allocation2 + $0x48] sm:$0xff] %vm1701, %v1590
        %1712 = vst.msk [vmem:[#allocation2 + $0x50] sm:$0xff] %vm1701, %v1591
        %1713 = vst.msk [vmem:[#allocation2 + $0x58] sm:$0xff] %vm1701, %v1592
        %1714 = vst.msk [vmem:[#allocation2 + $0x60] sm:$0xff] %vm1701, %v1593
        %1715 = vst.msk [vmem:[#allocation2 + $0x68] sm:$0xff] %vm1701, %v1594
        %1716 = vst.msk [vmem:[#allocation2 + $0x70] sm:$0xff] %vm1701, %v1595
        %1717 = vst.msk [vmem:[#allocation2 + $0x78] sm:$0xff] %vm1701, %v1596
        %1718 = vst.msk [vmem:[#allocation2 + $0x80] sm:$0xff] %vm1701, %v1597
        %1719 = vst.msk [vmem:[#allocation2 + $0x88] sm:$0xff] %vm1701, %v1598
        %1720 = vst.msk [vmem:[#allocation2 + $0x90] sm:$0xff] %vm1701, %v1599
        %1721 = vst.msk [vmem:[#allocation2 + $0x98] sm:$0xff] %vm1701, %v1600
        %1722 = vst.msk [vmem:[#allocation2 + $0xa0] sm:$0xff] %vm1701, %v1601
        %1723 = vst.msk [vmem:[#allocation2 + $0xa8] sm:$0xff] %vm1701, %v1602
        %1724 = vst.msk [vmem:[#allocation2 + $0xb0] sm:$0xff] %vm1701, %v1603
        %1725 = vst.msk [vmem:[#allocation2 + $0xb8] sm:$0xff] %vm1701, %v1604
        %1726 = vst.msk [vmem:[#allocation2 + $0xc0] sm:$0xff] %vm1701, %v1605
        %1727 = vst.msk [vmem:[#allocation2 + $0xc8] sm:$0xff] %vm1701, %v1606
        %1728 = vst.msk [vmem:[#allocation2 + $0xd0] sm:$0xff] %vm1701, %v1607
        %1729 = vst.msk [vmem:[#allocation2 + $0xd8] sm:$0xff] %vm1701, %v1608
        %1730 = vst.msk [vmem:[#allocation2 + $0xe0] sm:$0xff] %vm1701, %v1609
        %1731 = vst.msk [vmem:[#allocation2 + $0xe8] sm:$0xff] %vm1701, %v1610
        %1732 = vst.msk [vmem:[#allocation2 + $0xf0] sm:$0xff] %vm1701, %v1611
        %1733 = vst.msk [vmem:[#allocation2 + $0xf8] sm:$0xff] %vm1701, %v1612
        %1734 = vst.msk [vmem:[#allocation2 + $0x100] sm:$0xff] %vm1701, %v1613
        %1735 = vst.msk [vmem:[#allocation2 + $0x108] sm:$0xff] %vm1701, %v1614
        %1736 = vst.msk [vmem:[#allocation2 + $0x110] sm:$0xff] %vm1701, %v1615
        %1737 = vst.msk [vmem:[#allocation2 + $0x118] sm:$0xff] %vm1701, %v1616
        %1738 = vst.msk [vmem:[#allocation2 + $0x120] sm:$0xff] %vm1701, %v1617
        %1739 = vst.msk [vmem:[#allocation2 + $0x128] sm:$0xff] %vm1701, %v1618
        %1740 = vst.msk [vmem:[#allocation2 + $0x130] sm:$0xff] %vm1701, %v1619
        %1741 = vst.msk [vmem:[#allocation2 + $0x138] sm:$0xff] %vm1701, %v1620
        %1742 = vst.msk [vmem:[#allocation2 + $0x140] sm:$0xff] %vm1701, %v1621
        %1743 = vst.msk [vmem:[#allocation2 + $0x148] sm:$0xff] %vm1701, %v1622
        %1744 = vst.msk [vmem:[#allocation2 + $0x150] sm:$0xff] %vm1701, %v1623
        %1745 = vst.msk [vmem:[#allocation2 + $0x158] sm:$0xff] %vm1701, %v1624
        %1746 = vst.msk [vmem:[#allocation2 + $0x160] sm:$0xff] %vm1701, %v1625
        %1747 = vst.msk [vmem:[#allocation2 + $0x168] sm:$0xff] %vm1701, %v1626
        %1748 = vst.msk [vmem:[#allocation2 + $0x170] sm:$0xff] %vm1701, %v1627
        %1749 = vst.msk [vmem:[#allocation2 + $0x178] sm:$0xff] %vm1701, %v1628
        %1750 = vst.msk [vmem:[#allocation2 + $0x180] sm:$0xff] %vm1701, %v1629
        %1751 = vst.msk [vmem:[#allocation2 + $0x188] sm:$0xff] %vm1701, %v1630
        %1752 = vst.msk [vmem:[#allocation2 + $0x190] sm:$0xff] %vm1701, %v1631
        %1753 = vst.msk [vmem:[#allocation2 + $0x198] sm:$0xff] %vm1701, %v1632
        %1754 = vst.msk [vmem:[#allocation2 + $0x1a0] sm:$0xff] %vm1701, %v1633
        %1755 = vst.msk [vmem:[#allocation2 + $0x1a8] sm:$0xff] %vm1701, %v1634
        %1756 = vst.msk [vmem:[#allocation2 + $0x1b0] sm:$0xff] %vm1701, %v1635
        %1757 = vst.msk [vmem:[#allocation2 + $0x1b8] sm:$0xff] %vm1701, %v1636
        %1758 = vst.msk [vmem:[#allocation2 + $0x1c0] sm:$0xff] %vm1701, %v1637
        %1759 = vst.msk [vmem:[#allocation2 + $0x1c8] sm:$0xff] %vm1701, %v1638
        %1760 = vst.msk [vmem:[#allocation2 + $0x1d0] sm:$0xff] %vm1701, %v1639
        %1761 = vst.msk [vmem:[#allocation2 + $0x1d8] sm:$0xff] %vm1701, %v1640
        %1762 = vst.msk [vmem:[#allocation2 + $0x1e0] sm:$0xff] %vm1701, %v1641
        %1763 = vst.msk [vmem:[#allocation2 + $0x1e8] sm:$0xff] %vm1701, %v1642
        %1764 = vst.msk [vmem:[#allocation2 + $0x1f0] sm:$0xff] %vm1701, %v1643
        %1765 = vst.msk [vmem:[#allocation2 + $0x1f8] sm:$0xff] %vm1701, %v1644
        %1766 = vst.msk [vmem:[#allocation2 + $0x200] sm:$0xff] %vm1701, %v1645
        %1767 = vst.msk [vmem:[#allocation2 + $0x208] sm:$0xff] %vm1701, %v1646
        %1768 = vst.msk [vmem:[#allocation2 + $0x210] sm:$0xff] %vm1701, %v1647
        %1769 = vst.msk [vmem:[#allocation2 + $0x218] sm:$0xff] %vm1701, %v1648
        %1770 = vst.msk [vmem:[#allocation2 + $0x220] sm:$0xff] %vm1701, %v1649
        %1771 = vst.msk [vmem:[#allocation2 + $0x228] sm:$0xff] %vm1701, %v1650
        %1772 = vst.msk [vmem:[#allocation2 + $0x230] sm:$0xff] %vm1701, %v1651
        %1773 = vst.msk [vmem:[#allocation2 + $0x238] sm:$0xff] %vm1701, %v1652
        %1774 = vst.msk [vmem:[#allocation2 + $0x240] sm:$0xff] %vm1701, %v1653
        %1775 = vst.msk [vmem:[#allocation2 + $0x248] sm:$0xff] %vm1701, %v1654
        %1776 = vst.msk [vmem:[#allocation2 + $0x250] sm:$0xff] %vm1701, %v1655
        %1777 = vst.msk [vmem:[#allocation2 + $0x258] sm:$0xff] %vm1701, %v1656
        %1778 = vst.msk [vmem:[#allocation2 + $0x260] sm:$0xff] %vm1701, %v1657
        %1779 = vst.msk [vmem:[#allocation2 + $0x268] sm:$0xff] %vm1701, %v1658
        %1780 = vst.msk [vmem:[#allocation2 + $0x270] sm:$0xff] %vm1701, %v1659
        %1781 = vst.msk [vmem:[#allocation2 + $0x278] sm:$0xff] %vm1701, %v1660
        %1782 = vst.msk [vmem:[#allocation2 + $0x280] sm:$0xff] %vm1701, %v1661
        %1783 = vst.msk [vmem:[#allocation2 + $0x288] sm:$0xff] %vm1701, %v1662
        %1784 = vst.msk [vmem:[#allocation2 + $0x290] sm:$0xff] %vm1701, %v1663
        %1785 = vst.msk [vmem:[#allocation2 + $0x298] sm:$0xff] %vm1701, %v1664
        %1786 = vst.msk [vmem:[#allocation2 + $0x2a0] sm:$0xff] %vm1701, %v1665
        %1787 = vst.msk [vmem:[#allocation2 + $0x2a8] sm:$0xff] %vm1701, %v1666
        %1788 = vst.msk [vmem:[#allocation2 + $0x2b0] sm:$0xff] %vm1701, %v1667
        %1789 = vst.msk [vmem:[#allocation2 + $0x2b8] sm:$0xff] %vm1701, %v1668
        %1790 = vst.msk [vmem:[#allocation2 + $0x2c0] sm:$0xff] %vm1701, %v1669
        %1791 = vst.msk [vmem:[#allocation2 + $0x2c8] sm:$0xff] %vm1701, %v1670
        %1792 = vst.msk [vmem:[#allocation2 + $0x2d0] sm:$0xff] %vm1701, %v1671
        %1793 = vst.msk [vmem:[#allocation2 + $0x2d8] sm:$0xff] %vm1701, %v1672
        %1794 = vst.msk [vmem:[#allocation2 + $0x2e0] sm:$0xff] %vm1701, %v1673
        %1795 = vst.msk [vmem:[#allocation2 + $0x2e8] sm:$0xff] %vm1701, %v1674
        %1796 = vst.msk [vmem:[#allocation2 + $0x2f0] sm:$0xff] %vm1701, %v1675
        %1797 = vst.msk [vmem:[#allocation2 + $0x2f8] sm:$0xff] %vm1701, %v1676
        %1798 = vst.msk [vmem:[#allocation2 + $0x300] sm:$0xff] %vm1701, %v1677
        %1799 = vst.msk [vmem:[#allocation2 + $0x308] sm:$0xff] %vm1701, %v1678
        %1800 = vst.msk [vmem:[#allocation2 + $0x310] sm:$0xff] %vm1701, %v1679
        %1801 = vst.msk [vmem:[#allocation2 + $0x318] sm:$0xff] %vm1701, %v1680
        %1802 = vst.msk [vmem:[#allocation2 + $0x320] sm:$0xff] %vm1701, %v1681
        %1803 = vst.msk [vmem:[#allocation2 + $0x328] sm:$0xff] %vm1701, %v1682
        %1804 = vst.msk [vmem:[#allocation2 + $0x330] sm:$0xff] %vm1701, %v1683
        %1805 = vst.msk [vmem:[#allocation2 + $0x338] sm:$0xff] %vm1701, %v1684
        %1806 = vst.msk [vmem:[#allocation2 + $0x340] sm:$0xff] %vm1701, %v1685
        %1807 = vst.msk [vmem:[#allocation2 + $0x348] sm:$0xff] %vm1701, %v1686
        %1808 = vst.msk [vmem:[#allocation2 + $0x350] sm:$0xff] %vm1701, %v1687
        %1809 = vst.msk [vmem:[#allocation2 + $0x358] sm:$0xff] %vm1701, %v1688
        %1810 = vst.msk [vmem:[#allocation2 + $0x360] sm:$0xff] %vm1701, %v1689
        %1811 = vst.msk [vmem:[#allocation2 + $0x368] sm:$0xff] %vm1701, %v1690
        %1812 = vst.msk [vmem:[#allocation2 + $0x370] sm:$0xff] %vm1701, %v1691
        %1813 = vst.msk [vmem:[#allocation2 + $0x378] sm:$0xff] %vm1701, %v1692
        %1814 = vst.msk [vmem:[#allocation2 + $0x380] sm:$0xff] %vm1701, %v1693
        %1815 = vst.msk [vmem:[#allocation2 + $0x388] sm:$0xff] %vm1701, %v1694
        %1816 = vst.msk [vmem:[#allocation2 + $0x390] sm:$0xff] %vm1701, %v1695
        %1817 = vst.msk [vmem:[#allocation2 + $0x398] sm:$0xff] %vm1701, %v1696
        %1818 = vst.msk [vmem:[#allocation2 + $0x3a0] sm:$0xff] %vm1701, %v1697
        %1819 = vst.msk [vmem:[#allocation2 + $0x3a8] sm:$0xff] %vm1701, %v1698
        %1820 = vst.msk [vmem:[#allocation2 + $0x3b0] sm:$0xff] %vm1701, %v1699
        %1821 = vst.msk [vmem:[#allocation2 + $0x3b8] sm:$0xff] %vm1701, %v1700
        %v1822 = vld [vmem:[#allocation2] ss:$2 sm:$0xff]
        %s1823 = scalar_lea.vmem [#allocation2], 16
        %v1824 = vld [vmem:[%s1823] ss:$2 sm:$0xff]
        %s1825 = scalar_lea.vmem [#allocation2], 32
        %v1826 = vld [vmem:[%s1825] ss:$2 sm:$0xf]
        %s1827 = scalar_lea.vmem [#allocation2], 40
        %v1828 = vld [vmem:[%s1827] ss:$2 sm:$0xff]
        %s1829 = scalar_lea.vmem [#allocation2], 56
        %v1830 = vld [vmem:[%s1829] ss:$2 sm:$0xff]
        %s1831 = scalar_lea.vmem [#allocation2], 72
        %v1832 = vld [vmem:[%s1831] ss:$2 sm:$0xf]
        %s1833 = scalar_lea.vmem [#allocation2], 80
        %v1834 = vld [vmem:[%s1833] ss:$2 sm:$0xff]
        %s1835 = scalar_lea.vmem [#allocation2], 96
        %v1836 = vld [vmem:[%s1835] ss:$2 sm:$0xff]
        %s1837 = scalar_lea.vmem [#allocation2], 112
        %v1838 = vld [vmem:[%s1837] ss:$2 sm:$0xf]
        %s1839 = scalar_lea.vmem [#allocation2], 120
        %v1840 = vld [vmem:[%s1839] ss:$2 sm:$0xff]
        %s1841 = scalar_lea.vmem [#allocation2], 136
        %v1842 = vld [vmem:[%s1841] ss:$2 sm:$0xff]
        %s1843 = scalar_lea.vmem [#allocation2], 152
        %v1844 = vld [vmem:[%s1843] ss:$2 sm:$0xf]
        %s1845 = scalar_lea.vmem [#allocation2], 160
        %v1846 = vld [vmem:[%s1845] ss:$2 sm:$0xff]
        %s1847 = scalar_lea.vmem [#allocation2], 176
        %v1848 = vld [vmem:[%s1847] ss:$2 sm:$0xff]
        %s1849 = scalar_lea.vmem [#allocation2], 192
        %v1850 = vld [vmem:[%s1849] ss:$2 sm:$0xf]
        %s1851 = scalar_lea.vmem [#allocation2], 200
        %v1852 = vld [vmem:[%s1851] ss:$2 sm:$0xff]
        %s1853 = scalar_lea.vmem [#allocation2], 216
        %v1854 = vld [vmem:[%s1853] ss:$2 sm:$0xff]
        %s1855 = scalar_lea.vmem [#allocation2], 232
        %v1856 = vld [vmem:[%s1855] ss:$2 sm:$0xf]
        %s1857 = scalar_lea.vmem [#allocation2], 240
        %v1858 = vld [vmem:[%s1857] ss:$2 sm:$0xff]
        %s1859 = scalar_lea.vmem [#allocation2], 256
        %v1860 = vld [vmem:[%s1859] ss:$2 sm:$0xff]
        %s1861 = scalar_lea.vmem [#allocation2], 272
        %v1862 = vld [vmem:[%s1861] ss:$2 sm:$0xf]
        %s1863 = scalar_lea.vmem [#allocation2], 280
        %v1864 = vld [vmem:[%s1863] ss:$2 sm:$0xff]
        %s1865 = scalar_lea.vmem [#allocation2], 296
        %v1866 = vld [vmem:[%s1865] ss:$2 sm:$0xff]
        %s1867 = scalar_lea.vmem [#allocation2], 312
        %v1868 = vld [vmem:[%s1867] ss:$2 sm:$0xf]
        %s1869 = scalar_lea.vmem [#allocation2], 320
        %v1870 = vld [vmem:[%s1869] ss:$2 sm:$0xff]
        %s1871 = scalar_lea.vmem [#allocation2], 336
        %v1872 = vld [vmem:[%s1871] ss:$2 sm:$0xff]
        %s1873 = scalar_lea.vmem [#allocation2], 352
        %v1874 = vld [vmem:[%s1873] ss:$2 sm:$0xf]
        %s1875 = scalar_lea.vmem [#allocation2], 360
        %v1876 = vld [vmem:[%s1875] ss:$2 sm:$0xff]
        %s1877 = scalar_lea.vmem [#allocation2], 376
        %v1878 = vld [vmem:[%s1877] ss:$2 sm:$0xff]
        %s1879 = scalar_lea.vmem [#allocation2], 392
        %v1880 = vld [vmem:[%s1879] ss:$2 sm:$0xf]
        %s1881 = scalar_lea.vmem [#allocation2], 400
        %v1882 = vld [vmem:[%s1881] ss:$2 sm:$0xff]
        %s1883 = scalar_lea.vmem [#allocation2], 416
        %v1884 = vld [vmem:[%s1883] ss:$2 sm:$0xff]
        %s1885 = scalar_lea.vmem [#allocation2], 432
        %v1886 = vld [vmem:[%s1885] ss:$2 sm:$0xf]
        %s1887 = scalar_lea.vmem [#allocation2], 440
        %v1888 = vld [vmem:[%s1887] ss:$2 sm:$0xff]
        %s1889 = scalar_lea.vmem [#allocation2], 456
        %v1890 = vld [vmem:[%s1889] ss:$2 sm:$0xff]
        %s1891 = scalar_lea.vmem [#allocation2], 472
        %v1892 = vld [vmem:[%s1891] ss:$2 sm:$0xf]
        %s1893 = scalar_lea.vmem [#allocation2], 480
        %v1894 = vld [vmem:[%s1893] ss:$2 sm:$0xff]
        %s1895 = scalar_lea.vmem [#allocation2], 496
        %v1896 = vld [vmem:[%s1895] ss:$2 sm:$0xff]
        %s1897 = scalar_lea.vmem [#allocation2], 512
        %v1898 = vld [vmem:[%s1897] ss:$2 sm:$0xf]
        %s1899 = scalar_lea.vmem [#allocation2], 520
        %v1900 = vld [vmem:[%s1899] ss:$2 sm:$0xff]
        %s1901 = scalar_lea.vmem [#allocation2], 536
        %v1902 = vld [vmem:[%s1901] ss:$2 sm:$0xff]
        %s1903 = scalar_lea.vmem [#allocation2], 552
        %v1904 = vld [vmem:[%s1903] ss:$2 sm:$0xf]
        %s1905 = scalar_lea.vmem [#allocation2], 560
        %v1906 = vld [vmem:[%s1905] ss:$2 sm:$0xff]
        %s1907 = scalar_lea.vmem [#allocation2], 576
        %v1908 = vld [vmem:[%s1907] ss:$2 sm:$0xff]
        %s1909 = scalar_lea.vmem [#allocation2], 592
        %v1910 = vld [vmem:[%s1909] ss:$2 sm:$0xf]
        %s1911 = scalar_lea.vmem [#allocation2], 600
        %v1912 = vld [vmem:[%s1911] ss:$2 sm:$0xff]
        %s1913 = scalar_lea.vmem [#allocation2], 616
        %v1914 = vld [vmem:[%s1913] ss:$2 sm:$0xff]
        %s1915 = scalar_lea.vmem [#allocation2], 632
        %v1916 = vld [vmem:[%s1915] ss:$2 sm:$0xf]
        %s1917 = scalar_lea.vmem [#allocation2], 640
        %v1918 = vld [vmem:[%s1917] ss:$2 sm:$0xff]
        %s1919 = scalar_lea.vmem [#allocation2], 656
        %v1920 = vld [vmem:[%s1919] ss:$2 sm:$0xff]
        %s1921 = scalar_lea.vmem [#allocation2], 672
        %v1922 = vld [vmem:[%s1921] ss:$2 sm:$0xf]
        %s1923 = scalar_lea.vmem [#allocation2], 680
        %v1924 = vld [vmem:[%s1923] ss:$2 sm:$0xff]
        %s1925 = scalar_lea.vmem [#allocation2], 696
        %v1926 = vld [vmem:[%s1925] ss:$2 sm:$0xff]
        %s1927 = scalar_lea.vmem [#allocation2], 712
        %v1928 = vld [vmem:[%s1927] ss:$2 sm:$0xf]
        %s1929 = scalar_lea.vmem [#allocation2], 720
        %v1930 = vld [vmem:[%s1929] ss:$2 sm:$0xff]
        %s1931 = scalar_lea.vmem [#allocation2], 736
        %v1932 = vld [vmem:[%s1931] ss:$2 sm:$0xff]
        %s1933 = scalar_lea.vmem [#allocation2], 752
        %v1934 = vld [vmem:[%s1933] ss:$2 sm:$0xf]
        %s1935 = scalar_lea.vmem [#allocation2], 760
        %v1936 = vld [vmem:[%s1935] ss:$2 sm:$0xff]
        %s1937 = scalar_lea.vmem [#allocation2], 776
        %v1938 = vld [vmem:[%s1937] ss:$2 sm:$0xff]
        %s1939 = scalar_lea.vmem [#allocation2], 792
        %v1940 = vld [vmem:[%s1939] ss:$2 sm:$0xf]
        %s1941 = scalar_lea.vmem [#allocation2], 800
        %v1942 = vld [vmem:[%s1941] ss:$2 sm:$0xff]
        %s1943 = scalar_lea.vmem [#allocation2], 816
        %v1944 = vld [vmem:[%s1943] ss:$2 sm:$0xff]
        %s1945 = scalar_lea.vmem [#allocation2], 832
        %v1946 = vld [vmem:[%s1945] ss:$2 sm:$0xf]
        %s1947 = scalar_lea.vmem [#allocation2], 840
        %v1948 = vld [vmem:[%s1947] ss:$2 sm:$0xff]
        %s1949 = scalar_lea.vmem [#allocation2], 856
        %v1950 = vld [vmem:[%s1949] ss:$2 sm:$0xff]
        %s1951 = scalar_lea.vmem [#allocation2], 872
        %v1952 = vld [vmem:[%s1951] ss:$2 sm:$0xf]
        %s1953 = scalar_lea.vmem [#allocation2], 880
        %v1954 = vld [vmem:[%s1953] ss:$2 sm:$0xff]
        %s1955 = scalar_lea.vmem [#allocation2], 896
        %v1956 = vld [vmem:[%s1955] ss:$2 sm:$0xff]
        %s1957 = scalar_lea.vmem [#allocation2], 912
        %v1958 = vld [vmem:[%s1957] ss:$2 sm:$0xf]
        %s1959 = scalar_lea.vmem [#allocation2], 920
        %v1960 = vld [vmem:[%s1959] ss:$2 sm:$0xff]
        %s1961 = scalar_lea.vmem [#allocation2], 936
        %v1962 = vld [vmem:[%s1961] ss:$2 sm:$0xff]
        %s1963 = scalar_lea.vmem [#allocation2], 952
        %v1964 = vld [vmem:[%s1963] ss:$2 sm:$0xf]
        %s1965 = scalar_lea.vmem [#allocation2], 1
        %v1966 = vld [vmem:[%s1965] ss:$2 sm:$0xff]
        %s1967 = scalar_lea.vmem [#allocation2], 17
        %v1968 = vld [vmem:[%s1967] ss:$2 sm:$0xff]
        %s1969 = scalar_lea.vmem [#allocation2], 33
        %v1970 = vld [vmem:[%s1969] ss:$2 sm:$0xf]
        %s1971 = scalar_lea.vmem [#allocation2], 41
        %v1972 = vld [vmem:[%s1971] ss:$2 sm:$0xff]
        %s1973 = scalar_lea.vmem [#allocation2], 57
        %v1974 = vld [vmem:[%s1973] ss:$2 sm:$0xff]
        %s1975 = scalar_lea.vmem [#allocation2], 73
        %v1976 = vld [vmem:[%s1975] ss:$2 sm:$0xf]
        %s1977 = scalar_lea.vmem [#allocation2], 81
        %v1978 = vld [vmem:[%s1977] ss:$2 sm:$0xff]
        %s1979 = scalar_lea.vmem [#allocation2], 97
        %v1980 = vld [vmem:[%s1979] ss:$2 sm:$0xff]
        %s1981 = scalar_lea.vmem [#allocation2], 113
        %v1982 = vld [vmem:[%s1981] ss:$2 sm:$0xf]
        %s1983 = scalar_lea.vmem [#allocation2], 121
        %v1984 = vld [vmem:[%s1983] ss:$2 sm:$0xff]
        %s1985 = scalar_lea.vmem [#allocation2], 137
        %v1986 = vld [vmem:[%s1985] ss:$2 sm:$0xff]
        %s1987 = scalar_lea.vmem [#allocation2], 153
        %v1988 = vld [vmem:[%s1987] ss:$2 sm:$0xf]
        %s1989 = scalar_lea.vmem [#allocation2], 161
        %v1990 = vld [vmem:[%s1989] ss:$2 sm:$0xff]
        %s1991 = scalar_lea.vmem [#allocation2], 177
        %v1992 = vld [vmem:[%s1991] ss:$2 sm:$0xff]
        %s1993 = scalar_lea.vmem [#allocation2], 193
        %v1994 = vld [vmem:[%s1993] ss:$2 sm:$0xf]
        %s1995 = scalar_lea.vmem [#allocation2], 201
        %v1996 = vld [vmem:[%s1995] ss:$2 sm:$0xff]
        %s1997 = scalar_lea.vmem [#allocation2], 217
        %v1998 = vld [vmem:[%s1997] ss:$2 sm:$0xff]
        %s1999 = scalar_lea.vmem [#allocation2], 233
        %v2000 = vld [vmem:[%s1999] ss:$2 sm:$0xf]
        %s2001 = scalar_lea.vmem [#allocation2], 241
        %v2002 = vld [vmem:[%s2001] ss:$2 sm:$0xff]
        %s2003 = scalar_lea.vmem [#allocation2], 257
        %v2004 = vld [vmem:[%s2003] ss:$2 sm:$0xff]
        %s2005 = scalar_lea.vmem [#allocation2], 273
        %v2006 = vld [vmem:[%s2005] ss:$2 sm:$0xf]
        %s2007 = scalar_lea.vmem [#allocation2], 281
        %v2008 = vld [vmem:[%s2007] ss:$2 sm:$0xff]
        %s2009 = scalar_lea.vmem [#allocation2], 297
        %v2010 = vld [vmem:[%s2009] ss:$2 sm:$0xff]
        %s2011 = scalar_lea.vmem [#allocation2], 313
        %v2012 = vld [vmem:[%s2011] ss:$2 sm:$0xf]
        %s2013 = scalar_lea.vmem [#allocation2], 321
        %v2014 = vld [vmem:[%s2013] ss:$2 sm:$0xff]
        %s2015 = scalar_lea.vmem [#allocation2], 337
        %v2016 = vld [vmem:[%s2015] ss:$2 sm:$0xff]
        %s2017 = scalar_lea.vmem [#allocation2], 353
        %v2018 = vld [vmem:[%s2017] ss:$2 sm:$0xf]
        %s2019 = scalar_lea.vmem [#allocation2], 361
        %v2020 = vld [vmem:[%s2019] ss:$2 sm:$0xff]
        %s2021 = scalar_lea.vmem [#allocation2], 377
        %v2022 = vld [vmem:[%s2021] ss:$2 sm:$0xff]
        %s2023 = scalar_lea.vmem [#allocation2], 393
        %v2024 = vld [vmem:[%s2023] ss:$2 sm:$0xf]
        %s2025 = scalar_lea.vmem [#allocation2], 401
        %v2026 = vld [vmem:[%s2025] ss:$2 sm:$0xff]
        %s2027 = scalar_lea.vmem [#allocation2], 417
        %v2028 = vld [vmem:[%s2027] ss:$2 sm:$0xff]
        %s2029 = scalar_lea.vmem [#allocation2], 433
        %v2030 = vld [vmem:[%s2029] ss:$2 sm:$0xf]
        %s2031 = scalar_lea.vmem [#allocation2], 441
        %v2032 = vld [vmem:[%s2031] ss:$2 sm:$0xff]
        %s2033 = scalar_lea.vmem [#allocation2], 457
        %v2034 = vld [vmem:[%s2033] ss:$2 sm:$0xff]
        %s2035 = scalar_lea.vmem [#allocation2], 473
        %v2036 = vld [vmem:[%s2035] ss:$2 sm:$0xf]
        %s2037 = scalar_lea.vmem [#allocation2], 481
        %v2038 = vld [vmem:[%s2037] ss:$2 sm:$0xff]
        %s2039 = scalar_lea.vmem [#allocation2], 497
        %v2040 = vld [vmem:[%s2039] ss:$2 sm:$0xff]
        %s2041 = scalar_lea.vmem [#allocation2], 513
        %v2042 = vld [vmem:[%s2041] ss:$2 sm:$0xf]
        %s2043 = scalar_lea.vmem [#allocation2], 521
        %v2044 = vld [vmem:[%s2043] ss:$2 sm:$0xff]
        %s2045 = scalar_lea.vmem [#allocation2], 537
        %v2046 = vld [vmem:[%s2045] ss:$2 sm:$0xff]
        %s2047 = scalar_lea.vmem [#allocation2], 553
        %v2048 = vld [vmem:[%s2047] ss:$2 sm:$0xf]
        %s2049 = scalar_lea.vmem [#allocation2], 561
        %v2050 = vld [vmem:[%s2049] ss:$2 sm:$0xff]
        %s2051 = scalar_lea.vmem [#allocation2], 577
        %v2052 = vld [vmem:[%s2051] ss:$2 sm:$0xff]
        %s2053 = scalar_lea.vmem [#allocation2], 593
        %v2054 = vld [vmem:[%s2053] ss:$2 sm:$0xf]
        %s2055 = scalar_lea.vmem [#allocation2], 601
        %v2056 = vld [vmem:[%s2055] ss:$2 sm:$0xff]
        %s2057 = scalar_lea.vmem [#allocation2], 617
        %v2058 = vld [vmem:[%s2057] ss:$2 sm:$0xff]
        %s2059 = scalar_lea.vmem [#allocation2], 633
        %v2060 = vld [vmem:[%s2059] ss:$2 sm:$0xf]
        %s2061 = scalar_lea.vmem [#allocation2], 641
        %v2062 = vld [vmem:[%s2061] ss:$2 sm:$0xff]
        %s2063 = scalar_lea.vmem [#allocation2], 657
        %v2064 = vld [vmem:[%s2063] ss:$2 sm:$0xff]
        %s2065 = scalar_lea.vmem [#allocation2], 673
        %v2066 = vld [vmem:[%s2065] ss:$2 sm:$0xf]
        %s2067 = scalar_lea.vmem [#allocation2], 681
        %v2068 = vld [vmem:[%s2067] ss:$2 sm:$0xff]
        %s2069 = scalar_lea.vmem [#allocation2], 697
        %v2070 = vld [vmem:[%s2069] ss:$2 sm:$0xff]
        %s2071 = scalar_lea.vmem [#allocation2], 713
        %v2072 = vld [vmem:[%s2071] ss:$2 sm:$0xf]
        %s2073 = scalar_lea.vmem [#allocation2], 721
        %v2074 = vld [vmem:[%s2073] ss:$2 sm:$0xff]
        %s2075 = scalar_lea.vmem [#allocation2], 737
        %v2076 = vld [vmem:[%s2075] ss:$2 sm:$0xff]
        %s2077 = scalar_lea.vmem [#allocation2], 753
        %v2078 = vld [vmem:[%s2077] ss:$2 sm:$0xf]
        %s2079 = scalar_lea.vmem [#allocation2], 761
        %v2080 = vld [vmem:[%s2079] ss:$2 sm:$0xff]
        %s2081 = scalar_lea.vmem [#allocation2], 777
        %v2082 = vld [vmem:[%s2081] ss:$2 sm:$0xff]
        %s2083 = scalar_lea.vmem [#allocation2], 793
        %v2084 = vld [vmem:[%s2083] ss:$2 sm:$0xf]
        %s2085 = scalar_lea.vmem [#allocation2], 801
        %v2086 = vld [vmem:[%s2085] ss:$2 sm:$0xff]
        %s2087 = scalar_lea.vmem [#allocation2], 817
        %v2088 = vld [vmem:[%s2087] ss:$2 sm:$0xff]
        %s2089 = scalar_lea.vmem [#allocation2], 833
        %v2090 = vld [vmem:[%s2089] ss:$2 sm:$0xf]
        %s2091 = scalar_lea.vmem [#allocation2], 841
        %v2092 = vld [vmem:[%s2091] ss:$2 sm:$0xff]
        %s2093 = scalar_lea.vmem [#allocation2], 857
        %v2094 = vld [vmem:[%s2093] ss:$2 sm:$0xff]
        %s2095 = scalar_lea.vmem [#allocation2], 873
        %v2096 = vld [vmem:[%s2095] ss:$2 sm:$0xf]
        %s2097 = scalar_lea.vmem [#allocation2], 881
        %v2098 = vld [vmem:[%s2097] ss:$2 sm:$0xff]
        %s2099 = scalar_lea.vmem [#allocation2], 897
        %v2100 = vld [vmem:[%s2099] ss:$2 sm:$0xff]
        %s2101 = scalar_lea.vmem [#allocation2], 913
        %v2102 = vld [vmem:[%s2101] ss:$2 sm:$0xf]
        %s2103 = scalar_lea.vmem [#allocation2], 921
        %v2104 = vld [vmem:[%s2103] ss:$2 sm:$0xff]
        %s2105 = scalar_lea.vmem [#allocation2], 937
        %v2106 = vld [vmem:[%s2105] ss:$2 sm:$0xff]
        %s2107 = scalar_lea.vmem [#allocation2], 953
        %v2108 = vld [vmem:[%s2107] ss:$2 sm:$0xf]
        %v2109 = vmax.f32 %v1822, %v1966
        %v2110 = vmax.f32 %v1824, %v1968
        %v2111 = vmax.f32 %v1826, %v1970
        %v2112 = vmax.f32 %v1828, %v1972
        %v2113 = vmax.f32 %v1830, %v1974
        %v2114 = vmax.f32 %v1832, %v1976
        %v2115 = vmax.f32 %v1834, %v1978
        %v2116 = vmax.f32 %v1836, %v1980
        %v2117 = vmax.f32 %v1838, %v1982
        %v2118 = vmax.f32 %v1840, %v1984
        %v2119 = vmax.f32 %v1842, %v1986
        %v2120 = vmax.f32 %v1844, %v1988
        %v2121 = vmax.f32 %v1846, %v1990
        %v2122 = vmax.f32 %v1848, %v1992
        %v2123 = vmax.f32 %v1850, %v1994
        %v2124 = vmax.f32 %v1852, %v1996
        %v2125 = vmax.f32 %v1854, %v1998
        %v2126 = vmax.f32 %v1856, %v2000
        %v2127 = vmax.f32 %v1858, %v2002
        %v2128 = vmax.f32 %v1860, %v2004
        %v2129 = vmax.f32 %v1862, %v2006
        %v2130 = vmax.f32 %v1864, %v2008
        %v2131 = vmax.f32 %v1866, %v2010
        %v2132 = vmax.f32 %v1868, %v2012
        %v2133 = vmax.f32 %v1870, %v2014
        %v2134 = vmax.f32 %v1872, %v2016
        %v2135 = vmax.f32 %v1874, %v2018
        %v2136 = vmax.f32 %v1876, %v2020
        %v2137 = vmax.f32 %v1878, %v2022
        %v2138 = vmax.f32 %v1880, %v2024
        %v2139 = vmax.f32 %v1882, %v2026
        %v2140 = vmax.f32 %v1884, %v2028
        %v2141 = vmax.f32 %v1886, %v2030
        %v2142 = vmax.f32 %v1888, %v2032
        %v2143 = vmax.f32 %v1890, %v2034
        %v2144 = vmax.f32 %v1892, %v2036
        %v2145 = vmax.f32 %v1894, %v2038
        %v2146 = vmax.f32 %v1896, %v2040
        %v2147 = vmax.f32 %v1898, %v2042
        %v2148 = vmax.f32 %v1900, %v2044
        %v2149 = vmax.f32 %v1902, %v2046
        %v2150 = vmax.f32 %v1904, %v2048
        %v2151 = vmax.f32 %v1906, %v2050
        %v2152 = vmax.f32 %v1908, %v2052
        %v2153 = vmax.f32 %v1910, %v2054
        %v2154 = vmax.f32 %v1912, %v2056
        %v2155 = vmax.f32 %v1914, %v2058
        %v2156 = vmax.f32 %v1916, %v2060
        %v2157 = vmax.f32 %v1918, %v2062
        %v2158 = vmax.f32 %v1920, %v2064
        %v2159 = vmax.f32 %v1922, %v2066
        %v2160 = vmax.f32 %v1924, %v2068
        %v2161 = vmax.f32 %v1926, %v2070
        %v2162 = vmax.f32 %v1928, %v2072
        %v2163 = vmax.f32 %v1930, %v2074
        %v2164 = vmax.f32 %v1932, %v2076
        %v2165 = vmax.f32 %v1934, %v2078
        %v2166 = vmax.f32 %v1936, %v2080
        %v2167 = vmax.f32 %v1938, %v2082
        %v2168 = vmax.f32 %v1940, %v2084
        %v2169 = vmax.f32 %v1942, %v2086
        %v2170 = vmax.f32 %v1944, %v2088
        %v2171 = vmax.f32 %v1946, %v2090
        %v2172 = vmax.f32 %v1948, %v2092
        %v2173 = vmax.f32 %v1950, %v2094
        %v2174 = vmax.f32 %v1952, %v2096
        %v2175 = vmax.f32 %v1954, %v2098
        %v2176 = vmax.f32 %v1956, %v2100
        %v2177 = vmax.f32 %v1958, %v2102
        %v2178 = vmax.f32 %v1960, %v2104
        %v2179 = vmax.f32 %v1962, %v2106
        %v2180 = vmax.f32 %v1964, %v2108
        %v2181 = vmax.f32 %v2109, %v2112
        %v2182 = vmax.f32 %v2110, %v2113
        %v2183 = vmax.f32 %v2111, %v2114
        %v2184 = vmax.f32 %v2115, %v2118
        %v2185 = vmax.f32 %v2116, %v2119
        %v2186 = vmax.f32 %v2117, %v2120
        %v2187 = vmax.f32 %v2121, %v2124
        %v2188 = vmax.f32 %v2122, %v2125
        %v2189 = vmax.f32 %v2123, %v2126
        %v2190 = vmax.f32 %v2127, %v2130
        %v2191 = vmax.f32 %v2128, %v2131
        %v2192 = vmax.f32 %v2129, %v2132
        %v2193 = vmax.f32 %v2133, %v2136
        %v2194 = vmax.f32 %v2134, %v2137
        %v2195 = vmax.f32 %v2135, %v2138
        %v2196 = vmax.f32 %v2139, %v2142
        %v2197 = vmax.f32 %v2140, %v2143
        %v2198 = vmax.f32 %v2141, %v2144
        %v2199 = vmax.f32 %v2145, %v2148
        %v2200 = vmax.f32 %v2146, %v2149
        %v2201 = vmax.f32 %v2147, %v2150
        %v2202 = vmax.f32 %v2151, %v2154
        %v2203 = vmax.f32 %v2152, %v2155
        %v2204 = vmax.f32 %v2153, %v2156
        %v2205 = vmax.f32 %v2157, %v2160
        %v2206 = vmax.f32 %v2158, %v2161
        %v2207 = vmax.f32 %v2159, %v2162
        %v2208 = vmax.f32 %v2163, %v2166
        %v2209 = vmax.f32 %v2164, %v2167
        %v2210 = vmax.f32 %v2165, %v2168
        %v2211 = vmax.f32 %v2169, %v2172
        %v2212 = vmax.f32 %v2170, %v2173
        %v2213 = vmax.f32 %v2171, %v2174
        %v2214 = vmax.f32 %v2175, %v2178
        %v2215 = vmax.f32 %v2176, %v2179
        %v2216 = vmax.f32 %v2177, %v2180
        %v2217 = vld [vmem:[%s3] sm:$0xff]
        %v2218 = vld [vmem:[%s3 + $0x8] sm:$0xff]
        %v2219 = vld [vmem:[%s3 + $0x10] sm:$0xf]
        %vm2244 = vcmask 1046528
        %v2245 = vrot.slane %v2181, 1
        %v2246 = vrot.slane %v2182, 1
        %v2247 = vsel %vm2244, %v2245, %v2246
        %v2248 = vrot.slane %v2183, 1
        %v2249 = vsel %vm2244, %v2246, %v2248
        %v2250 = vrot.slane %v2184, 1
        %v2251 = vrot.slane %v2185, 1
        %v2252 = vsel %vm2244, %v2250, %v2251
        %v2253 = vrot.slane %v2186, 1
        %v2254 = vsel %vm2244, %v2251, %v2253
        %v2255 = vrot.slane %v2187, 1
        %v2256 = vrot.slane %v2188, 1
        %v2257 = vsel %vm2244, %v2255, %v2256
        %v2258 = vrot.slane %v2189, 1
        %v2259 = vsel %vm2244, %v2256, %v2258
        %v2260 = vrot.slane %v2190, 1
        %v2261 = vrot.slane %v2191, 1
        %v2262 = vsel %vm2244, %v2260, %v2261
        %v2263 = vrot.slane %v2192, 1
        %v2264 = vsel %vm2244, %v2261, %v2263
        %v2265 = vrot.slane %v2193, 1
        %v2266 = vrot.slane %v2194, 1
        %v2267 = vsel %vm2244, %v2265, %v2266
        %v2268 = vrot.slane %v2195, 1
        %v2269 = vsel %vm2244, %v2266, %v2268
        %v2270 = vrot.slane %v2196, 1
        %v2271 = vrot.slane %v2197, 1
        %v2272 = vsel %vm2244, %v2270, %v2271
        %v2273 = vrot.slane %v2198, 1
        %v2274 = vsel %vm2244, %v2271, %v2273
        %v2275 = vrot.slane %v2199, 1
        %v2276 = vrot.slane %v2200, 1
        %v2277 = vsel %vm2244, %v2275, %v2276
        %v2278 = vrot.slane %v2201, 1
        %v2279 = vsel %vm2244, %v2276, %v2278
        %v2280 = vrot.slane %v2202, 1
        %v2281 = vrot.slane %v2203, 1
        %v2282 = vsel %vm2244, %v2280, %v2281
        %v2283 = vrot.slane %v2204, 1
        %v2284 = vsel %vm2244, %v2281, %v2283
        %s2285 = scalar_lea.vmem %s3, 24
        %v2286 = vld [vmem:[%s2285] sm:$0xff]
        %v2287 = vld [vmem:[%s2285 + $0x8] sm:$0xff]
        %v2288 = vld [vmem:[%s2285 + $0x10] sm:$0xf]
        %v2289 = vsel %vm1701, %v2247, 0
        %v2291 = vsel %vm1701, %v2249, 0
        %v2293 = vsel %vm1701, %v2252, 0
        %v2295 = vsel %vm1701, %v2254, 0
        %v2297 = vsel %vm1701, %v2257, 0
        %v2299 = vsel %vm1701, %v2259, 0
        %v2301 = vsel %vm1701, %v2262, 0
        %v2303 = vsel %vm1701, %v2264, 0
        %v2305 = vsel %vm1701, %v2267, 0
        %v2307 = vsel %vm1701, %v2269, 0
        %v2309 = vsel %vm1701, %v2272, 0
        %v2311 = vsel %vm1701, %v2274, 0
        %v2313 = vsel %vm1701, %v2277, 0
        %v2315 = vsel %vm1701, %v2279, 0
        %v2317 = vsel %vm1701, %v2282, 0
        %v2319 = vsel %vm1701, %v2284, 0
        %vm2321 = vcmask 1043456
        %v2323 = vsel %vm2321, %v2288, 0
        %2325 = vmatprep.subr.mxu0 0.0
        %2326 = vmatpush1.msra.mxu0 0.0
        %2327 = vmatprep.subr.mxu0 0.0
        %2328 = vmatpush1.msra.mxu0 0.0
        %2329 = vmatprep.subr.mxu0 0.0
        %2330 = vmatpush1.msra.mxu0 0.0
        %2331 = vmatprep.subr.mxu0 0.0
        %2332 = vmatpush1.msra.mxu0 0.0
        %2333 = vmatprep.subr.mxu0 0.0
        %2334 = vmatpush1.msra.mxu0 0.0
        %2335 = vmatprep.subr.mxu0 0.0
        %2336 = vmatpush1.msra.mxu0 0.0
        %2337 = vmatprep.subr.mxu0 0.0
        %2338 = vmatpush1.msra.mxu0 0.0
        %2339 = vmatprep.subr.mxu0 0.0
        %2340 = vmatpush1.msra.mxu0 0.0
        %2341 = vmatprep.subr.mxu0 0.0
        %2342 = vmatpush1.msra.mxu0 0.0
        %2343 = vmatprep.subr.mxu0 0.0
        %2344 = vmatpush1.msra.mxu0 0.0
        %2345 = vmatprep.subr.mxu0 0.0
        %2346 = vmatpush1.msra.mxu0 0.0
        %2347 = vmatprep.subr.mxu0 0.0
        %2348 = vmatpush1.msra.mxu0 0.0
        %2349 = vmatprep.subr.mxu0 0.0
        %2350 = vmatpush1.msra.mxu0 0.0
        %2351 = vmatprep.subr.mxu0 0.0
        %2352 = vmatpush1.msra.mxu0 %v2323
        %2353 = vmatprep.subr.mxu0 0.0
        %2354 = vmatpush1.msra.mxu0 %v2287
        %2355 = vmatprep.subr.mxu0 0.0
        %2356 = vmatpush1.msra.mxu0 %v2286
        %2357 = vmatprep.subr.mxu0 0.0
        %2358 = vmatpush2.msra.mxu0 0.0
        %2359 = vmatprep.subr.mxu0 0.0
        %2360 = vmatpush2.msra.mxu0 0.0
        %2361 = vmatprep.subr.mxu0 0.0
        %2362 = vmatpush2.msra.mxu0 0.0
        %2363 = vmatprep.subr.mxu0 0.0
        %2364 = vmatpush2.msra.mxu0 0.0
        %2365 = vmatprep.subr.mxu0 0.0
        %2366 = vmatpush2.msra.mxu0 0.0
        %2367 = vmatprep.subr.mxu0 0.0
        %2368 = vmatpush2.msra.mxu0 0.0
        %2369 = vmatprep.subr.mxu0 0.0
        %2370 = vmatpush2.msra.mxu0 0.0
        %2371 = vmatprep.subr.mxu0 0.0
        %2372 = vmatpush2.msra.mxu0 0.0
        %2373 = vmatprep.subr.mxu0 0.0
        %2374 = vmatpush2.msra.mxu0 0.0
        %2375 = vmatprep.subr.mxu0 0.0
        %2376 = vmatpush2.msra.mxu0 0.0
        %2377 = vmatprep.subr.mxu0 0.0
        %2378 = vmatpush2.msra.mxu0 0.0
        %2379 = vmatprep.subr.mxu0 0.0
        %2380 = vmatpush2.msra.mxu0 0.0
        %2381 = vmatprep.subr.mxu0 0.0
        %2382 = vmatpush2.msra.mxu0 0.0
        %2383 = vmatprep.subr.mxu0 0.0
        %2384 = vmatpush2.msra.mxu0 0.0
        %2385 = vmatprep.subr.mxu0 0.0
        %2386 = vmatpush2.msra.mxu0 0.0
        %2387 = vmatprep.subr.mxu0 0.0
        %2388 = vmatpush2.msra.mxu0 0.0
        %2389 = vmatprep.mubr.f32.mxu0 0.0
        %2390 = vmatmul.mubr.f32.gmra.mxu0 %v2289
        %v2391 = vpop.f32.mrf.mxu0
        %v2392 = vadd.f32 0.0, %v2391
        %v2393 = vpop.f32.mrf.mxu0
        %2394 = vmatprep.mubr.f32.mxu0 0.0
        %2395 = vmatmul.mubr.f32.gmra.mxu0 %v2291
        %v2396 = vpop.f32.mrf.mxu0
        %v2397 = vadd.f32 0.0, %v2396
        %v2398 = vpop.f32.mrf.mxu0
        %2399 = vmatprep.mubr.f32.mxu0 0.0
        %2400 = vmatmul.mubr.f32.gmra.mxu0 %v2293
        %v2401 = vpop.f32.mrf.mxu0
        %v2402 = vadd.f32 0.0, %v2401
        %v2403 = vpop.f32.mrf.mxu0
        %2404 = vmatprep.mubr.f32.mxu0 0.0
        %2405 = vmatmul.mubr.f32.gmra.mxu0 %v2295
        %v2406 = vpop.f32.mrf.mxu0
        %v2407 = vadd.f32 0.0, %v2406
        %v2408 = vpop.f32.mrf.mxu0
        %2409 = vmatprep.mubr.f32.mxu0 0.0
        %2410 = vmatmul.mubr.f32.gmra.mxu0 %v2297
        %v2411 = vpop.f32.mrf.mxu0
        %v2412 = vadd.f32 0.0, %v2411
        %v2413 = vpop.f32.mrf.mxu0
        %2414 = vmatprep.mubr.f32.mxu0 0.0
        %2415 = vmatmul.mubr.f32.gmra.mxu0 %v2299
        %v2416 = vpop.f32.mrf.mxu0
        %v2417 = vadd.f32 0.0, %v2416
        %v2418 = vpop.f32.mrf.mxu0
        %2419 = vmatprep.mubr.f32.mxu0 0.0
        %2420 = vmatmul.mubr.f32.gmra.mxu0 %v2301
        %v2421 = vpop.f32.mrf.mxu0
        %v2422 = vadd.f32 0.0, %v2421
        %v2423 = vpop.f32.mrf.mxu0
        %2424 = vmatprep.mubr.f32.mxu0 0.0
        %2425 = vmatmul.mubr.f32.gmra.mxu0 %v2303
        %v2426 = vpop.f32.mrf.mxu0
        %v2427 = vadd.f32 0.0, %v2426
        %v2428 = vpop.f32.mrf.mxu0
        %2429 = vmatprep.mubr.f32.mxu0 0.0
        %2430 = vmatmul.mubr.f32.gmra.mxu0 %v2305
        %v2431 = vpop.f32.mrf.mxu0
        %v2432 = vadd.f32 0.0, %v2431
        %v2433 = vpop.f32.mrf.mxu0
        %2434 = vmatprep.mubr.f32.mxu0 0.0
        %2435 = vmatmul.mubr.f32.gmra.mxu0 %v2307
        %v2436 = vpop.f32.mrf.mxu0
        %v2437 = vadd.f32 0.0, %v2436
        %v2438 = vpop.f32.mrf.mxu0
        %2439 = vmatprep.mubr.f32.mxu0 0.0
        %2440 = vmatmul.mubr.f32.gmra.mxu0 %v2309
        %v2441 = vpop.f32.mrf.mxu0
        %v2442 = vadd.f32 0.0, %v2441
        %v2443 = vpop.f32.mrf.mxu0
        %2444 = vmatprep.mubr.f32.mxu0 0.0
        %2445 = vmatmul.mubr.f32.gmra.mxu0 %v2311
        %v2446 = vpop.f32.mrf.mxu0
        %v2447 = vadd.f32 0.0, %v2446
        %v2448 = vpop.f32.mrf.mxu0
        %2449 = vmatprep.mubr.f32.mxu0 0.0
        %2450 = vmatmul.mubr.f32.gmra.mxu0 %v2313
        %v2451 = vpop.f32.mrf.mxu0
        %v2452 = vadd.f32 0.0, %v2451
        %v2453 = vpop.f32.mrf.mxu0
        %2454 = vmatprep.mubr.f32.mxu0 0.0
        %2455 = vmatmul.mubr.f32.gmra.mxu0 %v2315
        %v2456 = vpop.f32.mrf.mxu0
        %v2457 = vadd.f32 0.0, %v2456
        %v2458 = vpop.f32.mrf.mxu0
        %2459 = vmatprep.mubr.f32.mxu0 0.0
        %2460 = vmatmul.mubr.f32.gmra.mxu0 %v2317
        %v2461 = vpop.f32.mrf.mxu0
        %v2462 = vadd.f32 0.0, %v2461
        %v2463 = vpop.f32.mrf.mxu0
        %2464 = vmatprep.mubr.f32.mxu0 0.0
        %2465 = vmatmul.mubr.f32.gmra.mxu0 %v2319
        %v2466 = vpop.f32.mrf.mxu0
        %v2467 = vadd.f32 0.0, %v2466
        %v2468 = vpop.f32.mrf.mxu0
        %2469 = vdwg.mxu0
        %v2470 = vsel %vm1701, %v2181, 0
        %v2472 = vsel %vm1701, %v2182, 0
        %v2474 = vsel %vm1701, %v2184, 0
        %v2476 = vsel %vm1701, %v2185, 0
        %v2478 = vsel %vm1701, %v2187, 0
        %v2480 = vsel %vm1701, %v2188, 0
        %v2482 = vsel %vm1701, %v2190, 0
        %v2484 = vsel %vm1701, %v2191, 0
        %v2486 = vsel %vm1701, %v2193, 0
        %v2488 = vsel %vm1701, %v2194, 0
        %v2490 = vsel %vm1701, %v2196, 0
        %v2492 = vsel %vm1701, %v2197, 0
        %v2494 = vsel %vm1701, %v2199, 0
        %v2496 = vsel %vm1701, %v2200, 0
        %v2498 = vsel %vm1701, %v2202, 0
        %v2500 = vsel %vm1701, %v2203, 0
        %v2503 = vsel %vm2321, %v2219, 0
        %2505 = vmatprep.subr.mxu0 0.0
        %2506 = vmatpush1.msra.mxu0 0.0
        %2507 = vmatprep.subr.mxu0 0.0
        %2508 = vmatpush1.msra.mxu0 0.0
        %2509 = vmatprep.subr.mxu0 0.0
        %2510 = vmatpush1.msra.mxu0 0.0
        %2511 = vmatprep.subr.mxu0 0.0
        %2512 = vmatpush1.msra.mxu0 0.0
        %2513 = vmatprep.subr.mxu0 0.0
        %2514 = vmatpush1.msra.mxu0 0.0
        %2515 = vmatprep.subr.mxu0 0.0
        %2516 = vmatpush1.msra.mxu0 0.0
        %2517 = vmatprep.subr.mxu0 0.0
        %2518 = vmatpush1.msra.mxu0 0.0
        %2519 = vmatprep.subr.mxu0 0.0
        %2520 = vmatpush1.msra.mxu0 0.0
        %2521 = vmatprep.subr.mxu0 0.0
        %2522 = vmatpush1.msra.mxu0 0.0
        %2523 = vmatprep.subr.mxu0 0.0
        %2524 = vmatpush1.msra.mxu0 0.0
        %2525 = vmatprep.subr.mxu0 0.0
        %2526 = vmatpush1.msra.mxu0 0.0
        %2527 = vmatprep.subr.mxu0 0.0
        %2528 = vmatpush1.msra.mxu0 0.0
        %2529 = vmatprep.subr.mxu0 0.0
        %2530 = vmatpush1.msra.mxu0 0.0
        %2531 = vmatprep.subr.mxu0 0.0
        %2532 = vmatpush1.msra.mxu0 %v2503
        %2533 = vmatprep.subr.mxu0 0.0
        %2534 = vmatpush1.msra.mxu0 %v2218
        %2535 = vmatprep.subr.mxu0 0.0
        %2536 = vmatpush1.msra.mxu0 %v2217
        %2537 = vmatprep.subr.mxu0 0.0
        %2538 = vmatpush2.msra.mxu0 0.0
        %2539 = vmatprep.subr.mxu0 0.0
        %2540 = vmatpush2.msra.mxu0 0.0
        %2541 = vmatprep.subr.mxu0 0.0
        %2542 = vmatpush2.msra.mxu0 0.0
        %2543 = vmatprep.subr.mxu0 0.0
        %2544 = vmatpush2.msra.mxu0 0.0
        %2545 = vmatprep.subr.mxu0 0.0
        %2546 = vmatpush2.msra.mxu0 0.0
        %2547 = vmatprep.subr.mxu0 0.0
        %2548 = vmatpush2.msra.mxu0 0.0
        %2549 = vmatprep.subr.mxu0 0.0
        %2550 = vmatpush2.msra.mxu0 0.0
        %2551 = vmatprep.subr.mxu0 0.0
        %2552 = vmatpush2.msra.mxu0 0.0
        %2553 = vmatprep.subr.mxu0 0.0
        %2554 = vmatpush2.msra.mxu0 0.0
        %2555 = vmatprep.subr.mxu0 0.0
        %2556 = vmatpush2.msra.mxu0 0.0
        %2557 = vmatprep.subr.mxu0 0.0
        %2558 = vmatpush2.msra.mxu0 0.0
        %2559 = vmatprep.subr.mxu0 0.0
        %2560 = vmatpush2.msra.mxu0 0.0
        %2561 = vmatprep.subr.mxu0 0.0
        %2562 = vmatpush2.msra.mxu0 0.0
        %2563 = vmatprep.subr.mxu0 0.0
        %2564 = vmatpush2.msra.mxu0 0.0
        %2565 = vmatprep.subr.mxu0 0.0
        %2566 = vmatpush2.msra.mxu0 0.0
        %2567 = vmatprep.subr.mxu0 0.0
        %2568 = vmatpush2.msra.mxu0 0.0
        %2569 = vmatprep.mubr.f32.mxu0 0.0
        %2570 = vmatmul.mubr.f32.gmra.mxu0 %v2470
        %v2571 = vpop.f32.mrf.mxu0
        %v2572 = vadd.f32 %v2392, %v2571
        %v2573 = vpop.f32.mrf.mxu0
        %2574 = vmatprep.mubr.f32.mxu0 0.0
        %2575 = vmatmul.mubr.f32.gmra.mxu0 %v2472
        %v2576 = vpop.f32.mrf.mxu0
        %v2577 = vadd.f32 %v2397, %v2576
        %v2578 = vpop.f32.mrf.mxu0
        %2579 = vmatprep.mubr.f32.mxu0 0.0
        %2580 = vmatmul.mubr.f32.gmra.mxu0 %v2474
        %v2581 = vpop.f32.mrf.mxu0
        %v2582 = vadd.f32 %v2402, %v2581
        %v2583 = vpop.f32.mrf.mxu0
        %2584 = vmatprep.mubr.f32.mxu0 0.0
        %2585 = vmatmul.mubr.f32.gmra.mxu0 %v2476
        %v2586 = vpop.f32.mrf.mxu0
        %v2587 = vadd.f32 %v2407, %v2586
        %v2588 = vpop.f32.mrf.mxu0
        %2589 = vmatprep.mubr.f32.mxu0 0.0
        %2590 = vmatmul.mubr.f32.gmra.mxu0 %v2478
        %v2591 = vpop.f32.mrf.mxu0
        %v2592 = vadd.f32 %v2412, %v2591
        %v2593 = vpop.f32.mrf.mxu0
        %2594 = vmatprep.mubr.f32.mxu0 0.0
        %2595 = vmatmul.mubr.f32.gmra.mxu0 %v2480
        %v2596 = vpop.f32.mrf.mxu0
        %v2597 = vadd.f32 %v2417, %v2596
        %v2598 = vpop.f32.mrf.mxu0
        %2599 = vmatprep.mubr.f32.mxu0 0.0
        %2600 = vmatmul.mubr.f32.gmra.mxu0 %v2482
        %v2601 = vpop.f32.mrf.mxu0
        %v2602 = vadd.f32 %v2422, %v2601
        %v2603 = vpop.f32.mrf.mxu0
        %2604 = vmatprep.mubr.f32.mxu0 0.0
        %2605 = vmatmul.mubr.f32.gmra.mxu0 %v2484
        %v2606 = vpop.f32.mrf.mxu0
        %v2607 = vadd.f32 %v2427, %v2606
        %v2608 = vpop.f32.mrf.mxu0
        %2609 = vmatprep.mubr.f32.mxu0 0.0
        %2610 = vmatmul.mubr.f32.gmra.mxu0 %v2486
        %v2611 = vpop.f32.mrf.mxu0
        %v2612 = vadd.f32 %v2432, %v2611
        %v2613 = vpop.f32.mrf.mxu0
        %2614 = vmatprep.mubr.f32.mxu0 0.0
        %2615 = vmatmul.mubr.f32.gmra.mxu0 %v2488
        %v2616 = vpop.f32.mrf.mxu0
        %v2617 = vadd.f32 %v2437, %v2616
        %v2618 = vpop.f32.mrf.mxu0
        %2619 = vmatprep.mubr.f32.mxu0 0.0
        %2620 = vmatmul.mubr.f32.gmra.mxu0 %v2490
        %v2621 = vpop.f32.mrf.mxu0
        %v2622 = vadd.f32 %v2442, %v2621
        %v2623 = vpop.f32.mrf.mxu0
        %2624 = vmatprep.mubr.f32.mxu0 0.0
        %2625 = vmatmul.mubr.f32.gmra.mxu0 %v2492
        %v2626 = vpop.f32.mrf.mxu0
        %v2627 = vadd.f32 %v2447, %v2626
        %v2628 = vpop.f32.mrf.mxu0
        %2629 = vmatprep.mubr.f32.mxu0 0.0
        %2630 = vmatmul.mubr.f32.gmra.mxu0 %v2494
        %v2631 = vpop.f32.mrf.mxu0
        %v2632 = vadd.f32 %v2452, %v2631
        %v2633 = vpop.f32.mrf.mxu0
        %2634 = vmatprep.mubr.f32.mxu0 0.0
        %2635 = vmatmul.mubr.f32.gmra.mxu0 %v2496
        %v2636 = vpop.f32.mrf.mxu0
        %v2637 = vadd.f32 %v2457, %v2636
        %v2638 = vpop.f32.mrf.mxu0
        %2639 = vmatprep.mubr.f32.mxu0 0.0
        %2640 = vmatmul.mubr.f32.gmra.mxu0 %v2498
        %v2641 = vpop.f32.mrf.mxu0
        %v2642 = vadd.f32 %v2462, %v2641
        %v2643 = vpop.f32.mrf.mxu0
        %2644 = vmatprep.mubr.f32.mxu0 0.0
        %2645 = vmatmul.mubr.f32.gmra.mxu0 %v2500
        %v2646 = vpop.f32.mrf.mxu0
        %v2647 = vadd.f32 %v2467, %v2646
        %v2648 = vpop.f32.mrf.mxu0
        %2649 = vdwg.mxu0
        %vm2650 = vcmask 1045504
        %v2651 = vrot.slane %v2181, 2
        %v2652 = vrot.slane %v2182, 2
        %v2653 = vsel %vm2650, %v2651, %v2652
        %v2654 = vrot.slane %v2183, 2
        %v2655 = vsel %vm2650, %v2652, %v2654
        %v2656 = vrot.slane %v2184, 2
        %v2657 = vrot.slane %v2185, 2
        %v2658 = vsel %vm2650, %v2656, %v2657
        %v2659 = vrot.slane %v2186, 2
        %v2660 = vsel %vm2650, %v2657, %v2659
        %v2661 = vrot.slane %v2187, 2
        %v2662 = vrot.slane %v2188, 2
        %v2663 = vsel %vm2650, %v2661, %v2662
        %v2664 = vrot.slane %v2189, 2
        %v2665 = vsel %vm2650, %v2662, %v2664
        %v2666 = vrot.slane %v2190, 2
        %v2667 = vrot.slane %v2191, 2
        %v2668 = vsel %vm2650, %v2666, %v2667
        %v2669 = vrot.slane %v2192, 2
        %v2670 = vsel %vm2650, %v2667, %v2669
        %v2671 = vrot.slane %v2193, 2
        %v2672 = vrot.slane %v2194, 2
        %v2673 = vsel %vm2650, %v2671, %v2672
        %v2674 = vrot.slane %v2195, 2
        %v2675 = vsel %vm2650, %v2672, %v2674
        %v2676 = vrot.slane %v2196, 2
        %v2677 = vrot.slane %v2197, 2
        %v2678 = vsel %vm2650, %v2676, %v2677
        %v2679 = vrot.slane %v2198, 2
        %v2680 = vsel %vm2650, %v2677, %v2679
        %v2681 = vrot.slane %v2199, 2
        %v2682 = vrot.slane %v2200, 2
        %v2683 = vsel %vm2650, %v2681, %v2682
        %v2684 = vrot.slane %v2201, 2
        %v2685 = vsel %vm2650, %v2682, %v2684
        %v2686 = vrot.slane %v2202, 2
        %v2687 = vrot.slane %v2203, 2
        %v2688 = vsel %vm2650, %v2686, %v2687
        %v2689 = vrot.slane %v2204, 2
        %v2690 = vsel %vm2650, %v2687, %v2689
        %s2691 = scalar_lea.vmem %s3, 48
        %v2692 = vld [vmem:[%s2691] sm:$0xff]
        %v2693 = vld [vmem:[%s2691 + $0x8] sm:$0xff]
        %v2694 = vld [vmem:[%s2691 + $0x10] sm:$0xf]
        %v2695 = vsel %vm1701, %v2653, 0
        %v2697 = vsel %vm1701, %v2655, 0
        %v2699 = vsel %vm1701, %v2658, 0
        %v2701 = vsel %vm1701, %v2660, 0
        %v2703 = vsel %vm1701, %v2663, 0
        %v2705 = vsel %vm1701, %v2665, 0
        %v2707 = vsel %vm1701, %v2668, 0
        %v2709 = vsel %vm1701, %v2670, 0
        %v2711 = vsel %vm1701, %v2673, 0
        %v2713 = vsel %vm1701, %v2675, 0
        %v2715 = vsel %vm1701, %v2678, 0
        %v2717 = vsel %vm1701, %v2680, 0
        %v2719 = vsel %vm1701, %v2683, 0
        %v2721 = vsel %vm1701, %v2685, 0
        %v2723 = vsel %vm1701, %v2688, 0
        %v2725 = vsel %vm1701, %v2690, 0
        %v2728 = vsel %vm2321, %v2694, 0
        %2730 = vmatprep.subr.mxu0 0.0
        %2731 = vmatpush1.msra.mxu0 0.0
        %2732 = vmatprep.subr.mxu0 0.0
        %2733 = vmatpush1.msra.mxu0 0.0
        %2734 = vmatprep.subr.mxu0 0.0
        %2735 = vmatpush1.msra.mxu0 0.0
        %2736 = vmatprep.subr.mxu0 0.0
        %2737 = vmatpush1.msra.mxu0 0.0
        %2738 = vmatprep.subr.mxu0 0.0
        %2739 = vmatpush1.msra.mxu0 0.0
        %2740 = vmatprep.subr.mxu0 0.0
        %2741 = vmatpush1.msra.mxu0 0.0
        %2742 = vmatprep.subr.mxu0 0.0
        %2743 = vmatpush1.msra.mxu0 0.0
        %2744 = vmatprep.subr.mxu0 0.0
        %2745 = vmatpush1.msra.mxu0 0.0
        %2746 = vmatprep.subr.mxu0 0.0
        %2747 = vmatpush1.msra.mxu0 0.0
        %2748 = vmatprep.subr.mxu0 0.0
        %2749 = vmatpush1.msra.mxu0 0.0
        %2750 = vmatprep.subr.mxu0 0.0
        %2751 = vmatpush1.msra.mxu0 0.0
        %2752 = vmatprep.subr.mxu0 0.0
        %2753 = vmatpush1.msra.mxu0 0.0
        %2754 = vmatprep.subr.mxu0 0.0
        %2755 = vmatpush1.msra.mxu0 0.0
        %2756 = vmatprep.subr.mxu0 0.0
        %2757 = vmatpush1.msra.mxu0 %v2728
        %2758 = vmatprep.subr.mxu0 0.0
        %2759 = vmatpush1.msra.mxu0 %v2693
        %2760 = vmatprep.subr.mxu0 0.0
        %2761 = vmatpush1.msra.mxu0 %v2692
        %2762 = vmatprep.subr.mxu0 0.0
        %2763 = vmatpush2.msra.mxu0 0.0
        %2764 = vmatprep.subr.mxu0 0.0
        %2765 = vmatpush2.msra.mxu0 0.0
        %2766 = vmatprep.subr.mxu0 0.0
        %2767 = vmatpush2.msra.mxu0 0.0
        %2768 = vmatprep.subr.mxu0 0.0
        %2769 = vmatpush2.msra.mxu0 0.0
        %2770 = vmatprep.subr.mxu0 0.0
        %2771 = vmatpush2.msra.mxu0 0.0
        %2772 = vmatprep.subr.mxu0 0.0
        %2773 = vmatpush2.msra.mxu0 0.0
        %2774 = vmatprep.subr.mxu0 0.0
        %2775 = vmatpush2.msra.mxu0 0.0
        %2776 = vmatprep.subr.mxu0 0.0
        %2777 = vmatpush2.msra.mxu0 0.0
        %2778 = vmatprep.subr.mxu0 0.0
        %2779 = vmatpush2.msra.mxu0 0.0
        %2780 = vmatprep.subr.mxu0 0.0
        %2781 = vmatpush2.msra.mxu0 0.0
        %2782 = vmatprep.subr.mxu0 0.0
        %2783 = vmatpush2.msra.mxu0 0.0
        %2784 = vmatprep.subr.mxu0 0.0
        %2785 = vmatpush2.msra.mxu0 0.0
        %2786 = vmatprep.subr.mxu0 0.0
        %2787 = vmatpush2.msra.mxu0 0.0
        %2788 = vmatprep.subr.mxu0 0.0
        %2789 = vmatpush2.msra.mxu0 0.0
        %2790 = vmatprep.subr.mxu0 0.0
        %2791 = vmatpush2.msra.mxu0 0.0
        %2792 = vmatprep.subr.mxu0 0.0
        %2793 = vmatpush2.msra.mxu0 0.0
        %2794 = vmatprep.mubr.f32.mxu0 0.0
        %2795 = vmatmul.mubr.f32.gmra.mxu0 %v2695
        %v2796 = vpop.f32.mrf.mxu0
        %v2797 = vadd.f32 0.0, %v2796
        %v2798 = vpop.f32.mrf.mxu0
        %2799 = vmatprep.mubr.f32.mxu0 0.0
        %2800 = vmatmul.mubr.f32.gmra.mxu0 %v2697
        %v2801 = vpop.f32.mrf.mxu0
        %v2802 = vadd.f32 0.0, %v2801
        %v2803 = vpop.f32.mrf.mxu0
        %2804 = vmatprep.mubr.f32.mxu0 0.0
        %2805 = vmatmul.mubr.f32.gmra.mxu0 %v2699
        %v2806 = vpop.f32.mrf.mxu0
        %v2807 = vadd.f32 0.0, %v2806
        %v2808 = vpop.f32.mrf.mxu0
        %2809 = vmatprep.mubr.f32.mxu0 0.0
        %2810 = vmatmul.mubr.f32.gmra.mxu0 %v2701
        %v2811 = vpop.f32.mrf.mxu0
        %v2812 = vadd.f32 0.0, %v2811
        %v2813 = vpop.f32.mrf.mxu0
        %2814 = vmatprep.mubr.f32.mxu0 0.0
        %2815 = vmatmul.mubr.f32.gmra.mxu0 %v2703
        %v2816 = vpop.f32.mrf.mxu0
        %v2817 = vadd.f32 0.0, %v2816
        %v2818 = vpop.f32.mrf.mxu0
        %2819 = vmatprep.mubr.f32.mxu0 0.0
        %2820 = vmatmul.mubr.f32.gmra.mxu0 %v2705
        %v2821 = vpop.f32.mrf.mxu0
        %v2822 = vadd.f32 0.0, %v2821
        %v2823 = vpop.f32.mrf.mxu0
        %2824 = vmatprep.mubr.f32.mxu0 0.0
        %2825 = vmatmul.mubr.f32.gmra.mxu0 %v2707
        %v2826 = vpop.f32.mrf.mxu0
        %v2827 = vadd.f32 0.0, %v2826
        %v2828 = vpop.f32.mrf.mxu0
        %2829 = vmatprep.mubr.f32.mxu0 0.0
        %2830 = vmatmul.mubr.f32.gmra.mxu0 %v2709
        %v2831 = vpop.f32.mrf.mxu0
        %v2832 = vadd.f32 0.0, %v2831
        %v2833 = vpop.f32.mrf.mxu0
        %2834 = vmatprep.mubr.f32.mxu0 0.0
        %2835 = vmatmul.mubr.f32.gmra.mxu0 %v2711
        %v2836 = vpop.f32.mrf.mxu0
        %v2837 = vadd.f32 0.0, %v2836
        %v2838 = vpop.f32.mrf.mxu0
        %2839 = vmatprep.mubr.f32.mxu0 0.0
        %2840 = vmatmul.mubr.f32.gmra.mxu0 %v2713
        %v2841 = vpop.f32.mrf.mxu0
        %v2842 = vadd.f32 0.0, %v2841
        %v2843 = vpop.f32.mrf.mxu0
        %2844 = vmatprep.mubr.f32.mxu0 0.0
        %2845 = vmatmul.mubr.f32.gmra.mxu0 %v2715
        %v2846 = vpop.f32.mrf.mxu0
        %v2847 = vadd.f32 0.0, %v2846
        %v2848 = vpop.f32.mrf.mxu0
        %2849 = vmatprep.mubr.f32.mxu0 0.0
        %2850 = vmatmul.mubr.f32.gmra.mxu0 %v2717
        %v2851 = vpop.f32.mrf.mxu0
        %v2852 = vadd.f32 0.0, %v2851
        %v2853 = vpop.f32.mrf.mxu0
        %2854 = vmatprep.mubr.f32.mxu0 0.0
        %2855 = vmatmul.mubr.f32.gmra.mxu0 %v2719
        %v2856 = vpop.f32.mrf.mxu0
        %v2857 = vadd.f32 0.0, %v2856
        %v2858 = vpop.f32.mrf.mxu0
        %2859 = vmatprep.mubr.f32.mxu0 0.0
        %2860 = vmatmul.mubr.f32.gmra.mxu0 %v2721
        %v2861 = vpop.f32.mrf.mxu0
        %v2862 = vadd.f32 0.0, %v2861
        %v2863 = vpop.f32.mrf.mxu0
        %2864 = vmatprep.mubr.f32.mxu0 0.0
        %2865 = vmatmul.mubr.f32.gmra.mxu0 %v2723
        %v2866 = vpop.f32.mrf.mxu0
        %v2867 = vadd.f32 0.0, %v2866
        %v2868 = vpop.f32.mrf.mxu0
        %2869 = vmatprep.mubr.f32.mxu0 0.0
        %2870 = vmatmul.mubr.f32.gmra.mxu0 %v2725
        %v2871 = vpop.f32.mrf.mxu0
        %v2872 = vadd.f32 0.0, %v2871
        %v2873 = vpop.f32.mrf.mxu0
        %2874 = vdwg.mxu0
        %v2875 = vadd.f32 %v2572, %v2797
        %v2876 = vadd.f32 %v2577, %v2802
        %v2877 = vadd.f32 %v2582, %v2807
        %v2878 = vadd.f32 %v2587, %v2812
        %v2879 = vadd.f32 %v2592, %v2817
        %v2880 = vadd.f32 %v2597, %v2822
        %v2881 = vadd.f32 %v2602, %v2827
        %v2882 = vadd.f32 %v2607, %v2832
        %v2883 = vadd.f32 %v2612, %v2837
        %v2884 = vadd.f32 %v2617, %v2842
        %v2885 = vadd.f32 %v2622, %v2847
        %v2886 = vadd.f32 %v2627, %v2852
        %v2887 = vadd.f32 %v2632, %v2857
        %v2888 = vadd.f32 %v2637, %v2862
        %v2889 = vadd.f32 %v2642, %v2867
        %v2890 = vadd.f32 %v2647, %v2872
        %vm2891 = vcmask 1044480
        %v2892 = vrot.slane %v2181, 3
        %v2893 = vrot.slane %v2182, 3
        %v2894 = vsel %vm2891, %v2892, %v2893
        %v2895 = vrot.slane %v2183, 3
        %v2896 = vsel %vm2891, %v2893, %v2895
        %v2897 = vrot.slane %v2184, 3
        %v2898 = vrot.slane %v2185, 3
        %v2899 = vsel %vm2891, %v2897, %v2898
        %v2900 = vrot.slane %v2186, 3
        %v2901 = vsel %vm2891, %v2898, %v2900
        %v2902 = vrot.slane %v2187, 3
        %v2903 = vrot.slane %v2188, 3
        %v2904 = vsel %vm2891, %v2902, %v2903
        %v2905 = vrot.slane %v2189, 3
        %v2906 = vsel %vm2891, %v2903, %v2905
        %v2907 = vrot.slane %v2190, 3
        %v2908 = vrot.slane %v2191, 3
        %v2909 = vsel %vm2891, %v2907, %v2908
        %v2910 = vrot.slane %v2192, 3
        %v2911 = vsel %vm2891, %v2908, %v2910
        %v2912 = vrot.slane %v2193, 3
        %v2913 = vrot.slane %v2194, 3
        %v2914 = vsel %vm2891, %v2912, %v2913
        %v2915 = vrot.slane %v2195, 3
        %v2916 = vsel %vm2891, %v2913, %v2915
        %v2917 = vrot.slane %v2196, 3
        %v2918 = vrot.slane %v2197, 3
        %v2919 = vsel %vm2891, %v2917, %v2918
        %v2920 = vrot.slane %v2198, 3
        %v2921 = vsel %vm2891, %v2918, %v2920
        %v2922 = vrot.slane %v2199, 3
        %v2923 = vrot.slane %v2200, 3
        %v2924 = vsel %vm2891, %v2922, %v2923
        %v2925 = vrot.slane %v2201, 3
        %v2926 = vsel %vm2891, %v2923, %v2925
        %v2927 = vrot.slane %v2202, 3
        %v2928 = vrot.slane %v2203, 3
        %v2929 = vsel %vm2891, %v2927, %v2928
        %v2930 = vrot.slane %v2204, 3
        %v2931 = vsel %vm2891, %v2928, %v2930
        %s2932 = scalar_lea.vmem %s3, 72
        %v2933 = vld [vmem:[%s2932] sm:$0xff]
        %v2934 = vld [vmem:[%s2932 + $0x8] sm:$0xff]
        %v2935 = vld [vmem:[%s2932 + $0x10] sm:$0xf]
        %v2936 = vsel %vm1701, %v2894, 0
        %v2938 = vsel %vm1701, %v2896, 0
        %v2940 = vsel %vm1701, %v2899, 0
        %v2942 = vsel %vm1701, %v2901, 0
        %v2944 = vsel %vm1701, %v2904, 0
        %v2946 = vsel %vm1701, %v2906, 0
        %v2948 = vsel %vm1701, %v2909, 0
        %v2950 = vsel %vm1701, %v2911, 0
        %v2952 = vsel %vm1701, %v2914, 0
        %v2954 = vsel %vm1701, %v2916, 0
        %v2956 = vsel %vm1701, %v2919, 0
        %v2958 = vsel %vm1701, %v2921, 0
        %v2960 = vsel %vm1701, %v2924, 0
        %v2962 = vsel %vm1701, %v2926, 0
        %v2964 = vsel %vm1701, %v2929, 0
        %v2966 = vsel %vm1701, %v2931, 0
        %v2969 = vsel %vm2321, %v2935, 0
        %2971 = vmatprep.subr.mxu0 0.0
        %2972 = vmatpush1.msra.mxu0 0.0
        %2973 = vmatprep.subr.mxu0 0.0
        %2974 = vmatpush1.msra.mxu0 0.0
        %2975 = vmatprep.subr.mxu0 0.0
        %2976 = vmatpush1.msra.mxu0 0.0
        %2977 = vmatprep.subr.mxu0 0.0
        %2978 = vmatpush1.msra.mxu0 0.0
        %2979 = vmatprep.subr.mxu0 0.0
        %2980 = vmatpush1.msra.mxu0 0.0
        %2981 = vmatprep.subr.mxu0 0.0
        %2982 = vmatpush1.msra.mxu0 0.0
        %2983 = vmatprep.subr.mxu0 0.0
        %2984 = vmatpush1.msra.mxu0 0.0
        %2985 = vmatprep.subr.mxu0 0.0
        %2986 = vmatpush1.msra.mxu0 0.0
        %2987 = vmatprep.subr.mxu0 0.0
        %2988 = vmatpush1.msra.mxu0 0.0
        %2989 = vmatprep.subr.mxu0 0.0
        %2990 = vmatpush1.msra.mxu0 0.0
        %2991 = vmatprep.subr.mxu0 0.0
        %2992 = vmatpush1.msra.mxu0 0.0
        %2993 = vmatprep.subr.mxu0 0.0
        %2994 = vmatpush1.msra.mxu0 0.0
        %2995 = vmatprep.subr.mxu0 0.0
        %2996 = vmatpush1.msra.mxu0 0.0
        %2997 = vmatprep.subr.mxu0 0.0
        %2998 = vmatpush1.msra.mxu0 %v2969
        %2999 = vmatprep.subr.mxu0 0.0
        %3000 = vmatpush1.msra.mxu0 %v2934
        %3001 = vmatprep.subr.mxu0 0.0
        %3002 = vmatpush1.msra.mxu0 %v2933
        %3003 = vmatprep.subr.mxu0 0.0
        %3004 = vmatpush2.msra.mxu0 0.0
        %3005 = vmatprep.subr.mxu0 0.0
        %3006 = vmatpush2.msra.mxu0 0.0
        %3007 = vmatprep.subr.mxu0 0.0
        %3008 = vmatpush2.msra.mxu0 0.0
        %3009 = vmatprep.subr.mxu0 0.0
        %3010 = vmatpush2.msra.mxu0 0.0
        %3011 = vmatprep.subr.mxu0 0.0
        %3012 = vmatpush2.msra.mxu0 0.0
        %3013 = vmatprep.subr.mxu0 0.0
        %3014 = vmatpush2.msra.mxu0 0.0
        %3015 = vmatprep.subr.mxu0 0.0
        %3016 = vmatpush2.msra.mxu0 0.0
        %3017 = vmatprep.subr.mxu0 0.0
        %3018 = vmatpush2.msra.mxu0 0.0
        %3019 = vmatprep.subr.mxu0 0.0
        %3020 = vmatpush2.msra.mxu0 0.0
        %3021 = vmatprep.subr.mxu0 0.0
        %3022 = vmatpush2.msra.mxu0 0.0
        %3023 = vmatprep.subr.mxu0 0.0
        %3024 = vmatpush2.msra.mxu0 0.0
        %3025 = vmatprep.subr.mxu0 0.0
        %3026 = vmatpush2.msra.mxu0 0.0
        %3027 = vmatprep.subr.mxu0 0.0
        %3028 = vmatpush2.msra.mxu0 0.0
        %3029 = vmatprep.subr.mxu0 0.0
        %3030 = vmatpush2.msra.mxu0 0.0
        %3031 = vmatprep.subr.mxu0 0.0
        %3032 = vmatpush2.msra.mxu0 0.0
        %3033 = vmatprep.subr.mxu0 0.0
        %3034 = vmatpush2.msra.mxu0 0.0
        %3035 = vmatprep.mubr.f32.mxu0 0.0
        %3036 = vmatmul.mubr.f32.gmra.mxu0 %v2936
        %v3037 = vpop.f32.mrf.mxu0
        %v3038 = vadd.f32 0.0, %v3037
        %v3039 = vpop.f32.mrf.mxu0
        %3040 = vmatprep.mubr.f32.mxu0 0.0
        %3041 = vmatmul.mubr.f32.gmra.mxu0 %v2938
        %v3042 = vpop.f32.mrf.mxu0
        %v3043 = vadd.f32 0.0, %v3042
        %v3044 = vpop.f32.mrf.mxu0
        %3045 = vmatprep.mubr.f32.mxu0 0.0
        %3046 = vmatmul.mubr.f32.gmra.mxu0 %v2940
        %v3047 = vpop.f32.mrf.mxu0
        %v3048 = vadd.f32 0.0, %v3047
        %v3049 = vpop.f32.mrf.mxu0
        %3050 = vmatprep.mubr.f32.mxu0 0.0
        %3051 = vmatmul.mubr.f32.gmra.mxu0 %v2942
        %v3052 = vpop.f32.mrf.mxu0
        %v3053 = vadd.f32 0.0, %v3052
        %v3054 = vpop.f32.mrf.mxu0
        %3055 = vmatprep.mubr.f32.mxu0 0.0
        %3056 = vmatmul.mubr.f32.gmra.mxu0 %v2944
        %v3057 = vpop.f32.mrf.mxu0
        %v3058 = vadd.f32 0.0, %v3057
        %v3059 = vpop.f32.mrf.mxu0
        %3060 = vmatprep.mubr.f32.mxu0 0.0
        %3061 = vmatmul.mubr.f32.gmra.mxu0 %v2946
        %v3062 = vpop.f32.mrf.mxu0
        %v3063 = vadd.f32 0.0, %v3062
        %v3064 = vpop.f32.mrf.mxu0
        %3065 = vmatprep.mubr.f32.mxu0 0.0
        %3066 = vmatmul.mubr.f32.gmra.mxu0 %v2948
        %v3067 = vpop.f32.mrf.mxu0
        %v3068 = vadd.f32 0.0, %v3067
        %v3069 = vpop.f32.mrf.mxu0
        %3070 = vmatprep.mubr.f32.mxu0 0.0
        %3071 = vmatmul.mubr.f32.gmra.mxu0 %v2950
        %v3072 = vpop.f32.mrf.mxu0
        %v3073 = vadd.f32 0.0, %v3072
        %v3074 = vpop.f32.mrf.mxu0
        %3075 = vmatprep.mubr.f32.mxu0 0.0
        %3076 = vmatmul.mubr.f32.gmra.mxu0 %v2952
        %v3077 = vpop.f32.mrf.mxu0
        %v3078 = vadd.f32 0.0, %v3077
        %v3079 = vpop.f32.mrf.mxu0
        %3080 = vmatprep.mubr.f32.mxu0 0.0
        %3081 = vmatmul.mubr.f32.gmra.mxu0 %v2954
        %v3082 = vpop.f32.mrf.mxu0
        %v3083 = vadd.f32 0.0, %v3082
        %v3084 = vpop.f32.mrf.mxu0
        %3085 = vmatprep.mubr.f32.mxu0 0.0
        %3086 = vmatmul.mubr.f32.gmra.mxu0 %v2956
        %v3087 = vpop.f32.mrf.mxu0
        %v3088 = vadd.f32 0.0, %v3087
        %v3089 = vpop.f32.mrf.mxu0
        %3090 = vmatprep.mubr.f32.mxu0 0.0
        %3091 = vmatmul.mubr.f32.gmra.mxu0 %v2958
        %v3092 = vpop.f32.mrf.mxu0
        %v3093 = vadd.f32 0.0, %v3092
        %v3094 = vpop.f32.mrf.mxu0
        %3095 = vmatprep.mubr.f32.mxu0 0.0
        %3096 = vmatmul.mubr.f32.gmra.mxu0 %v2960
        %v3097 = vpop.f32.mrf.mxu0
        %v3098 = vadd.f32 0.0, %v3097
        %v3099 = vpop.f32.mrf.mxu0
        %3100 = vmatprep.mubr.f32.mxu0 0.0
        %3101 = vmatmul.mubr.f32.gmra.mxu0 %v2962
        %v3102 = vpop.f32.mrf.mxu0
        %v3103 = vadd.f32 0.0, %v3102
        %v3104 = vpop.f32.mrf.mxu0
        %3105 = vmatprep.mubr.f32.mxu0 0.0
        %3106 = vmatmul.mubr.f32.gmra.mxu0 %v2964
        %v3107 = vpop.f32.mrf.mxu0
        %v3108 = vadd.f32 0.0, %v3107
        %v3109 = vpop.f32.mrf.mxu0
        %3110 = vmatprep.mubr.f32.mxu0 0.0
        %3111 = vmatmul.mubr.f32.gmra.mxu0 %v2966
        %v3112 = vpop.f32.mrf.mxu0
        %v3113 = vadd.f32 0.0, %v3112
        %v3114 = vpop.f32.mrf.mxu0
        %3115 = vdwg.mxu0
        %v3116 = vadd.f32 %v2875, %v3038
        %v3117 = vadd.f32 %v2876, %v3043
        %v3118 = vadd.f32 %v2877, %v3048
        %v3119 = vadd.f32 %v2878, %v3053
        %v3120 = vadd.f32 %v2879, %v3058
        %v3121 = vadd.f32 %v2880, %v3063
        %v3122 = vadd.f32 %v2881, %v3068
        %v3123 = vadd.f32 %v2882, %v3073
        %v3124 = vadd.f32 %v2883, %v3078
        %v3125 = vadd.f32 %v2884, %v3083
        %v3126 = vadd.f32 %v2885, %v3088
        %v3127 = vadd.f32 %v2886, %v3093
        %v3128 = vadd.f32 %v2887, %v3098
        %v3129 = vadd.f32 %v2888, %v3103
        %v3130 = vadd.f32 %v2889, %v3108
        %v3131 = vadd.f32 %v2890, %v3113
        %v3132 = vrot.slane %v2181, 4
        %v3133 = vrot.slane %v2182, 4
        %v3134 = vsel %vm2321, %v3132, %v3133
        %v3135 = vrot.slane %v2183, 4
        %v3136 = vsel %vm2321, %v3133, %v3135
        %v3137 = vrot.slane %v2184, 4
        %v3138 = vrot.slane %v2185, 4
        %v3139 = vsel %vm2321, %v3137, %v3138
        %v3140 = vrot.slane %v2186, 4
        %v3141 = vsel %vm2321, %v3138, %v3140
        %v3142 = vrot.slane %v2187, 4
        %v3143 = vrot.slane %v2188, 4
        %v3144 = vsel %vm2321, %v3142, %v3143
        %v3145 = vrot.slane %v2189, 4
        %v3146 = vsel %vm2321, %v3143, %v3145
        %v3147 = vrot.slane %v2190, 4
        %v3148 = vrot.slane %v2191, 4
        %v3149 = vsel %vm2321, %v3147, %v3148
        %v3150 = vrot.slane %v2192, 4
        %v3151 = vsel %vm2321, %v3148, %v3150
        %v3152 = vrot.slane %v2193, 4
        %v3153 = vrot.slane %v2194, 4
        %v3154 = vsel %vm2321, %v3152, %v3153
        %v3155 = vrot.slane %v2195, 4
        %v3156 = vsel %vm2321, %v3153, %v3155
        %v3157 = vrot.slane %v2196, 4
        %v3158 = vrot.slane %v2197, 4
        %v3159 = vsel %vm2321, %v3157, %v3158
        %v3160 = vrot.slane %v2198, 4
        %v3161 = vsel %vm2321, %v3158, %v3160
        %v3162 = vrot.slane %v2199, 4
        %v3163 = vrot.slane %v2200, 4
        %v3164 = vsel %vm2321, %v3162, %v3163
        %v3165 = vrot.slane %v2201, 4
        %v3166 = vsel %vm2321, %v3163, %v3165
        %v3167 = vrot.slane %v2202, 4
        %v3168 = vrot.slane %v2203, 4
        %v3169 = vsel %vm2321, %v3167, %v3168
        %v3170 = vrot.slane %v2204, 4
        %v3171 = vsel %vm2321, %v3168, %v3170
        %s3172 = scalar_lea.vmem %s3, 96
        %v3173 = vld [vmem:[%s3172] sm:$0xff]
        %v3174 = vld [vmem:[%s3172 + $0x8] sm:$0xff]
        %v3175 = vld [vmem:[%s3172 + $0x10] sm:$0xf]
        %v3176 = vsel %vm1701, %v3134, 0
        %v3178 = vsel %vm1701, %v3136, 0
        %v3180 = vsel %vm1701, %v3139, 0
        %v3182 = vsel %vm1701, %v3141, 0
        %v3184 = vsel %vm1701, %v3144, 0
        %v3186 = vsel %vm1701, %v3146, 0
        %v3188 = vsel %vm1701, %v3149, 0
        %v3190 = vsel %vm1701, %v3151, 0
        %v3192 = vsel %vm1701, %v3154, 0
        %v3194 = vsel %vm1701, %v3156, 0
        %v3196 = vsel %vm1701, %v3159, 0
        %v3198 = vsel %vm1701, %v3161, 0
        %v3200 = vsel %vm1701, %v3164, 0
        %v3202 = vsel %vm1701, %v3166, 0
        %v3204 = vsel %vm1701, %v3169, 0
        %v3206 = vsel %vm1701, %v3171, 0
        %v3209 = vsel %vm2321, %v3175, 0
        %3211 = vmatprep.subr.mxu0 0.0
        %3212 = vmatpush1.msra.mxu0 0.0
        %3213 = vmatprep.subr.mxu0 0.0
        %3214 = vmatpush1.msra.mxu0 0.0
        %3215 = vmatprep.subr.mxu0 0.0
        %3216 = vmatpush1.msra.mxu0 0.0
        %3217 = vmatprep.subr.mxu0 0.0
        %3218 = vmatpush1.msra.mxu0 0.0
        %3219 = vmatprep.subr.mxu0 0.0
        %3220 = vmatpush1.msra.mxu0 0.0
        %3221 = vmatprep.subr.mxu0 0.0
        %3222 = vmatpush1.msra.mxu0 0.0
        %3223 = vmatprep.subr.mxu0 0.0
        %3224 = vmatpush1.msra.mxu0 0.0
        %3225 = vmatprep.subr.mxu0 0.0
        %3226 = vmatpush1.msra.mxu0 0.0
        %3227 = vmatprep.subr.mxu0 0.0
        %3228 = vmatpush1.msra.mxu0 0.0
        %3229 = vmatprep.subr.mxu0 0.0
        %3230 = vmatpush1.msra.mxu0 0.0
        %3231 = vmatprep.subr.mxu0 0.0
        %3232 = vmatpush1.msra.mxu0 0.0
        %3233 = vmatprep.subr.mxu0 0.0
        %3234 = vmatpush1.msra.mxu0 0.0
        %3235 = vmatprep.subr.mxu0 0.0
        %3236 = vmatpush1.msra.mxu0 0.0
        %3237 = vmatprep.subr.mxu0 0.0
        %3238 = vmatpush1.msra.mxu0 %v3209
        %3239 = vmatprep.subr.mxu0 0.0
        %3240 = vmatpush1.msra.mxu0 %v3174
        %3241 = vmatprep.subr.mxu0 0.0
        %3242 = vmatpush1.msra.mxu0 %v3173
        %3243 = vmatprep.subr.mxu0 0.0
        %3244 = vmatpush2.msra.mxu0 0.0
        %3245 = vmatprep.subr.mxu0 0.0
        %3246 = vmatpush2.msra.mxu0 0.0
        %3247 = vmatprep.subr.mxu0 0.0
        %3248 = vmatpush2.msra.mxu0 0.0
        %3249 = vmatprep.subr.mxu0 0.0
        %3250 = vmatpush2.msra.mxu0 0.0
        %3251 = vmatprep.subr.mxu0 0.0
        %3252 = vmatpush2.msra.mxu0 0.0
        %3253 = vmatprep.subr.mxu0 0.0
        %3254 = vmatpush2.msra.mxu0 0.0
        %3255 = vmatprep.subr.mxu0 0.0
        %3256 = vmatpush2.msra.mxu0 0.0
        %3257 = vmatprep.subr.mxu0 0.0
        %3258 = vmatpush2.msra.mxu0 0.0
        %3259 = vmatprep.subr.mxu0 0.0
        %3260 = vmatpush2.msra.mxu0 0.0
        %3261 = vmatprep.subr.mxu0 0.0
        %3262 = vmatpush2.msra.mxu0 0.0
        %3263 = vmatprep.subr.mxu0 0.0
        %3264 = vmatpush2.msra.mxu0 0.0
        %3265 = vmatprep.subr.mxu0 0.0
        %3266 = vmatpush2.msra.mxu0 0.0
        %3267 = vmatprep.subr.mxu0 0.0
        %3268 = vmatpush2.msra.mxu0 0.0
        %3269 = vmatprep.subr.mxu0 0.0
        %3270 = vmatpush2.msra.mxu0 0.0
        %3271 = vmatprep.subr.mxu0 0.0
        %3272 = vmatpush2.msra.mxu0 0.0
        %3273 = vmatprep.subr.mxu0 0.0
        %3274 = vmatpush2.msra.mxu0 0.0
        %3275 = vmatprep.mubr.f32.mxu0 0.0
        %3276 = vmatmul.mubr.f32.gmra.mxu0 %v3176
        %v3277 = vpop.f32.mrf.mxu0
        %v3278 = vadd.f32 0.0, %v3277
        %v3279 = vpop.f32.mrf.mxu0
        %3280 = vmatprep.mubr.f32.mxu0 0.0
        %3281 = vmatmul.mubr.f32.gmra.mxu0 %v3178
        %v3282 = vpop.f32.mrf.mxu0
        %v3283 = vadd.f32 0.0, %v3282
        %v3284 = vpop.f32.mrf.mxu0
        %3285 = vmatprep.mubr.f32.mxu0 0.0
        %3286 = vmatmul.mubr.f32.gmra.mxu0 %v3180
        %v3287 = vpop.f32.mrf.mxu0
        %v3288 = vadd.f32 0.0, %v3287
        %v3289 = vpop.f32.mrf.mxu0
        %3290 = vmatprep.mubr.f32.mxu0 0.0
        %3291 = vmatmul.mubr.f32.gmra.mxu0 %v3182
        %v3292 = vpop.f32.mrf.mxu0
        %v3293 = vadd.f32 0.0, %v3292
        %v3294 = vpop.f32.mrf.mxu0
        %3295 = vmatprep.mubr.f32.mxu0 0.0
        %3296 = vmatmul.mubr.f32.gmra.mxu0 %v3184
        %v3297 = vpop.f32.mrf.mxu0
        %v3298 = vadd.f32 0.0, %v3297
        %v3299 = vpop.f32.mrf.mxu0
        %3300 = vmatprep.mubr.f32.mxu0 0.0
        %3301 = vmatmul.mubr.f32.gmra.mxu0 %v3186
        %v3302 = vpop.f32.mrf.mxu0
        %v3303 = vadd.f32 0.0, %v3302
        %v3304 = vpop.f32.mrf.mxu0
        %3305 = vmatprep.mubr.f32.mxu0 0.0
        %3306 = vmatmul.mubr.f32.gmra.mxu0 %v3188
        %v3307 = vpop.f32.mrf.mxu0
        %v3308 = vadd.f32 0.0, %v3307
        %v3309 = vpop.f32.mrf.mxu0
        %3310 = vmatprep.mubr.f32.mxu0 0.0
        %3311 = vmatmul.mubr.f32.gmra.mxu0 %v3190
        %v3312 = vpop.f32.mrf.mxu0
        %v3313 = vadd.f32 0.0, %v3312
        %v3314 = vpop.f32.mrf.mxu0
        %3315 = vmatprep.mubr.f32.mxu0 0.0
        %3316 = vmatmul.mubr.f32.gmra.mxu0 %v3192
        %v3317 = vpop.f32.mrf.mxu0
        %v3318 = vadd.f32 0.0, %v3317
        %v3319 = vpop.f32.mrf.mxu0
        %3320 = vmatprep.mubr.f32.mxu0 0.0
        %3321 = vmatmul.mubr.f32.gmra.mxu0 %v3194
        %v3322 = vpop.f32.mrf.mxu0
        %v3323 = vadd.f32 0.0, %v3322
        %v3324 = vpop.f32.mrf.mxu0
        %3325 = vmatprep.mubr.f32.mxu0 0.0
        %3326 = vmatmul.mubr.f32.gmra.mxu0 %v3196
        %v3327 = vpop.f32.mrf.mxu0
        %v3328 = vadd.f32 0.0, %v3327
        %v3329 = vpop.f32.mrf.mxu0
        %3330 = vmatprep.mubr.f32.mxu0 0.0
        %3331 = vmatmul.mubr.f32.gmra.mxu0 %v3198
        %v3332 = vpop.f32.mrf.mxu0
        %v3333 = vadd.f32 0.0, %v3332
        %v3334 = vpop.f32.mrf.mxu0
        %3335 = vmatprep.mubr.f32.mxu0 0.0
        %3336 = vmatmul.mubr.f32.gmra.mxu0 %v3200
        %v3337 = vpop.f32.mrf.mxu0
        %v3338 = vadd.f32 0.0, %v3337
        %v3339 = vpop.f32.mrf.mxu0
        %3340 = vmatprep.mubr.f32.mxu0 0.0
        %3341 = vmatmul.mubr.f32.gmra.mxu0 %v3202
        %v3342 = vpop.f32.mrf.mxu0
        %v3343 = vadd.f32 0.0, %v3342
        %v3344 = vpop.f32.mrf.mxu0
        %3345 = vmatprep.mubr.f32.mxu0 0.0
        %3346 = vmatmul.mubr.f32.gmra.mxu0 %v3204
        %v3347 = vpop.f32.mrf.mxu0
        %v3348 = vadd.f32 0.0, %v3347
        %v3349 = vpop.f32.mrf.mxu0
        %3350 = vmatprep.mubr.f32.mxu0 0.0
        %3351 = vmatmul.mubr.f32.gmra.mxu0 %v3206
        %v3352 = vpop.f32.mrf.mxu0
        %v3353 = vadd.f32 0.0, %v3352
        %v3354 = vpop.f32.mrf.mxu0
        %3355 = vdwg.mxu0
        %v3356 = vadd.f32 %v3116, %v3278
        %v3357 = vadd.f32 %v3117, %v3283
        %v3358 = vadd.f32 %v3118, %v3288
        %v3359 = vadd.f32 %v3119, %v3293
        %v3360 = vadd.f32 %v3120, %v3298
        %v3361 = vadd.f32 %v3121, %v3303
        %v3362 = vadd.f32 %v3122, %v3308
        %v3363 = vadd.f32 %v3123, %v3313
        %v3364 = vadd.f32 %v3124, %v3318
        %v3365 = vadd.f32 %v3125, %v3323
        %v3366 = vadd.f32 %v3126, %v3328
        %v3367 = vadd.f32 %v3127, %v3333
        %v3368 = vadd.f32 %v3128, %v3338
        %v3369 = vadd.f32 %v3129, %v3343
        %v3370 = vadd.f32 %v3130, %v3348
        %v3371 = vadd.f32 %v3131, %v3353
        %s3372 = scalar_lea.vmem %s3, 120
        %v3373 = vld [vmem:[%s3372] sm:$0xff]
        %v3374 = vld [vmem:[%s3372 + $0x8] sm:$0xff]
        %v3375 = vld [vmem:[%s3372 + $0x10] sm:$0xf]
        %v3377 = vsel %vm1701, %v2205, 0
        %v3380 = vsel %vm1701, %v2206, 0
        %v3383 = vsel %vm2321, %v3375, 0
        %3385 = vmatprep.subr.mxu0 0.0
        %3386 = vmatpush1.msra.mxu0 0.0
        %3387 = vmatprep.subr.mxu0 0.0
        %3388 = vmatpush1.msra.mxu0 0.0
        %3389 = vmatprep.subr.mxu0 0.0
        %3390 = vmatpush1.msra.mxu0 0.0
        %3391 = vmatprep.subr.mxu0 0.0
        %3392 = vmatpush1.msra.mxu0 0.0
        %3393 = vmatprep.subr.mxu0 0.0
        %3394 = vmatpush1.msra.mxu0 0.0
        %3395 = vmatprep.subr.mxu0 0.0
        %3396 = vmatpush1.msra.mxu0 0.0
        %3397 = vmatprep.subr.mxu0 0.0
        %3398 = vmatpush1.msra.mxu0 0.0
        %3399 = vmatprep.subr.mxu0 0.0
        %3400 = vmatpush1.msra.mxu0 0.0
        %3401 = vmatprep.subr.mxu0 0.0
        %3402 = vmatpush1.msra.mxu0 0.0
        %3403 = vmatprep.subr.mxu0 0.0
        %3404 = vmatpush1.msra.mxu0 0.0
        %3405 = vmatprep.subr.mxu0 0.0
        %3406 = vmatpush1.msra.mxu0 0.0
        %3407 = vmatprep.subr.mxu0 0.0
        %3408 = vmatpush1.msra.mxu0 0.0
        %3409 = vmatprep.subr.mxu0 0.0
        %3410 = vmatpush1.msra.mxu0 0.0
        %3411 = vmatprep.subr.mxu0 0.0
        %3412 = vmatpush1.msra.mxu0 %v3383
        %3413 = vmatprep.subr.mxu0 0.0
        %3414 = vmatpush1.msra.mxu0 %v3374
        %3415 = vmatprep.subr.mxu0 0.0
        %3416 = vmatpush1.msra.mxu0 %v3373
        %3417 = vmatprep.subr.mxu0 0.0
        %3418 = vmatpush2.msra.mxu0 0.0
        %3419 = vmatprep.subr.mxu0 0.0
        %3420 = vmatpush2.msra.mxu0 0.0
        %3421 = vmatprep.subr.mxu0 0.0
        %3422 = vmatpush2.msra.mxu0 0.0
        %3423 = vmatprep.subr.mxu0 0.0
        %3424 = vmatpush2.msra.mxu0 0.0
        %3425 = vmatprep.subr.mxu0 0.0
        %3426 = vmatpush2.msra.mxu0 0.0
        %3427 = vmatprep.subr.mxu0 0.0
        %3428 = vmatpush2.msra.mxu0 0.0
        %3429 = vmatprep.subr.mxu0 0.0
        %3430 = vmatpush2.msra.mxu0 0.0
        %3431 = vmatprep.subr.mxu0 0.0
        %3432 = vmatpush2.msra.mxu0 0.0
        %3433 = vmatprep.subr.mxu0 0.0
        %3434 = vmatpush2.msra.mxu0 0.0
        %3435 = vmatprep.subr.mxu0 0.0
        %3436 = vmatpush2.msra.mxu0 0.0
        %3437 = vmatprep.subr.mxu0 0.0
        %3438 = vmatpush2.msra.mxu0 0.0
        %3439 = vmatprep.subr.mxu0 0.0
        %3440 = vmatpush2.msra.mxu0 0.0
        %3441 = vmatprep.subr.mxu0 0.0
        %3442 = vmatpush2.msra.mxu0 0.0
        %3443 = vmatprep.subr.mxu0 0.0
        %3444 = vmatpush2.msra.mxu0 0.0
        %3445 = vmatprep.subr.mxu0 0.0
        %3446 = vmatpush2.msra.mxu0 0.0
        %3447 = vmatprep.subr.mxu0 0.0
        %3448 = vmatpush2.msra.mxu0 0.0
        %3449 = vmatprep.mubr.f32.mxu0 0.0
        %3450 = vmatmul.mubr.f32.gmra.mxu0 %v2474
        %v3451 = vpop.f32.mrf.mxu0
        %v3452 = vadd.f32 0.0, %v3451
        %v3453 = vpop.f32.mrf.mxu0
        %3454 = vmatprep.mubr.f32.mxu0 0.0
        %3455 = vmatmul.mubr.f32.gmra.mxu0 %v2476
        %v3456 = vpop.f32.mrf.mxu0
        %v3457 = vadd.f32 0.0, %v3456
        %v3458 = vpop.f32.mrf.mxu0
        %3459 = vmatprep.mubr.f32.mxu0 0.0
        %3460 = vmatmul.mubr.f32.gmra.mxu0 %v2478
        %v3461 = vpop.f32.mrf.mxu0
        %v3462 = vadd.f32 0.0, %v3461
        %v3463 = vpop.f32.mrf.mxu0
        %3464 = vmatprep.mubr.f32.mxu0 0.0
        %3465 = vmatmul.mubr.f32.gmra.mxu0 %v2480
        %v3466 = vpop.f32.mrf.mxu0
        %v3467 = vadd.f32 0.0, %v3466
        %v3468 = vpop.f32.mrf.mxu0
        %3469 = vmatprep.mubr.f32.mxu0 0.0
        %3470 = vmatmul.mubr.f32.gmra.mxu0 %v2482
        %v3471 = vpop.f32.mrf.mxu0
        %v3472 = vadd.f32 0.0, %v3471
        %v3473 = vpop.f32.mrf.mxu0
        %3474 = vmatprep.mubr.f32.mxu0 0.0
        %3475 = vmatmul.mubr.f32.gmra.mxu0 %v2484
        %v3476 = vpop.f32.mrf.mxu0
        %v3477 = vadd.f32 0.0, %v3476
        %v3478 = vpop.f32.mrf.mxu0
        %3479 = vmatprep.mubr.f32.mxu0 0.0
        %3480 = vmatmul.mubr.f32.gmra.mxu0 %v2486
        %v3481 = vpop.f32.mrf.mxu0
        %v3482 = vadd.f32 0.0, %v3481
        %v3483 = vpop.f32.mrf.mxu0
        %3484 = vmatprep.mubr.f32.mxu0 0.0
        %3485 = vmatmul.mubr.f32.gmra.mxu0 %v2488
        %v3486 = vpop.f32.mrf.mxu0
        %v3487 = vadd.f32 0.0, %v3486
        %v3488 = vpop.f32.mrf.mxu0
        %3489 = vmatprep.mubr.f32.mxu0 0.0
        %3490 = vmatmul.mubr.f32.gmra.mxu0 %v2490
        %v3491 = vpop.f32.mrf.mxu0
        %v3492 = vadd.f32 0.0, %v3491
        %v3493 = vpop.f32.mrf.mxu0
        %3494 = vmatprep.mubr.f32.mxu0 0.0
        %3495 = vmatmul.mubr.f32.gmra.mxu0 %v2492
        %v3496 = vpop.f32.mrf.mxu0
        %v3497 = vadd.f32 0.0, %v3496
        %v3498 = vpop.f32.mrf.mxu0
        %3499 = vmatprep.mubr.f32.mxu0 0.0
        %3500 = vmatmul.mubr.f32.gmra.mxu0 %v2494
        %v3501 = vpop.f32.mrf.mxu0
        %v3502 = vadd.f32 0.0, %v3501
        %v3503 = vpop.f32.mrf.mxu0
        %3504 = vmatprep.mubr.f32.mxu0 0.0
        %3505 = vmatmul.mubr.f32.gmra.mxu0 %v2496
        %v3506 = vpop.f32.mrf.mxu0
        %v3507 = vadd.f32 0.0, %v3506
        %v3508 = vpop.f32.mrf.mxu0
        %3509 = vmatprep.mubr.f32.mxu0 0.0
        %3510 = vmatmul.mubr.f32.gmra.mxu0 %v2498
        %v3511 = vpop.f32.mrf.mxu0
        %v3512 = vadd.f32 0.0, %v3511
        %v3513 = vpop.f32.mrf.mxu0
        %3514 = vmatprep.mubr.f32.mxu0 0.0
        %3515 = vmatmul.mubr.f32.gmra.mxu0 %v2500
        %v3516 = vpop.f32.mrf.mxu0
        %v3517 = vadd.f32 0.0, %v3516
        %v3518 = vpop.f32.mrf.mxu0
        %3519 = vmatprep.mubr.f32.mxu0 0.0
        %3520 = vmatmul.mubr.f32.gmra.mxu0 %v3377
        %v3521 = vpop.f32.mrf.mxu0
        %v3522 = vadd.f32 0.0, %v3521
        %v3523 = vpop.f32.mrf.mxu0
        %3524 = vmatprep.mubr.f32.mxu0 0.0
        %3525 = vmatmul.mubr.f32.gmra.mxu0 %v3380
        %v3526 = vpop.f32.mrf.mxu0
        %v3527 = vadd.f32 0.0, %v3526
        %v3528 = vpop.f32.mrf.mxu0
        %3529 = vdwg.mxu0
        %v3530 = vadd.f32 %v3356, %v3452
        %v3531 = vadd.f32 %v3357, %v3457
        %v3532 = vadd.f32 %v3358, %v3462
        %v3533 = vadd.f32 %v3359, %v3467
        %v3534 = vadd.f32 %v3360, %v3472
        %v3535 = vadd.f32 %v3361, %v3477
        %v3536 = vadd.f32 %v3362, %v3482
        %v3537 = vadd.f32 %v3363, %v3487
        %v3538 = vadd.f32 %v3364, %v3492
        %v3539 = vadd.f32 %v3365, %v3497
        %v3540 = vadd.f32 %v3366, %v3502
        %v3541 = vadd.f32 %v3367, %v3507
        %v3542 = vadd.f32 %v3368, %v3512
        %v3543 = vadd.f32 %v3369, %v3517
        %v3544 = vadd.f32 %v3370, %v3522
        %v3545 = vadd.f32 %v3371, %v3527
        %v3547 = vrot.slane %v2205, 1
        %v3548 = vrot.slane %v2206, 1
        %v3549 = vsel %vm2244, %v3547, %v3548
        %v3550 = vrot.slane %v2207, 1
        %v3551 = vsel %vm2244, %v3548, %v3550
        %s3552 = scalar_lea.vmem %s3, 144
        %v3553 = vld [vmem:[%s3552] sm:$0xff]
        %v3554 = vld [vmem:[%s3552 + $0x8] sm:$0xff]
        %v3555 = vld [vmem:[%s3552 + $0x10] sm:$0xf]
        %v3556 = vsel %vm1701, %v3549, 0
        %v3558 = vsel %vm1701, %v3551, 0
        %v3561 = vsel %vm2321, %v3555, 0
        %3563 = vmatprep.subr.mxu0 0.0
        %3564 = vmatpush1.msra.mxu0 0.0
        %3565 = vmatprep.subr.mxu0 0.0
        %3566 = vmatpush1.msra.mxu0 0.0
        %3567 = vmatprep.subr.mxu0 0.0
        %3568 = vmatpush1.msra.mxu0 0.0
        %3569 = vmatprep.subr.mxu0 0.0
        %3570 = vmatpush1.msra.mxu0 0.0
        %3571 = vmatprep.subr.mxu0 0.0
        %3572 = vmatpush1.msra.mxu0 0.0
        %3573 = vmatprep.subr.mxu0 0.0
        %3574 = vmatpush1.msra.mxu0 0.0
        %3575 = vmatprep.subr.mxu0 0.0
        %3576 = vmatpush1.msra.mxu0 0.0
        %3577 = vmatprep.subr.mxu0 0.0
        %3578 = vmatpush1.msra.mxu0 0.0
        %3579 = vmatprep.subr.mxu0 0.0
        %3580 = vmatpush1.msra.mxu0 0.0
        %3581 = vmatprep.subr.mxu0 0.0
        %3582 = vmatpush1.msra.mxu0 0.0
        %3583 = vmatprep.subr.mxu0 0.0
        %3584 = vmatpush1.msra.mxu0 0.0
        %3585 = vmatprep.subr.mxu0 0.0
        %3586 = vmatpush1.msra.mxu0 0.0
        %3587 = vmatprep.subr.mxu0 0.0
        %3588 = vmatpush1.msra.mxu0 0.0
        %3589 = vmatprep.subr.mxu0 0.0
        %3590 = vmatpush1.msra.mxu0 %v3561
        %3591 = vmatprep.subr.mxu0 0.0
        %3592 = vmatpush1.msra.mxu0 %v3554
        %3593 = vmatprep.subr.mxu0 0.0
        %3594 = vmatpush1.msra.mxu0 %v3553
        %3595 = vmatprep.subr.mxu0 0.0
        %3596 = vmatpush2.msra.mxu0 0.0
        %3597 = vmatprep.subr.mxu0 0.0
        %3598 = vmatpush2.msra.mxu0 0.0
        %3599 = vmatprep.subr.mxu0 0.0
        %3600 = vmatpush2.msra.mxu0 0.0
        %3601 = vmatprep.subr.mxu0 0.0
        %3602 = vmatpush2.msra.mxu0 0.0
        %3603 = vmatprep.subr.mxu0 0.0
        %3604 = vmatpush2.msra.mxu0 0.0
        %3605 = vmatprep.subr.mxu0 0.0
        %3606 = vmatpush2.msra.mxu0 0.0
        %3607 = vmatprep.subr.mxu0 0.0
        %3608 = vmatpush2.msra.mxu0 0.0
        %3609 = vmatprep.subr.mxu0 0.0
        %3610 = vmatpush2.msra.mxu0 0.0
        %3611 = vmatprep.subr.mxu0 0.0
        %3612 = vmatpush2.msra.mxu0 0.0
        %3613 = vmatprep.subr.mxu0 0.0
        %3614 = vmatpush2.msra.mxu0 0.0
        %3615 = vmatprep.subr.mxu0 0.0
        %3616 = vmatpush2.msra.mxu0 0.0
        %3617 = vmatprep.subr.mxu0 0.0
        %3618 = vmatpush2.msra.mxu0 0.0
        %3619 = vmatprep.subr.mxu0 0.0
        %3620 = vmatpush2.msra.mxu0 0.0
        %3621 = vmatprep.subr.mxu0 0.0
        %3622 = vmatpush2.msra.mxu0 0.0
        %3623 = vmatprep.subr.mxu0 0.0
        %3624 = vmatpush2.msra.mxu0 0.0
        %3625 = vmatprep.subr.mxu0 0.0
        %3626 = vmatpush2.msra.mxu0 0.0
        %3627 = vmatprep.mubr.f32.mxu0 0.0
        %3628 = vmatmul.mubr.f32.gmra.mxu0 %v2293
        %v3629 = vpop.f32.mrf.mxu0
        %v3630 = vadd.f32 0.0, %v3629
        %v3631 = vpop.f32.mrf.mxu0
        %3632 = vmatprep.mubr.f32.mxu0 0.0
        %3633 = vmatmul.mubr.f32.gmra.mxu0 %v2295
        %v3634 = vpop.f32.mrf.mxu0
        %v3635 = vadd.f32 0.0, %v3634
        %v3636 = vpop.f32.mrf.mxu0
        %3637 = vmatprep.mubr.f32.mxu0 0.0
        %3638 = vmatmul.mubr.f32.gmra.mxu0 %v2297
        %v3639 = vpop.f32.mrf.mxu0
        %v3640 = vadd.f32 0.0, %v3639
        %v3641 = vpop.f32.mrf.mxu0
        %3642 = vmatprep.mubr.f32.mxu0 0.0
        %3643 = vmatmul.mubr.f32.gmra.mxu0 %v2299
        %v3644 = vpop.f32.mrf.mxu0
        %v3645 = vadd.f32 0.0, %v3644
        %v3646 = vpop.f32.mrf.mxu0
        %3647 = vmatprep.mubr.f32.mxu0 0.0
        %3648 = vmatmul.mubr.f32.gmra.mxu0 %v2301
        %v3649 = vpop.f32.mrf.mxu0
        %v3650 = vadd.f32 0.0, %v3649
        %v3651 = vpop.f32.mrf.mxu0
        %3652 = vmatprep.mubr.f32.mxu0 0.0
        %3653 = vmatmul.mubr.f32.gmra.mxu0 %v2303
        %v3654 = vpop.f32.mrf.mxu0
        %v3655 = vadd.f32 0.0, %v3654
        %v3656 = vpop.f32.mrf.mxu0
        %3657 = vmatprep.mubr.f32.mxu0 0.0
        %3658 = vmatmul.mubr.f32.gmra.mxu0 %v2305
        %v3659 = vpop.f32.mrf.mxu0
        %v3660 = vadd.f32 0.0, %v3659
        %v3661 = vpop.f32.mrf.mxu0
        %3662 = vmatprep.mubr.f32.mxu0 0.0
        %3663 = vmatmul.mubr.f32.gmra.mxu0 %v2307
        %v3664 = vpop.f32.mrf.mxu0
        %v3665 = vadd.f32 0.0, %v3664
        %v3666 = vpop.f32.mrf.mxu0
        %3667 = vmatprep.mubr.f32.mxu0 0.0
        %3668 = vmatmul.mubr.f32.gmra.mxu0 %v2309
        %v3669 = vpop.f32.mrf.mxu0
        %v3670 = vadd.f32 0.0, %v3669
        %v3671 = vpop.f32.mrf.mxu0
        %3672 = vmatprep.mubr.f32.mxu0 0.0
        %3673 = vmatmul.mubr.f32.gmra.mxu0 %v2311
        %v3674 = vpop.f32.mrf.mxu0
        %v3675 = vadd.f32 0.0, %v3674
        %v3676 = vpop.f32.mrf.mxu0
        %3677 = vmatprep.mubr.f32.mxu0 0.0
        %3678 = vmatmul.mubr.f32.gmra.mxu0 %v2313
        %v3679 = vpop.f32.mrf.mxu0
        %v3680 = vadd.f32 0.0, %v3679
        %v3681 = vpop.f32.mrf.mxu0
        %3682 = vmatprep.mubr.f32.mxu0 0.0
        %3683 = vmatmul.mubr.f32.gmra.mxu0 %v2315
        %v3684 = vpop.f32.mrf.mxu0
        %v3685 = vadd.f32 0.0, %v3684
        %v3686 = vpop.f32.mrf.mxu0
        %3687 = vmatprep.mubr.f32.mxu0 0.0
        %3688 = vmatmul.mubr.f32.gmra.mxu0 %v2317
        %v3689 = vpop.f32.mrf.mxu0
        %v3690 = vadd.f32 0.0, %v3689
        %v3691 = vpop.f32.mrf.mxu0
        %3692 = vmatprep.mubr.f32.mxu0 0.0
        %3693 = vmatmul.mubr.f32.gmra.mxu0 %v2319
        %v3694 = vpop.f32.mrf.mxu0
        %v3695 = vadd.f32 0.0, %v3694
        %v3696 = vpop.f32.mrf.mxu0
        %3697 = vmatprep.mubr.f32.mxu0 0.0
        %3698 = vmatmul.mubr.f32.gmra.mxu0 %v3556
        %v3699 = vpop.f32.mrf.mxu0
        %v3700 = vadd.f32 0.0, %v3699
        %v3701 = vpop.f32.mrf.mxu0
        %3702 = vmatprep.mubr.f32.mxu0 0.0
        %3703 = vmatmul.mubr.f32.gmra.mxu0 %v3558
        %v3704 = vpop.f32.mrf.mxu0
        %v3705 = vadd.f32 0.0, %v3704
        %v3706 = vpop.f32.mrf.mxu0
        %3707 = vdwg.mxu0
        %v3708 = vadd.f32 %v3530, %v3630
        %v3709 = vadd.f32 %v3531, %v3635
        %v3710 = vadd.f32 %v3532, %v3640
        %v3711 = vadd.f32 %v3533, %v3645
        %v3712 = vadd.f32 %v3534, %v3650
        %v3713 = vadd.f32 %v3535, %v3655
        %v3714 = vadd.f32 %v3536, %v3660
        %v3715 = vadd.f32 %v3537, %v3665
        %v3716 = vadd.f32 %v3538, %v3670
        %v3717 = vadd.f32 %v3539, %v3675
        %v3718 = vadd.f32 %v3540, %v3680
        %v3719 = vadd.f32 %v3541, %v3685
        %v3720 = vadd.f32 %v3542, %v3690
        %v3721 = vadd.f32 %v3543, %v3695
        %v3722 = vadd.f32 %v3544, %v3700
        %v3723 = vadd.f32 %v3545, %v3705
        %v3724 = vrot.slane %v2205, 2
        %v3725 = vrot.slane %v2206, 2
        %v3726 = vsel %vm2650, %v3724, %v3725
        %v3727 = vrot.slane %v2207, 2
        %v3728 = vsel %vm2650, %v3725, %v3727
        %s3729 = scalar_lea.vmem %s3, 168
        %v3730 = vld [vmem:[%s3729] sm:$0xff]
        %v3731 = vld [vmem:[%s3729 + $0x8] sm:$0xff]
        %v3732 = vld [vmem:[%s3729 + $0x10] sm:$0xf]
        %v3733 = vsel %vm1701, %v3726, 0
        %v3735 = vsel %vm1701, %v3728, 0
        %v3738 = vsel %vm2321, %v3732, 0
        %3740 = vmatprep.subr.mxu0 0.0
        %3741 = vmatpush1.msra.mxu0 0.0
        %3742 = vmatprep.subr.mxu0 0.0
        %3743 = vmatpush1.msra.mxu0 0.0
        %3744 = vmatprep.subr.mxu0 0.0
        %3745 = vmatpush1.msra.mxu0 0.0
        %3746 = vmatprep.subr.mxu0 0.0
        %3747 = vmatpush1.msra.mxu0 0.0
        %3748 = vmatprep.subr.mxu0 0.0
        %3749 = vmatpush1.msra.mxu0 0.0
        %3750 = vmatprep.subr.mxu0 0.0
        %3751 = vmatpush1.msra.mxu0 0.0
        %3752 = vmatprep.subr.mxu0 0.0
        %3753 = vmatpush1.msra.mxu0 0.0
        %3754 = vmatprep.subr.mxu0 0.0
        %3755 = vmatpush1.msra.mxu0 0.0
        %3756 = vmatprep.subr.mxu0 0.0
        %3757 = vmatpush1.msra.mxu0 0.0
        %3758 = vmatprep.subr.mxu0 0.0
        %3759 = vmatpush1.msra.mxu0 0.0
        %3760 = vmatprep.subr.mxu0 0.0
        %3761 = vmatpush1.msra.mxu0 0.0
        %3762 = vmatprep.subr.mxu0 0.0
        %3763 = vmatpush1.msra.mxu0 0.0
        %3764 = vmatprep.subr.mxu0 0.0
        %3765 = vmatpush1.msra.mxu0 0.0
        %3766 = vmatprep.subr.mxu0 0.0
        %3767 = vmatpush1.msra.mxu0 %v3738
        %3768 = vmatprep.subr.mxu0 0.0
        %3769 = vmatpush1.msra.mxu0 %v3731
        %3770 = vmatprep.subr.mxu0 0.0
        %3771 = vmatpush1.msra.mxu0 %v3730
        %3772 = vmatprep.subr.mxu0 0.0
        %3773 = vmatpush2.msra.mxu0 0.0
        %3774 = vmatprep.subr.mxu0 0.0
        %3775 = vmatpush2.msra.mxu0 0.0
        %3776 = vmatprep.subr.mxu0 0.0
        %3777 = vmatpush2.msra.mxu0 0.0
        %3778 = vmatprep.subr.mxu0 0.0
        %3779 = vmatpush2.msra.mxu0 0.0
        %3780 = vmatprep.subr.mxu0 0.0
        %3781 = vmatpush2.msra.mxu0 0.0
        %3782 = vmatprep.subr.mxu0 0.0
        %3783 = vmatpush2.msra.mxu0 0.0
        %3784 = vmatprep.subr.mxu0 0.0
        %3785 = vmatpush2.msra.mxu0 0.0
        %3786 = vmatprep.subr.mxu0 0.0
        %3787 = vmatpush2.msra.mxu0 0.0
        %3788 = vmatprep.subr.mxu0 0.0
        %3789 = vmatpush2.msra.mxu0 0.0
        %3790 = vmatprep.subr.mxu0 0.0
        %3791 = vmatpush2.msra.mxu0 0.0
        %3792 = vmatprep.subr.mxu0 0.0
        %3793 = vmatpush2.msra.mxu0 0.0
        %3794 = vmatprep.subr.mxu0 0.0
        %3795 = vmatpush2.msra.mxu0 0.0
        %3796 = vmatprep.subr.mxu0 0.0
        %3797 = vmatpush2.msra.mxu0 0.0
        %3798 = vmatprep.subr.mxu0 0.0
        %3799 = vmatpush2.msra.mxu0 0.0
        %3800 = vmatprep.subr.mxu0 0.0
        %3801 = vmatpush2.msra.mxu0 0.0
        %3802 = vmatprep.subr.mxu0 0.0
        %3803 = vmatpush2.msra.mxu0 0.0
        %3804 = vmatprep.mubr.f32.mxu0 0.0
        %3805 = vmatmul.mubr.f32.gmra.mxu0 %v2699
        %v3806 = vpop.f32.mrf.mxu0
        %v3807 = vadd.f32 0.0, %v3806
        %v3808 = vpop.f32.mrf.mxu0
        %3809 = vmatprep.mubr.f32.mxu0 0.0
        %3810 = vmatmul.mubr.f32.gmra.mxu0 %v2701
        %v3811 = vpop.f32.mrf.mxu0
        %v3812 = vadd.f32 0.0, %v3811
        %v3813 = vpop.f32.mrf.mxu0
        %3814 = vmatprep.mubr.f32.mxu0 0.0
        %3815 = vmatmul.mubr.f32.gmra.mxu0 %v2703
        %v3816 = vpop.f32.mrf.mxu0
        %v3817 = vadd.f32 0.0, %v3816
        %v3818 = vpop.f32.mrf.mxu0
        %3819 = vmatprep.mubr.f32.mxu0 0.0
        %3820 = vmatmul.mubr.f32.gmra.mxu0 %v2705
        %v3821 = vpop.f32.mrf.mxu0
        %v3822 = vadd.f32 0.0, %v3821
        %v3823 = vpop.f32.mrf.mxu0
        %3824 = vmatprep.mubr.f32.mxu0 0.0
        %3825 = vmatmul.mubr.f32.gmra.mxu0 %v2707
        %v3826 = vpop.f32.mrf.mxu0
        %v3827 = vadd.f32 0.0, %v3826
        %v3828 = vpop.f32.mrf.mxu0
        %3829 = vmatprep.mubr.f32.mxu0 0.0
        %3830 = vmatmul.mubr.f32.gmra.mxu0 %v2709
        %v3831 = vpop.f32.mrf.mxu0
        %v3832 = vadd.f32 0.0, %v3831
        %v3833 = vpop.f32.mrf.mxu0
        %3834 = vmatprep.mubr.f32.mxu0 0.0
        %3835 = vmatmul.mubr.f32.gmra.mxu0 %v2711
        %v3836 = vpop.f32.mrf.mxu0
        %v3837 = vadd.f32 0.0, %v3836
        %v3838 = vpop.f32.mrf.mxu0
        %3839 = vmatprep.mubr.f32.mxu0 0.0
        %3840 = vmatmul.mubr.f32.gmra.mxu0 %v2713
        %v3841 = vpop.f32.mrf.mxu0
        %v3842 = vadd.f32 0.0, %v3841
        %v3843 = vpop.f32.mrf.mxu0
        %3844 = vmatprep.mubr.f32.mxu0 0.0
        %3845 = vmatmul.mubr.f32.gmra.mxu0 %v2715
        %v3846 = vpop.f32.mrf.mxu0
        %v3847 = vadd.f32 0.0, %v3846
        %v3848 = vpop.f32.mrf.mxu0
        %3849 = vmatprep.mubr.f32.mxu0 0.0
        %3850 = vmatmul.mubr.f32.gmra.mxu0 %v2717
        %v3851 = vpop.f32.mrf.mxu0
        %v3852 = vadd.f32 0.0, %v3851
        %v3853 = vpop.f32.mrf.mxu0
        %3854 = vmatprep.mubr.f32.mxu0 0.0
        %3855 = vmatmul.mubr.f32.gmra.mxu0 %v2719
        %v3856 = vpop.f32.mrf.mxu0
        %v3857 = vadd.f32 0.0, %v3856
        %v3858 = vpop.f32.mrf.mxu0
        %3859 = vmatprep.mubr.f32.mxu0 0.0
        %3860 = vmatmul.mubr.f32.gmra.mxu0 %v2721
        %v3861 = vpop.f32.mrf.mxu0
        %v3862 = vadd.f32 0.0, %v3861
        %v3863 = vpop.f32.mrf.mxu0
        %3864 = vmatprep.mubr.f32.mxu0 0.0
        %3865 = vmatmul.mubr.f32.gmra.mxu0 %v2723
        %v3866 = vpop.f32.mrf.mxu0
        %v3867 = vadd.f32 0.0, %v3866
        %v3868 = vpop.f32.mrf.mxu0
        %3869 = vmatprep.mubr.f32.mxu0 0.0
        %3870 = vmatmul.mubr.f32.gmra.mxu0 %v2725
        %v3871 = vpop.f32.mrf.mxu0
        %v3872 = vadd.f32 0.0, %v3871
        %v3873 = vpop.f32.mrf.mxu0
        %3874 = vmatprep.mubr.f32.mxu0 0.0
        %3875 = vmatmul.mubr.f32.gmra.mxu0 %v3733
        %v3876 = vpop.f32.mrf.mxu0
        %v3877 = vadd.f32 0.0, %v3876
        %v3878 = vpop.f32.mrf.mxu0
        %3879 = vmatprep.mubr.f32.mxu0 0.0
        %3880 = vmatmul.mubr.f32.gmra.mxu0 %v3735
        %v3881 = vpop.f32.mrf.mxu0
        %v3882 = vadd.f32 0.0, %v3881
        %v3883 = vpop.f32.mrf.mxu0
        %3884 = vdwg.mxu0
        %v3885 = vadd.f32 %v3708, %v3807
        %v3886 = vadd.f32 %v3709, %v3812
        %v3887 = vadd.f32 %v3710, %v3817
        %v3888 = vadd.f32 %v3711, %v3822
        %v3889 = vadd.f32 %v3712, %v3827
        %v3890 = vadd.f32 %v3713, %v3832
        %v3891 = vadd.f32 %v3714, %v3837
        %v3892 = vadd.f32 %v3715, %v3842
        %v3893 = vadd.f32 %v3716, %v3847
        %v3894 = vadd.f32 %v3717, %v3852
        %v3895 = vadd.f32 %v3718, %v3857
        %v3896 = vadd.f32 %v3719, %v3862
        %v3897 = vadd.f32 %v3720, %v3867
        %v3898 = vadd.f32 %v3721, %v3872
        %v3899 = vadd.f32 %v3722, %v3877
        %v3900 = vadd.f32 %v3723, %v3882
        %v3901 = vrot.slane %v2205, 3
        %v3902 = vrot.slane %v2206, 3
        %v3903 = vsel %vm2891, %v3901, %v3902
        %v3904 = vrot.slane %v2207, 3
        %v3905 = vsel %vm2891, %v3902, %v3904
        %s3906 = scalar_lea.vmem %s3, 192
        %v3907 = vld [vmem:[%s3906] sm:$0xff]
        %v3908 = vld [vmem:[%s3906 + $0x8] sm:$0xff]
        %v3909 = vld [vmem:[%s3906 + $0x10] sm:$0xf]
        %v3910 = vsel %vm1701, %v3903, 0
        %v3912 = vsel %vm1701, %v3905, 0
        %v3915 = vsel %vm2321, %v3909, 0
        %3917 = vmatprep.subr.mxu0 0.0
        %3918 = vmatpush1.msra.mxu0 0.0
        %3919 = vmatprep.subr.mxu0 0.0
        %3920 = vmatpush1.msra.mxu0 0.0
        %3921 = vmatprep.subr.mxu0 0.0
        %3922 = vmatpush1.msra.mxu0 0.0
        %3923 = vmatprep.subr.mxu0 0.0
        %3924 = vmatpush1.msra.mxu0 0.0
        %3925 = vmatprep.subr.mxu0 0.0
        %3926 = vmatpush1.msra.mxu0 0.0
        %3927 = vmatprep.subr.mxu0 0.0
        %3928 = vmatpush1.msra.mxu0 0.0
        %3929 = vmatprep.subr.mxu0 0.0
        %3930 = vmatpush1.msra.mxu0 0.0
        %3931 = vmatprep.subr.mxu0 0.0
        %3932 = vmatpush1.msra.mxu0 0.0
        %3933 = vmatprep.subr.mxu0 0.0
        %3934 = vmatpush1.msra.mxu0 0.0
        %3935 = vmatprep.subr.mxu0 0.0
        %3936 = vmatpush1.msra.mxu0 0.0
        %3937 = vmatprep.subr.mxu0 0.0
        %3938 = vmatpush1.msra.mxu0 0.0
        %3939 = vmatprep.subr.mxu0 0.0
        %3940 = vmatpush1.msra.mxu0 0.0
        %3941 = vmatprep.subr.mxu0 0.0
        %3942 = vmatpush1.msra.mxu0 0.0
        %3943 = vmatprep.subr.mxu0 0.0
        %3944 = vmatpush1.msra.mxu0 %v3915
        %3945 = vmatprep.subr.mxu0 0.0
        %3946 = vmatpush1.msra.mxu0 %v3908
        %3947 = vmatprep.subr.mxu0 0.0
        %3948 = vmatpush1.msra.mxu0 %v3907
        %3949 = vmatprep.subr.mxu0 0.0
        %3950 = vmatpush2.msra.mxu0 0.0
        %3951 = vmatprep.subr.mxu0 0.0
        %3952 = vmatpush2.msra.mxu0 0.0
        %3953 = vmatprep.subr.mxu0 0.0
        %3954 = vmatpush2.msra.mxu0 0.0
        %3955 = vmatprep.subr.mxu0 0.0
        %3956 = vmatpush2.msra.mxu0 0.0
        %3957 = vmatprep.subr.mxu0 0.0
        %3958 = vmatpush2.msra.mxu0 0.0
        %3959 = vmatprep.subr.mxu0 0.0
        %3960 = vmatpush2.msra.mxu0 0.0
        %3961 = vmatprep.subr.mxu0 0.0
        %3962 = vmatpush2.msra.mxu0 0.0
        %3963 = vmatprep.subr.mxu0 0.0
        %3964 = vmatpush2.msra.mxu0 0.0
        %3965 = vmatprep.subr.mxu0 0.0
        %3966 = vmatpush2.msra.mxu0 0.0
        %3967 = vmatprep.subr.mxu0 0.0
        %3968 = vmatpush2.msra.mxu0 0.0
        %3969 = vmatprep.subr.mxu0 0.0
        %3970 = vmatpush2.msra.mxu0 0.0
        %3971 = vmatprep.subr.mxu0 0.0
        %3972 = vmatpush2.msra.mxu0 0.0
        %3973 = vmatprep.subr.mxu0 0.0
        %3974 = vmatpush2.msra.mxu0 0.0
        %3975 = vmatprep.subr.mxu0 0.0
        %3976 = vmatpush2.msra.mxu0 0.0
        %3977 = vmatprep.subr.mxu0 0.0
        %3978 = vmatpush2.msra.mxu0 0.0
        %3979 = vmatprep.subr.mxu0 0.0
        %3980 = vmatpush2.msra.mxu0 0.0
        %3981 = vmatprep.mubr.f32.mxu0 0.0
        %3982 = vmatmul.mubr.f32.gmra.mxu0 %v2940
        %v3983 = vpop.f32.mrf.mxu0
        %v3984 = vadd.f32 0.0, %v3983
        %v3985 = vpop.f32.mrf.mxu0
        %3986 = vmatprep.mubr.f32.mxu0 0.0
        %3987 = vmatmul.mubr.f32.gmra.mxu0 %v2942
        %v3988 = vpop.f32.mrf.mxu0
        %v3989 = vadd.f32 0.0, %v3988
        %v3990 = vpop.f32.mrf.mxu0
        %3991 = vmatprep.mubr.f32.mxu0 0.0
        %3992 = vmatmul.mubr.f32.gmra.mxu0 %v2944
        %v3993 = vpop.f32.mrf.mxu0
        %v3994 = vadd.f32 0.0, %v3993
        %v3995 = vpop.f32.mrf.mxu0
        %3996 = vmatprep.mubr.f32.mxu0 0.0
        %3997 = vmatmul.mubr.f32.gmra.mxu0 %v2946
        %v3998 = vpop.f32.mrf.mxu0
        %v3999 = vadd.f32 0.0, %v3998
        %v4000 = vpop.f32.mrf.mxu0
        %4001 = vmatprep.mubr.f32.mxu0 0.0
        %4002 = vmatmul.mubr.f32.gmra.mxu0 %v2948
        %v4003 = vpop.f32.mrf.mxu0
        %v4004 = vadd.f32 0.0, %v4003
        %v4005 = vpop.f32.mrf.mxu0
        %4006 = vmatprep.mubr.f32.mxu0 0.0
        %4007 = vmatmul.mubr.f32.gmra.mxu0 %v2950
        %v4008 = vpop.f32.mrf.mxu0
        %v4009 = vadd.f32 0.0, %v4008
        %v4010 = vpop.f32.mrf.mxu0
        %4011 = vmatprep.mubr.f32.mxu0 0.0
        %4012 = vmatmul.mubr.f32.gmra.mxu0 %v2952
        %v4013 = vpop.f32.mrf.mxu0
        %v4014 = vadd.f32 0.0, %v4013
        %v4015 = vpop.f32.mrf.mxu0
        %4016 = vmatprep.mubr.f32.mxu0 0.0
        %4017 = vmatmul.mubr.f32.gmra.mxu0 %v2954
        %v4018 = vpop.f32.mrf.mxu0
        %v4019 = vadd.f32 0.0, %v4018
        %v4020 = vpop.f32.mrf.mxu0
        %4021 = vmatprep.mubr.f32.mxu0 0.0
        %4022 = vmatmul.mubr.f32.gmra.mxu0 %v2956
        %v4023 = vpop.f32.mrf.mxu0
        %v4024 = vadd.f32 0.0, %v4023
        %v4025 = vpop.f32.mrf.mxu0
        %4026 = vmatprep.mubr.f32.mxu0 0.0
        %4027 = vmatmul.mubr.f32.gmra.mxu0 %v2958
        %v4028 = vpop.f32.mrf.mxu0
        %v4029 = vadd.f32 0.0, %v4028
        %v4030 = vpop.f32.mrf.mxu0
        %4031 = vmatprep.mubr.f32.mxu0 0.0
        %4032 = vmatmul.mubr.f32.gmra.mxu0 %v2960
        %v4033 = vpop.f32.mrf.mxu0
        %v4034 = vadd.f32 0.0, %v4033
        %v4035 = vpop.f32.mrf.mxu0
        %4036 = vmatprep.mubr.f32.mxu0 0.0
        %4037 = vmatmul.mubr.f32.gmra.mxu0 %v2962
        %v4038 = vpop.f32.mrf.mxu0
        %v4039 = vadd.f32 0.0, %v4038
        %v4040 = vpop.f32.mrf.mxu0
        %4041 = vmatprep.mubr.f32.mxu0 0.0
        %4042 = vmatmul.mubr.f32.gmra.mxu0 %v2964
        %v4043 = vpop.f32.mrf.mxu0
        %v4044 = vadd.f32 0.0, %v4043
        %v4045 = vpop.f32.mrf.mxu0
        %4046 = vmatprep.mubr.f32.mxu0 0.0
        %4047 = vmatmul.mubr.f32.gmra.mxu0 %v2966
        %v4048 = vpop.f32.mrf.mxu0
        %v4049 = vadd.f32 0.0, %v4048
        %v4050 = vpop.f32.mrf.mxu0
        %4051 = vmatprep.mubr.f32.mxu0 0.0
        %4052 = vmatmul.mubr.f32.gmra.mxu0 %v3910
        %v4053 = vpop.f32.mrf.mxu0
        %v4054 = vadd.f32 0.0, %v4053
        %v4055 = vpop.f32.mrf.mxu0
        %4056 = vmatprep.mubr.f32.mxu0 0.0
        %4057 = vmatmul.mubr.f32.gmra.mxu0 %v3912
        %v4058 = vpop.f32.mrf.mxu0
        %v4059 = vadd.f32 0.0, %v4058
        %v4060 = vpop.f32.mrf.mxu0
        %4061 = vdwg.mxu0
        %v4062 = vadd.f32 %v3885, %v3984
        %v4063 = vadd.f32 %v3886, %v3989
        %v4064 = vadd.f32 %v3887, %v3994
        %v4065 = vadd.f32 %v3888, %v3999
        %v4066 = vadd.f32 %v3889, %v4004
        %v4067 = vadd.f32 %v3890, %v4009
        %v4068 = vadd.f32 %v3891, %v4014
        %v4069 = vadd.f32 %v3892, %v4019
        %v4070 = vadd.f32 %v3893, %v4024
        %v4071 = vadd.f32 %v3894, %v4029
        %v4072 = vadd.f32 %v3895, %v4034
        %v4073 = vadd.f32 %v3896, %v4039
        %v4074 = vadd.f32 %v3897, %v4044
        %v4075 = vadd.f32 %v3898, %v4049
        %v4076 = vadd.f32 %v3899, %v4054
        %v4077 = vadd.f32 %v3900, %v4059
        %v4078 = vrot.slane %v2205, 4
        %v4079 = vrot.slane %v2206, 4
        %v4080 = vsel %vm2321, %v4078, %v4079
        %v4081 = vrot.slane %v2207, 4
        %v4082 = vsel %vm2321, %v4079, %v4081
        %s4083 = scalar_lea.vmem %s3, 216
        %v4084 = vld [vmem:[%s4083] sm:$0xff]
        %v4085 = vld [vmem:[%s4083 + $0x8] sm:$0xff]
        %v4086 = vld [vmem:[%s4083 + $0x10] sm:$0xf]
        %v4087 = vsel %vm1701, %v4080, 0
        %v4089 = vsel %vm1701, %v4082, 0
        %v4092 = vsel %vm2321, %v4086, 0
        %4094 = vmatprep.subr.mxu0 0.0
        %4095 = vmatpush1.msra.mxu0 0.0
        %4096 = vmatprep.subr.mxu0 0.0
        %4097 = vmatpush1.msra.mxu0 0.0
        %4098 = vmatprep.subr.mxu0 0.0
        %4099 = vmatpush1.msra.mxu0 0.0
        %4100 = vmatprep.subr.mxu0 0.0
        %4101 = vmatpush1.msra.mxu0 0.0
        %4102 = vmatprep.subr.mxu0 0.0
        %4103 = vmatpush1.msra.mxu0 0.0
        %4104 = vmatprep.subr.mxu0 0.0
        %4105 = vmatpush1.msra.mxu0 0.0
        %4106 = vmatprep.subr.mxu0 0.0
        %4107 = vmatpush1.msra.mxu0 0.0
        %4108 = vmatprep.subr.mxu0 0.0
        %4109 = vmatpush1.msra.mxu0 0.0
        %4110 = vmatprep.subr.mxu0 0.0
        %4111 = vmatpush1.msra.mxu0 0.0
        %4112 = vmatprep.subr.mxu0 0.0
        %4113 = vmatpush1.msra.mxu0 0.0
        %4114 = vmatprep.subr.mxu0 0.0
        %4115 = vmatpush1.msra.mxu0 0.0
        %4116 = vmatprep.subr.mxu0 0.0
        %4117 = vmatpush1.msra.mxu0 0.0
        %4118 = vmatprep.subr.mxu0 0.0
        %4119 = vmatpush1.msra.mxu0 0.0
        %4120 = vmatprep.subr.mxu0 0.0
        %4121 = vmatpush1.msra.mxu0 %v4092
        %4122 = vmatprep.subr.mxu0 0.0
        %4123 = vmatpush1.msra.mxu0 %v4085
        %4124 = vmatprep.subr.mxu0 0.0
        %4125 = vmatpush1.msra.mxu0 %v4084
        %4126 = vmatprep.subr.mxu0 0.0
        %4127 = vmatpush2.msra.mxu0 0.0
        %4128 = vmatprep.subr.mxu0 0.0
        %4129 = vmatpush2.msra.mxu0 0.0
        %4130 = vmatprep.subr.mxu0 0.0
        %4131 = vmatpush2.msra.mxu0 0.0
        %4132 = vmatprep.subr.mxu0 0.0
        %4133 = vmatpush2.msra.mxu0 0.0
        %4134 = vmatprep.subr.mxu0 0.0
        %4135 = vmatpush2.msra.mxu0 0.0
        %4136 = vmatprep.subr.mxu0 0.0
        %4137 = vmatpush2.msra.mxu0 0.0
        %4138 = vmatprep.subr.mxu0 0.0
        %4139 = vmatpush2.msra.mxu0 0.0
        %4140 = vmatprep.subr.mxu0 0.0
        %4141 = vmatpush2.msra.mxu0 0.0
        %4142 = vmatprep.subr.mxu0 0.0
        %4143 = vmatpush2.msra.mxu0 0.0
        %4144 = vmatprep.subr.mxu0 0.0
        %4145 = vmatpush2.msra.mxu0 0.0
        %4146 = vmatprep.subr.mxu0 0.0
        %4147 = vmatpush2.msra.mxu0 0.0
        %4148 = vmatprep.subr.mxu0 0.0
        %4149 = vmatpush2.msra.mxu0 0.0
        %4150 = vmatprep.subr.mxu0 0.0
        %4151 = vmatpush2.msra.mxu0 0.0
        %4152 = vmatprep.subr.mxu0 0.0
        %4153 = vmatpush2.msra.mxu0 0.0
        %4154 = vmatprep.subr.mxu0 0.0
        %4155 = vmatpush2.msra.mxu0 0.0
        %4156 = vmatprep.subr.mxu0 0.0
        %4157 = vmatpush2.msra.mxu0 0.0
        %4158 = vmatprep.mubr.f32.mxu0 0.0
        %4159 = vmatmul.mubr.f32.gmra.mxu0 %v3180
        %v4160 = vpop.f32.mrf.mxu0
        %v4161 = vadd.f32 0.0, %v4160
        %v4162 = vpop.f32.mrf.mxu0
        %4163 = vmatprep.mubr.f32.mxu0 0.0
        %4164 = vmatmul.mubr.f32.gmra.mxu0 %v3182
        %v4165 = vpop.f32.mrf.mxu0
        %v4166 = vadd.f32 0.0, %v4165
        %v4167 = vpop.f32.mrf.mxu0
        %4168 = vmatprep.mubr.f32.mxu0 0.0
        %4169 = vmatmul.mubr.f32.gmra.mxu0 %v3184
        %v4170 = vpop.f32.mrf.mxu0
        %v4171 = vadd.f32 0.0, %v4170
        %v4172 = vpop.f32.mrf.mxu0
        %4173 = vmatprep.mubr.f32.mxu0 0.0
        %4174 = vmatmul.mubr.f32.gmra.mxu0 %v3186
        %v4175 = vpop.f32.mrf.mxu0
        %v4176 = vadd.f32 0.0, %v4175
        %v4177 = vpop.f32.mrf.mxu0
        %4178 = vmatprep.mubr.f32.mxu0 0.0
        %4179 = vmatmul.mubr.f32.gmra.mxu0 %v3188
        %v4180 = vpop.f32.mrf.mxu0
        %v4181 = vadd.f32 0.0, %v4180
        %v4182 = vpop.f32.mrf.mxu0
        %4183 = vmatprep.mubr.f32.mxu0 0.0
        %4184 = vmatmul.mubr.f32.gmra.mxu0 %v3190
        %v4185 = vpop.f32.mrf.mxu0
        %v4186 = vadd.f32 0.0, %v4185
        %v4187 = vpop.f32.mrf.mxu0
        %4188 = vmatprep.mubr.f32.mxu0 0.0
        %4189 = vmatmul.mubr.f32.gmra.mxu0 %v3192
        %v4190 = vpop.f32.mrf.mxu0
        %v4191 = vadd.f32 0.0, %v4190
        %v4192 = vpop.f32.mrf.mxu0
        %4193 = vmatprep.mubr.f32.mxu0 0.0
        %4194 = vmatmul.mubr.f32.gmra.mxu0 %v3194
        %v4195 = vpop.f32.mrf.mxu0
        %v4196 = vadd.f32 0.0, %v4195
        %v4197 = vpop.f32.mrf.mxu0
        %4198 = vmatprep.mubr.f32.mxu0 0.0
        %4199 = vmatmul.mubr.f32.gmra.mxu0 %v3196
        %v4200 = vpop.f32.mrf.mxu0
        %v4201 = vadd.f32 0.0, %v4200
        %v4202 = vpop.f32.mrf.mxu0
        %4203 = vmatprep.mubr.f32.mxu0 0.0
        %4204 = vmatmul.mubr.f32.gmra.mxu0 %v3198
        %v4205 = vpop.f32.mrf.mxu0
        %v4206 = vadd.f32 0.0, %v4205
        %v4207 = vpop.f32.mrf.mxu0
        %4208 = vmatprep.mubr.f32.mxu0 0.0
        %4209 = vmatmul.mubr.f32.gmra.mxu0 %v3200
        %v4210 = vpop.f32.mrf.mxu0
        %v4211 = vadd.f32 0.0, %v4210
        %v4212 = vpop.f32.mrf.mxu0
        %4213 = vmatprep.mubr.f32.mxu0 0.0
        %4214 = vmatmul.mubr.f32.gmra.mxu0 %v3202
        %v4215 = vpop.f32.mrf.mxu0
        %v4216 = vadd.f32 0.0, %v4215
        %v4217 = vpop.f32.mrf.mxu0
        %4218 = vmatprep.mubr.f32.mxu0 0.0
        %4219 = vmatmul.mubr.f32.gmra.mxu0 %v3204
        %v4220 = vpop.f32.mrf.mxu0
        %v4221 = vadd.f32 0.0, %v4220
        %v4222 = vpop.f32.mrf.mxu0
        %4223 = vmatprep.mubr.f32.mxu0 0.0
        %4224 = vmatmul.mubr.f32.gmra.mxu0 %v3206
        %v4225 = vpop.f32.mrf.mxu0
        %v4226 = vadd.f32 0.0, %v4225
        %v4227 = vpop.f32.mrf.mxu0
        %4228 = vmatprep.mubr.f32.mxu0 0.0
        %4229 = vmatmul.mubr.f32.gmra.mxu0 %v4087
        %v4230 = vpop.f32.mrf.mxu0
        %v4231 = vadd.f32 0.0, %v4230
        %v4232 = vpop.f32.mrf.mxu0
        %4233 = vmatprep.mubr.f32.mxu0 0.0
        %4234 = vmatmul.mubr.f32.gmra.mxu0 %v4089
        %v4235 = vpop.f32.mrf.mxu0
        %v4236 = vadd.f32 0.0, %v4235
        %v4237 = vpop.f32.mrf.mxu0
        %4238 = vdwg.mxu0
        %v4239 = vadd.f32 %v4062, %v4161
        %v4240 = vadd.f32 %v4063, %v4166
        %v4241 = vadd.f32 %v4064, %v4171
        %v4242 = vadd.f32 %v4065, %v4176
        %v4243 = vadd.f32 %v4066, %v4181
        %v4244 = vadd.f32 %v4067, %v4186
        %v4245 = vadd.f32 %v4068, %v4191
        %v4246 = vadd.f32 %v4069, %v4196
        %v4247 = vadd.f32 %v4070, %v4201
        %v4248 = vadd.f32 %v4071, %v4206
        %v4249 = vadd.f32 %v4072, %v4211
        %v4250 = vadd.f32 %v4073, %v4216
        %v4251 = vadd.f32 %v4074, %v4221
        %v4252 = vadd.f32 %v4075, %v4226
        %v4253 = vadd.f32 %v4076, %v4231
        %v4254 = vadd.f32 %v4077, %v4236
        %s4255 = scalar_lea.vmem %s3, 240
        %v4256 = vld [vmem:[%s4255] sm:$0xff]
        %v4257 = vld [vmem:[%s4255 + $0x8] sm:$0xff]
        %v4258 = vld [vmem:[%s4255 + $0x10] sm:$0xf]
        %v4260 = vsel %vm1701, %v2208, 0
        %v4263 = vsel %vm1701, %v2209, 0
        %v4266 = vsel %vm2321, %v4258, 0
        %4268 = vmatprep.subr.mxu0 0.0
        %4269 = vmatpush1.msra.mxu0 0.0
        %4270 = vmatprep.subr.mxu0 0.0
        %4271 = vmatpush1.msra.mxu0 0.0
        %4272 = vmatprep.subr.mxu0 0.0
        %4273 = vmatpush1.msra.mxu0 0.0
        %4274 = vmatprep.subr.mxu0 0.0
        %4275 = vmatpush1.msra.mxu0 0.0
        %4276 = vmatprep.subr.mxu0 0.0
        %4277 = vmatpush1.msra.mxu0 0.0
        %4278 = vmatprep.subr.mxu0 0.0
        %4279 = vmatpush1.msra.mxu0 0.0
        %4280 = vmatprep.subr.mxu0 0.0
        %4281 = vmatpush1.msra.mxu0 0.0
        %4282 = vmatprep.subr.mxu0 0.0
        %4283 = vmatpush1.msra.mxu0 0.0
        %4284 = vmatprep.subr.mxu0 0.0
        %4285 = vmatpush1.msra.mxu0 0.0
        %4286 = vmatprep.subr.mxu0 0.0
        %4287 = vmatpush1.msra.mxu0 0.0
        %4288 = vmatprep.subr.mxu0 0.0
        %4289 = vmatpush1.msra.mxu0 0.0
        %4290 = vmatprep.subr.mxu0 0.0
        %4291 = vmatpush1.msra.mxu0 0.0
        %4292 = vmatprep.subr.mxu0 0.0
        %4293 = vmatpush1.msra.mxu0 0.0
        %4294 = vmatprep.subr.mxu0 0.0
        %4295 = vmatpush1.msra.mxu0 %v4266
        %4296 = vmatprep.subr.mxu0 0.0
        %4297 = vmatpush1.msra.mxu0 %v4257
        %4298 = vmatprep.subr.mxu0 0.0
        %4299 = vmatpush1.msra.mxu0 %v4256
        %4300 = vmatprep.subr.mxu0 0.0
        %4301 = vmatpush2.msra.mxu0 0.0
        %4302 = vmatprep.subr.mxu0 0.0
        %4303 = vmatpush2.msra.mxu0 0.0
        %4304 = vmatprep.subr.mxu0 0.0
        %4305 = vmatpush2.msra.mxu0 0.0
        %4306 = vmatprep.subr.mxu0 0.0
        %4307 = vmatpush2.msra.mxu0 0.0
        %4308 = vmatprep.subr.mxu0 0.0
        %4309 = vmatpush2.msra.mxu0 0.0
        %4310 = vmatprep.subr.mxu0 0.0
        %4311 = vmatpush2.msra.mxu0 0.0
        %4312 = vmatprep.subr.mxu0 0.0
        %4313 = vmatpush2.msra.mxu0 0.0
        %4314 = vmatprep.subr.mxu0 0.0
        %4315 = vmatpush2.msra.mxu0 0.0
        %4316 = vmatprep.subr.mxu0 0.0
        %4317 = vmatpush2.msra.mxu0 0.0
        %4318 = vmatprep.subr.mxu0 0.0
        %4319 = vmatpush2.msra.mxu0 0.0
        %4320 = vmatprep.subr.mxu0 0.0
        %4321 = vmatpush2.msra.mxu0 0.0
        %4322 = vmatprep.subr.mxu0 0.0
        %4323 = vmatpush2.msra.mxu0 0.0
        %4324 = vmatprep.subr.mxu0 0.0
        %4325 = vmatpush2.msra.mxu0 0.0
        %4326 = vmatprep.subr.mxu0 0.0
        %4327 = vmatpush2.msra.mxu0 0.0
        %4328 = vmatprep.subr.mxu0 0.0
        %4329 = vmatpush2.msra.mxu0 0.0
        %4330 = vmatprep.subr.mxu0 0.0
        %4331 = vmatpush2.msra.mxu0 0.0
        %4332 = vmatprep.mubr.f32.mxu0 0.0
        %4333 = vmatmul.mubr.f32.gmra.mxu0 %v2478
        %v4334 = vpop.f32.mrf.mxu0
        %v4335 = vadd.f32 0.0, %v4334
        %v4336 = vpop.f32.mrf.mxu0
        %4337 = vmatprep.mubr.f32.mxu0 0.0
        %4338 = vmatmul.mubr.f32.gmra.mxu0 %v2480
        %v4339 = vpop.f32.mrf.mxu0
        %v4340 = vadd.f32 0.0, %v4339
        %v4341 = vpop.f32.mrf.mxu0
        %4342 = vmatprep.mubr.f32.mxu0 0.0
        %4343 = vmatmul.mubr.f32.gmra.mxu0 %v2482
        %v4344 = vpop.f32.mrf.mxu0
        %v4345 = vadd.f32 0.0, %v4344
        %v4346 = vpop.f32.mrf.mxu0
        %4347 = vmatprep.mubr.f32.mxu0 0.0
        %4348 = vmatmul.mubr.f32.gmra.mxu0 %v2484
        %v4349 = vpop.f32.mrf.mxu0
        %v4350 = vadd.f32 0.0, %v4349
        %v4351 = vpop.f32.mrf.mxu0
        %4352 = vmatprep.mubr.f32.mxu0 0.0
        %4353 = vmatmul.mubr.f32.gmra.mxu0 %v2486
        %v4354 = vpop.f32.mrf.mxu0
        %v4355 = vadd.f32 0.0, %v4354
        %v4356 = vpop.f32.mrf.mxu0
        %4357 = vmatprep.mubr.f32.mxu0 0.0
        %4358 = vmatmul.mubr.f32.gmra.mxu0 %v2488
        %v4359 = vpop.f32.mrf.mxu0
        %v4360 = vadd.f32 0.0, %v4359
        %v4361 = vpop.f32.mrf.mxu0
        %4362 = vmatprep.mubr.f32.mxu0 0.0
        %4363 = vmatmul.mubr.f32.gmra.mxu0 %v2490
        %v4364 = vpop.f32.mrf.mxu0
        %v4365 = vadd.f32 0.0, %v4364
        %v4366 = vpop.f32.mrf.mxu0
        %4367 = vmatprep.mubr.f32.mxu0 0.0
        %4368 = vmatmul.mubr.f32.gmra.mxu0 %v2492
        %v4369 = vpop.f32.mrf.mxu0
        %v4370 = vadd.f32 0.0, %v4369
        %v4371 = vpop.f32.mrf.mxu0
        %4372 = vmatprep.mubr.f32.mxu0 0.0
        %4373 = vmatmul.mubr.f32.gmra.mxu0 %v2494
        %v4374 = vpop.f32.mrf.mxu0
        %v4375 = vadd.f32 0.0, %v4374
        %v4376 = vpop.f32.mrf.mxu0
        %4377 = vmatprep.mubr.f32.mxu0 0.0
        %4378 = vmatmul.mubr.f32.gmra.mxu0 %v2496
        %v4379 = vpop.f32.mrf.mxu0
        %v4380 = vadd.f32 0.0, %v4379
        %v4381 = vpop.f32.mrf.mxu0
        %4382 = vmatprep.mubr.f32.mxu0 0.0
        %4383 = vmatmul.mubr.f32.gmra.mxu0 %v2498
        %v4384 = vpop.f32.mrf.mxu0
        %v4385 = vadd.f32 0.0, %v4384
        %v4386 = vpop.f32.mrf.mxu0
        %4387 = vmatprep.mubr.f32.mxu0 0.0
        %4388 = vmatmul.mubr.f32.gmra.mxu0 %v2500
        %v4389 = vpop.f32.mrf.mxu0
        %v4390 = vadd.f32 0.0, %v4389
        %v4391 = vpop.f32.mrf.mxu0
        %4392 = vmatprep.mubr.f32.mxu0 0.0
        %4393 = vmatmul.mubr.f32.gmra.mxu0 %v3377
        %v4394 = vpop.f32.mrf.mxu0
        %v4395 = vadd.f32 0.0, %v4394
        %v4396 = vpop.f32.mrf.mxu0
        %4397 = vmatprep.mubr.f32.mxu0 0.0
        %4398 = vmatmul.mubr.f32.gmra.mxu0 %v3380
        %v4399 = vpop.f32.mrf.mxu0
        %v4400 = vadd.f32 0.0, %v4399
        %v4401 = vpop.f32.mrf.mxu0
        %4402 = vmatprep.mubr.f32.mxu0 0.0
        %4403 = vmatmul.mubr.f32.gmra.mxu0 %v4260
        %v4404 = vpop.f32.mrf.mxu0
        %v4405 = vadd.f32 0.0, %v4404
        %v4406 = vpop.f32.mrf.mxu0
        %4407 = vmatprep.mubr.f32.mxu0 0.0
        %4408 = vmatmul.mubr.f32.gmra.mxu0 %v4263
        %v4409 = vpop.f32.mrf.mxu0
        %v4410 = vadd.f32 0.0, %v4409
        %v4411 = vpop.f32.mrf.mxu0
        %4412 = vdwg.mxu0
        %v4413 = vadd.f32 %v4239, %v4335
        %v4414 = vadd.f32 %v4240, %v4340
        %v4415 = vadd.f32 %v4241, %v4345
        %v4416 = vadd.f32 %v4242, %v4350
        %v4417 = vadd.f32 %v4243, %v4355
        %v4418 = vadd.f32 %v4244, %v4360
        %v4419 = vadd.f32 %v4245, %v4365
        %v4420 = vadd.f32 %v4246, %v4370
        %v4421 = vadd.f32 %v4247, %v4375
        %v4422 = vadd.f32 %v4248, %v4380
        %v4423 = vadd.f32 %v4249, %v4385
        %v4424 = vadd.f32 %v4250, %v4390
        %v4425 = vadd.f32 %v4251, %v4395
        %v4426 = vadd.f32 %v4252, %v4400
        %v4427 = vadd.f32 %v4253, %v4405
        %v4428 = vadd.f32 %v4254, %v4410
        %v4430 = vrot.slane %v2208, 1
        %v4431 = vrot.slane %v2209, 1
        %v4432 = vsel %vm2244, %v4430, %v4431
        %v4433 = vrot.slane %v2210, 1
        %v4434 = vsel %vm2244, %v4431, %v4433
        %s4435 = scalar_lea.vmem %s3, 264
        %v4436 = vld [vmem:[%s4435] sm:$0xff]
        %v4437 = vld [vmem:[%s4435 + $0x8] sm:$0xff]
        %v4438 = vld [vmem:[%s4435 + $0x10] sm:$0xf]
        %v4439 = vsel %vm1701, %v4432, 0
        %v4441 = vsel %vm1701, %v4434, 0
        %v4444 = vsel %vm2321, %v4438, 0
        %4446 = vmatprep.subr.mxu0 0.0
        %4447 = vmatpush1.msra.mxu0 0.0
        %4448 = vmatprep.subr.mxu0 0.0
        %4449 = vmatpush1.msra.mxu0 0.0
        %4450 = vmatprep.subr.mxu0 0.0
        %4451 = vmatpush1.msra.mxu0 0.0
        %4452 = vmatprep.subr.mxu0 0.0
        %4453 = vmatpush1.msra.mxu0 0.0
        %4454 = vmatprep.subr.mxu0 0.0
        %4455 = vmatpush1.msra.mxu0 0.0
        %4456 = vmatprep.subr.mxu0 0.0
        %4457 = vmatpush1.msra.mxu0 0.0
        %4458 = vmatprep.subr.mxu0 0.0
        %4459 = vmatpush1.msra.mxu0 0.0
        %4460 = vmatprep.subr.mxu0 0.0
        %4461 = vmatpush1.msra.mxu0 0.0
        %4462 = vmatprep.subr.mxu0 0.0
        %4463 = vmatpush1.msra.mxu0 0.0
        %4464 = vmatprep.subr.mxu0 0.0
        %4465 = vmatpush1.msra.mxu0 0.0
        %4466 = vmatprep.subr.mxu0 0.0
        %4467 = vmatpush1.msra.mxu0 0.0
        %4468 = vmatprep.subr.mxu0 0.0
        %4469 = vmatpush1.msra.mxu0 0.0
        %4470 = vmatprep.subr.mxu0 0.0
        %4471 = vmatpush1.msra.mxu0 0.0
        %4472 = vmatprep.subr.mxu0 0.0
        %4473 = vmatpush1.msra.mxu0 %v4444
        %4474 = vmatprep.subr.mxu0 0.0
        %4475 = vmatpush1.msra.mxu0 %v4437
        %4476 = vmatprep.subr.mxu0 0.0
        %4477 = vmatpush1.msra.mxu0 %v4436
        %4478 = vmatprep.subr.mxu0 0.0
        %4479 = vmatpush2.msra.mxu0 0.0
        %4480 = vmatprep.subr.mxu0 0.0
        %4481 = vmatpush2.msra.mxu0 0.0
        %4482 = vmatprep.subr.mxu0 0.0
        %4483 = vmatpush2.msra.mxu0 0.0
        %4484 = vmatprep.subr.mxu0 0.0
        %4485 = vmatpush2.msra.mxu0 0.0
        %4486 = vmatprep.subr.mxu0 0.0
        %4487 = vmatpush2.msra.mxu0 0.0
        %4488 = vmatprep.subr.mxu0 0.0
        %4489 = vmatpush2.msra.mxu0 0.0
        %4490 = vmatprep.subr.mxu0 0.0
        %4491 = vmatpush2.msra.mxu0 0.0
        %4492 = vmatprep.subr.mxu0 0.0
        %4493 = vmatpush2.msra.mxu0 0.0
        %4494 = vmatprep.subr.mxu0 0.0
        %4495 = vmatpush2.msra.mxu0 0.0
        %4496 = vmatprep.subr.mxu0 0.0
        %4497 = vmatpush2.msra.mxu0 0.0
        %4498 = vmatprep.subr.mxu0 0.0
        %4499 = vmatpush2.msra.mxu0 0.0
        %4500 = vmatprep.subr.mxu0 0.0
        %4501 = vmatpush2.msra.mxu0 0.0
        %4502 = vmatprep.subr.mxu0 0.0
        %4503 = vmatpush2.msra.mxu0 0.0
        %4504 = vmatprep.subr.mxu0 0.0
        %4505 = vmatpush2.msra.mxu0 0.0
        %4506 = vmatprep.subr.mxu0 0.0
        %4507 = vmatpush2.msra.mxu0 0.0
        %4508 = vmatprep.subr.mxu0 0.0
        %4509 = vmatpush2.msra.mxu0 0.0
        %4510 = vmatprep.mubr.f32.mxu0 0.0
        %4511 = vmatmul.mubr.f32.gmra.mxu0 %v2297
        %v4512 = vpop.f32.mrf.mxu0
        %v4513 = vadd.f32 0.0, %v4512
        %v4514 = vpop.f32.mrf.mxu0
        %4515 = vmatprep.mubr.f32.mxu0 0.0
        %4516 = vmatmul.mubr.f32.gmra.mxu0 %v2299
        %v4517 = vpop.f32.mrf.mxu0
        %v4518 = vadd.f32 0.0, %v4517
        %v4519 = vpop.f32.mrf.mxu0
        %4520 = vmatprep.mubr.f32.mxu0 0.0
        %4521 = vmatmul.mubr.f32.gmra.mxu0 %v2301
        %v4522 = vpop.f32.mrf.mxu0
        %v4523 = vadd.f32 0.0, %v4522
        %v4524 = vpop.f32.mrf.mxu0
        %4525 = vmatprep.mubr.f32.mxu0 0.0
        %4526 = vmatmul.mubr.f32.gmra.mxu0 %v2303
        %v4527 = vpop.f32.mrf.mxu0
        %v4528 = vadd.f32 0.0, %v4527
        %v4529 = vpop.f32.mrf.mxu0
        %4530 = vmatprep.mubr.f32.mxu0 0.0
        %4531 = vmatmul.mubr.f32.gmra.mxu0 %v2305
        %v4532 = vpop.f32.mrf.mxu0
        %v4533 = vadd.f32 0.0, %v4532
        %v4534 = vpop.f32.mrf.mxu0
        %4535 = vmatprep.mubr.f32.mxu0 0.0
        %4536 = vmatmul.mubr.f32.gmra.mxu0 %v2307
        %v4537 = vpop.f32.mrf.mxu0
        %v4538 = vadd.f32 0.0, %v4537
        %v4539 = vpop.f32.mrf.mxu0
        %4540 = vmatprep.mubr.f32.mxu0 0.0
        %4541 = vmatmul.mubr.f32.gmra.mxu0 %v2309
        %v4542 = vpop.f32.mrf.mxu0
        %v4543 = vadd.f32 0.0, %v4542
        %v4544 = vpop.f32.mrf.mxu0
        %4545 = vmatprep.mubr.f32.mxu0 0.0
        %4546 = vmatmul.mubr.f32.gmra.mxu0 %v2311
        %v4547 = vpop.f32.mrf.mxu0
        %v4548 = vadd.f32 0.0, %v4547
        %v4549 = vpop.f32.mrf.mxu0
        %4550 = vmatprep.mubr.f32.mxu0 0.0
        %4551 = vmatmul.mubr.f32.gmra.mxu0 %v2313
        %v4552 = vpop.f32.mrf.mxu0
        %v4553 = vadd.f32 0.0, %v4552
        %v4554 = vpop.f32.mrf.mxu0
        %4555 = vmatprep.mubr.f32.mxu0 0.0
        %4556 = vmatmul.mubr.f32.gmra.mxu0 %v2315
        %v4557 = vpop.f32.mrf.mxu0
        %v4558 = vadd.f32 0.0, %v4557
        %v4559 = vpop.f32.mrf.mxu0
        %4560 = vmatprep.mubr.f32.mxu0 0.0
        %4561 = vmatmul.mubr.f32.gmra.mxu0 %v2317
        %v4562 = vpop.f32.mrf.mxu0
        %v4563 = vadd.f32 0.0, %v4562
        %v4564 = vpop.f32.mrf.mxu0
        %4565 = vmatprep.mubr.f32.mxu0 0.0
        %4566 = vmatmul.mubr.f32.gmra.mxu0 %v2319
        %v4567 = vpop.f32.mrf.mxu0
        %v4568 = vadd.f32 0.0, %v4567
        %v4569 = vpop.f32.mrf.mxu0
        %4570 = vmatprep.mubr.f32.mxu0 0.0
        %4571 = vmatmul.mubr.f32.gmra.mxu0 %v3556
        %v4572 = vpop.f32.mrf.mxu0
        %v4573 = vadd.f32 0.0, %v4572
        %v4574 = vpop.f32.mrf.mxu0
        %4575 = vmatprep.mubr.f32.mxu0 0.0
        %4576 = vmatmul.mubr.f32.gmra.mxu0 %v3558
        %v4577 = vpop.f32.mrf.mxu0
        %v4578 = vadd.f32 0.0, %v4577
        %v4579 = vpop.f32.mrf.mxu0
        %4580 = vmatprep.mubr.f32.mxu0 0.0
        %4581 = vmatmul.mubr.f32.gmra.mxu0 %v4439
        %v4582 = vpop.f32.mrf.mxu0
        %v4583 = vadd.f32 0.0, %v4582
        %v4584 = vpop.f32.mrf.mxu0
        %4585 = vmatprep.mubr.f32.mxu0 0.0
        %4586 = vmatmul.mubr.f32.gmra.mxu0 %v4441
        %v4587 = vpop.f32.mrf.mxu0
        %v4588 = vadd.f32 0.0, %v4587
        %v4589 = vpop.f32.mrf.mxu0
        %4590 = vdwg.mxu0
        %v4591 = vadd.f32 %v4413, %v4513
        %v4592 = vadd.f32 %v4414, %v4518
        %v4593 = vadd.f32 %v4415, %v4523
        %v4594 = vadd.f32 %v4416, %v4528
        %v4595 = vadd.f32 %v4417, %v4533
        %v4596 = vadd.f32 %v4418, %v4538
        %v4597 = vadd.f32 %v4419, %v4543
        %v4598 = vadd.f32 %v4420, %v4548
        %v4599 = vadd.f32 %v4421, %v4553
        %v4600 = vadd.f32 %v4422, %v4558
        %v4601 = vadd.f32 %v4423, %v4563
        %v4602 = vadd.f32 %v4424, %v4568
        %v4603 = vadd.f32 %v4425, %v4573
        %v4604 = vadd.f32 %v4426, %v4578
        %v4605 = vadd.f32 %v4427, %v4583
        %v4606 = vadd.f32 %v4428, %v4588
        %v4607 = vrot.slane %v2208, 2
        %v4608 = vrot.slane %v2209, 2
        %v4609 = vsel %vm2650, %v4607, %v4608
        %v4610 = vrot.slane %v2210, 2
        %v4611 = vsel %vm2650, %v4608, %v4610
        %s4612 = scalar_lea.vmem %s3, 288
        %v4613 = vld [vmem:[%s4612] sm:$0xff]
        %v4614 = vld [vmem:[%s4612 + $0x8] sm:$0xff]
        %v4615 = vld [vmem:[%s4612 + $0x10] sm:$0xf]
        %v4616 = vsel %vm1701, %v4609, 0
        %v4618 = vsel %vm1701, %v4611, 0
        %v4621 = vsel %vm2321, %v4615, 0
        %4623 = vmatprep.subr.mxu0 0.0
        %4624 = vmatpush1.msra.mxu0 0.0
        %4625 = vmatprep.subr.mxu0 0.0
        %4626 = vmatpush1.msra.mxu0 0.0
        %4627 = vmatprep.subr.mxu0 0.0
        %4628 = vmatpush1.msra.mxu0 0.0
        %4629 = vmatprep.subr.mxu0 0.0
        %4630 = vmatpush1.msra.mxu0 0.0
        %4631 = vmatprep.subr.mxu0 0.0
        %4632 = vmatpush1.msra.mxu0 0.0
        %4633 = vmatprep.subr.mxu0 0.0
        %4634 = vmatpush1.msra.mxu0 0.0
        %4635 = vmatprep.subr.mxu0 0.0
        %4636 = vmatpush1.msra.mxu0 0.0
        %4637 = vmatprep.subr.mxu0 0.0
        %4638 = vmatpush1.msra.mxu0 0.0
        %4639 = vmatprep.subr.mxu0 0.0
        %4640 = vmatpush1.msra.mxu0 0.0
        %4641 = vmatprep.subr.mxu0 0.0
        %4642 = vmatpush1.msra.mxu0 0.0
        %4643 = vmatprep.subr.mxu0 0.0
        %4644 = vmatpush1.msra.mxu0 0.0
        %4645 = vmatprep.subr.mxu0 0.0
        %4646 = vmatpush1.msra.mxu0 0.0
        %4647 = vmatprep.subr.mxu0 0.0
        %4648 = vmatpush1.msra.mxu0 0.0
        %4649 = vmatprep.subr.mxu0 0.0
        %4650 = vmatpush1.msra.mxu0 %v4621
        %4651 = vmatprep.subr.mxu0 0.0
        %4652 = vmatpush1.msra.mxu0 %v4614
        %4653 = vmatprep.subr.mxu0 0.0
        %4654 = vmatpush1.msra.mxu0 %v4613
        %4655 = vmatprep.subr.mxu0 0.0
        %4656 = vmatpush2.msra.mxu0 0.0
        %4657 = vmatprep.subr.mxu0 0.0
        %4658 = vmatpush2.msra.mxu0 0.0
        %4659 = vmatprep.subr.mxu0 0.0
        %4660 = vmatpush2.msra.mxu0 0.0
        %4661 = vmatprep.subr.mxu0 0.0
        %4662 = vmatpush2.msra.mxu0 0.0
        %4663 = vmatprep.subr.mxu0 0.0
        %4664 = vmatpush2.msra.mxu0 0.0
        %4665 = vmatprep.subr.mxu0 0.0
        %4666 = vmatpush2.msra.mxu0 0.0
        %4667 = vmatprep.subr.mxu0 0.0
        %4668 = vmatpush2.msra.mxu0 0.0
        %4669 = vmatprep.subr.mxu0 0.0
        %4670 = vmatpush2.msra.mxu0 0.0
        %4671 = vmatprep.subr.mxu0 0.0
        %4672 = vmatpush2.msra.mxu0 0.0
        %4673 = vmatprep.subr.mxu0 0.0
        %4674 = vmatpush2.msra.mxu0 0.0
        %4675 = vmatprep.subr.mxu0 0.0
        %4676 = vmatpush2.msra.mxu0 0.0
        %4677 = vmatprep.subr.mxu0 0.0
        %4678 = vmatpush2.msra.mxu0 0.0
        %4679 = vmatprep.subr.mxu0 0.0
        %4680 = vmatpush2.msra.mxu0 0.0
        %4681 = vmatprep.subr.mxu0 0.0
        %4682 = vmatpush2.msra.mxu0 0.0
        %4683 = vmatprep.subr.mxu0 0.0
        %4684 = vmatpush2.msra.mxu0 0.0
        %4685 = vmatprep.subr.mxu0 0.0
        %4686 = vmatpush2.msra.mxu0 0.0
        %4687 = vmatprep.mubr.f32.mxu0 0.0
        %4688 = vmatmul.mubr.f32.gmra.mxu0 %v2703
        %v4689 = vpop.f32.mrf.mxu0
        %v4690 = vadd.f32 0.0, %v4689
        %v4691 = vpop.f32.mrf.mxu0
        %4692 = vmatprep.mubr.f32.mxu0 0.0
        %4693 = vmatmul.mubr.f32.gmra.mxu0 %v2705
        %v4694 = vpop.f32.mrf.mxu0
        %v4695 = vadd.f32 0.0, %v4694
        %v4696 = vpop.f32.mrf.mxu0
        %4697 = vmatprep.mubr.f32.mxu0 0.0
        %4698 = vmatmul.mubr.f32.gmra.mxu0 %v2707
        %v4699 = vpop.f32.mrf.mxu0
        %v4700 = vadd.f32 0.0, %v4699
        %v4701 = vpop.f32.mrf.mxu0
        %4702 = vmatprep.mubr.f32.mxu0 0.0
        %4703 = vmatmul.mubr.f32.gmra.mxu0 %v2709
        %v4704 = vpop.f32.mrf.mxu0
        %v4705 = vadd.f32 0.0, %v4704
        %v4706 = vpop.f32.mrf.mxu0
        %4707 = vmatprep.mubr.f32.mxu0 0.0
        %4708 = vmatmul.mubr.f32.gmra.mxu0 %v2711
        %v4709 = vpop.f32.mrf.mxu0
        %v4710 = vadd.f32 0.0, %v4709
        %v4711 = vpop.f32.mrf.mxu0
        %4712 = vmatprep.mubr.f32.mxu0 0.0
        %4713 = vmatmul.mubr.f32.gmra.mxu0 %v2713
        %v4714 = vpop.f32.mrf.mxu0
        %v4715 = vadd.f32 0.0, %v4714
        %v4716 = vpop.f32.mrf.mxu0
        %4717 = vmatprep.mubr.f32.mxu0 0.0
        %4718 = vmatmul.mubr.f32.gmra.mxu0 %v2715
        %v4719 = vpop.f32.mrf.mxu0
        %v4720 = vadd.f32 0.0, %v4719
        %v4721 = vpop.f32.mrf.mxu0
        %4722 = vmatprep.mubr.f32.mxu0 0.0
        %4723 = vmatmul.mubr.f32.gmra.mxu0 %v2717
        %v4724 = vpop.f32.mrf.mxu0
        %v4725 = vadd.f32 0.0, %v4724
        %v4726 = vpop.f32.mrf.mxu0
        %4727 = vmatprep.mubr.f32.mxu0 0.0
        %4728 = vmatmul.mubr.f32.gmra.mxu0 %v2719
        %v4729 = vpop.f32.mrf.mxu0
        %v4730 = vadd.f32 0.0, %v4729
        %v4731 = vpop.f32.mrf.mxu0
        %4732 = vmatprep.mubr.f32.mxu0 0.0
        %4733 = vmatmul.mubr.f32.gmra.mxu0 %v2721
        %v4734 = vpop.f32.mrf.mxu0
        %v4735 = vadd.f32 0.0, %v4734
        %v4736 = vpop.f32.mrf.mxu0
        %4737 = vmatprep.mubr.f32.mxu0 0.0
        %4738 = vmatmul.mubr.f32.gmra.mxu0 %v2723
        %v4739 = vpop.f32.mrf.mxu0
        %v4740 = vadd.f32 0.0, %v4739
        %v4741 = vpop.f32.mrf.mxu0
        %4742 = vmatprep.mubr.f32.mxu0 0.0
        %4743 = vmatmul.mubr.f32.gmra.mxu0 %v2725
        %v4744 = vpop.f32.mrf.mxu0
        %v4745 = vadd.f32 0.0, %v4744
        %v4746 = vpop.f32.mrf.mxu0
        %4747 = vmatprep.mubr.f32.mxu0 0.0
        %4748 = vmatmul.mubr.f32.gmra.mxu0 %v3733
        %v4749 = vpop.f32.mrf.mxu0
        %v4750 = vadd.f32 0.0, %v4749
        %v4751 = vpop.f32.mrf.mxu0
        %4752 = vmatprep.mubr.f32.mxu0 0.0
        %4753 = vmatmul.mubr.f32.gmra.mxu0 %v3735
        %v4754 = vpop.f32.mrf.mxu0
        %v4755 = vadd.f32 0.0, %v4754
        %v4756 = vpop.f32.mrf.mxu0
        %4757 = vmatprep.mubr.f32.mxu0 0.0
        %4758 = vmatmul.mubr.f32.gmra.mxu0 %v4616
        %v4759 = vpop.f32.mrf.mxu0
        %v4760 = vadd.f32 0.0, %v4759
        %v4761 = vpop.f32.mrf.mxu0
        %4762 = vmatprep.mubr.f32.mxu0 0.0
        %4763 = vmatmul.mubr.f32.gmra.mxu0 %v4618
        %v4764 = vpop.f32.mrf.mxu0
        %v4765 = vadd.f32 0.0, %v4764
        %v4766 = vpop.f32.mrf.mxu0
        %4767 = vdwg.mxu0
        %v4768 = vadd.f32 %v4591, %v4690
        %v4769 = vadd.f32 %v4592, %v4695
        %v4770 = vadd.f32 %v4593, %v4700
        %v4771 = vadd.f32 %v4594, %v4705
        %v4772 = vadd.f32 %v4595, %v4710
        %v4773 = vadd.f32 %v4596, %v4715
        %v4774 = vadd.f32 %v4597, %v4720
        %v4775 = vadd.f32 %v4598, %v4725
        %v4776 = vadd.f32 %v4599, %v4730
        %v4777 = vadd.f32 %v4600, %v4735
        %v4778 = vadd.f32 %v4601, %v4740
        %v4779 = vadd.f32 %v4602, %v4745
        %v4780 = vadd.f32 %v4603, %v4750
        %v4781 = vadd.f32 %v4604, %v4755
        %v4782 = vadd.f32 %v4605, %v4760
        %v4783 = vadd.f32 %v4606, %v4765
        %v4784 = vrot.slane %v2208, 3
        %v4785 = vrot.slane %v2209, 3
        %v4786 = vsel %vm2891, %v4784, %v4785
        %v4787 = vrot.slane %v2210, 3
        %v4788 = vsel %vm2891, %v4785, %v4787
        %s4789 = scalar_lea.vmem %s3, 312
        %v4790 = vld [vmem:[%s4789] sm:$0xff]
        %v4791 = vld [vmem:[%s4789 + $0x8] sm:$0xff]
        %v4792 = vld [vmem:[%s4789 + $0x10] sm:$0xf]
        %v4793 = vsel %vm1701, %v4786, 0
        %v4795 = vsel %vm1701, %v4788, 0
        %v4798 = vsel %vm2321, %v4792, 0
        %4800 = vmatprep.subr.mxu0 0.0
        %4801 = vmatpush1.msra.mxu0 0.0
        %4802 = vmatprep.subr.mxu0 0.0
        %4803 = vmatpush1.msra.mxu0 0.0
        %4804 = vmatprep.subr.mxu0 0.0
        %4805 = vmatpush1.msra.mxu0 0.0
        %4806 = vmatprep.subr.mxu0 0.0
        %4807 = vmatpush1.msra.mxu0 0.0
        %4808 = vmatprep.subr.mxu0 0.0
        %4809 = vmatpush1.msra.mxu0 0.0
        %4810 = vmatprep.subr.mxu0 0.0
        %4811 = vmatpush1.msra.mxu0 0.0
        %4812 = vmatprep.subr.mxu0 0.0
        %4813 = vmatpush1.msra.mxu0 0.0
        %4814 = vmatprep.subr.mxu0 0.0
        %4815 = vmatpush1.msra.mxu0 0.0
        %4816 = vmatprep.subr.mxu0 0.0
        %4817 = vmatpush1.msra.mxu0 0.0
        %4818 = vmatprep.subr.mxu0 0.0
        %4819 = vmatpush1.msra.mxu0 0.0
        %4820 = vmatprep.subr.mxu0 0.0
        %4821 = vmatpush1.msra.mxu0 0.0
        %4822 = vmatprep.subr.mxu0 0.0
        %4823 = vmatpush1.msra.mxu0 0.0
        %4824 = vmatprep.subr.mxu0 0.0
        %4825 = vmatpush1.msra.mxu0 0.0
        %4826 = vmatprep.subr.mxu0 0.0
        %4827 = vmatpush1.msra.mxu0 %v4798
        %4828 = vmatprep.subr.mxu0 0.0
        %4829 = vmatpush1.msra.mxu0 %v4791
        %4830 = vmatprep.subr.mxu0 0.0
        %4831 = vmatpush1.msra.mxu0 %v4790
        %4832 = vmatprep.subr.mxu0 0.0
        %4833 = vmatpush2.msra.mxu0 0.0
        %4834 = vmatprep.subr.mxu0 0.0
        %4835 = vmatpush2.msra.mxu0 0.0
        %4836 = vmatprep.subr.mxu0 0.0
        %4837 = vmatpush2.msra.mxu0 0.0
        %4838 = vmatprep.subr.mxu0 0.0
        %4839 = vmatpush2.msra.mxu0 0.0
        %4840 = vmatprep.subr.mxu0 0.0
        %4841 = vmatpush2.msra.mxu0 0.0
        %4842 = vmatprep.subr.mxu0 0.0
        %4843 = vmatpush2.msra.mxu0 0.0
        %4844 = vmatprep.subr.mxu0 0.0
        %4845 = vmatpush2.msra.mxu0 0.0
        %4846 = vmatprep.subr.mxu0 0.0
        %4847 = vmatpush2.msra.mxu0 0.0
        %4848 = vmatprep.subr.mxu0 0.0
        %4849 = vmatpush2.msra.mxu0 0.0
        %4850 = vmatprep.subr.mxu0 0.0
        %4851 = vmatpush2.msra.mxu0 0.0
        %4852 = vmatprep.subr.mxu0 0.0
        %4853 = vmatpush2.msra.mxu0 0.0
        %4854 = vmatprep.subr.mxu0 0.0
        %4855 = vmatpush2.msra.mxu0 0.0
        %4856 = vmatprep.subr.mxu0 0.0
        %4857 = vmatpush2.msra.mxu0 0.0
        %4858 = vmatprep.subr.mxu0 0.0
        %4859 = vmatpush2.msra.mxu0 0.0
        %4860 = vmatprep.subr.mxu0 0.0
        %4861 = vmatpush2.msra.mxu0 0.0
        %4862 = vmatprep.subr.mxu0 0.0
        %4863 = vmatpush2.msra.mxu0 0.0
        %4864 = vmatprep.mubr.f32.mxu0 0.0
        %4865 = vmatmul.mubr.f32.gmra.mxu0 %v2944
        %v4866 = vpop.f32.mrf.mxu0
        %v4867 = vadd.f32 0.0, %v4866
        %v4868 = vpop.f32.mrf.mxu0
        %4869 = vmatprep.mubr.f32.mxu0 0.0
        %4870 = vmatmul.mubr.f32.gmra.mxu0 %v2946
        %v4871 = vpop.f32.mrf.mxu0
        %v4872 = vadd.f32 0.0, %v4871
        %v4873 = vpop.f32.mrf.mxu0
        %4874 = vmatprep.mubr.f32.mxu0 0.0
        %4875 = vmatmul.mubr.f32.gmra.mxu0 %v2948
        %v4876 = vpop.f32.mrf.mxu0
        %v4877 = vadd.f32 0.0, %v4876
        %v4878 = vpop.f32.mrf.mxu0
        %4879 = vmatprep.mubr.f32.mxu0 0.0
        %4880 = vmatmul.mubr.f32.gmra.mxu0 %v2950
        %v4881 = vpop.f32.mrf.mxu0
        %v4882 = vadd.f32 0.0, %v4881
        %v4883 = vpop.f32.mrf.mxu0
        %4884 = vmatprep.mubr.f32.mxu0 0.0
        %4885 = vmatmul.mubr.f32.gmra.mxu0 %v2952
        %v4886 = vpop.f32.mrf.mxu0
        %v4887 = vadd.f32 0.0, %v4886
        %v4888 = vpop.f32.mrf.mxu0
        %4889 = vmatprep.mubr.f32.mxu0 0.0
        %4890 = vmatmul.mubr.f32.gmra.mxu0 %v2954
        %v4891 = vpop.f32.mrf.mxu0
        %v4892 = vadd.f32 0.0, %v4891
        %v4893 = vpop.f32.mrf.mxu0
        %4894 = vmatprep.mubr.f32.mxu0 0.0
        %4895 = vmatmul.mubr.f32.gmra.mxu0 %v2956
        %v4896 = vpop.f32.mrf.mxu0
        %v4897 = vadd.f32 0.0, %v4896
        %v4898 = vpop.f32.mrf.mxu0
        %4899 = vmatprep.mubr.f32.mxu0 0.0
        %4900 = vmatmul.mubr.f32.gmra.mxu0 %v2958
        %v4901 = vpop.f32.mrf.mxu0
        %v4902 = vadd.f32 0.0, %v4901
        %v4903 = vpop.f32.mrf.mxu0
        %4904 = vmatprep.mubr.f32.mxu0 0.0
        %4905 = vmatmul.mubr.f32.gmra.mxu0 %v2960
        %v4906 = vpop.f32.mrf.mxu0
        %v4907 = vadd.f32 0.0, %v4906
        %v4908 = vpop.f32.mrf.mxu0
        %4909 = vmatprep.mubr.f32.mxu0 0.0
        %4910 = vmatmul.mubr.f32.gmra.mxu0 %v2962
        %v4911 = vpop.f32.mrf.mxu0
        %v4912 = vadd.f32 0.0, %v4911
        %v4913 = vpop.f32.mrf.mxu0
        %4914 = vmatprep.mubr.f32.mxu0 0.0
        %4915 = vmatmul.mubr.f32.gmra.mxu0 %v2964
        %v4916 = vpop.f32.mrf.mxu0
        %v4917 = vadd.f32 0.0, %v4916
        %v4918 = vpop.f32.mrf.mxu0
        %4919 = vmatprep.mubr.f32.mxu0 0.0
        %4920 = vmatmul.mubr.f32.gmra.mxu0 %v2966
        %v4921 = vpop.f32.mrf.mxu0
        %v4922 = vadd.f32 0.0, %v4921
        %v4923 = vpop.f32.mrf.mxu0
        %4924 = vmatprep.mubr.f32.mxu0 0.0
        %4925 = vmatmul.mubr.f32.gmra.mxu0 %v3910
        %v4926 = vpop.f32.mrf.mxu0
        %v4927 = vadd.f32 0.0, %v4926
        %v4928 = vpop.f32.mrf.mxu0
        %4929 = vmatprep.mubr.f32.mxu0 0.0
        %4930 = vmatmul.mubr.f32.gmra.mxu0 %v3912
        %v4931 = vpop.f32.mrf.mxu0
        %v4932 = vadd.f32 0.0, %v4931
        %v4933 = vpop.f32.mrf.mxu0
        %4934 = vmatprep.mubr.f32.mxu0 0.0
        %4935 = vmatmul.mubr.f32.gmra.mxu0 %v4793
        %v4936 = vpop.f32.mrf.mxu0
        %v4937 = vadd.f32 0.0, %v4936
        %v4938 = vpop.f32.mrf.mxu0
        %4939 = vmatprep.mubr.f32.mxu0 0.0
        %4940 = vmatmul.mubr.f32.gmra.mxu0 %v4795
        %v4941 = vpop.f32.mrf.mxu0
        %v4942 = vadd.f32 0.0, %v4941
        %v4943 = vpop.f32.mrf.mxu0
        %4944 = vdwg.mxu0
        %v4945 = vadd.f32 %v4768, %v4867
        %v4946 = vadd.f32 %v4769, %v4872
        %v4947 = vadd.f32 %v4770, %v4877
        %v4948 = vadd.f32 %v4771, %v4882
        %v4949 = vadd.f32 %v4772, %v4887
        %v4950 = vadd.f32 %v4773, %v4892
        %v4951 = vadd.f32 %v4774, %v4897
        %v4952 = vadd.f32 %v4775, %v4902
        %v4953 = vadd.f32 %v4776, %v4907
        %v4954 = vadd.f32 %v4777, %v4912
        %v4955 = vadd.f32 %v4778, %v4917
        %v4956 = vadd.f32 %v4779, %v4922
        %v4957 = vadd.f32 %v4780, %v4927
        %v4958 = vadd.f32 %v4781, %v4932
        %v4959 = vadd.f32 %v4782, %v4937
        %v4960 = vadd.f32 %v4783, %v4942
        %v4961 = vrot.slane %v2208, 4
        %v4962 = vrot.slane %v2209, 4
        %v4963 = vsel %vm2321, %v4961, %v4962
        %v4964 = vrot.slane %v2210, 4
        %v4965 = vsel %vm2321, %v4962, %v4964
        %s4966 = scalar_lea.vmem %s3, 336
        %v4967 = vld [vmem:[%s4966] sm:$0xff]
        %v4968 = vld [vmem:[%s4966 + $0x8] sm:$0xff]
        %v4969 = vld [vmem:[%s4966 + $0x10] sm:$0xf]
        %v4970 = vsel %vm1701, %v4963, 0
        %v4972 = vsel %vm1701, %v4965, 0
        %v4975 = vsel %vm2321, %v4969, 0
        %4977 = vmatprep.subr.mxu0 0.0
        %4978 = vmatpush1.msra.mxu0 0.0
        %4979 = vmatprep.subr.mxu0 0.0
        %4980 = vmatpush1.msra.mxu0 0.0
        %4981 = vmatprep.subr.mxu0 0.0
        %4982 = vmatpush1.msra.mxu0 0.0
        %4983 = vmatprep.subr.mxu0 0.0
        %4984 = vmatpush1.msra.mxu0 0.0
        %4985 = vmatprep.subr.mxu0 0.0
        %4986 = vmatpush1.msra.mxu0 0.0
        %4987 = vmatprep.subr.mxu0 0.0
        %4988 = vmatpush1.msra.mxu0 0.0
        %4989 = vmatprep.subr.mxu0 0.0
        %4990 = vmatpush1.msra.mxu0 0.0
        %4991 = vmatprep.subr.mxu0 0.0
        %4992 = vmatpush1.msra.mxu0 0.0
        %4993 = vmatprep.subr.mxu0 0.0
        %4994 = vmatpush1.msra.mxu0 0.0
        %4995 = vmatprep.subr.mxu0 0.0
        %4996 = vmatpush1.msra.mxu0 0.0
        %4997 = vmatprep.subr.mxu0 0.0
        %4998 = vmatpush1.msra.mxu0 0.0
        %4999 = vmatprep.subr.mxu0 0.0
        %5000 = vmatpush1.msra.mxu0 0.0
        %5001 = vmatprep.subr.mxu0 0.0
        %5002 = vmatpush1.msra.mxu0 0.0
        %5003 = vmatprep.subr.mxu0 0.0
        %5004 = vmatpush1.msra.mxu0 %v4975
        %5005 = vmatprep.subr.mxu0 0.0
        %5006 = vmatpush1.msra.mxu0 %v4968
        %5007 = vmatprep.subr.mxu0 0.0
        %5008 = vmatpush1.msra.mxu0 %v4967
        %5009 = vmatprep.subr.mxu0 0.0
        %5010 = vmatpush2.msra.mxu0 0.0
        %5011 = vmatprep.subr.mxu0 0.0
        %5012 = vmatpush2.msra.mxu0 0.0
        %5013 = vmatprep.subr.mxu0 0.0
        %5014 = vmatpush2.msra.mxu0 0.0
        %5015 = vmatprep.subr.mxu0 0.0
        %5016 = vmatpush2.msra.mxu0 0.0
        %5017 = vmatprep.subr.mxu0 0.0
        %5018 = vmatpush2.msra.mxu0 0.0
        %5019 = vmatprep.subr.mxu0 0.0
        %5020 = vmatpush2.msra.mxu0 0.0
        %5021 = vmatprep.subr.mxu0 0.0
        %5022 = vmatpush2.msra.mxu0 0.0
        %5023 = vmatprep.subr.mxu0 0.0
        %5024 = vmatpush2.msra.mxu0 0.0
        %5025 = vmatprep.subr.mxu0 0.0
        %5026 = vmatpush2.msra.mxu0 0.0
        %5027 = vmatprep.subr.mxu0 0.0
        %5028 = vmatpush2.msra.mxu0 0.0
        %5029 = vmatprep.subr.mxu0 0.0
        %5030 = vmatpush2.msra.mxu0 0.0
        %5031 = vmatprep.subr.mxu0 0.0
        %5032 = vmatpush2.msra.mxu0 0.0
        %5033 = vmatprep.subr.mxu0 0.0
        %5034 = vmatpush2.msra.mxu0 0.0
        %5035 = vmatprep.subr.mxu0 0.0
        %5036 = vmatpush2.msra.mxu0 0.0
        %5037 = vmatprep.subr.mxu0 0.0
        %5038 = vmatpush2.msra.mxu0 0.0
        %5039 = vmatprep.subr.mxu0 0.0
        %5040 = vmatpush2.msra.mxu0 0.0
        %5041 = vmatprep.mubr.f32.mxu0 0.0
        %5042 = vmatmul.mubr.f32.gmra.mxu0 %v3184
        %v5043 = vpop.f32.mrf.mxu0
        %v5044 = vadd.f32 0.0, %v5043
        %v5045 = vpop.f32.mrf.mxu0
        %5046 = vmatprep.mubr.f32.mxu0 0.0
        %5047 = vmatmul.mubr.f32.gmra.mxu0 %v3186
        %v5048 = vpop.f32.mrf.mxu0
        %v5049 = vadd.f32 0.0, %v5048
        %v5050 = vpop.f32.mrf.mxu0
        %5051 = vmatprep.mubr.f32.mxu0 0.0
        %5052 = vmatmul.mubr.f32.gmra.mxu0 %v3188
        %v5053 = vpop.f32.mrf.mxu0
        %v5054 = vadd.f32 0.0, %v5053
        %v5055 = vpop.f32.mrf.mxu0
        %5056 = vmatprep.mubr.f32.mxu0 0.0
        %5057 = vmatmul.mubr.f32.gmra.mxu0 %v3190
        %v5058 = vpop.f32.mrf.mxu0
        %v5059 = vadd.f32 0.0, %v5058
        %v5060 = vpop.f32.mrf.mxu0
        %5061 = vmatprep.mubr.f32.mxu0 0.0
        %5062 = vmatmul.mubr.f32.gmra.mxu0 %v3192
        %v5063 = vpop.f32.mrf.mxu0
        %v5064 = vadd.f32 0.0, %v5063
        %v5065 = vpop.f32.mrf.mxu0
        %5066 = vmatprep.mubr.f32.mxu0 0.0
        %5067 = vmatmul.mubr.f32.gmra.mxu0 %v3194
        %v5068 = vpop.f32.mrf.mxu0
        %v5069 = vadd.f32 0.0, %v5068
        %v5070 = vpop.f32.mrf.mxu0
        %5071 = vmatprep.mubr.f32.mxu0 0.0
        %5072 = vmatmul.mubr.f32.gmra.mxu0 %v3196
        %v5073 = vpop.f32.mrf.mxu0
        %v5074 = vadd.f32 0.0, %v5073
        %v5075 = vpop.f32.mrf.mxu0
        %5076 = vmatprep.mubr.f32.mxu0 0.0
        %5077 = vmatmul.mubr.f32.gmra.mxu0 %v3198
        %v5078 = vpop.f32.mrf.mxu0
        %v5079 = vadd.f32 0.0, %v5078
        %v5080 = vpop.f32.mrf.mxu0
        %5081 = vmatprep.mubr.f32.mxu0 0.0
        %5082 = vmatmul.mubr.f32.gmra.mxu0 %v3200
        %v5083 = vpop.f32.mrf.mxu0
        %v5084 = vadd.f32 0.0, %v5083
        %v5085 = vpop.f32.mrf.mxu0
        %5086 = vmatprep.mubr.f32.mxu0 0.0
        %5087 = vmatmul.mubr.f32.gmra.mxu0 %v3202
        %v5088 = vpop.f32.mrf.mxu0
        %v5089 = vadd.f32 0.0, %v5088
        %v5090 = vpop.f32.mrf.mxu0
        %5091 = vmatprep.mubr.f32.mxu0 0.0
        %5092 = vmatmul.mubr.f32.gmra.mxu0 %v3204
        %v5093 = vpop.f32.mrf.mxu0
        %v5094 = vadd.f32 0.0, %v5093
        %v5095 = vpop.f32.mrf.mxu0
        %5096 = vmatprep.mubr.f32.mxu0 0.0
        %5097 = vmatmul.mubr.f32.gmra.mxu0 %v3206
        %v5098 = vpop.f32.mrf.mxu0
        %v5099 = vadd.f32 0.0, %v5098
        %v5100 = vpop.f32.mrf.mxu0
        %5101 = vmatprep.mubr.f32.mxu0 0.0
        %5102 = vmatmul.mubr.f32.gmra.mxu0 %v4087
        %v5103 = vpop.f32.mrf.mxu0
        %v5104 = vadd.f32 0.0, %v5103
        %v5105 = vpop.f32.mrf.mxu0
        %5106 = vmatprep.mubr.f32.mxu0 0.0
        %5107 = vmatmul.mubr.f32.gmra.mxu0 %v4089
        %v5108 = vpop.f32.mrf.mxu0
        %v5109 = vadd.f32 0.0, %v5108
        %v5110 = vpop.f32.mrf.mxu0
        %5111 = vmatprep.mubr.f32.mxu0 0.0
        %5112 = vmatmul.mubr.f32.gmra.mxu0 %v4970
        %v5113 = vpop.f32.mrf.mxu0
        %v5114 = vadd.f32 0.0, %v5113
        %v5115 = vpop.f32.mrf.mxu0
        %5116 = vmatprep.mubr.f32.mxu0 0.0
        %5117 = vmatmul.mubr.f32.gmra.mxu0 %v4972
        %v5118 = vpop.f32.mrf.mxu0
        %v5119 = vadd.f32 0.0, %v5118
        %v5120 = vpop.f32.mrf.mxu0
        %5121 = vdwg.mxu0
        %v5122 = vadd.f32 %v4945, %v5044
        %v5123 = vadd.f32 %v4946, %v5049
        %v5124 = vadd.f32 %v4947, %v5054
        %v5125 = vadd.f32 %v4948, %v5059
        %v5126 = vadd.f32 %v4949, %v5064
        %v5127 = vadd.f32 %v4950, %v5069
        %v5128 = vadd.f32 %v4951, %v5074
        %v5129 = vadd.f32 %v4952, %v5079
        %v5130 = vadd.f32 %v4953, %v5084
        %v5131 = vadd.f32 %v4954, %v5089
        %v5132 = vadd.f32 %v4955, %v5094
        %v5133 = vadd.f32 %v4956, %v5099
        %v5134 = vadd.f32 %v4957, %v5104
        %v5135 = vadd.f32 %v4958, %v5109
        %v5136 = vadd.f32 %v4959, %v5114
        %v5137 = vadd.f32 %v4960, %v5119
        %s5138 = scalar_lea.vmem %s3, 360
        %v5139 = vld [vmem:[%s5138] sm:$0xff]
        %v5140 = vld [vmem:[%s5138 + $0x8] sm:$0xff]
        %v5141 = vld [vmem:[%s5138 + $0x10] sm:$0xf]
        %v5143 = vsel %vm1701, %v2211, 0
        %v5146 = vsel %vm1701, %v2212, 0
        %v5149 = vsel %vm2321, %v5141, 0
        %5151 = vmatprep.subr.mxu0 0.0
        %5152 = vmatpush1.msra.mxu0 0.0
        %5153 = vmatprep.subr.mxu0 0.0
        %5154 = vmatpush1.msra.mxu0 0.0
        %5155 = vmatprep.subr.mxu0 0.0
        %5156 = vmatpush1.msra.mxu0 0.0
        %5157 = vmatprep.subr.mxu0 0.0
        %5158 = vmatpush1.msra.mxu0 0.0
        %5159 = vmatprep.subr.mxu0 0.0
        %5160 = vmatpush1.msra.mxu0 0.0
        %5161 = vmatprep.subr.mxu0 0.0
        %5162 = vmatpush1.msra.mxu0 0.0
        %5163 = vmatprep.subr.mxu0 0.0
        %5164 = vmatpush1.msra.mxu0 0.0
        %5165 = vmatprep.subr.mxu0 0.0
        %5166 = vmatpush1.msra.mxu0 0.0
        %5167 = vmatprep.subr.mxu0 0.0
        %5168 = vmatpush1.msra.mxu0 0.0
        %5169 = vmatprep.subr.mxu0 0.0
        %5170 = vmatpush1.msra.mxu0 0.0
        %5171 = vmatprep.subr.mxu0 0.0
        %5172 = vmatpush1.msra.mxu0 0.0
        %5173 = vmatprep.subr.mxu0 0.0
        %5174 = vmatpush1.msra.mxu0 0.0
        %5175 = vmatprep.subr.mxu0 0.0
        %5176 = vmatpush1.msra.mxu0 0.0
        %5177 = vmatprep.subr.mxu0 0.0
        %5178 = vmatpush1.msra.mxu0 %v5149
        %5179 = vmatprep.subr.mxu0 0.0
        %5180 = vmatpush1.msra.mxu0 %v5140
        %5181 = vmatprep.subr.mxu0 0.0
        %5182 = vmatpush1.msra.mxu0 %v5139
        %5183 = vmatprep.subr.mxu0 0.0
        %5184 = vmatpush2.msra.mxu0 0.0
        %5185 = vmatprep.subr.mxu0 0.0
        %5186 = vmatpush2.msra.mxu0 0.0
        %5187 = vmatprep.subr.mxu0 0.0
        %5188 = vmatpush2.msra.mxu0 0.0
        %5189 = vmatprep.subr.mxu0 0.0
        %5190 = vmatpush2.msra.mxu0 0.0
        %5191 = vmatprep.subr.mxu0 0.0
        %5192 = vmatpush2.msra.mxu0 0.0
        %5193 = vmatprep.subr.mxu0 0.0
        %5194 = vmatpush2.msra.mxu0 0.0
        %5195 = vmatprep.subr.mxu0 0.0
        %5196 = vmatpush2.msra.mxu0 0.0
        %5197 = vmatprep.subr.mxu0 0.0
        %5198 = vmatpush2.msra.mxu0 0.0
        %5199 = vmatprep.subr.mxu0 0.0
        %5200 = vmatpush2.msra.mxu0 0.0
        %5201 = vmatprep.subr.mxu0 0.0
        %5202 = vmatpush2.msra.mxu0 0.0
        %5203 = vmatprep.subr.mxu0 0.0
        %5204 = vmatpush2.msra.mxu0 0.0
        %5205 = vmatprep.subr.mxu0 0.0
        %5206 = vmatpush2.msra.mxu0 0.0
        %5207 = vmatprep.subr.mxu0 0.0
        %5208 = vmatpush2.msra.mxu0 0.0
        %5209 = vmatprep.subr.mxu0 0.0
        %5210 = vmatpush2.msra.mxu0 0.0
        %5211 = vmatprep.subr.mxu0 0.0
        %5212 = vmatpush2.msra.mxu0 0.0
        %5213 = vmatprep.subr.mxu0 0.0
        %5214 = vmatpush2.msra.mxu0 0.0
        %5215 = vmatprep.mubr.f32.mxu0 0.0
        %5216 = vmatmul.mubr.f32.gmra.mxu0 %v2482
        %v5217 = vpop.f32.mrf.mxu0
        %v5218 = vadd.f32 0.0, %v5217
        %v5219 = vpop.f32.mrf.mxu0
        %5220 = vmatprep.mubr.f32.mxu0 0.0
        %5221 = vmatmul.mubr.f32.gmra.mxu0 %v2484
        %v5222 = vpop.f32.mrf.mxu0
        %v5223 = vadd.f32 0.0, %v5222
        %v5224 = vpop.f32.mrf.mxu0
        %5225 = vmatprep.mubr.f32.mxu0 0.0
        %5226 = vmatmul.mubr.f32.gmra.mxu0 %v2486
        %v5227 = vpop.f32.mrf.mxu0
        %v5228 = vadd.f32 0.0, %v5227
        %v5229 = vpop.f32.mrf.mxu0
        %5230 = vmatprep.mubr.f32.mxu0 0.0
        %5231 = vmatmul.mubr.f32.gmra.mxu0 %v2488
        %v5232 = vpop.f32.mrf.mxu0
        %v5233 = vadd.f32 0.0, %v5232
        %v5234 = vpop.f32.mrf.mxu0
        %5235 = vmatprep.mubr.f32.mxu0 0.0
        %5236 = vmatmul.mubr.f32.gmra.mxu0 %v2490
        %v5237 = vpop.f32.mrf.mxu0
        %v5238 = vadd.f32 0.0, %v5237
        %v5239 = vpop.f32.mrf.mxu0
        %5240 = vmatprep.mubr.f32.mxu0 0.0
        %5241 = vmatmul.mubr.f32.gmra.mxu0 %v2492
        %v5242 = vpop.f32.mrf.mxu0
        %v5243 = vadd.f32 0.0, %v5242
        %v5244 = vpop.f32.mrf.mxu0
        %5245 = vmatprep.mubr.f32.mxu0 0.0
        %5246 = vmatmul.mubr.f32.gmra.mxu0 %v2494
        %v5247 = vpop.f32.mrf.mxu0
        %v5248 = vadd.f32 0.0, %v5247
        %v5249 = vpop.f32.mrf.mxu0
        %5250 = vmatprep.mubr.f32.mxu0 0.0
        %5251 = vmatmul.mubr.f32.gmra.mxu0 %v2496
        %v5252 = vpop.f32.mrf.mxu0
        %v5253 = vadd.f32 0.0, %v5252
        %v5254 = vpop.f32.mrf.mxu0
        %5255 = vmatprep.mubr.f32.mxu0 0.0
        %5256 = vmatmul.mubr.f32.gmra.mxu0 %v2498
        %v5257 = vpop.f32.mrf.mxu0
        %v5258 = vadd.f32 0.0, %v5257
        %v5259 = vpop.f32.mrf.mxu0
        %5260 = vmatprep.mubr.f32.mxu0 0.0
        %5261 = vmatmul.mubr.f32.gmra.mxu0 %v2500
        %v5262 = vpop.f32.mrf.mxu0
        %v5263 = vadd.f32 0.0, %v5262
        %v5264 = vpop.f32.mrf.mxu0
        %5265 = vmatprep.mubr.f32.mxu0 0.0
        %5266 = vmatmul.mubr.f32.gmra.mxu0 %v3377
        %v5267 = vpop.f32.mrf.mxu0
        %v5268 = vadd.f32 0.0, %v5267
        %v5269 = vpop.f32.mrf.mxu0
        %5270 = vmatprep.mubr.f32.mxu0 0.0
        %5271 = vmatmul.mubr.f32.gmra.mxu0 %v3380
        %v5272 = vpop.f32.mrf.mxu0
        %v5273 = vadd.f32 0.0, %v5272
        %v5274 = vpop.f32.mrf.mxu0
        %5275 = vmatprep.mubr.f32.mxu0 0.0
        %5276 = vmatmul.mubr.f32.gmra.mxu0 %v4260
        %v5277 = vpop.f32.mrf.mxu0
        %v5278 = vadd.f32 0.0, %v5277
        %v5279 = vpop.f32.mrf.mxu0
        %5280 = vmatprep.mubr.f32.mxu0 0.0
        %5281 = vmatmul.mubr.f32.gmra.mxu0 %v4263
        %v5282 = vpop.f32.mrf.mxu0
        %v5283 = vadd.f32 0.0, %v5282
        %v5284 = vpop.f32.mrf.mxu0
        %5285 = vmatprep.mubr.f32.mxu0 0.0
        %5286 = vmatmul.mubr.f32.gmra.mxu0 %v5143
        %v5287 = vpop.f32.mrf.mxu0
        %v5288 = vadd.f32 0.0, %v5287
        %v5289 = vpop.f32.mrf.mxu0
        %5290 = vmatprep.mubr.f32.mxu0 0.0
        %5291 = vmatmul.mubr.f32.gmra.mxu0 %v5146
        %v5292 = vpop.f32.mrf.mxu0
        %v5293 = vadd.f32 0.0, %v5292
        %v5294 = vpop.f32.mrf.mxu0
        %5295 = vdwg.mxu0
        %v5296 = vadd.f32 %v5122, %v5218
        %v5297 = vadd.f32 %v5123, %v5223
        %v5298 = vadd.f32 %v5124, %v5228
        %v5299 = vadd.f32 %v5125, %v5233
        %v5300 = vadd.f32 %v5126, %v5238
        %v5301 = vadd.f32 %v5127, %v5243
        %v5302 = vadd.f32 %v5128, %v5248
        %v5303 = vadd.f32 %v5129, %v5253
        %v5304 = vadd.f32 %v5130, %v5258
        %v5305 = vadd.f32 %v5131, %v5263
        %v5306 = vadd.f32 %v5132, %v5268
        %v5307 = vadd.f32 %v5133, %v5273
        %v5308 = vadd.f32 %v5134, %v5278
        %v5309 = vadd.f32 %v5135, %v5283
        %v5310 = vadd.f32 %v5136, %v5288
        %v5311 = vadd.f32 %v5137, %v5293
        %v5313 = vrot.slane %v2211, 1
        %v5314 = vrot.slane %v2212, 1
        %v5315 = vsel %vm2244, %v5313, %v5314
        %v5316 = vrot.slane %v2213, 1
        %v5317 = vsel %vm2244, %v5314, %v5316
        %s5318 = scalar_lea.vmem %s3, 384
        %v5319 = vld [vmem:[%s5318] sm:$0xff]
        %v5320 = vld [vmem:[%s5318 + $0x8] sm:$0xff]
        %v5321 = vld [vmem:[%s5318 + $0x10] sm:$0xf]
        %v5322 = vsel %vm1701, %v5315, 0
        %v5324 = vsel %vm1701, %v5317, 0
        %v5327 = vsel %vm2321, %v5321, 0
        %5329 = vmatprep.subr.mxu0 0.0
        %5330 = vmatpush1.msra.mxu0 0.0
        %5331 = vmatprep.subr.mxu0 0.0
        %5332 = vmatpush1.msra.mxu0 0.0
        %5333 = vmatprep.subr.mxu0 0.0
        %5334 = vmatpush1.msra.mxu0 0.0
        %5335 = vmatprep.subr.mxu0 0.0
        %5336 = vmatpush1.msra.mxu0 0.0
        %5337 = vmatprep.subr.mxu0 0.0
        %5338 = vmatpush1.msra.mxu0 0.0
        %5339 = vmatprep.subr.mxu0 0.0
        %5340 = vmatpush1.msra.mxu0 0.0
        %5341 = vmatprep.subr.mxu0 0.0
        %5342 = vmatpush1.msra.mxu0 0.0
        %5343 = vmatprep.subr.mxu0 0.0
        %5344 = vmatpush1.msra.mxu0 0.0
        %5345 = vmatprep.subr.mxu0 0.0
        %5346 = vmatpush1.msra.mxu0 0.0
        %5347 = vmatprep.subr.mxu0 0.0
        %5348 = vmatpush1.msra.mxu0 0.0
        %5349 = vmatprep.subr.mxu0 0.0
        %5350 = vmatpush1.msra.mxu0 0.0
        %5351 = vmatprep.subr.mxu0 0.0
        %5352 = vmatpush1.msra.mxu0 0.0
        %5353 = vmatprep.subr.mxu0 0.0
        %5354 = vmatpush1.msra.mxu0 0.0
        %5355 = vmatprep.subr.mxu0 0.0
        %5356 = vmatpush1.msra.mxu0 %v5327
        %5357 = vmatprep.subr.mxu0 0.0
        %5358 = vmatpush1.msra.mxu0 %v5320
        %5359 = vmatprep.subr.mxu0 0.0
        %5360 = vmatpush1.msra.mxu0 %v5319
        %5361 = vmatprep.subr.mxu0 0.0
        %5362 = vmatpush2.msra.mxu0 0.0
        %5363 = vmatprep.subr.mxu0 0.0
        %5364 = vmatpush2.msra.mxu0 0.0
        %5365 = vmatprep.subr.mxu0 0.0
        %5366 = vmatpush2.msra.mxu0 0.0
        %5367 = vmatprep.subr.mxu0 0.0
        %5368 = vmatpush2.msra.mxu0 0.0
        %5369 = vmatprep.subr.mxu0 0.0
        %5370 = vmatpush2.msra.mxu0 0.0
        %5371 = vmatprep.subr.mxu0 0.0
        %5372 = vmatpush2.msra.mxu0 0.0
        %5373 = vmatprep.subr.mxu0 0.0
        %5374 = vmatpush2.msra.mxu0 0.0
        %5375 = vmatprep.subr.mxu0 0.0
        %5376 = vmatpush2.msra.mxu0 0.0
        %5377 = vmatprep.subr.mxu0 0.0
        %5378 = vmatpush2.msra.mxu0 0.0
        %5379 = vmatprep.subr.mxu0 0.0
        %5380 = vmatpush2.msra.mxu0 0.0
        %5381 = vmatprep.subr.mxu0 0.0
        %5382 = vmatpush2.msra.mxu0 0.0
        %5383 = vmatprep.subr.mxu0 0.0
        %5384 = vmatpush2.msra.mxu0 0.0
        %5385 = vmatprep.subr.mxu0 0.0
        %5386 = vmatpush2.msra.mxu0 0.0
        %5387 = vmatprep.subr.mxu0 0.0
        %5388 = vmatpush2.msra.mxu0 0.0
        %5389 = vmatprep.subr.mxu0 0.0
        %5390 = vmatpush2.msra.mxu0 0.0
        %5391 = vmatprep.subr.mxu0 0.0
        %5392 = vmatpush2.msra.mxu0 0.0
        %5393 = vmatprep.mubr.f32.mxu0 0.0
        %5394 = vmatmul.mubr.f32.gmra.mxu0 %v2301
        %v5395 = vpop.f32.mrf.mxu0
        %v5396 = vadd.f32 0.0, %v5395
        %v5397 = vpop.f32.mrf.mxu0
        %5398 = vmatprep.mubr.f32.mxu0 0.0
        %5399 = vmatmul.mubr.f32.gmra.mxu0 %v2303
        %v5400 = vpop.f32.mrf.mxu0
        %v5401 = vadd.f32 0.0, %v5400
        %v5402 = vpop.f32.mrf.mxu0
        %5403 = vmatprep.mubr.f32.mxu0 0.0
        %5404 = vmatmul.mubr.f32.gmra.mxu0 %v2305
        %v5405 = vpop.f32.mrf.mxu0
        %v5406 = vadd.f32 0.0, %v5405
        %v5407 = vpop.f32.mrf.mxu0
        %5408 = vmatprep.mubr.f32.mxu0 0.0
        %5409 = vmatmul.mubr.f32.gmra.mxu0 %v2307
        %v5410 = vpop.f32.mrf.mxu0
        %v5411 = vadd.f32 0.0, %v5410
        %v5412 = vpop.f32.mrf.mxu0
        %5413 = vmatprep.mubr.f32.mxu0 0.0
        %5414 = vmatmul.mubr.f32.gmra.mxu0 %v2309
        %v5415 = vpop.f32.mrf.mxu0
        %v5416 = vadd.f32 0.0, %v5415
        %v5417 = vpop.f32.mrf.mxu0
        %5418 = vmatprep.mubr.f32.mxu0 0.0
        %5419 = vmatmul.mubr.f32.gmra.mxu0 %v2311
        %v5420 = vpop.f32.mrf.mxu0
        %v5421 = vadd.f32 0.0, %v5420
        %v5422 = vpop.f32.mrf.mxu0
        %5423 = vmatprep.mubr.f32.mxu0 0.0
        %5424 = vmatmul.mubr.f32.gmra.mxu0 %v2313
        %v5425 = vpop.f32.mrf.mxu0
        %v5426 = vadd.f32 0.0, %v5425
        %v5427 = vpop.f32.mrf.mxu0
        %5428 = vmatprep.mubr.f32.mxu0 0.0
        %5429 = vmatmul.mubr.f32.gmra.mxu0 %v2315
        %v5430 = vpop.f32.mrf.mxu0
        %v5431 = vadd.f32 0.0, %v5430
        %v5432 = vpop.f32.mrf.mxu0
        %5433 = vmatprep.mubr.f32.mxu0 0.0
        %5434 = vmatmul.mubr.f32.gmra.mxu0 %v2317
        %v5435 = vpop.f32.mrf.mxu0
        %v5436 = vadd.f32 0.0, %v5435
        %v5437 = vpop.f32.mrf.mxu0
        %5438 = vmatprep.mubr.f32.mxu0 0.0
        %5439 = vmatmul.mubr.f32.gmra.mxu0 %v2319
        %v5440 = vpop.f32.mrf.mxu0
        %v5441 = vadd.f32 0.0, %v5440
        %v5442 = vpop.f32.mrf.mxu0
        %5443 = vmatprep.mubr.f32.mxu0 0.0
        %5444 = vmatmul.mubr.f32.gmra.mxu0 %v3556
        %v5445 = vpop.f32.mrf.mxu0
        %v5446 = vadd.f32 0.0, %v5445
        %v5447 = vpop.f32.mrf.mxu0
        %5448 = vmatprep.mubr.f32.mxu0 0.0
        %5449 = vmatmul.mubr.f32.gmra.mxu0 %v3558
        %v5450 = vpop.f32.mrf.mxu0
        %v5451 = vadd.f32 0.0, %v5450
        %v5452 = vpop.f32.mrf.mxu0
        %5453 = vmatprep.mubr.f32.mxu0 0.0
        %5454 = vmatmul.mubr.f32.gmra.mxu0 %v4439
        %v5455 = vpop.f32.mrf.mxu0
        %v5456 = vadd.f32 0.0, %v5455
        %v5457 = vpop.f32.mrf.mxu0
        %5458 = vmatprep.mubr.f32.mxu0 0.0
        %5459 = vmatmul.mubr.f32.gmra.mxu0 %v4441
        %v5460 = vpop.f32.mrf.mxu0
        %v5461 = vadd.f32 0.0, %v5460
        %v5462 = vpop.f32.mrf.mxu0
        %5463 = vmatprep.mubr.f32.mxu0 0.0
        %5464 = vmatmul.mubr.f32.gmra.mxu0 %v5322
        %v5465 = vpop.f32.mrf.mxu0
        %v5466 = vadd.f32 0.0, %v5465
        %v5467 = vpop.f32.mrf.mxu0
        %5468 = vmatprep.mubr.f32.mxu0 0.0
        %5469 = vmatmul.mubr.f32.gmra.mxu0 %v5324
        %v5470 = vpop.f32.mrf.mxu0
        %v5471 = vadd.f32 0.0, %v5470
        %v5472 = vpop.f32.mrf.mxu0
        %5473 = vdwg.mxu0
        %v5474 = vadd.f32 %v5296, %v5396
        %v5475 = vadd.f32 %v5297, %v5401
        %v5476 = vadd.f32 %v5298, %v5406
        %v5477 = vadd.f32 %v5299, %v5411
        %v5478 = vadd.f32 %v5300, %v5416
        %v5479 = vadd.f32 %v5301, %v5421
        %v5480 = vadd.f32 %v5302, %v5426
        %v5481 = vadd.f32 %v5303, %v5431
        %v5482 = vadd.f32 %v5304, %v5436
        %v5483 = vadd.f32 %v5305, %v5441
        %v5484 = vadd.f32 %v5306, %v5446
        %v5485 = vadd.f32 %v5307, %v5451
        %v5486 = vadd.f32 %v5308, %v5456
        %v5487 = vadd.f32 %v5309, %v5461
        %v5488 = vadd.f32 %v5310, %v5466
        %v5489 = vadd.f32 %v5311, %v5471
        %v5490 = vrot.slane %v2211, 2
        %v5491 = vrot.slane %v2212, 2
        %v5492 = vsel %vm2650, %v5490, %v5491
        %v5493 = vrot.slane %v2213, 2
        %v5494 = vsel %vm2650, %v5491, %v5493
        %s5495 = scalar_lea.vmem %s3, 408
        %v5496 = vld [vmem:[%s5495] sm:$0xff]
        %v5497 = vld [vmem:[%s5495 + $0x8] sm:$0xff]
        %v5498 = vld [vmem:[%s5495 + $0x10] sm:$0xf]
        %v5499 = vsel %vm1701, %v5492, 0
        %v5501 = vsel %vm1701, %v5494, 0
        %v5504 = vsel %vm2321, %v5498, 0
        %5506 = vmatprep.subr.mxu0 0.0
        %5507 = vmatpush1.msra.mxu0 0.0
        %5508 = vmatprep.subr.mxu0 0.0
        %5509 = vmatpush1.msra.mxu0 0.0
        %5510 = vmatprep.subr.mxu0 0.0
        %5511 = vmatpush1.msra.mxu0 0.0
        %5512 = vmatprep.subr.mxu0 0.0
        %5513 = vmatpush1.msra.mxu0 0.0
        %5514 = vmatprep.subr.mxu0 0.0
        %5515 = vmatpush1.msra.mxu0 0.0
        %5516 = vmatprep.subr.mxu0 0.0
        %5517 = vmatpush1.msra.mxu0 0.0
        %5518 = vmatprep.subr.mxu0 0.0
        %5519 = vmatpush1.msra.mxu0 0.0
        %5520 = vmatprep.subr.mxu0 0.0
        %5521 = vmatpush1.msra.mxu0 0.0
        %5522 = vmatprep.subr.mxu0 0.0
        %5523 = vmatpush1.msra.mxu0 0.0
        %5524 = vmatprep.subr.mxu0 0.0
        %5525 = vmatpush1.msra.mxu0 0.0
        %5526 = vmatprep.subr.mxu0 0.0
        %5527 = vmatpush1.msra.mxu0 0.0
        %5528 = vmatprep.subr.mxu0 0.0
        %5529 = vmatpush1.msra.mxu0 0.0
        %5530 = vmatprep.subr.mxu0 0.0
        %5531 = vmatpush1.msra.mxu0 0.0
        %5532 = vmatprep.subr.mxu0 0.0
        %5533 = vmatpush1.msra.mxu0 %v5504
        %5534 = vmatprep.subr.mxu0 0.0
        %5535 = vmatpush1.msra.mxu0 %v5497
        %5536 = vmatprep.subr.mxu0 0.0
        %5537 = vmatpush1.msra.mxu0 %v5496
        %5538 = vmatprep.subr.mxu0 0.0
        %5539 = vmatpush2.msra.mxu0 0.0
        %5540 = vmatprep.subr.mxu0 0.0
        %5541 = vmatpush2.msra.mxu0 0.0
        %5542 = vmatprep.subr.mxu0 0.0
        %5543 = vmatpush2.msra.mxu0 0.0
        %5544 = vmatprep.subr.mxu0 0.0
        %5545 = vmatpush2.msra.mxu0 0.0
        %5546 = vmatprep.subr.mxu0 0.0
        %5547 = vmatpush2.msra.mxu0 0.0
        %5548 = vmatprep.subr.mxu0 0.0
        %5549 = vmatpush2.msra.mxu0 0.0
        %5550 = vmatprep.subr.mxu0 0.0
        %5551 = vmatpush2.msra.mxu0 0.0
        %5552 = vmatprep.subr.mxu0 0.0
        %5553 = vmatpush2.msra.mxu0 0.0
        %5554 = vmatprep.subr.mxu0 0.0
        %5555 = vmatpush2.msra.mxu0 0.0
        %5556 = vmatprep.subr.mxu0 0.0
        %5557 = vmatpush2.msra.mxu0 0.0
        %5558 = vmatprep.subr.mxu0 0.0
        %5559 = vmatpush2.msra.mxu0 0.0
        %5560 = vmatprep.subr.mxu0 0.0
        %5561 = vmatpush2.msra.mxu0 0.0
        %5562 = vmatprep.subr.mxu0 0.0
        %5563 = vmatpush2.msra.mxu0 0.0
        %5564 = vmatprep.subr.mxu0 0.0
        %5565 = vmatpush2.msra.mxu0 0.0
        %5566 = vmatprep.subr.mxu0 0.0
        %5567 = vmatpush2.msra.mxu0 0.0
        %5568 = vmatprep.subr.mxu0 0.0
        %5569 = vmatpush2.msra.mxu0 0.0
        %5570 = vmatprep.mubr.f32.mxu0 0.0
        %5571 = vmatmul.mubr.f32.gmra.mxu0 %v2707
        %v5572 = vpop.f32.mrf.mxu0
        %v5573 = vadd.f32 0.0, %v5572
        %v5574 = vpop.f32.mrf.mxu0
        %5575 = vmatprep.mubr.f32.mxu0 0.0
        %5576 = vmatmul.mubr.f32.gmra.mxu0 %v2709
        %v5577 = vpop.f32.mrf.mxu0
        %v5578 = vadd.f32 0.0, %v5577
        %v5579 = vpop.f32.mrf.mxu0
        %5580 = vmatprep.mubr.f32.mxu0 0.0
        %5581 = vmatmul.mubr.f32.gmra.mxu0 %v2711
        %v5582 = vpop.f32.mrf.mxu0
        %v5583 = vadd.f32 0.0, %v5582
        %v5584 = vpop.f32.mrf.mxu0
        %5585 = vmatprep.mubr.f32.mxu0 0.0
        %5586 = vmatmul.mubr.f32.gmra.mxu0 %v2713
        %v5587 = vpop.f32.mrf.mxu0
        %v5588 = vadd.f32 0.0, %v5587
        %v5589 = vpop.f32.mrf.mxu0
        %5590 = vmatprep.mubr.f32.mxu0 0.0
        %5591 = vmatmul.mubr.f32.gmra.mxu0 %v2715
        %v5592 = vpop.f32.mrf.mxu0
        %v5593 = vadd.f32 0.0, %v5592
        %v5594 = vpop.f32.mrf.mxu0
        %5595 = vmatprep.mubr.f32.mxu0 0.0
        %5596 = vmatmul.mubr.f32.gmra.mxu0 %v2717
        %v5597 = vpop.f32.mrf.mxu0
        %v5598 = vadd.f32 0.0, %v5597
        %v5599 = vpop.f32.mrf.mxu0
        %5600 = vmatprep.mubr.f32.mxu0 0.0
        %5601 = vmatmul.mubr.f32.gmra.mxu0 %v2719
        %v5602 = vpop.f32.mrf.mxu0
        %v5603 = vadd.f32 0.0, %v5602
        %v5604 = vpop.f32.mrf.mxu0
        %5605 = vmatprep.mubr.f32.mxu0 0.0
        %5606 = vmatmul.mubr.f32.gmra.mxu0 %v2721
        %v5607 = vpop.f32.mrf.mxu0
        %v5608 = vadd.f32 0.0, %v5607
        %v5609 = vpop.f32.mrf.mxu0
        %5610 = vmatprep.mubr.f32.mxu0 0.0
        %5611 = vmatmul.mubr.f32.gmra.mxu0 %v2723
        %v5612 = vpop.f32.mrf.mxu0
        %v5613 = vadd.f32 0.0, %v5612
        %v5614 = vpop.f32.mrf.mxu0
        %5615 = vmatprep.mubr.f32.mxu0 0.0
        %5616 = vmatmul.mubr.f32.gmra.mxu0 %v2725
        %v5617 = vpop.f32.mrf.mxu0
        %v5618 = vadd.f32 0.0, %v5617
        %v5619 = vpop.f32.mrf.mxu0
        %5620 = vmatprep.mubr.f32.mxu0 0.0
        %5621 = vmatmul.mubr.f32.gmra.mxu0 %v3733
        %v5622 = vpop.f32.mrf.mxu0
        %v5623 = vadd.f32 0.0, %v5622
        %v5624 = vpop.f32.mrf.mxu0
        %5625 = vmatprep.mubr.f32.mxu0 0.0
        %5626 = vmatmul.mubr.f32.gmra.mxu0 %v3735
        %v5627 = vpop.f32.mrf.mxu0
        %v5628 = vadd.f32 0.0, %v5627
        %v5629 = vpop.f32.mrf.mxu0
        %5630 = vmatprep.mubr.f32.mxu0 0.0
        %5631 = vmatmul.mubr.f32.gmra.mxu0 %v4616
        %v5632 = vpop.f32.mrf.mxu0
        %v5633 = vadd.f32 0.0, %v5632
        %v5634 = vpop.f32.mrf.mxu0
        %5635 = vmatprep.mubr.f32.mxu0 0.0
        %5636 = vmatmul.mubr.f32.gmra.mxu0 %v4618
        %v5637 = vpop.f32.mrf.mxu0
        %v5638 = vadd.f32 0.0, %v5637
        %v5639 = vpop.f32.mrf.mxu0
        %5640 = vmatprep.mubr.f32.mxu0 0.0
        %5641 = vmatmul.mubr.f32.gmra.mxu0 %v5499
        %v5642 = vpop.f32.mrf.mxu0
        %v5643 = vadd.f32 0.0, %v5642
        %v5644 = vpop.f32.mrf.mxu0
        %5645 = vmatprep.mubr.f32.mxu0 0.0
        %5646 = vmatmul.mubr.f32.gmra.mxu0 %v5501
        %v5647 = vpop.f32.mrf.mxu0
        %v5648 = vadd.f32 0.0, %v5647
        %v5649 = vpop.f32.mrf.mxu0
        %5650 = vdwg.mxu0
        %v5651 = vadd.f32 %v5474, %v5573
        %v5652 = vadd.f32 %v5475, %v5578
        %v5653 = vadd.f32 %v5476, %v5583
        %v5654 = vadd.f32 %v5477, %v5588
        %v5655 = vadd.f32 %v5478, %v5593
        %v5656 = vadd.f32 %v5479, %v5598
        %v5657 = vadd.f32 %v5480, %v5603
        %v5658 = vadd.f32 %v5481, %v5608
        %v5659 = vadd.f32 %v5482, %v5613
        %v5660 = vadd.f32 %v5483, %v5618
        %v5661 = vadd.f32 %v5484, %v5623
        %v5662 = vadd.f32 %v5485, %v5628
        %v5663 = vadd.f32 %v5486, %v5633
        %v5664 = vadd.f32 %v5487, %v5638
        %v5665 = vadd.f32 %v5488, %v5643
        %v5666 = vadd.f32 %v5489, %v5648
        %v5667 = vrot.slane %v2211, 3
        %v5668 = vrot.slane %v2212, 3
        %v5669 = vsel %vm2891, %v5667, %v5668
        %v5670 = vrot.slane %v2213, 3
        %v5671 = vsel %vm2891, %v5668, %v5670
        %s5672 = scalar_lea.vmem %s3, 432
        %v5673 = vld [vmem:[%s5672] sm:$0xff]
        %v5674 = vld [vmem:[%s5672 + $0x8] sm:$0xff]
        %v5675 = vld [vmem:[%s5672 + $0x10] sm:$0xf]
        %v5676 = vsel %vm1701, %v5669, 0
        %v5678 = vsel %vm1701, %v5671, 0
        %v5681 = vsel %vm2321, %v5675, 0
        %5683 = vmatprep.subr.mxu0 0.0
        %5684 = vmatpush1.msra.mxu0 0.0
        %5685 = vmatprep.subr.mxu0 0.0
        %5686 = vmatpush1.msra.mxu0 0.0
        %5687 = vmatprep.subr.mxu0 0.0
        %5688 = vmatpush1.msra.mxu0 0.0
        %5689 = vmatprep.subr.mxu0 0.0
        %5690 = vmatpush1.msra.mxu0 0.0
        %5691 = vmatprep.subr.mxu0 0.0
        %5692 = vmatpush1.msra.mxu0 0.0
        %5693 = vmatprep.subr.mxu0 0.0
        %5694 = vmatpush1.msra.mxu0 0.0
        %5695 = vmatprep.subr.mxu0 0.0
        %5696 = vmatpush1.msra.mxu0 0.0
        %5697 = vmatprep.subr.mxu0 0.0
        %5698 = vmatpush1.msra.mxu0 0.0
        %5699 = vmatprep.subr.mxu0 0.0
        %5700 = vmatpush1.msra.mxu0 0.0
        %5701 = vmatprep.subr.mxu0 0.0
        %5702 = vmatpush1.msra.mxu0 0.0
        %5703 = vmatprep.subr.mxu0 0.0
        %5704 = vmatpush1.msra.mxu0 0.0
        %5705 = vmatprep.subr.mxu0 0.0
        %5706 = vmatpush1.msra.mxu0 0.0
        %5707 = vmatprep.subr.mxu0 0.0
        %5708 = vmatpush1.msra.mxu0 0.0
        %5709 = vmatprep.subr.mxu0 0.0
        %5710 = vmatpush1.msra.mxu0 %v5681
        %5711 = vmatprep.subr.mxu0 0.0
        %5712 = vmatpush1.msra.mxu0 %v5674
        %5713 = vmatprep.subr.mxu0 0.0
        %5714 = vmatpush1.msra.mxu0 %v5673
        %5715 = vmatprep.subr.mxu0 0.0
        %5716 = vmatpush2.msra.mxu0 0.0
        %5717 = vmatprep.subr.mxu0 0.0
        %5718 = vmatpush2.msra.mxu0 0.0
        %5719 = vmatprep.subr.mxu0 0.0
        %5720 = vmatpush2.msra.mxu0 0.0
        %5721 = vmatprep.subr.mxu0 0.0
        %5722 = vmatpush2.msra.mxu0 0.0
        %5723 = vmatprep.subr.mxu0 0.0
        %5724 = vmatpush2.msra.mxu0 0.0
        %5725 = vmatprep.subr.mxu0 0.0
        %5726 = vmatpush2.msra.mxu0 0.0
        %5727 = vmatprep.subr.mxu0 0.0
        %5728 = vmatpush2.msra.mxu0 0.0
        %5729 = vmatprep.subr.mxu0 0.0
        %5730 = vmatpush2.msra.mxu0 0.0
        %5731 = vmatprep.subr.mxu0 0.0
        %5732 = vmatpush2.msra.mxu0 0.0
        %5733 = vmatprep.subr.mxu0 0.0
        %5734 = vmatpush2.msra.mxu0 0.0
        %5735 = vmatprep.subr.mxu0 0.0
        %5736 = vmatpush2.msra.mxu0 0.0
        %5737 = vmatprep.subr.mxu0 0.0
        %5738 = vmatpush2.msra.mxu0 0.0
        %5739 = vmatprep.subr.mxu0 0.0
        %5740 = vmatpush2.msra.mxu0 0.0
        %5741 = vmatprep.subr.mxu0 0.0
        %5742 = vmatpush2.msra.mxu0 0.0
        %5743 = vmatprep.subr.mxu0 0.0
        %5744 = vmatpush2.msra.mxu0 0.0
        %5745 = vmatprep.subr.mxu0 0.0
        %5746 = vmatpush2.msra.mxu0 0.0
        %5747 = vmatprep.mubr.f32.mxu0 0.0
        %5748 = vmatmul.mubr.f32.gmra.mxu0 %v2948
        %v5749 = vpop.f32.mrf.mxu0
        %v5750 = vadd.f32 0.0, %v5749
        %v5751 = vpop.f32.mrf.mxu0
        %5752 = vmatprep.mubr.f32.mxu0 0.0
        %5753 = vmatmul.mubr.f32.gmra.mxu0 %v2950
        %v5754 = vpop.f32.mrf.mxu0
        %v5755 = vadd.f32 0.0, %v5754
        %v5756 = vpop.f32.mrf.mxu0
        %5757 = vmatprep.mubr.f32.mxu0 0.0
        %5758 = vmatmul.mubr.f32.gmra.mxu0 %v2952
        %v5759 = vpop.f32.mrf.mxu0
        %v5760 = vadd.f32 0.0, %v5759
        %v5761 = vpop.f32.mrf.mxu0
        %5762 = vmatprep.mubr.f32.mxu0 0.0
        %5763 = vmatmul.mubr.f32.gmra.mxu0 %v2954
        %v5764 = vpop.f32.mrf.mxu0
        %v5765 = vadd.f32 0.0, %v5764
        %v5766 = vpop.f32.mrf.mxu0
        %5767 = vmatprep.mubr.f32.mxu0 0.0
        %5768 = vmatmul.mubr.f32.gmra.mxu0 %v2956
        %v5769 = vpop.f32.mrf.mxu0
        %v5770 = vadd.f32 0.0, %v5769
        %v5771 = vpop.f32.mrf.mxu0
        %5772 = vmatprep.mubr.f32.mxu0 0.0
        %5773 = vmatmul.mubr.f32.gmra.mxu0 %v2958
        %v5774 = vpop.f32.mrf.mxu0
        %v5775 = vadd.f32 0.0, %v5774
        %v5776 = vpop.f32.mrf.mxu0
        %5777 = vmatprep.mubr.f32.mxu0 0.0
        %5778 = vmatmul.mubr.f32.gmra.mxu0 %v2960
        %v5779 = vpop.f32.mrf.mxu0
        %v5780 = vadd.f32 0.0, %v5779
        %v5781 = vpop.f32.mrf.mxu0
        %5782 = vmatprep.mubr.f32.mxu0 0.0
        %5783 = vmatmul.mubr.f32.gmra.mxu0 %v2962
        %v5784 = vpop.f32.mrf.mxu0
        %v5785 = vadd.f32 0.0, %v5784
        %v5786 = vpop.f32.mrf.mxu0
        %5787 = vmatprep.mubr.f32.mxu0 0.0
        %5788 = vmatmul.mubr.f32.gmra.mxu0 %v2964
        %v5789 = vpop.f32.mrf.mxu0
        %v5790 = vadd.f32 0.0, %v5789
        %v5791 = vpop.f32.mrf.mxu0
        %5792 = vmatprep.mubr.f32.mxu0 0.0
        %5793 = vmatmul.mubr.f32.gmra.mxu0 %v2966
        %v5794 = vpop.f32.mrf.mxu0
        %v5795 = vadd.f32 0.0, %v5794
        %v5796 = vpop.f32.mrf.mxu0
        %5797 = vmatprep.mubr.f32.mxu0 0.0
        %5798 = vmatmul.mubr.f32.gmra.mxu0 %v3910
        %v5799 = vpop.f32.mrf.mxu0
        %v5800 = vadd.f32 0.0, %v5799
        %v5801 = vpop.f32.mrf.mxu0
        %5802 = vmatprep.mubr.f32.mxu0 0.0
        %5803 = vmatmul.mubr.f32.gmra.mxu0 %v3912
        %v5804 = vpop.f32.mrf.mxu0
        %v5805 = vadd.f32 0.0, %v5804
        %v5806 = vpop.f32.mrf.mxu0
        %5807 = vmatprep.mubr.f32.mxu0 0.0
        %5808 = vmatmul.mubr.f32.gmra.mxu0 %v4793
        %v5809 = vpop.f32.mrf.mxu0
        %v5810 = vadd.f32 0.0, %v5809
        %v5811 = vpop.f32.mrf.mxu0
        %5812 = vmatprep.mubr.f32.mxu0 0.0
        %5813 = vmatmul.mubr.f32.gmra.mxu0 %v4795
        %v5814 = vpop.f32.mrf.mxu0
        %v5815 = vadd.f32 0.0, %v5814
        %v5816 = vpop.f32.mrf.mxu0
        %5817 = vmatprep.mubr.f32.mxu0 0.0
        %5818 = vmatmul.mubr.f32.gmra.mxu0 %v5676
        %v5819 = vpop.f32.mrf.mxu0
        %v5820 = vadd.f32 0.0, %v5819
        %v5821 = vpop.f32.mrf.mxu0
        %5822 = vmatprep.mubr.f32.mxu0 0.0
        %5823 = vmatmul.mubr.f32.gmra.mxu0 %v5678
        %v5824 = vpop.f32.mrf.mxu0
        %v5825 = vadd.f32 0.0, %v5824
        %v5826 = vpop.f32.mrf.mxu0
        %5827 = vdwg.mxu0
        %v5828 = vadd.f32 %v5651, %v5750
        %v5829 = vadd.f32 %v5652, %v5755
        %v5830 = vadd.f32 %v5653, %v5760
        %v5831 = vadd.f32 %v5654, %v5765
        %v5832 = vadd.f32 %v5655, %v5770
        %v5833 = vadd.f32 %v5656, %v5775
        %v5834 = vadd.f32 %v5657, %v5780
        %v5835 = vadd.f32 %v5658, %v5785
        %v5836 = vadd.f32 %v5659, %v5790
        %v5837 = vadd.f32 %v5660, %v5795
        %v5838 = vadd.f32 %v5661, %v5800
        %v5839 = vadd.f32 %v5662, %v5805
        %v5840 = vadd.f32 %v5663, %v5810
        %v5841 = vadd.f32 %v5664, %v5815
        %v5842 = vadd.f32 %v5665, %v5820
        %v5843 = vadd.f32 %v5666, %v5825
        %v5844 = vrot.slane %v2211, 4
        %v5845 = vrot.slane %v2212, 4
        %v5846 = vsel %vm2321, %v5844, %v5845
        %v5847 = vrot.slane %v2213, 4
        %v5848 = vsel %vm2321, %v5845, %v5847
        %s5849 = scalar_lea.vmem %s3, 456
        %v5850 = vld [vmem:[%s5849] sm:$0xff]
        %v5851 = vld [vmem:[%s5849 + $0x8] sm:$0xff]
        %v5852 = vld [vmem:[%s5849 + $0x10] sm:$0xf]
        %v5853 = vsel %vm1701, %v5846, 0
        %v5855 = vsel %vm1701, %v5848, 0
        %v5858 = vsel %vm2321, %v5852, 0
        %5860 = vmatprep.subr.mxu0 0.0
        %5861 = vmatpush1.msra.mxu0 0.0
        %5862 = vmatprep.subr.mxu0 0.0
        %5863 = vmatpush1.msra.mxu0 0.0
        %5864 = vmatprep.subr.mxu0 0.0
        %5865 = vmatpush1.msra.mxu0 0.0
        %5866 = vmatprep.subr.mxu0 0.0
        %5867 = vmatpush1.msra.mxu0 0.0
        %5868 = vmatprep.subr.mxu0 0.0
        %5869 = vmatpush1.msra.mxu0 0.0
        %5870 = vmatprep.subr.mxu0 0.0
        %5871 = vmatpush1.msra.mxu0 0.0
        %5872 = vmatprep.subr.mxu0 0.0
        %5873 = vmatpush1.msra.mxu0 0.0
        %5874 = vmatprep.subr.mxu0 0.0
        %5875 = vmatpush1.msra.mxu0 0.0
        %5876 = vmatprep.subr.mxu0 0.0
        %5877 = vmatpush1.msra.mxu0 0.0
        %5878 = vmatprep.subr.mxu0 0.0
        %5879 = vmatpush1.msra.mxu0 0.0
        %5880 = vmatprep.subr.mxu0 0.0
        %5881 = vmatpush1.msra.mxu0 0.0
        %5882 = vmatprep.subr.mxu0 0.0
        %5883 = vmatpush1.msra.mxu0 0.0
        %5884 = vmatprep.subr.mxu0 0.0
        %5885 = vmatpush1.msra.mxu0 0.0
        %5886 = vmatprep.subr.mxu0 0.0
        %5887 = vmatpush1.msra.mxu0 %v5858
        %5888 = vmatprep.subr.mxu0 0.0
        %5889 = vmatpush1.msra.mxu0 %v5851
        %5890 = vmatprep.subr.mxu0 0.0
        %5891 = vmatpush1.msra.mxu0 %v5850
        %5892 = vmatprep.subr.mxu0 0.0
        %5893 = vmatpush2.msra.mxu0 0.0
        %5894 = vmatprep.subr.mxu0 0.0
        %5895 = vmatpush2.msra.mxu0 0.0
        %5896 = vmatprep.subr.mxu0 0.0
        %5897 = vmatpush2.msra.mxu0 0.0
        %5898 = vmatprep.subr.mxu0 0.0
        %5899 = vmatpush2.msra.mxu0 0.0
        %5900 = vmatprep.subr.mxu0 0.0
        %5901 = vmatpush2.msra.mxu0 0.0
        %5902 = vmatprep.subr.mxu0 0.0
        %5903 = vmatpush2.msra.mxu0 0.0
        %5904 = vmatprep.subr.mxu0 0.0
        %5905 = vmatpush2.msra.mxu0 0.0
        %5906 = vmatprep.subr.mxu0 0.0
        %5907 = vmatpush2.msra.mxu0 0.0
        %5908 = vmatprep.subr.mxu0 0.0
        %5909 = vmatpush2.msra.mxu0 0.0
        %5910 = vmatprep.subr.mxu0 0.0
        %5911 = vmatpush2.msra.mxu0 0.0
        %5912 = vmatprep.subr.mxu0 0.0
        %5913 = vmatpush2.msra.mxu0 0.0
        %5914 = vmatprep.subr.mxu0 0.0
        %5915 = vmatpush2.msra.mxu0 0.0
        %5916 = vmatprep.subr.mxu0 0.0
        %5917 = vmatpush2.msra.mxu0 0.0
        %5918 = vmatprep.subr.mxu0 0.0
        %5919 = vmatpush2.msra.mxu0 0.0
        %5920 = vmatprep.subr.mxu0 0.0
        %5921 = vmatpush2.msra.mxu0 0.0
        %5922 = vmatprep.subr.mxu0 0.0
        %5923 = vmatpush2.msra.mxu0 0.0
        %5924 = vmatprep.mubr.f32.mxu0 0.0
        %5925 = vmatmul.mubr.f32.gmra.mxu0 %v3188
        %v5926 = vpop.f32.mrf.mxu0
        %v5927 = vadd.f32 0.0, %v5926
        %v5928 = vpop.f32.mrf.mxu0
        %5929 = vmatprep.mubr.f32.mxu0 0.0
        %5930 = vmatmul.mubr.f32.gmra.mxu0 %v3190
        %v5931 = vpop.f32.mrf.mxu0
        %v5932 = vadd.f32 0.0, %v5931
        %v5933 = vpop.f32.mrf.mxu0
        %5934 = vmatprep.mubr.f32.mxu0 0.0
        %5935 = vmatmul.mubr.f32.gmra.mxu0 %v3192
        %v5936 = vpop.f32.mrf.mxu0
        %v5937 = vadd.f32 0.0, %v5936
        %v5938 = vpop.f32.mrf.mxu0
        %5939 = vmatprep.mubr.f32.mxu0 0.0
        %5940 = vmatmul.mubr.f32.gmra.mxu0 %v3194
        %v5941 = vpop.f32.mrf.mxu0
        %v5942 = vadd.f32 0.0, %v5941
        %v5943 = vpop.f32.mrf.mxu0
        %5944 = vmatprep.mubr.f32.mxu0 0.0
        %5945 = vmatmul.mubr.f32.gmra.mxu0 %v3196
        %v5946 = vpop.f32.mrf.mxu0
        %v5947 = vadd.f32 0.0, %v5946
        %v5948 = vpop.f32.mrf.mxu0
        %5949 = vmatprep.mubr.f32.mxu0 0.0
        %5950 = vmatmul.mubr.f32.gmra.mxu0 %v3198
        %v5951 = vpop.f32.mrf.mxu0
        %v5952 = vadd.f32 0.0, %v5951
        %v5953 = vpop.f32.mrf.mxu0
        %5954 = vmatprep.mubr.f32.mxu0 0.0
        %5955 = vmatmul.mubr.f32.gmra.mxu0 %v3200
        %v5956 = vpop.f32.mrf.mxu0
        %v5957 = vadd.f32 0.0, %v5956
        %v5958 = vpop.f32.mrf.mxu0
        %5959 = vmatprep.mubr.f32.mxu0 0.0
        %5960 = vmatmul.mubr.f32.gmra.mxu0 %v3202
        %v5961 = vpop.f32.mrf.mxu0
        %v5962 = vadd.f32 0.0, %v5961
        %v5963 = vpop.f32.mrf.mxu0
        %5964 = vmatprep.mubr.f32.mxu0 0.0
        %5965 = vmatmul.mubr.f32.gmra.mxu0 %v3204
        %v5966 = vpop.f32.mrf.mxu0
        %v5967 = vadd.f32 0.0, %v5966
        %v5968 = vpop.f32.mrf.mxu0
        %5969 = vmatprep.mubr.f32.mxu0 0.0
        %5970 = vmatmul.mubr.f32.gmra.mxu0 %v3206
        %v5971 = vpop.f32.mrf.mxu0
        %v5972 = vadd.f32 0.0, %v5971
        %v5973 = vpop.f32.mrf.mxu0
        %5974 = vmatprep.mubr.f32.mxu0 0.0
        %5975 = vmatmul.mubr.f32.gmra.mxu0 %v4087
        %v5976 = vpop.f32.mrf.mxu0
        %v5977 = vadd.f32 0.0, %v5976
        %v5978 = vpop.f32.mrf.mxu0
        %5979 = vmatprep.mubr.f32.mxu0 0.0
        %5980 = vmatmul.mubr.f32.gmra.mxu0 %v4089
        %v5981 = vpop.f32.mrf.mxu0
        %v5982 = vadd.f32 0.0, %v5981
        %v5983 = vpop.f32.mrf.mxu0
        %5984 = vmatprep.mubr.f32.mxu0 0.0
        %5985 = vmatmul.mubr.f32.gmra.mxu0 %v4970
        %v5986 = vpop.f32.mrf.mxu0
        %v5987 = vadd.f32 0.0, %v5986
        %v5988 = vpop.f32.mrf.mxu0
        %5989 = vmatprep.mubr.f32.mxu0 0.0
        %5990 = vmatmul.mubr.f32.gmra.mxu0 %v4972
        %v5991 = vpop.f32.mrf.mxu0
        %v5992 = vadd.f32 0.0, %v5991
        %v5993 = vpop.f32.mrf.mxu0
        %5994 = vmatprep.mubr.f32.mxu0 0.0
        %5995 = vmatmul.mubr.f32.gmra.mxu0 %v5853
        %v5996 = vpop.f32.mrf.mxu0
        %v5997 = vadd.f32 0.0, %v5996
        %v5998 = vpop.f32.mrf.mxu0
        %5999 = vmatprep.mubr.f32.mxu0 0.0
        %6000 = vmatmul.mubr.f32.gmra.mxu0 %v5855
        %v6001 = vpop.f32.mrf.mxu0
        %v6002 = vadd.f32 0.0, %v6001
        %v6003 = vpop.f32.mrf.mxu0
        %6004 = vdwg.mxu0
        %v6005 = vadd.f32 %v5828, %v5927
        %v6006 = vadd.f32 %v5829, %v5932
        %v6007 = vadd.f32 %v5830, %v5937
        %v6008 = vadd.f32 %v5831, %v5942
        %v6009 = vadd.f32 %v5832, %v5947
        %v6010 = vadd.f32 %v5833, %v5952
        %v6011 = vadd.f32 %v5834, %v5957
        %v6012 = vadd.f32 %v5835, %v5962
        %v6013 = vadd.f32 %v5836, %v5967
        %v6014 = vadd.f32 %v5837, %v5972
        %v6015 = vadd.f32 %v5838, %v5977
        %v6016 = vadd.f32 %v5839, %v5982
        %v6017 = vadd.f32 %v5840, %v5987
        %v6018 = vadd.f32 %v5841, %v5992
        %v6019 = vadd.f32 %v5842, %v5997
        %v6020 = vadd.f32 %v5843, %v6002
        %s6021 = scalar_lea.vmem %s3, 480
        %v6022 = vld [vmem:[%s6021] sm:$0xff]
        %v6023 = vld [vmem:[%s6021 + $0x8] sm:$0xff]
        %v6024 = vld [vmem:[%s6021 + $0x10] sm:$0xf]
        %v6026 = vsel %vm1701, %v2214, 0
        %v6029 = vsel %vm1701, %v2215, 0
        %v6032 = vsel %vm2321, %v6024, 0
        %6034 = vmatprep.subr.mxu0 0.0
        %6035 = vmatpush1.msra.mxu0 0.0
        %6036 = vmatprep.subr.mxu0 0.0
        %6037 = vmatpush1.msra.mxu0 0.0
        %6038 = vmatprep.subr.mxu0 0.0
        %6039 = vmatpush1.msra.mxu0 0.0
        %6040 = vmatprep.subr.mxu0 0.0
        %6041 = vmatpush1.msra.mxu0 0.0
        %6042 = vmatprep.subr.mxu0 0.0
        %6043 = vmatpush1.msra.mxu0 0.0
        %6044 = vmatprep.subr.mxu0 0.0
        %6045 = vmatpush1.msra.mxu0 0.0
        %6046 = vmatprep.subr.mxu0 0.0
        %6047 = vmatpush1.msra.mxu0 0.0
        %6048 = vmatprep.subr.mxu0 0.0
        %6049 = vmatpush1.msra.mxu0 0.0
        %6050 = vmatprep.subr.mxu0 0.0
        %6051 = vmatpush1.msra.mxu0 0.0
        %6052 = vmatprep.subr.mxu0 0.0
        %6053 = vmatpush1.msra.mxu0 0.0
        %6054 = vmatprep.subr.mxu0 0.0
        %6055 = vmatpush1.msra.mxu0 0.0
        %6056 = vmatprep.subr.mxu0 0.0
        %6057 = vmatpush1.msra.mxu0 0.0
        %6058 = vmatprep.subr.mxu0 0.0
        %6059 = vmatpush1.msra.mxu0 0.0
        %6060 = vmatprep.subr.mxu0 0.0
        %6061 = vmatpush1.msra.mxu0 %v6032
        %6062 = vmatprep.subr.mxu0 0.0
        %6063 = vmatpush1.msra.mxu0 %v6023
        %6064 = vmatprep.subr.mxu0 0.0
        %6065 = vmatpush1.msra.mxu0 %v6022
        %6066 = vmatprep.subr.mxu0 0.0
        %6067 = vmatpush2.msra.mxu0 0.0
        %6068 = vmatprep.subr.mxu0 0.0
        %6069 = vmatpush2.msra.mxu0 0.0
        %6070 = vmatprep.subr.mxu0 0.0
        %6071 = vmatpush2.msra.mxu0 0.0
        %6072 = vmatprep.subr.mxu0 0.0
        %6073 = vmatpush2.msra.mxu0 0.0
        %6074 = vmatprep.subr.mxu0 0.0
        %6075 = vmatpush2.msra.mxu0 0.0
        %6076 = vmatprep.subr.mxu0 0.0
        %6077 = vmatpush2.msra.mxu0 0.0
        %6078 = vmatprep.subr.mxu0 0.0
        %6079 = vmatpush2.msra.mxu0 0.0
        %6080 = vmatprep.subr.mxu0 0.0
        %6081 = vmatpush2.msra.mxu0 0.0
        %6082 = vmatprep.subr.mxu0 0.0
        %6083 = vmatpush2.msra.mxu0 0.0
        %6084 = vmatprep.subr.mxu0 0.0
        %6085 = vmatpush2.msra.mxu0 0.0
        %6086 = vmatprep.subr.mxu0 0.0
        %6087 = vmatpush2.msra.mxu0 0.0
        %6088 = vmatprep.subr.mxu0 0.0
        %6089 = vmatpush2.msra.mxu0 0.0
        %6090 = vmatprep.subr.mxu0 0.0
        %6091 = vmatpush2.msra.mxu0 0.0
        %6092 = vmatprep.subr.mxu0 0.0
        %6093 = vmatpush2.msra.mxu0 0.0
        %6094 = vmatprep.subr.mxu0 0.0
        %6095 = vmatpush2.msra.mxu0 0.0
        %6096 = vmatprep.subr.mxu0 0.0
        %6097 = vmatpush2.msra.mxu0 0.0
        %6098 = vmatprep.mubr.f32.mxu0 0.0
        %6099 = vmatmul.mubr.f32.gmra.mxu0 %v2486
        %v6100 = vpop.f32.mrf.mxu0
        %v6101 = vadd.f32 0.0, %v6100
        %v6102 = vpop.f32.mrf.mxu0
        %6103 = vmatprep.mubr.f32.mxu0 0.0
        %6104 = vmatmul.mubr.f32.gmra.mxu0 %v2488
        %v6105 = vpop.f32.mrf.mxu0
        %v6106 = vadd.f32 0.0, %v6105
        %v6107 = vpop.f32.mrf.mxu0
        %6108 = vmatprep.mubr.f32.mxu0 0.0
        %6109 = vmatmul.mubr.f32.gmra.mxu0 %v2490
        %v6110 = vpop.f32.mrf.mxu0
        %v6111 = vadd.f32 0.0, %v6110
        %v6112 = vpop.f32.mrf.mxu0
        %6113 = vmatprep.mubr.f32.mxu0 0.0
        %6114 = vmatmul.mubr.f32.gmra.mxu0 %v2492
        %v6115 = vpop.f32.mrf.mxu0
        %v6116 = vadd.f32 0.0, %v6115
        %v6117 = vpop.f32.mrf.mxu0
        %6118 = vmatprep.mubr.f32.mxu0 0.0
        %6119 = vmatmul.mubr.f32.gmra.mxu0 %v2494
        %v6120 = vpop.f32.mrf.mxu0
        %v6121 = vadd.f32 0.0, %v6120
        %v6122 = vpop.f32.mrf.mxu0
        %6123 = vmatprep.mubr.f32.mxu0 0.0
        %6124 = vmatmul.mubr.f32.gmra.mxu0 %v2496
        %v6125 = vpop.f32.mrf.mxu0
        %v6126 = vadd.f32 0.0, %v6125
        %v6127 = vpop.f32.mrf.mxu0
        %6128 = vmatprep.mubr.f32.mxu0 0.0
        %6129 = vmatmul.mubr.f32.gmra.mxu0 %v2498
        %v6130 = vpop.f32.mrf.mxu0
        %v6131 = vadd.f32 0.0, %v6130
        %v6132 = vpop.f32.mrf.mxu0
        %6133 = vmatprep.mubr.f32.mxu0 0.0
        %6134 = vmatmul.mubr.f32.gmra.mxu0 %v2500
        %v6135 = vpop.f32.mrf.mxu0
        %v6136 = vadd.f32 0.0, %v6135
        %v6137 = vpop.f32.mrf.mxu0
        %6138 = vmatprep.mubr.f32.mxu0 0.0
        %6139 = vmatmul.mubr.f32.gmra.mxu0 %v3377
        %v6140 = vpop.f32.mrf.mxu0
        %v6141 = vadd.f32 0.0, %v6140
        %v6142 = vpop.f32.mrf.mxu0
        %6143 = vmatprep.mubr.f32.mxu0 0.0
        %6144 = vmatmul.mubr.f32.gmra.mxu0 %v3380
        %v6145 = vpop.f32.mrf.mxu0
        %v6146 = vadd.f32 0.0, %v6145
        %v6147 = vpop.f32.mrf.mxu0
        %6148 = vmatprep.mubr.f32.mxu0 0.0
        %6149 = vmatmul.mubr.f32.gmra.mxu0 %v4260
        %v6150 = vpop.f32.mrf.mxu0
        %v6151 = vadd.f32 0.0, %v6150
        %v6152 = vpop.f32.mrf.mxu0
        %6153 = vmatprep.mubr.f32.mxu0 0.0
        %6154 = vmatmul.mubr.f32.gmra.mxu0 %v4263
        %v6155 = vpop.f32.mrf.mxu0
        %v6156 = vadd.f32 0.0, %v6155
        %v6157 = vpop.f32.mrf.mxu0
        %6158 = vmatprep.mubr.f32.mxu0 0.0
        %6159 = vmatmul.mubr.f32.gmra.mxu0 %v5143
        %v6160 = vpop.f32.mrf.mxu0
        %v6161 = vadd.f32 0.0, %v6160
        %v6162 = vpop.f32.mrf.mxu0
        %6163 = vmatprep.mubr.f32.mxu0 0.0
        %6164 = vmatmul.mubr.f32.gmra.mxu0 %v5146
        %v6165 = vpop.f32.mrf.mxu0
        %v6166 = vadd.f32 0.0, %v6165
        %v6167 = vpop.f32.mrf.mxu0
        %6168 = vmatprep.mubr.f32.mxu0 0.0
        %6169 = vmatmul.mubr.f32.gmra.mxu0 %v6026
        %v6170 = vpop.f32.mrf.mxu0
        %v6171 = vadd.f32 0.0, %v6170
        %v6172 = vpop.f32.mrf.mxu0
        %6173 = vmatprep.mubr.f32.mxu0 0.0
        %6174 = vmatmul.mubr.f32.gmra.mxu0 %v6029
        %v6175 = vpop.f32.mrf.mxu0
        %v6176 = vadd.f32 0.0, %v6175
        %v6177 = vpop.f32.mrf.mxu0
        %6178 = vdwg.mxu0
        %v6179 = vadd.f32 %v6005, %v6101
        %v6180 = vadd.f32 %v6006, %v6106
        %v6181 = vadd.f32 %v6007, %v6111
        %v6182 = vadd.f32 %v6008, %v6116
        %v6183 = vadd.f32 %v6009, %v6121
        %v6184 = vadd.f32 %v6010, %v6126
        %v6185 = vadd.f32 %v6011, %v6131
        %v6186 = vadd.f32 %v6012, %v6136
        %v6187 = vadd.f32 %v6013, %v6141
        %v6188 = vadd.f32 %v6014, %v6146
        %v6189 = vadd.f32 %v6015, %v6151
        %v6190 = vadd.f32 %v6016, %v6156
        %v6191 = vadd.f32 %v6017, %v6161
        %v6192 = vadd.f32 %v6018, %v6166
        %v6193 = vadd.f32 %v6019, %v6171
        %v6194 = vadd.f32 %v6020, %v6176
        %v6196 = vrot.slane %v2214, 1
        %v6197 = vrot.slane %v2215, 1
        %v6198 = vsel %vm2244, %v6196, %v6197
        %v6199 = vrot.slane %v2216, 1
        %v6200 = vsel %vm2244, %v6197, %v6199
        %s6201 = scalar_lea.vmem %s3, 504
        %v6202 = vld [vmem:[%s6201] sm:$0xff]
        %v6203 = vld [vmem:[%s6201 + $0x8] sm:$0xff]
        %v6204 = vld [vmem:[%s6201 + $0x10] sm:$0xf]
        %v6205 = vsel %vm1701, %v6198, 0
        %v6207 = vsel %vm1701, %v6200, 0
        %v6210 = vsel %vm2321, %v6204, 0
        %6212 = vmatprep.subr.mxu0 0.0
        %6213 = vmatpush1.msra.mxu0 0.0
        %6214 = vmatprep.subr.mxu0 0.0
        %6215 = vmatpush1.msra.mxu0 0.0
        %6216 = vmatprep.subr.mxu0 0.0
        %6217 = vmatpush1.msra.mxu0 0.0
        %6218 = vmatprep.subr.mxu0 0.0
        %6219 = vmatpush1.msra.mxu0 0.0
        %6220 = vmatprep.subr.mxu0 0.0
        %6221 = vmatpush1.msra.mxu0 0.0
        %6222 = vmatprep.subr.mxu0 0.0
        %6223 = vmatpush1.msra.mxu0 0.0
        %6224 = vmatprep.subr.mxu0 0.0
        %6225 = vmatpush1.msra.mxu0 0.0
        %6226 = vmatprep.subr.mxu0 0.0
        %6227 = vmatpush1.msra.mxu0 0.0
        %6228 = vmatprep.subr.mxu0 0.0
        %6229 = vmatpush1.msra.mxu0 0.0
        %6230 = vmatprep.subr.mxu0 0.0
        %6231 = vmatpush1.msra.mxu0 0.0
        %6232 = vmatprep.subr.mxu0 0.0
        %6233 = vmatpush1.msra.mxu0 0.0
        %6234 = vmatprep.subr.mxu0 0.0
        %6235 = vmatpush1.msra.mxu0 0.0
        %6236 = vmatprep.subr.mxu0 0.0
        %6237 = vmatpush1.msra.mxu0 0.0
        %6238 = vmatprep.subr.mxu0 0.0
        %6239 = vmatpush1.msra.mxu0 %v6210
        %6240 = vmatprep.subr.mxu0 0.0
        %6241 = vmatpush1.msra.mxu0 %v6203
        %6242 = vmatprep.subr.mxu0 0.0
        %6243 = vmatpush1.msra.mxu0 %v6202
        %6244 = vmatprep.subr.mxu0 0.0
        %6245 = vmatpush2.msra.mxu0 0.0
        %6246 = vmatprep.subr.mxu0 0.0
        %6247 = vmatpush2.msra.mxu0 0.0
        %6248 = vmatprep.subr.mxu0 0.0
        %6249 = vmatpush2.msra.mxu0 0.0
        %6250 = vmatprep.subr.mxu0 0.0
        %6251 = vmatpush2.msra.mxu0 0.0
        %6252 = vmatprep.subr.mxu0 0.0
        %6253 = vmatpush2.msra.mxu0 0.0
        %6254 = vmatprep.subr.mxu0 0.0
        %6255 = vmatpush2.msra.mxu0 0.0
        %6256 = vmatprep.subr.mxu0 0.0
        %6257 = vmatpush2.msra.mxu0 0.0
        %6258 = vmatprep.subr.mxu0 0.0
        %6259 = vmatpush2.msra.mxu0 0.0
        %6260 = vmatprep.subr.mxu0 0.0
        %6261 = vmatpush2.msra.mxu0 0.0
        %6262 = vmatprep.subr.mxu0 0.0
        %6263 = vmatpush2.msra.mxu0 0.0
        %6264 = vmatprep.subr.mxu0 0.0
        %6265 = vmatpush2.msra.mxu0 0.0
        %6266 = vmatprep.subr.mxu0 0.0
        %6267 = vmatpush2.msra.mxu0 0.0
        %6268 = vmatprep.subr.mxu0 0.0
        %6269 = vmatpush2.msra.mxu0 0.0
        %6270 = vmatprep.subr.mxu0 0.0
        %6271 = vmatpush2.msra.mxu0 0.0
        %6272 = vmatprep.subr.mxu0 0.0
        %6273 = vmatpush2.msra.mxu0 0.0
        %6274 = vmatprep.subr.mxu0 0.0
        %6275 = vmatpush2.msra.mxu0 0.0
        %6276 = vmatprep.mubr.f32.mxu0 0.0
        %6277 = vmatmul.mubr.f32.gmra.mxu0 %v2305
        %v6278 = vpop.f32.mrf.mxu0
        %v6279 = vadd.f32 0.0, %v6278
        %v6280 = vpop.f32.mrf.mxu0
        %6281 = vmatprep.mubr.f32.mxu0 0.0
        %6282 = vmatmul.mubr.f32.gmra.mxu0 %v2307
        %v6283 = vpop.f32.mrf.mxu0
        %v6284 = vadd.f32 0.0, %v6283
        %v6285 = vpop.f32.mrf.mxu0
        %6286 = vmatprep.mubr.f32.mxu0 0.0
        %6287 = vmatmul.mubr.f32.gmra.mxu0 %v2309
        %v6288 = vpop.f32.mrf.mxu0
        %v6289 = vadd.f32 0.0, %v6288
        %v6290 = vpop.f32.mrf.mxu0
        %6291 = vmatprep.mubr.f32.mxu0 0.0
        %6292 = vmatmul.mubr.f32.gmra.mxu0 %v2311
        %v6293 = vpop.f32.mrf.mxu0
        %v6294 = vadd.f32 0.0, %v6293
        %v6295 = vpop.f32.mrf.mxu0
        %6296 = vmatprep.mubr.f32.mxu0 0.0
        %6297 = vmatmul.mubr.f32.gmra.mxu0 %v2313
        %v6298 = vpop.f32.mrf.mxu0
        %v6299 = vadd.f32 0.0, %v6298
        %v6300 = vpop.f32.mrf.mxu0
        %6301 = vmatprep.mubr.f32.mxu0 0.0
        %6302 = vmatmul.mubr.f32.gmra.mxu0 %v2315
        %v6303 = vpop.f32.mrf.mxu0
        %v6304 = vadd.f32 0.0, %v6303
        %v6305 = vpop.f32.mrf.mxu0
        %6306 = vmatprep.mubr.f32.mxu0 0.0
        %6307 = vmatmul.mubr.f32.gmra.mxu0 %v2317
        %v6308 = vpop.f32.mrf.mxu0
        %v6309 = vadd.f32 0.0, %v6308
        %v6310 = vpop.f32.mrf.mxu0
        %6311 = vmatprep.mubr.f32.mxu0 0.0
        %6312 = vmatmul.mubr.f32.gmra.mxu0 %v2319
        %v6313 = vpop.f32.mrf.mxu0
        %v6314 = vadd.f32 0.0, %v6313
        %v6315 = vpop.f32.mrf.mxu0
        %6316 = vmatprep.mubr.f32.mxu0 0.0
        %6317 = vmatmul.mubr.f32.gmra.mxu0 %v3556
        %v6318 = vpop.f32.mrf.mxu0
        %v6319 = vadd.f32 0.0, %v6318
        %v6320 = vpop.f32.mrf.mxu0
        %6321 = vmatprep.mubr.f32.mxu0 0.0
        %6322 = vmatmul.mubr.f32.gmra.mxu0 %v3558
        %v6323 = vpop.f32.mrf.mxu0
        %v6324 = vadd.f32 0.0, %v6323
        %v6325 = vpop.f32.mrf.mxu0
        %6326 = vmatprep.mubr.f32.mxu0 0.0
        %6327 = vmatmul.mubr.f32.gmra.mxu0 %v4439
        %v6328 = vpop.f32.mrf.mxu0
        %v6329 = vadd.f32 0.0, %v6328
        %v6330 = vpop.f32.mrf.mxu0
        %6331 = vmatprep.mubr.f32.mxu0 0.0
        %6332 = vmatmul.mubr.f32.gmra.mxu0 %v4441
        %v6333 = vpop.f32.mrf.mxu0
        %v6334 = vadd.f32 0.0, %v6333
        %v6335 = vpop.f32.mrf.mxu0
        %6336 = vmatprep.mubr.f32.mxu0 0.0
        %6337 = vmatmul.mubr.f32.gmra.mxu0 %v5322
        %v6338 = vpop.f32.mrf.mxu0
        %v6339 = vadd.f32 0.0, %v6338
        %v6340 = vpop.f32.mrf.mxu0
        %6341 = vmatprep.mubr.f32.mxu0 0.0
        %6342 = vmatmul.mubr.f32.gmra.mxu0 %v5324
        %v6343 = vpop.f32.mrf.mxu0
        %v6344 = vadd.f32 0.0, %v6343
        %v6345 = vpop.f32.mrf.mxu0
        %6346 = vmatprep.mubr.f32.mxu0 0.0
        %6347 = vmatmul.mubr.f32.gmra.mxu0 %v6205
        %v6348 = vpop.f32.mrf.mxu0
        %v6349 = vadd.f32 0.0, %v6348
        %v6350 = vpop.f32.mrf.mxu0
        %6351 = vmatprep.mubr.f32.mxu0 0.0
        %6352 = vmatmul.mubr.f32.gmra.mxu0 %v6207
        %v6353 = vpop.f32.mrf.mxu0
        %v6354 = vadd.f32 0.0, %v6353
        %v6355 = vpop.f32.mrf.mxu0
        %6356 = vdwg.mxu0
        %v6357 = vadd.f32 %v6179, %v6279
        %v6358 = vadd.f32 %v6180, %v6284
        %v6359 = vadd.f32 %v6181, %v6289
        %v6360 = vadd.f32 %v6182, %v6294
        %v6361 = vadd.f32 %v6183, %v6299
        %v6362 = vadd.f32 %v6184, %v6304
        %v6363 = vadd.f32 %v6185, %v6309
        %v6364 = vadd.f32 %v6186, %v6314
        %v6365 = vadd.f32 %v6187, %v6319
        %v6366 = vadd.f32 %v6188, %v6324
        %v6367 = vadd.f32 %v6189, %v6329
        %v6368 = vadd.f32 %v6190, %v6334
        %v6369 = vadd.f32 %v6191, %v6339
        %v6370 = vadd.f32 %v6192, %v6344
        %v6371 = vadd.f32 %v6193, %v6349
        %v6372 = vadd.f32 %v6194, %v6354
        %v6373 = vrot.slane %v2214, 2
        %v6374 = vrot.slane %v2215, 2
        %v6375 = vsel %vm2650, %v6373, %v6374
        %v6376 = vrot.slane %v2216, 2
        %v6377 = vsel %vm2650, %v6374, %v6376
        %s6378 = scalar_lea.vmem %s3, 528
        %v6379 = vld [vmem:[%s6378] sm:$0xff]
        %v6380 = vld [vmem:[%s6378 + $0x8] sm:$0xff]
        %v6381 = vld [vmem:[%s6378 + $0x10] sm:$0xf]
        %v6382 = vsel %vm1701, %v6375, 0
        %v6384 = vsel %vm1701, %v6377, 0
        %v6387 = vsel %vm2321, %v6381, 0
        %6389 = vmatprep.subr.mxu0 0.0
        %6390 = vmatpush1.msra.mxu0 0.0
        %6391 = vmatprep.subr.mxu0 0.0
        %6392 = vmatpush1.msra.mxu0 0.0
        %6393 = vmatprep.subr.mxu0 0.0
        %6394 = vmatpush1.msra.mxu0 0.0
        %6395 = vmatprep.subr.mxu0 0.0
        %6396 = vmatpush1.msra.mxu0 0.0
        %6397 = vmatprep.subr.mxu0 0.0
        %6398 = vmatpush1.msra.mxu0 0.0
        %6399 = vmatprep.subr.mxu0 0.0
        %6400 = vmatpush1.msra.mxu0 0.0
        %6401 = vmatprep.subr.mxu0 0.0
        %6402 = vmatpush1.msra.mxu0 0.0
        %6403 = vmatprep.subr.mxu0 0.0
        %6404 = vmatpush1.msra.mxu0 0.0
        %6405 = vmatprep.subr.mxu0 0.0
        %6406 = vmatpush1.msra.mxu0 0.0
        %6407 = vmatprep.subr.mxu0 0.0
        %6408 = vmatpush1.msra.mxu0 0.0
        %6409 = vmatprep.subr.mxu0 0.0
        %6410 = vmatpush1.msra.mxu0 0.0
        %6411 = vmatprep.subr.mxu0 0.0
        %6412 = vmatpush1.msra.mxu0 0.0
        %6413 = vmatprep.subr.mxu0 0.0
        %6414 = vmatpush1.msra.mxu0 0.0
        %6415 = vmatprep.subr.mxu0 0.0
        %6416 = vmatpush1.msra.mxu0 %v6387
        %6417 = vmatprep.subr.mxu0 0.0
        %6418 = vmatpush1.msra.mxu0 %v6380
        %6419 = vmatprep.subr.mxu0 0.0
        %6420 = vmatpush1.msra.mxu0 %v6379
        %6421 = vmatprep.subr.mxu0 0.0
        %6422 = vmatpush2.msra.mxu0 0.0
        %6423 = vmatprep.subr.mxu0 0.0
        %6424 = vmatpush2.msra.mxu0 0.0
        %6425 = vmatprep.subr.mxu0 0.0
        %6426 = vmatpush2.msra.mxu0 0.0
        %6427 = vmatprep.subr.mxu0 0.0
        %6428 = vmatpush2.msra.mxu0 0.0
        %6429 = vmatprep.subr.mxu0 0.0
        %6430 = vmatpush2.msra.mxu0 0.0
        %6431 = vmatprep.subr.mxu0 0.0
        %6432 = vmatpush2.msra.mxu0 0.0
        %6433 = vmatprep.subr.mxu0 0.0
        %6434 = vmatpush2.msra.mxu0 0.0
        %6435 = vmatprep.subr.mxu0 0.0
        %6436 = vmatpush2.msra.mxu0 0.0
        %6437 = vmatprep.subr.mxu0 0.0
        %6438 = vmatpush2.msra.mxu0 0.0
        %6439 = vmatprep.subr.mxu0 0.0
        %6440 = vmatpush2.msra.mxu0 0.0
        %6441 = vmatprep.subr.mxu0 0.0
        %6442 = vmatpush2.msra.mxu0 0.0
        %6443 = vmatprep.subr.mxu0 0.0
        %6444 = vmatpush2.msra.mxu0 0.0
        %6445 = vmatprep.subr.mxu0 0.0
        %6446 = vmatpush2.msra.mxu0 0.0
        %6447 = vmatprep.subr.mxu0 0.0
        %6448 = vmatpush2.msra.mxu0 0.0
        %6449 = vmatprep.subr.mxu0 0.0
        %6450 = vmatpush2.msra.mxu0 0.0
        %6451 = vmatprep.subr.mxu0 0.0
        %6452 = vmatpush2.msra.mxu0 0.0
        %6453 = vmatprep.mubr.f32.mxu0 0.0
        %6454 = vmatmul.mubr.f32.gmra.mxu0 %v2711
        %v6455 = vpop.f32.mrf.mxu0
        %v6456 = vadd.f32 0.0, %v6455
        %v6457 = vpop.f32.mrf.mxu0
        %6458 = vmatprep.mubr.f32.mxu0 0.0
        %6459 = vmatmul.mubr.f32.gmra.mxu0 %v2713
        %v6460 = vpop.f32.mrf.mxu0
        %v6461 = vadd.f32 0.0, %v6460
        %v6462 = vpop.f32.mrf.mxu0
        %6463 = vmatprep.mubr.f32.mxu0 0.0
        %6464 = vmatmul.mubr.f32.gmra.mxu0 %v2715
        %v6465 = vpop.f32.mrf.mxu0
        %v6466 = vadd.f32 0.0, %v6465
        %v6467 = vpop.f32.mrf.mxu0
        %6468 = vmatprep.mubr.f32.mxu0 0.0
        %6469 = vmatmul.mubr.f32.gmra.mxu0 %v2717
        %v6470 = vpop.f32.mrf.mxu0
        %v6471 = vadd.f32 0.0, %v6470
        %v6472 = vpop.f32.mrf.mxu0
        %6473 = vmatprep.mubr.f32.mxu0 0.0
        %6474 = vmatmul.mubr.f32.gmra.mxu0 %v2719
        %v6475 = vpop.f32.mrf.mxu0
        %v6476 = vadd.f32 0.0, %v6475
        %v6477 = vpop.f32.mrf.mxu0
        %6478 = vmatprep.mubr.f32.mxu0 0.0
        %6479 = vmatmul.mubr.f32.gmra.mxu0 %v2721
        %v6480 = vpop.f32.mrf.mxu0
        %v6481 = vadd.f32 0.0, %v6480
        %v6482 = vpop.f32.mrf.mxu0
        %6483 = vmatprep.mubr.f32.mxu0 0.0
        %6484 = vmatmul.mubr.f32.gmra.mxu0 %v2723
        %v6485 = vpop.f32.mrf.mxu0
        %v6486 = vadd.f32 0.0, %v6485
        %v6487 = vpop.f32.mrf.mxu0
        %6488 = vmatprep.mubr.f32.mxu0 0.0
        %6489 = vmatmul.mubr.f32.gmra.mxu0 %v2725
        %v6490 = vpop.f32.mrf.mxu0
        %v6491 = vadd.f32 0.0, %v6490
        %v6492 = vpop.f32.mrf.mxu0
        %6493 = vmatprep.mubr.f32.mxu0 0.0
        %6494 = vmatmul.mubr.f32.gmra.mxu0 %v3733
        %v6495 = vpop.f32.mrf.mxu0
        %v6496 = vadd.f32 0.0, %v6495
        %v6497 = vpop.f32.mrf.mxu0
        %6498 = vmatprep.mubr.f32.mxu0 0.0
        %6499 = vmatmul.mubr.f32.gmra.mxu0 %v3735
        %v6500 = vpop.f32.mrf.mxu0
        %v6501 = vadd.f32 0.0, %v6500
        %v6502 = vpop.f32.mrf.mxu0
        %6503 = vmatprep.mubr.f32.mxu0 0.0
        %6504 = vmatmul.mubr.f32.gmra.mxu0 %v4616
        %v6505 = vpop.f32.mrf.mxu0
        %v6506 = vadd.f32 0.0, %v6505
        %v6507 = vpop.f32.mrf.mxu0
        %6508 = vmatprep.mubr.f32.mxu0 0.0
        %6509 = vmatmul.mubr.f32.gmra.mxu0 %v4618
        %v6510 = vpop.f32.mrf.mxu0
        %v6511 = vadd.f32 0.0, %v6510
        %v6512 = vpop.f32.mrf.mxu0
        %6513 = vmatprep.mubr.f32.mxu0 0.0
        %6514 = vmatmul.mubr.f32.gmra.mxu0 %v5499
        %v6515 = vpop.f32.mrf.mxu0
        %v6516 = vadd.f32 0.0, %v6515
        %v6517 = vpop.f32.mrf.mxu0
        %6518 = vmatprep.mubr.f32.mxu0 0.0
        %6519 = vmatmul.mubr.f32.gmra.mxu0 %v5501
        %v6520 = vpop.f32.mrf.mxu0
        %v6521 = vadd.f32 0.0, %v6520
        %v6522 = vpop.f32.mrf.mxu0
        %6523 = vmatprep.mubr.f32.mxu0 0.0
        %6524 = vmatmul.mubr.f32.gmra.mxu0 %v6382
        %v6525 = vpop.f32.mrf.mxu0
        %v6526 = vadd.f32 0.0, %v6525
        %v6527 = vpop.f32.mrf.mxu0
        %6528 = vmatprep.mubr.f32.mxu0 0.0
        %6529 = vmatmul.mubr.f32.gmra.mxu0 %v6384
        %v6530 = vpop.f32.mrf.mxu0
        %v6531 = vadd.f32 0.0, %v6530
        %v6532 = vpop.f32.mrf.mxu0
        %6533 = vdwg.mxu0
        %v6534 = vadd.f32 %v6357, %v6456
        %v6535 = vadd.f32 %v6358, %v6461
        %v6536 = vadd.f32 %v6359, %v6466
        %v6537 = vadd.f32 %v6360, %v6471
        %v6538 = vadd.f32 %v6361, %v6476
        %v6539 = vadd.f32 %v6362, %v6481
        %v6540 = vadd.f32 %v6363, %v6486
        %v6541 = vadd.f32 %v6364, %v6491
        %v6542 = vadd.f32 %v6365, %v6496
        %v6543 = vadd.f32 %v6366, %v6501
        %v6544 = vadd.f32 %v6367, %v6506
        %v6545 = vadd.f32 %v6368, %v6511
        %v6546 = vadd.f32 %v6369, %v6516
        %v6547 = vadd.f32 %v6370, %v6521
        %v6548 = vadd.f32 %v6371, %v6526
        %v6549 = vadd.f32 %v6372, %v6531
        %v6550 = vrot.slane %v2214, 3
        %v6551 = vrot.slane %v2215, 3
        %v6552 = vsel %vm2891, %v6550, %v6551
        %v6553 = vrot.slane %v2216, 3
        %v6554 = vsel %vm2891, %v6551, %v6553
        %s6555 = scalar_lea.vmem %s3, 552
        %v6556 = vld [vmem:[%s6555] sm:$0xff]
        %v6557 = vld [vmem:[%s6555 + $0x8] sm:$0xff]
        %v6558 = vld [vmem:[%s6555 + $0x10] sm:$0xf]
        %v6559 = vsel %vm1701, %v6552, 0
        %v6561 = vsel %vm1701, %v6554, 0
        %v6564 = vsel %vm2321, %v6558, 0
        %6566 = vmatprep.subr.mxu0 0.0
        %6567 = vmatpush1.msra.mxu0 0.0
        %6568 = vmatprep.subr.mxu0 0.0
        %6569 = vmatpush1.msra.mxu0 0.0
        %6570 = vmatprep.subr.mxu0 0.0
        %6571 = vmatpush1.msra.mxu0 0.0
        %6572 = vmatprep.subr.mxu0 0.0
        %6573 = vmatpush1.msra.mxu0 0.0
        %6574 = vmatprep.subr.mxu0 0.0
        %6575 = vmatpush1.msra.mxu0 0.0
        %6576 = vmatprep.subr.mxu0 0.0
        %6577 = vmatpush1.msra.mxu0 0.0
        %6578 = vmatprep.subr.mxu0 0.0
        %6579 = vmatpush1.msra.mxu0 0.0
        %6580 = vmatprep.subr.mxu0 0.0
        %6581 = vmatpush1.msra.mxu0 0.0
        %6582 = vmatprep.subr.mxu0 0.0
        %6583 = vmatpush1.msra.mxu0 0.0
        %6584 = vmatprep.subr.mxu0 0.0
        %6585 = vmatpush1.msra.mxu0 0.0
        %6586 = vmatprep.subr.mxu0 0.0
        %6587 = vmatpush1.msra.mxu0 0.0
        %6588 = vmatprep.subr.mxu0 0.0
        %6589 = vmatpush1.msra.mxu0 0.0
        %6590 = vmatprep.subr.mxu0 0.0
        %6591 = vmatpush1.msra.mxu0 0.0
        %6592 = vmatprep.subr.mxu0 0.0
        %6593 = vmatpush1.msra.mxu0 %v6564
        %6594 = vmatprep.subr.mxu0 0.0
        %6595 = vmatpush1.msra.mxu0 %v6557
        %6596 = vmatprep.subr.mxu0 0.0
        %6597 = vmatpush1.msra.mxu0 %v6556
        %6598 = vmatprep.subr.mxu0 0.0
        %6599 = vmatpush2.msra.mxu0 0.0
        %6600 = vmatprep.subr.mxu0 0.0
        %6601 = vmatpush2.msra.mxu0 0.0
        %6602 = vmatprep.subr.mxu0 0.0
        %6603 = vmatpush2.msra.mxu0 0.0
        %6604 = vmatprep.subr.mxu0 0.0
        %6605 = vmatpush2.msra.mxu0 0.0
        %6606 = vmatprep.subr.mxu0 0.0
        %6607 = vmatpush2.msra.mxu0 0.0
        %6608 = vmatprep.subr.mxu0 0.0
        %6609 = vmatpush2.msra.mxu0 0.0
        %6610 = vmatprep.subr.mxu0 0.0
        %6611 = vmatpush2.msra.mxu0 0.0
        %6612 = vmatprep.subr.mxu0 0.0
        %6613 = vmatpush2.msra.mxu0 0.0
        %6614 = vmatprep.subr.mxu0 0.0
        %6615 = vmatpush2.msra.mxu0 0.0
        %6616 = vmatprep.subr.mxu0 0.0
        %6617 = vmatpush2.msra.mxu0 0.0
        %6618 = vmatprep.subr.mxu0 0.0
        %6619 = vmatpush2.msra.mxu0 0.0
        %6620 = vmatprep.subr.mxu0 0.0
        %6621 = vmatpush2.msra.mxu0 0.0
        %6622 = vmatprep.subr.mxu0 0.0
        %6623 = vmatpush2.msra.mxu0 0.0
        %6624 = vmatprep.subr.mxu0 0.0
        %6625 = vmatpush2.msra.mxu0 0.0
        %6626 = vmatprep.subr.mxu0 0.0
        %6627 = vmatpush2.msra.mxu0 0.0
        %6628 = vmatprep.subr.mxu0 0.0
        %6629 = vmatpush2.msra.mxu0 0.0
        %6630 = vmatprep.mubr.f32.mxu0 0.0
        %6631 = vmatmul.mubr.f32.gmra.mxu0 %v2952
        %v6632 = vpop.f32.mrf.mxu0
        %v6633 = vadd.f32 0.0, %v6632
        %v6634 = vpop.f32.mrf.mxu0
        %6635 = vmatprep.mubr.f32.mxu0 0.0
        %6636 = vmatmul.mubr.f32.gmra.mxu0 %v2954
        %v6637 = vpop.f32.mrf.mxu0
        %v6638 = vadd.f32 0.0, %v6637
        %v6639 = vpop.f32.mrf.mxu0
        %6640 = vmatprep.mubr.f32.mxu0 0.0
        %6641 = vmatmul.mubr.f32.gmra.mxu0 %v2956
        %v6642 = vpop.f32.mrf.mxu0
        %v6643 = vadd.f32 0.0, %v6642
        %v6644 = vpop.f32.mrf.mxu0
        %6645 = vmatprep.mubr.f32.mxu0 0.0
        %6646 = vmatmul.mubr.f32.gmra.mxu0 %v2958
        %v6647 = vpop.f32.mrf.mxu0
        %v6648 = vadd.f32 0.0, %v6647
        %v6649 = vpop.f32.mrf.mxu0
        %6650 = vmatprep.mubr.f32.mxu0 0.0
        %6651 = vmatmul.mubr.f32.gmra.mxu0 %v2960
        %v6652 = vpop.f32.mrf.mxu0
        %v6653 = vadd.f32 0.0, %v6652
        %v6654 = vpop.f32.mrf.mxu0
        %6655 = vmatprep.mubr.f32.mxu0 0.0
        %6656 = vmatmul.mubr.f32.gmra.mxu0 %v2962
        %v6657 = vpop.f32.mrf.mxu0
        %v6658 = vadd.f32 0.0, %v6657
        %v6659 = vpop.f32.mrf.mxu0
        %6660 = vmatprep.mubr.f32.mxu0 0.0
        %6661 = vmatmul.mubr.f32.gmra.mxu0 %v2964
        %v6662 = vpop.f32.mrf.mxu0
        %v6663 = vadd.f32 0.0, %v6662
        %v6664 = vpop.f32.mrf.mxu0
        %6665 = vmatprep.mubr.f32.mxu0 0.0
        %6666 = vmatmul.mubr.f32.gmra.mxu0 %v2966
        %v6667 = vpop.f32.mrf.mxu0
        %v6668 = vadd.f32 0.0, %v6667
        %v6669 = vpop.f32.mrf.mxu0
        %6670 = vmatprep.mubr.f32.mxu0 0.0
        %6671 = vmatmul.mubr.f32.gmra.mxu0 %v3910
        %v6672 = vpop.f32.mrf.mxu0
        %v6673 = vadd.f32 0.0, %v6672
        %v6674 = vpop.f32.mrf.mxu0
        %6675 = vmatprep.mubr.f32.mxu0 0.0
        %6676 = vmatmul.mubr.f32.gmra.mxu0 %v3912
        %v6677 = vpop.f32.mrf.mxu0
        %v6678 = vadd.f32 0.0, %v6677
        %v6679 = vpop.f32.mrf.mxu0
        %6680 = vmatprep.mubr.f32.mxu0 0.0
        %6681 = vmatmul.mubr.f32.gmra.mxu0 %v4793
        %v6682 = vpop.f32.mrf.mxu0
        %v6683 = vadd.f32 0.0, %v6682
        %v6684 = vpop.f32.mrf.mxu0
        %6685 = vmatprep.mubr.f32.mxu0 0.0
        %6686 = vmatmul.mubr.f32.gmra.mxu0 %v4795
        %v6687 = vpop.f32.mrf.mxu0
        %v6688 = vadd.f32 0.0, %v6687
        %v6689 = vpop.f32.mrf.mxu0
        %6690 = vmatprep.mubr.f32.mxu0 0.0
        %6691 = vmatmul.mubr.f32.gmra.mxu0 %v5676
        %v6692 = vpop.f32.mrf.mxu0
        %v6693 = vadd.f32 0.0, %v6692
        %v6694 = vpop.f32.mrf.mxu0
        %6695 = vmatprep.mubr.f32.mxu0 0.0
        %6696 = vmatmul.mubr.f32.gmra.mxu0 %v5678
        %v6697 = vpop.f32.mrf.mxu0
        %v6698 = vadd.f32 0.0, %v6697
        %v6699 = vpop.f32.mrf.mxu0
        %6700 = vmatprep.mubr.f32.mxu0 0.0
        %6701 = vmatmul.mubr.f32.gmra.mxu0 %v6559
        %v6702 = vpop.f32.mrf.mxu0
        %v6703 = vadd.f32 0.0, %v6702
        %v6704 = vpop.f32.mrf.mxu0
        %6705 = vmatprep.mubr.f32.mxu0 0.0
        %6706 = vmatmul.mubr.f32.gmra.mxu0 %v6561
        %v6707 = vpop.f32.mrf.mxu0
        %v6708 = vadd.f32 0.0, %v6707
        %v6709 = vpop.f32.mrf.mxu0
        %6710 = vdwg.mxu0
        %v6711 = vadd.f32 %v6534, %v6633
        %v6712 = vadd.f32 %v6535, %v6638
        %v6713 = vadd.f32 %v6536, %v6643
        %v6714 = vadd.f32 %v6537, %v6648
        %v6715 = vadd.f32 %v6538, %v6653
        %v6716 = vadd.f32 %v6539, %v6658
        %v6717 = vadd.f32 %v6540, %v6663
        %v6718 = vadd.f32 %v6541, %v6668
        %v6719 = vadd.f32 %v6542, %v6673
        %v6720 = vadd.f32 %v6543, %v6678
        %v6721 = vadd.f32 %v6544, %v6683
        %v6722 = vadd.f32 %v6545, %v6688
        %v6723 = vadd.f32 %v6546, %v6693
        %v6724 = vadd.f32 %v6547, %v6698
        %v6725 = vadd.f32 %v6548, %v6703
        %v6726 = vadd.f32 %v6549, %v6708
        %v6727 = vrot.slane %v2214, 4
        %v6728 = vrot.slane %v2215, 4
        %v6729 = vsel %vm2321, %v6727, %v6728
        %v6730 = vrot.slane %v2216, 4
        %v6731 = vsel %vm2321, %v6728, %v6730
        %s6732 = scalar_lea.vmem %s3, 576
        %v6733 = vld [vmem:[%s6732] sm:$0xff]
        %v6734 = vld [vmem:[%s6732 + $0x8] sm:$0xff]
        %v6735 = vld [vmem:[%s6732 + $0x10] sm:$0xf]
        %v6736 = vsel %vm1701, %v6729, 0
        %v6738 = vsel %vm1701, %v6731, 0
        %v6741 = vsel %vm2321, %v6735, 0
        %6743 = vmatprep.subr.mxu0 0.0
        %6744 = vmatpush1.msra.mxu0 0.0
        %6745 = vmatprep.subr.mxu0 0.0
        %6746 = vmatpush1.msra.mxu0 0.0
        %6747 = vmatprep.subr.mxu0 0.0
        %6748 = vmatpush1.msra.mxu0 0.0
        %6749 = vmatprep.subr.mxu0 0.0
        %6750 = vmatpush1.msra.mxu0 0.0
        %6751 = vmatprep.subr.mxu0 0.0
        %6752 = vmatpush1.msra.mxu0 0.0
        %6753 = vmatprep.subr.mxu0 0.0
        %6754 = vmatpush1.msra.mxu0 0.0
        %6755 = vmatprep.subr.mxu0 0.0
        %6756 = vmatpush1.msra.mxu0 0.0
        %6757 = vmatprep.subr.mxu0 0.0
        %6758 = vmatpush1.msra.mxu0 0.0
        %6759 = vmatprep.subr.mxu0 0.0
        %6760 = vmatpush1.msra.mxu0 0.0
        %6761 = vmatprep.subr.mxu0 0.0
        %6762 = vmatpush1.msra.mxu0 0.0
        %6763 = vmatprep.subr.mxu0 0.0
        %6764 = vmatpush1.msra.mxu0 0.0
        %6765 = vmatprep.subr.mxu0 0.0
        %6766 = vmatpush1.msra.mxu0 0.0
        %6767 = vmatprep.subr.mxu0 0.0
        %6768 = vmatpush1.msra.mxu0 0.0
        %6769 = vmatprep.subr.mxu0 0.0
        %6770 = vmatpush1.msra.mxu0 %v6741
        %6771 = vmatprep.subr.mxu0 0.0
        %6772 = vmatpush1.msra.mxu0 %v6734
        %6773 = vmatprep.subr.mxu0 0.0
        %6774 = vmatpush1.msra.mxu0 %v6733
        %6775 = vmatprep.subr.mxu0 0.0
        %6776 = vmatpush2.msra.mxu0 0.0
        %6777 = vmatprep.subr.mxu0 0.0
        %6778 = vmatpush2.msra.mxu0 0.0
        %6779 = vmatprep.subr.mxu0 0.0
        %6780 = vmatpush2.msra.mxu0 0.0
        %6781 = vmatprep.subr.mxu0 0.0
        %6782 = vmatpush2.msra.mxu0 0.0
        %6783 = vmatprep.subr.mxu0 0.0
        %6784 = vmatpush2.msra.mxu0 0.0
        %6785 = vmatprep.subr.mxu0 0.0
        %6786 = vmatpush2.msra.mxu0 0.0
        %6787 = vmatprep.subr.mxu0 0.0
        %6788 = vmatpush2.msra.mxu0 0.0
        %6789 = vmatprep.subr.mxu0 0.0
        %6790 = vmatpush2.msra.mxu0 0.0
        %6791 = vmatprep.subr.mxu0 0.0
        %6792 = vmatpush2.msra.mxu0 0.0
        %6793 = vmatprep.subr.mxu0 0.0
        %6794 = vmatpush2.msra.mxu0 0.0
        %6795 = vmatprep.subr.mxu0 0.0
        %6796 = vmatpush2.msra.mxu0 0.0
        %6797 = vmatprep.subr.mxu0 0.0
        %6798 = vmatpush2.msra.mxu0 0.0
        %6799 = vmatprep.subr.mxu0 0.0
        %6800 = vmatpush2.msra.mxu0 0.0
        %6801 = vmatprep.subr.mxu0 0.0
        %6802 = vmatpush2.msra.mxu0 0.0
        %6803 = vmatprep.subr.mxu0 0.0
        %6804 = vmatpush2.msra.mxu0 0.0
        %6805 = vmatprep.subr.mxu0 0.0
        %6806 = vmatpush2.msra.mxu0 0.0
        %6807 = vmatprep.mubr.f32.mxu0 0.0
        %6808 = vmatmul.mubr.f32.gmra.mxu0 %v3192
        %v6809 = vpop.f32.mrf.mxu0
        %v6810 = vadd.f32 0.0, %v6809
        %v6811 = vpop.f32.mrf.mxu0
        %6812 = vmatprep.mubr.f32.mxu0 0.0
        %6813 = vmatmul.mubr.f32.gmra.mxu0 %v3194
        %v6814 = vpop.f32.mrf.mxu0
        %v6815 = vadd.f32 0.0, %v6814
        %v6816 = vpop.f32.mrf.mxu0
        %6817 = vmatprep.mubr.f32.mxu0 0.0
        %6818 = vmatmul.mubr.f32.gmra.mxu0 %v3196
        %v6819 = vpop.f32.mrf.mxu0
        %v6820 = vadd.f32 0.0, %v6819
        %v6821 = vpop.f32.mrf.mxu0
        %6822 = vmatprep.mubr.f32.mxu0 0.0
        %6823 = vmatmul.mubr.f32.gmra.mxu0 %v3198
        %v6824 = vpop.f32.mrf.mxu0
        %v6825 = vadd.f32 0.0, %v6824
        %v6826 = vpop.f32.mrf.mxu0
        %6827 = vmatprep.mubr.f32.mxu0 0.0
        %6828 = vmatmul.mubr.f32.gmra.mxu0 %v3200
        %v6829 = vpop.f32.mrf.mxu0
        %v6830 = vadd.f32 0.0, %v6829
        %v6831 = vpop.f32.mrf.mxu0
        %6832 = vmatprep.mubr.f32.mxu0 0.0
        %6833 = vmatmul.mubr.f32.gmra.mxu0 %v3202
        %v6834 = vpop.f32.mrf.mxu0
        %v6835 = vadd.f32 0.0, %v6834
        %v6836 = vpop.f32.mrf.mxu0
        %6837 = vmatprep.mubr.f32.mxu0 0.0
        %6838 = vmatmul.mubr.f32.gmra.mxu0 %v3204
        %v6839 = vpop.f32.mrf.mxu0
        %v6840 = vadd.f32 0.0, %v6839
        %v6841 = vpop.f32.mrf.mxu0
        %6842 = vmatprep.mubr.f32.mxu0 0.0
        %6843 = vmatmul.mubr.f32.gmra.mxu0 %v3206
        %v6844 = vpop.f32.mrf.mxu0
        %v6845 = vadd.f32 0.0, %v6844
        %v6846 = vpop.f32.mrf.mxu0
        %6847 = vmatprep.mubr.f32.mxu0 0.0
        %6848 = vmatmul.mubr.f32.gmra.mxu0 %v4087
        %v6849 = vpop.f32.mrf.mxu0
        %v6850 = vadd.f32 0.0, %v6849
        %v6851 = vpop.f32.mrf.mxu0
        %6852 = vmatprep.mubr.f32.mxu0 0.0
        %6853 = vmatmul.mubr.f32.gmra.mxu0 %v4089
        %v6854 = vpop.f32.mrf.mxu0
        %v6855 = vadd.f32 0.0, %v6854
        %v6856 = vpop.f32.mrf.mxu0
        %6857 = vmatprep.mubr.f32.mxu0 0.0
        %6858 = vmatmul.mubr.f32.gmra.mxu0 %v4970
        %v6859 = vpop.f32.mrf.mxu0
        %v6860 = vadd.f32 0.0, %v6859
        %v6861 = vpop.f32.mrf.mxu0
        %6862 = vmatprep.mubr.f32.mxu0 0.0
        %6863 = vmatmul.mubr.f32.gmra.mxu0 %v4972
        %v6864 = vpop.f32.mrf.mxu0
        %v6865 = vadd.f32 0.0, %v6864
        %v6866 = vpop.f32.mrf.mxu0
        %6867 = vmatprep.mubr.f32.mxu0 0.0
        %6868 = vmatmul.mubr.f32.gmra.mxu0 %v5853
        %v6869 = vpop.f32.mrf.mxu0
        %v6870 = vadd.f32 0.0, %v6869
        %v6871 = vpop.f32.mrf.mxu0
        %6872 = vmatprep.mubr.f32.mxu0 0.0
        %6873 = vmatmul.mubr.f32.gmra.mxu0 %v5855
        %v6874 = vpop.f32.mrf.mxu0
        %v6875 = vadd.f32 0.0, %v6874
        %v6876 = vpop.f32.mrf.mxu0
        %6877 = vmatprep.mubr.f32.mxu0 0.0
        %6878 = vmatmul.mubr.f32.gmra.mxu0 %v6736
        %v6879 = vpop.f32.mrf.mxu0
        %v6880 = vadd.f32 0.0, %v6879
        %v6881 = vpop.f32.mrf.mxu0
        %6882 = vmatprep.mubr.f32.mxu0 0.0
        %6883 = vmatmul.mubr.f32.gmra.mxu0 %v6738
        %v6884 = vpop.f32.mrf.mxu0
        %v6885 = vadd.f32 0.0, %v6884
        %v6886 = vpop.f32.mrf.mxu0
        %6887 = vdwg.mxu0
        %v6888 = vadd.f32 %v6711, %v6810
        %v6889 = vadd.f32 %v6712, %v6815
        %v6890 = vadd.f32 %v6713, %v6820
        %v6891 = vadd.f32 %v6714, %v6825
        %v6892 = vadd.f32 %v6715, %v6830
        %v6893 = vadd.f32 %v6716, %v6835
        %v6894 = vadd.f32 %v6717, %v6840
        %v6895 = vadd.f32 %v6718, %v6845
        %v6896 = vadd.f32 %v6719, %v6850
        %v6897 = vadd.f32 %v6720, %v6855
        %v6898 = vadd.f32 %v6721, %v6860
        %v6899 = vadd.f32 %v6722, %v6865
        %v6900 = vadd.f32 %v6723, %v6870
        %v6901 = vadd.f32 %v6724, %v6875
        %v6902 = vadd.f32 %v6725, %v6880
        %v6903 = vadd.f32 %v6726, %v6885
        %v6904 = vld [vmem:[%s4] sm:$0x1]
        %v6906 = vlaneseq
        %v6907 = vshrl.u32 %v6906, 7
        %v6908 = vsub.s32 0, %v6907
        %v6909 = vrot.slane %v6904, %v6908
        %v6911 = vadd.f32 %v6888, %v6909
        %v6912 = vadd.f32 %v6889, %v6909
        %v6913 = vadd.f32 %v6890, %v6909
        %v6914 = vadd.f32 %v6891, %v6909
        %v6915 = vadd.f32 %v6892, %v6909
        %v6916 = vadd.f32 %v6893, %v6909
        %v6917 = vadd.f32 %v6894, %v6909
        %v6918 = vadd.f32 %v6895, %v6909
        %v6919 = vadd.f32 %v6896, %v6909
        %v6920 = vadd.f32 %v6897, %v6909
        %v6921 = vadd.f32 %v6898, %v6909
        %v6922 = vadd.f32 %v6899, %v6909
        %v6923 = vadd.f32 %v6900, %v6909
        %v6924 = vadd.f32 %v6901, %v6909
        %v6925 = vadd.f32 %v6902, %v6909
        %v6926 = vadd.f32 %v6903, %v6909
        %v6927 = vmax.f32 %v6911, 0.0
        %v6928 = vmax.f32 %v6912, 0.0
        %v6929 = vmax.f32 %v6913, 0.0
        %v6930 = vmax.f32 %v6914, 0.0
        %v6931 = vmax.f32 %v6915, 0.0
        %v6932 = vmax.f32 %v6916, 0.0
        %v6933 = vmax.f32 %v6917, 0.0
        %v6934 = vmax.f32 %v6918, 0.0
        %v6935 = vmax.f32 %v6919, 0.0
        %v6936 = vmax.f32 %v6920, 0.0
        %v6937 = vmax.f32 %v6921, 0.0
        %v6938 = vmax.f32 %v6922, 0.0
        %v6939 = vmax.f32 %v6923, 0.0
        %v6940 = vmax.f32 %v6924, 0.0
        %v6941 = vmax.f32 %v6925, 0.0
        %v6942 = vmax.f32 %v6926, 0.0
        %vm6943 = vcmask 408576
        %6944 = vst.msk [vmem:[#allocation3] sm:$0xff] %vm6943, %v6927
        %6945 = vst.msk [vmem:[#allocation3 + $0x8] sm:$0xff] %vm6943, %v6928
        %6946 = vst.msk [vmem:[#allocation3 + $0x10] sm:$0xff] %vm6943, %v6929
        %6947 = vst.msk [vmem:[#allocation3 + $0x18] sm:$0xff] %vm6943, %v6930
        %6948 = vst.msk [vmem:[#allocation3 + $0x20] sm:$0xff] %vm6943, %v6931
        %6949 = vst.msk [vmem:[#allocation3 + $0x28] sm:$0xff] %vm6943, %v6932
        %6950 = vst.msk [vmem:[#allocation3 + $0x30] sm:$0xff] %vm6943, %v6933
        %6951 = vst.msk [vmem:[#allocation3 + $0x38] sm:$0xff] %vm6943, %v6934
        %6952 = vst.msk [vmem:[#allocation3 + $0x40] sm:$0xff] %vm6943, %v6935
        %6953 = vst.msk [vmem:[#allocation3 + $0x48] sm:$0xff] %vm6943, %v6936
        %6954 = vst.msk [vmem:[#allocation3 + $0x50] sm:$0xff] %vm6943, %v6937
        %6955 = vst.msk [vmem:[#allocation3 + $0x58] sm:$0xff] %vm6943, %v6938
        %6956 = vst.msk [vmem:[#allocation3 + $0x60] sm:$0xff] %vm6943, %v6939
        %6957 = vst.msk [vmem:[#allocation3 + $0x68] sm:$0xff] %vm6943, %v6940
        %6958 = vst.msk [vmem:[#allocation3 + $0x70] sm:$0xff] %vm6943, %v6941
        %6959 = vst.msk [vmem:[#allocation3 + $0x78] sm:$0xff] %vm6943, %v6942
        %v6960 = vld [vmem:[#allocation3] ss:$2 sm:$0xff]
        %s6961 = scalar_lea.vmem [#allocation3], 16
        %v6962 = vld [vmem:[%s6961] ss:$2 sm:$0xff]
        %s6963 = scalar_lea.vmem [#allocation3], 32
        %v6964 = vld [vmem:[%s6963] ss:$2 sm:$0xff]
        %s6965 = scalar_lea.vmem [#allocation3], 48
        %v6966 = vld [vmem:[%s6965] ss:$2 sm:$0xff]
        %s6967 = scalar_lea.vmem [#allocation3], 64
        %v6968 = vld [vmem:[%s6967] ss:$2 sm:$0xff]
        %s6969 = scalar_lea.vmem [#allocation3], 80
        %v6970 = vld [vmem:[%s6969] ss:$2 sm:$0xff]
        %s6971 = scalar_lea.vmem [#allocation3], 96
        %v6972 = vld [vmem:[%s6971] ss:$2 sm:$0xff]
        %s6973 = scalar_lea.vmem [#allocation3], 112
        %v6974 = vld [vmem:[%s6973] ss:$2 sm:$0xff]
        %s6975 = scalar_lea.vmem [#allocation3], 1
        %v6976 = vld [vmem:[%s6975] ss:$2 sm:$0xff]
        %s6977 = scalar_lea.vmem [#allocation3], 17
        %v6978 = vld [vmem:[%s6977] ss:$2 sm:$0xff]
        %s6979 = scalar_lea.vmem [#allocation3], 33
        %v6980 = vld [vmem:[%s6979] ss:$2 sm:$0xff]
        %s6981 = scalar_lea.vmem [#allocation3], 49
        %v6982 = vld [vmem:[%s6981] ss:$2 sm:$0xff]
        %s6983 = scalar_lea.vmem [#allocation3], 65
        %v6984 = vld [vmem:[%s6983] ss:$2 sm:$0xff]
        %s6985 = scalar_lea.vmem [#allocation3], 81
        %v6986 = vld [vmem:[%s6985] ss:$2 sm:$0xff]
        %s6987 = scalar_lea.vmem [#allocation3], 97
        %v6988 = vld [vmem:[%s6987] ss:$2 sm:$0xff]
        %s6989 = scalar_lea.vmem [#allocation3], 113
        %v6990 = vld [vmem:[%s6989] ss:$2 sm:$0xff]
        %v6991 = vmax.f32 %v6960, %v6976
        %v6992 = vmax.f32 %v6962, %v6978
        %v6993 = vmax.f32 %v6964, %v6980
        %v6994 = vmax.f32 %v6966, %v6982
        %v6995 = vmax.f32 %v6968, %v6984
        %v6996 = vmax.f32 %v6970, %v6986
        %v6997 = vmax.f32 %v6972, %v6988
        %v6998 = vmax.f32 %v6974, %v6990
        %v6999 = vmax.f32 %v6991, %v6992
        %v7000 = vmax.f32 %v6993, %v6994
        %v7001 = vmax.f32 %v6995, %v6996
        %v7002 = vmax.f32 %v6997, %v6998
        %v7004 = vrot.slane %v6999, 1
        %7005 = vrot.lane.b32.xlu0 %v7004, 50
        %v7006 = vpop.permute.xlu0 %7005
        %v7008 = vrot.slane %v6999, 2
        %7009 = vrot.lane.b32.xlu0 %v7008, 100
        %v7010 = vpop.permute.xlu0 %7009
        %v7012 = vrot.slane %v6999, 3
        %7013 = vrot.lane.b32.xlu0 %v7012, 22
        %v7014 = vpop.permute.xlu0 %7013
        %v7016 = vrot.slane %v6999, 4
        %7017 = vrot.lane.b32.xlu0 %v7016, 72
        %v7018 = vpop.permute.xlu0 %7017
        %v7020 = vrot.slane %v6999, 5
        %7021 = vrot.lane.b32.xlu0 %v7020, 122
        %v7022 = vpop.permute.xlu0 %7021
        %v7024 = vrot.slane %v6999, 6
        %7025 = vrot.lane.b32.xlu0 %v7024, 44
        %v7026 = vpop.permute.xlu0 %7025
        %v7028 = vrot.slane %v6999, 7
        %7029 = vrot.lane.b32.xlu0 %v7028, 94
        %v7030 = vpop.permute.xlu0 %7029
        %7033 = vrot.lane.b32.xlu0 %v7000, 16
        %v7034 = vpop.permute.xlu0 %7033
        %v7036 = vrot.slane %v7000, 1
        %7037 = vrot.lane.b32.xlu0 %v7036, 66
        %v7038 = vpop.permute.xlu0 %7037
        %v7040 = vrot.slane %v7000, 2
        %7041 = vrot.lane.b32.xlu0 %v7040, 116
        %v7042 = vpop.permute.xlu0 %7041
        %v7044 = vrot.slane %v7000, 3
        %7045 = vrot.lane.b32.xlu0 %v7044, 38
        %v7046 = vpop.permute.xlu0 %7045
        %v7048 = vrot.slane %v7000, 4
        %7049 = vrot.lane.b32.xlu0 %v7048, 88
        %v7050 = vpop.permute.xlu0 %7049
        %v7052 = vrot.slane %v7000, 5
        %7053 = vrot.lane.b32.xlu0 %v7052, 10
        %v7054 = vpop.permute.xlu0 %7053
        %v7056 = vrot.slane %v7000, 6
        %7057 = vrot.lane.b32.xlu0 %v7056, 60
        %v7058 = vpop.permute.xlu0 %7057
        %v7060 = vrot.slane %v7000, 7
        %7061 = vrot.lane.b32.xlu0 %v7060, 110
        %v7062 = vpop.permute.xlu0 %7061
        %v7064 = vsel %vm6943, %v6999, %v7006
        %vm7065 = vcmask 818176
        %v7066 = vsel %vm7065, %v7064, %v7010
        %vm7067 = vcmask 179200
        %v7068 = vsel %vm7067, %v7010, %v7014
        %vm7069 = vcmask 588800
        %v7070 = vsel %vm7069, %v7068, %v7018
        %vm7071 = vcmask 998400
        %v7072 = vsel %vm7071, %v7070, %v7022
        %vm7073 = vcmask 359424
        %v7074 = vsel %vm7073, %v7022, %v7026
        %vm7075 = vcmask 769024
        %v7076 = vsel %vm7075, %v7074, %v7030
        %vm7077 = vcmask 130048
        %v7078 = vsel %vm7077, %v7030, %v7034
        %vm7079 = vcmask 539648
        %v7080 = vsel %vm7079, %v7078, %v7038
        %vm7081 = vcmask 949248
        %v7082 = vsel %vm7081, %v7080, %v7042
        %vm7083 = vcmask 310272
        %v7084 = vsel %vm7083, %v7042, %v7046
        %vm7085 = vcmask 719872
        %v7086 = vsel %vm7085, %v7084, %v7050
        %vm7087 = vcmask 80896
        %v7088 = vsel %vm7087, %v7050, %v7054
        %vm7089 = vcmask 490496
        %v7090 = vsel %vm7089, %v7088, %v7058
        %vm7091 = vcmask 900096
        %v7092 = vsel %vm7091, %v7090, %v7062
        %v7094 = vrot.slane %v7001, 1
        %7095 = vrot.lane.b32.xlu0 %v7094, 50
        %v7096 = vpop.permute.xlu0 %7095
        %v7098 = vrot.slane %v7001, 2
        %7099 = vrot.lane.b32.xlu0 %v7098, 100
        %v7100 = vpop.permute.xlu0 %7099
        %v7102 = vrot.slane %v7001, 3
        %7103 = vrot.lane.b32.xlu0 %v7102, 22
        %v7104 = vpop.permute.xlu0 %7103
        %v7106 = vrot.slane %v7001, 4
        %7107 = vrot.lane.b32.xlu0 %v7106, 72
        %v7108 = vpop.permute.xlu0 %7107
        %v7110 = vrot.slane %v7001, 5
        %7111 = vrot.lane.b32.xlu0 %v7110, 122
        %v7112 = vpop.permute.xlu0 %7111
        %v7114 = vrot.slane %v7001, 6
        %7115 = vrot.lane.b32.xlu0 %v7114, 44
        %v7116 = vpop.permute.xlu0 %7115
        %v7118 = vrot.slane %v7001, 7
        %7119 = vrot.lane.b32.xlu0 %v7118, 94
        %v7120 = vpop.permute.xlu0 %7119
        %7123 = vrot.lane.b32.xlu0 %v7002, 16
        %v7124 = vpop.permute.xlu0 %7123
        %v7126 = vrot.slane %v7002, 1
        %7127 = vrot.lane.b32.xlu0 %v7126, 66
        %v7128 = vpop.permute.xlu0 %7127
        %v7130 = vrot.slane %v7002, 2
        %7131 = vrot.lane.b32.xlu0 %v7130, 116
        %v7132 = vpop.permute.xlu0 %7131
        %v7134 = vrot.slane %v7002, 3
        %7135 = vrot.lane.b32.xlu0 %v7134, 38
        %v7136 = vpop.permute.xlu0 %7135
        %v7138 = vrot.slane %v7002, 4
        %7139 = vrot.lane.b32.xlu0 %v7138, 88
        %v7140 = vpop.permute.xlu0 %7139
        %v7142 = vrot.slane %v7002, 5
        %7143 = vrot.lane.b32.xlu0 %v7142, 10
        %v7144 = vpop.permute.xlu0 %7143
        %v7146 = vrot.slane %v7002, 6
        %7147 = vrot.lane.b32.xlu0 %v7146, 60
        %v7148 = vpop.permute.xlu0 %7147
        %v7150 = vrot.slane %v7002, 7
        %7151 = vrot.lane.b32.xlu0 %v7150, 110
        %v7152 = vpop.permute.xlu0 %7151
        %v7154 = vsel %vm6943, %v7001, %v7096
        %v7155 = vsel %vm7065, %v7154, %v7100
        %v7156 = vsel %vm7067, %v7100, %v7104
        %v7157 = vsel %vm7069, %v7156, %v7108
        %v7158 = vsel %vm7071, %v7157, %v7112
        %v7159 = vsel %vm7073, %v7112, %v7116
        %v7160 = vsel %vm7075, %v7159, %v7120
        %v7161 = vsel %vm7077, %v7120, %v7124
        %v7162 = vsel %vm7079, %v7161, %v7128
        %v7163 = vsel %vm7081, %v7162, %v7132
        %v7164 = vsel %vm7083, %v7132, %v7136
        %v7165 = vsel %vm7085, %v7164, %v7140
        %v7166 = vsel %vm7087, %v7140, %v7144
        %v7167 = vsel %vm7089, %v7166, %v7148
        %v7168 = vsel %vm7091, %v7167, %v7152
        %7175 = vrot.lane.b32.xlu0 %v7155, 32
        %v7176 = vpop.permute.xlu0 %7175
        %7177 = vrot.lane.b32.xlu0 %v7158, 32
        %v7178 = vpop.permute.xlu0 %7177
        %7179 = vrot.lane.b32.xlu0 %v7160, 32
        %v7180 = vpop.permute.xlu0 %7179
        %7181 = vrot.lane.b32.xlu0 %v7163, 32
        %v7182 = vpop.permute.xlu0 %7181
        %7183 = vrot.lane.b32.xlu0 %v7165, 32
        %v7184 = vpop.permute.xlu0 %7183
        %7185 = vrot.lane.b32.xlu0 %v7168, 32
        %v7186 = vpop.permute.xlu0 %7185
        %7187 = vrot.lane.b32.xlu0 %v7152, 32
        %v7188 = vpop.permute.xlu0 %7187
        %vm7189 = vcmask 261120
        %v7190 = vsel %vm7189, %v7176, %v7178
        %v7191 = vsel %vm7189, %v7178, %v7180
        %v7192 = vsel %vm7189, %v7180, %v7182
        %v7193 = vsel %vm7189, %v7182, %v7184
        %v7194 = vsel %vm7189, %v7184, %v7186
        %v7195 = vsel %vm7189, %v7186, %v7188
        %v7202 = vsel %vm7189, %v7062, %v7176
        %v7203 = vld [vmem:[%s5] sm:$0xff]
        %v7204 = vld [vmem:[%s5 + $0x8] sm:$0xff]
        %v7205 = vld [vmem:[%s5 + $0x10] sm:$0xff]
        %v7206 = vld [vmem:[%s5 + $0x18] sm:$0xff]
        %v7207 = vld [vmem:[%s5 + $0x20] sm:$0xff]
        %v7208 = vld [vmem:[%s5 + $0x28] sm:$0xff]
        %v7209 = vld [vmem:[%s5 + $0x30] sm:$0xff]
        %v7210 = vld [vmem:[%s5 + $0x38] sm:$0xff]
        %v7211 = vld [vmem:[%s5 + $0x40] sm:$0xff]
        %v7212 = vld [vmem:[%s5 + $0x48] sm:$0xff]
        %v7213 = vld [vmem:[%s5 + $0x50] sm:$0xff]
        %v7214 = vld [vmem:[%s5 + $0x58] sm:$0xff]
        %v7215 = vld [vmem:[%s5 + $0x60] sm:$0xff]
        %v7216 = vld [vmem:[%s5 + $0x68] sm:$0xff]
        %v7217 = vld [vmem:[%s5 + $0x70] sm:$0xff]
        %v7218 = vld [vmem:[%s5 + $0x78] sm:$0xff]
        %v7219 = vld [vmem:[%s5 + $0x80] sm:$0xff]
        %v7220 = vld [vmem:[%s5 + $0x88] sm:$0xff]
        %v7221 = vld [vmem:[%s5 + $0x90] sm:$0xff]
        %v7222 = vld [vmem:[%s5 + $0x98] sm:$0xff]
        %v7223 = vld [vmem:[%s5 + $0xa0] sm:$0xff]
        %v7224 = vld [vmem:[%s5 + $0xa8] sm:$0xff]
        %v7225 = vld [vmem:[%s5 + $0xb0] sm:$0xff]
        %v7226 = vld [vmem:[%s5 + $0xb8] sm:$0xff]
        %v7227 = vld [vmem:[%s5 + $0xc0] sm:$0xff]
        %v7228 = vld [vmem:[%s5 + $0xc8] sm:$0xff]
        %v7229 = vld [vmem:[%s5 + $0xd0] sm:$0xff]
        %v7230 = vld [vmem:[%s5 + $0xd8] sm:$0xff]
        %v7231 = vld [vmem:[%s5 + $0xe0] sm:$0xff]
        %v7232 = vld [vmem:[%s5 + $0xe8] sm:$0xff]
        %v7233 = vld [vmem:[%s5 + $0xf0] sm:$0xff]
        %v7234 = vld [vmem:[%s5 + $0xf8] sm:$0xff]
        %v7235 = vld [vmem:[%s5 + $0x100] sm:$0xff]
        %v7236 = vld [vmem:[%s5 + $0x108] sm:$0xff]
        %v7237 = vld [vmem:[%s5 + $0x110] sm:$0xff]
        %v7238 = vld [vmem:[%s5 + $0x118] sm:$0xff]
        %v7239 = vld [vmem:[%s5 + $0x120] sm:$0xff]
        %v7240 = vld [vmem:[%s5 + $0x128] sm:$0xff]
        %v7241 = vld [vmem:[%s5 + $0x130] sm:$0xff]
        %v7242 = vld [vmem:[%s5 + $0x138] sm:$0xff]
        %v7243 = vld [vmem:[%s5 + $0x140] sm:$0xff]
        %v7244 = vld [vmem:[%s5 + $0x148] sm:$0xff]
        %v7245 = vld [vmem:[%s5 + $0x150] sm:$0xff]
        %v7246 = vld [vmem:[%s5 + $0x158] sm:$0xff]
        %v7247 = vld [vmem:[%s5 + $0x160] sm:$0xff]
        %v7248 = vld [vmem:[%s5 + $0x168] sm:$0xff]
        %v7249 = vld [vmem:[%s5 + $0x170] sm:$0xff]
        %v7250 = vld [vmem:[%s5 + $0x178] sm:$0xff]
        %v7251 = vld [vmem:[%s5 + $0x180] sm:$0xff]
        %v7252 = vld [vmem:[%s5 + $0x188] sm:$0xff]
        %v7253 = vld [vmem:[%s5 + $0x190] sm:$0xff]
        %v7254 = vld [vmem:[%s5 + $0x198] sm:$0xff]
        %v7255 = vld [vmem:[%s5 + $0x1a0] sm:$0xff]
        %v7256 = vld [vmem:[%s5 + $0x1a8] sm:$0xff]
        %v7257 = vld [vmem:[%s5 + $0x1b0] sm:$0xff]
        %v7258 = vld [vmem:[%s5 + $0x1b8] sm:$0xff]
        %v7259 = vld [vmem:[%s5 + $0x1c0] sm:$0xff]
        %v7260 = vld [vmem:[%s5 + $0x1c8] sm:$0xff]
        %v7261 = vld [vmem:[%s5 + $0x1d0] sm:$0xff]
        %v7262 = vld [vmem:[%s5 + $0x1d8] sm:$0xff]
        %v7263 = vld [vmem:[%s5 + $0x1e0] sm:$0xff]
        %v7264 = vld [vmem:[%s5 + $0x1e8] sm:$0xff]
        %v7265 = vld [vmem:[%s5 + $0x1f0] sm:$0xff]
        %v7266 = vld [vmem:[%s5 + $0x1f8] sm:$0xff]
        %v7267 = vld [vmem:[%s5 + $0x200] sm:$0xff]
        %v7268 = vld [vmem:[%s5 + $0x208] sm:$0xff]
        %v7269 = vld [vmem:[%s5 + $0x210] sm:$0xff]
        %v7270 = vld [vmem:[%s5 + $0x218] sm:$0xff]
        %v7271 = vld [vmem:[%s5 + $0x220] sm:$0xff]
        %v7272 = vld [vmem:[%s5 + $0x228] sm:$0xff]
        %v7273 = vld [vmem:[%s5 + $0x230] sm:$0xff]
        %v7274 = vld [vmem:[%s5 + $0x238] sm:$0xff]
        %v7275 = vld [vmem:[%s5 + $0x240] sm:$0xff]
        %v7276 = vld [vmem:[%s5 + $0x248] sm:$0xff]
        %v7277 = vld [vmem:[%s5 + $0x250] sm:$0xff]
        %v7278 = vld [vmem:[%s5 + $0x258] sm:$0xff]
        %v7279 = vld [vmem:[%s5 + $0x260] sm:$0xff]
        %v7280 = vld [vmem:[%s5 + $0x268] sm:$0xff]
        %v7281 = vld [vmem:[%s5 + $0x270] sm:$0xff]
        %v7282 = vld [vmem:[%s5 + $0x278] sm:$0xff]
        %v7283 = vld [vmem:[%s5 + $0x280] sm:$0xff]
        %v7284 = vld [vmem:[%s5 + $0x288] sm:$0xff]
        %v7285 = vld [vmem:[%s5 + $0x290] sm:$0xff]
        %v7286 = vld [vmem:[%s5 + $0x298] sm:$0xff]
        %v7287 = vld [vmem:[%s5 + $0x2a0] sm:$0xff]
        %v7288 = vld [vmem:[%s5 + $0x2a8] sm:$0xff]
        %v7289 = vld [vmem:[%s5 + $0x2b0] sm:$0xff]
        %v7290 = vld [vmem:[%s5 + $0x2b8] sm:$0xff]
        %v7291 = vld [vmem:[%s5 + $0x2c0] sm:$0xff]
        %v7292 = vld [vmem:[%s5 + $0x2c8] sm:$0xff]
        %v7293 = vld [vmem:[%s5 + $0x2d0] sm:$0xff]
        %v7294 = vld [vmem:[%s5 + $0x2d8] sm:$0xff]
        %v7295 = vld [vmem:[%s5 + $0x2e0] sm:$0xff]
        %v7296 = vld [vmem:[%s5 + $0x2e8] sm:$0xff]
        %v7297 = vld [vmem:[%s5 + $0x2f0] sm:$0xff]
        %v7298 = vld [vmem:[%s5 + $0x2f8] sm:$0xff]
        %v7299 = vld [vmem:[%s5 + $0x300] sm:$0xff]
        %v7300 = vld [vmem:[%s5 + $0x308] sm:$0xff]
        %v7301 = vld [vmem:[%s5 + $0x310] sm:$0xff]
        %v7302 = vld [vmem:[%s5 + $0x318] sm:$0xff]
        %v7303 = vld [vmem:[%s5 + $0x320] sm:$0xff]
        %v7304 = vld [vmem:[%s5 + $0x328] sm:$0xff]
        %v7305 = vld [vmem:[%s5 + $0x330] sm:$0xff]
        %v7306 = vld [vmem:[%s5 + $0x338] sm:$0xff]
        %v7307 = vld [vmem:[%s5 + $0x340] sm:$0xff]
        %v7308 = vld [vmem:[%s5 + $0x348] sm:$0xff]
        %v7309 = vld [vmem:[%s5 + $0x350] sm:$0xff]
        %v7310 = vld [vmem:[%s5 + $0x358] sm:$0xff]
        %v7311 = vld [vmem:[%s5 + $0x360] sm:$0xff]
        %v7312 = vld [vmem:[%s5 + $0x368] sm:$0xff]
        %v7313 = vld [vmem:[%s5 + $0x370] sm:$0xff]
        %v7314 = vld [vmem:[%s5 + $0x378] sm:$0xff]
        %v7315 = vld [vmem:[%s5 + $0x380] sm:$0xff]
        %v7316 = vld [vmem:[%s5 + $0x388] sm:$0xff]
        %v7317 = vld [vmem:[%s5 + $0x390] sm:$0xff]
        %v7318 = vld [vmem:[%s5 + $0x398] sm:$0xff]
        %v7319 = vld [vmem:[%s5 + $0x3a0] sm:$0xff]
        %v7320 = vld [vmem:[%s5 + $0x3a8] sm:$0xff]
        %v7321 = vld [vmem:[%s5 + $0x3b0] sm:$0xff]
        %v7322 = vld [vmem:[%s5 + $0x3b8] sm:$0xff]
        %v7323 = vld [vmem:[%s5 + $0x3c0] sm:$0xff]
        %v7324 = vld [vmem:[%s5 + $0x3c8] sm:$0xff]
        %v7325 = vld [vmem:[%s5 + $0x3d0] sm:$0xff]
        %v7326 = vld [vmem:[%s5 + $0x3d8] sm:$0xff]
        %v7327 = vld [vmem:[%s5 + $0x3e0] sm:$0xff]
        %v7328 = vld [vmem:[%s5 + $0x3e8] sm:$0xff]
        %v7329 = vld [vmem:[%s5 + $0x3f0] sm:$0xff]
        %v7330 = vld [vmem:[%s5 + $0x3f8] sm:$0xff]
        %v7331 = vld [vmem:[%s5 + $0x400] sm:$0xff]
        %v7332 = vld [vmem:[%s5 + $0x408] sm:$0xff]
        %v7333 = vld [vmem:[%s5 + $0x410] sm:$0xff]
        %v7334 = vld [vmem:[%s5 + $0x418] sm:$0xff]
        %v7335 = vld [vmem:[%s5 + $0x420] sm:$0xff]
        %v7336 = vld [vmem:[%s5 + $0x428] sm:$0xff]
        %v7337 = vld [vmem:[%s5 + $0x430] sm:$0xff]
        %v7338 = vld [vmem:[%s5 + $0x438] sm:$0xff]
        %v7339 = vld [vmem:[%s5 + $0x440] sm:$0xff]
        %v7340 = vld [vmem:[%s5 + $0x448] sm:$0xff]
        %v7341 = vld [vmem:[%s5 + $0x450] sm:$0xff]
        %v7342 = vld [vmem:[%s5 + $0x458] sm:$0xff]
        %v7343 = vld [vmem:[%s5 + $0x460] sm:$0xff]
        %v7344 = vld [vmem:[%s5 + $0x468] sm:$0xff]
        %v7345 = vld [vmem:[%s5 + $0x470] sm:$0xff]
        %v7346 = vld [vmem:[%s5 + $0x478] sm:$0xff]
        %v7347 = vld [vmem:[%s5 + $0x480] sm:$0xff]
        %v7348 = vld [vmem:[%s5 + $0x488] sm:$0xff]
        %v7349 = vld [vmem:[%s5 + $0x490] sm:$0xff]
        %v7350 = vld [vmem:[%s5 + $0x498] sm:$0xff]
        %v7351 = vld [vmem:[%s5 + $0x4a0] sm:$0xff]
        %v7352 = vld [vmem:[%s5 + $0x4a8] sm:$0xff]
        %v7353 = vld [vmem:[%s5 + $0x4b0] sm:$0xff]
        %v7354 = vld [vmem:[%s5 + $0x4b8] sm:$0xff]
        %v7355 = vld [vmem:[%s5 + $0x4c0] sm:$0xff]
        %v7356 = vld [vmem:[%s5 + $0x4c8] sm:$0xff]
        %v7357 = vld [vmem:[%s5 + $0x4d0] sm:$0xff]
        %v7358 = vld [vmem:[%s5 + $0x4d8] sm:$0xff]
        %v7359 = vld [vmem:[%s5 + $0x4e0] sm:$0xff]
        %v7360 = vld [vmem:[%s5 + $0x4e8] sm:$0xff]
        %v7361 = vld [vmem:[%s5 + $0x4f0] sm:$0xff]
        %v7362 = vld [vmem:[%s5 + $0x4f8] sm:$0xff]
        %v7363 = vld [vmem:[%s5 + $0x500] sm:$0xff]
        %v7364 = vld [vmem:[%s5 + $0x508] sm:$0xff]
        %v7365 = vld [vmem:[%s5 + $0x510] sm:$0xff]
        %v7366 = vld [vmem:[%s5 + $0x518] sm:$0xff]
        %v7367 = vld [vmem:[%s5 + $0x520] sm:$0xff]
        %v7368 = vld [vmem:[%s5 + $0x528] sm:$0xff]
        %v7369 = vld [vmem:[%s5 + $0x530] sm:$0xff]
        %v7370 = vld [vmem:[%s5 + $0x538] sm:$0xff]
        %v7371 = vld [vmem:[%s5 + $0x540] sm:$0xff]
        %v7372 = vld [vmem:[%s5 + $0x548] sm:$0xff]
        %v7373 = vld [vmem:[%s5 + $0x550] sm:$0xff]
        %v7374 = vld [vmem:[%s5 + $0x558] sm:$0xff]
        %v7375 = vld [vmem:[%s5 + $0x560] sm:$0xff]
        %v7376 = vld [vmem:[%s5 + $0x568] sm:$0xff]
        %v7377 = vld [vmem:[%s5 + $0x570] sm:$0xff]
        %v7378 = vld [vmem:[%s5 + $0x578] sm:$0xff]
        %v7379 = vld [vmem:[%s5 + $0x580] sm:$0xff]
        %v7380 = vld [vmem:[%s5 + $0x588] sm:$0xff]
        %v7381 = vld [vmem:[%s5 + $0x590] sm:$0xff]
        %v7382 = vld [vmem:[%s5 + $0x598] sm:$0xff]
        %v7383 = vld [vmem:[%s5 + $0x5a0] sm:$0xff]
        %v7384 = vld [vmem:[%s5 + $0x5a8] sm:$0xff]
        %v7385 = vld [vmem:[%s5 + $0x5b0] sm:$0xff]
        %v7386 = vld [vmem:[%s5 + $0x5b8] sm:$0xff]
        %v7387 = vld [vmem:[%s5 + $0x5c0] sm:$0xff]
        %v7388 = vld [vmem:[%s5 + $0x5c8] sm:$0xff]
        %v7389 = vld [vmem:[%s5 + $0x5d0] sm:$0xff]
        %v7390 = vld [vmem:[%s5 + $0x5d8] sm:$0xff]
        %v7391 = vld [vmem:[%s5 + $0x5e0] sm:$0xff]
        %v7392 = vld [vmem:[%s5 + $0x5e8] sm:$0xff]
        %v7393 = vld [vmem:[%s5 + $0x5f0] sm:$0xff]
        %v7394 = vld [vmem:[%s5 + $0x5f8] sm:$0xff]
        %v7395 = vld [vmem:[%s5 + $0x600] sm:$0xff]
        %v7396 = vld [vmem:[%s5 + $0x608] sm:$0xff]
        %v7397 = vld [vmem:[%s5 + $0x610] sm:$0xff]
        %v7398 = vld [vmem:[%s5 + $0x618] sm:$0xff]
        %v7399 = vld [vmem:[%s5 + $0x620] sm:$0xff]
        %v7400 = vld [vmem:[%s5 + $0x628] sm:$0xff]
        %v7401 = vld [vmem:[%s5 + $0x630] sm:$0xff]
        %v7402 = vld [vmem:[%s5 + $0x638] sm:$0xff]
        %v7403 = vld [vmem:[%s5 + $0x640] sm:$0xff]
        %v7404 = vld [vmem:[%s5 + $0x648] sm:$0xff]
        %v7405 = vld [vmem:[%s5 + $0x650] sm:$0xff]
        %v7406 = vld [vmem:[%s5 + $0x658] sm:$0xff]
        %v7407 = vld [vmem:[%s5 + $0x660] sm:$0xff]
        %v7408 = vld [vmem:[%s5 + $0x668] sm:$0xff]
        %v7409 = vld [vmem:[%s5 + $0x670] sm:$0xff]
        %v7410 = vld [vmem:[%s5 + $0x678] sm:$0xff]
        %v7411 = vld [vmem:[%s5 + $0x680] sm:$0xff]
        %v7412 = vld [vmem:[%s5 + $0x688] sm:$0xff]
        %v7413 = vld [vmem:[%s5 + $0x690] sm:$0xff]
        %v7414 = vld [vmem:[%s5 + $0x698] sm:$0xff]
        %v7415 = vld [vmem:[%s5 + $0x6a0] sm:$0xff]
        %v7416 = vld [vmem:[%s5 + $0x6a8] sm:$0xff]
        %v7417 = vld [vmem:[%s5 + $0x6b0] sm:$0xff]
        %v7418 = vld [vmem:[%s5 + $0x6b8] sm:$0xff]
        %v7419 = vld [vmem:[%s5 + $0x6c0] sm:$0xff]
        %v7420 = vld [vmem:[%s5 + $0x6c8] sm:$0xff]
        %v7421 = vld [vmem:[%s5 + $0x6d0] sm:$0xff]
        %v7422 = vld [vmem:[%s5 + $0x6d8] sm:$0xff]
        %v7423 = vld [vmem:[%s5 + $0x6e0] sm:$0xff]
        %v7424 = vld [vmem:[%s5 + $0x6e8] sm:$0xff]
        %v7425 = vld [vmem:[%s5 + $0x6f0] sm:$0xff]
        %v7426 = vld [vmem:[%s5 + $0x6f8] sm:$0xff]
        %v7427 = vld [vmem:[%s5 + $0x700] sm:$0xff]
        %v7428 = vld [vmem:[%s5 + $0x708] sm:$0xff]
        %v7429 = vld [vmem:[%s5 + $0x710] sm:$0xff]
        %v7430 = vld [vmem:[%s5 + $0x718] sm:$0xff]
        %v7431 = vld [vmem:[%s5 + $0x720] sm:$0xff]
        %v7432 = vld [vmem:[%s5 + $0x728] sm:$0xff]
        %v7433 = vld [vmem:[%s5 + $0x730] sm:$0xff]
        %v7434 = vld [vmem:[%s5 + $0x738] sm:$0xff]
        %v7435 = vld [vmem:[%s5 + $0x740] sm:$0xff]
        %v7436 = vld [vmem:[%s5 + $0x748] sm:$0xff]
        %v7437 = vld [vmem:[%s5 + $0x750] sm:$0xff]
        %v7438 = vld [vmem:[%s5 + $0x758] sm:$0xff]
        %v7439 = vld [vmem:[%s5 + $0x760] sm:$0xff]
        %v7440 = vld [vmem:[%s5 + $0x768] sm:$0xff]
        %v7441 = vld [vmem:[%s5 + $0x770] sm:$0xff]
        %v7442 = vld [vmem:[%s5 + $0x778] sm:$0xff]
        %v7443 = vld [vmem:[%s5 + $0x780] sm:$0xff]
        %v7444 = vld [vmem:[%s5 + $0x788] sm:$0xff]
        %v7445 = vld [vmem:[%s5 + $0x790] sm:$0xff]
        %v7446 = vld [vmem:[%s5 + $0x798] sm:$0xff]
        %v7447 = vld [vmem:[%s5 + $0x7a0] sm:$0xff]
        %v7448 = vld [vmem:[%s5 + $0x7a8] sm:$0xff]
        %v7449 = vld [vmem:[%s5 + $0x7b0] sm:$0xff]
        %v7450 = vld [vmem:[%s5 + $0x7b8] sm:$0xff]
        %v7451 = vld [vmem:[%s5 + $0x7c0] sm:$0xff]
        %v7452 = vld [vmem:[%s5 + $0x7c8] sm:$0xff]
        %v7453 = vld [vmem:[%s5 + $0x7d0] sm:$0xff]
        %v7454 = vld [vmem:[%s5 + $0x7d8] sm:$0xff]
        %v7455 = vld [vmem:[%s5 + $0x7e0] sm:$0xff]
        %v7456 = vld [vmem:[%s5 + $0x7e8] sm:$0xff]
        %v7457 = vld [vmem:[%s5 + $0x7f0] sm:$0xff]
        %v7458 = vld [vmem:[%s5 + $0x7f8] sm:$0xff]
        %v7459 = vld [vmem:[%s5 + $0x800] sm:$0xff]
        %v7460 = vld [vmem:[%s5 + $0x808] sm:$0xff]
        %v7461 = vld [vmem:[%s5 + $0x810] sm:$0xff]
        %v7462 = vld [vmem:[%s5 + $0x818] sm:$0xff]
        %v7463 = vld [vmem:[%s5 + $0x820] sm:$0xff]
        %v7464 = vld [vmem:[%s5 + $0x828] sm:$0xff]
        %v7465 = vld [vmem:[%s5 + $0x830] sm:$0xff]
        %v7466 = vld [vmem:[%s5 + $0x838] sm:$0xff]
        %v7467 = vld [vmem:[%s5 + $0x840] sm:$0xff]
        %v7468 = vld [vmem:[%s5 + $0x848] sm:$0xff]
        %v7469 = vld [vmem:[%s5 + $0x850] sm:$0xff]
        %v7470 = vld [vmem:[%s5 + $0x858] sm:$0xff]
        %v7471 = vld [vmem:[%s5 + $0x860] sm:$0xff]
        %v7472 = vld [vmem:[%s5 + $0x868] sm:$0xff]
        %v7473 = vld [vmem:[%s5 + $0x870] sm:$0xff]
        %v7474 = vld [vmem:[%s5 + $0x878] sm:$0xff]
        %v7475 = vld [vmem:[%s5 + $0x880] sm:$0xff]
        %v7476 = vld [vmem:[%s5 + $0x888] sm:$0xff]
        %v7477 = vld [vmem:[%s5 + $0x890] sm:$0xff]
        %v7478 = vld [vmem:[%s5 + $0x898] sm:$0xff]
        %v7479 = vld [vmem:[%s5 + $0x8a0] sm:$0xff]
        %v7480 = vld [vmem:[%s5 + $0x8a8] sm:$0xff]
        %v7481 = vld [vmem:[%s5 + $0x8b0] sm:$0xff]
        %v7482 = vld [vmem:[%s5 + $0x8b8] sm:$0xff]
        %v7483 = vld [vmem:[%s5 + $0x8c0] sm:$0xff]
        %v7484 = vld [vmem:[%s5 + $0x8c8] sm:$0xff]
        %v7485 = vld [vmem:[%s5 + $0x8d0] sm:$0xff]
        %v7486 = vld [vmem:[%s5 + $0x8d8] sm:$0xff]
        %v7487 = vld [vmem:[%s5 + $0x8e0] sm:$0xff]
        %v7488 = vld [vmem:[%s5 + $0x8e8] sm:$0xff]
        %v7489 = vld [vmem:[%s5 + $0x8f0] sm:$0xff]
        %v7490 = vld [vmem:[%s5 + $0x8f8] sm:$0xff]
        %v7491 = vld [vmem:[%s5 + $0x900] sm:$0xff]
        %v7492 = vld [vmem:[%s5 + $0x908] sm:$0xff]
        %v7493 = vld [vmem:[%s5 + $0x910] sm:$0xff]
        %v7494 = vld [vmem:[%s5 + $0x918] sm:$0xff]
        %v7495 = vld [vmem:[%s5 + $0x920] sm:$0xff]
        %v7496 = vld [vmem:[%s5 + $0x928] sm:$0xff]
        %v7497 = vld [vmem:[%s5 + $0x930] sm:$0xff]
        %v7498 = vld [vmem:[%s5 + $0x938] sm:$0xff]
        %v7499 = vld [vmem:[%s5 + $0x940] sm:$0xff]
        %v7500 = vld [vmem:[%s5 + $0x948] sm:$0xff]
        %v7501 = vld [vmem:[%s5 + $0x950] sm:$0xff]
        %v7502 = vld [vmem:[%s5 + $0x958] sm:$0xff]
        %v7503 = vld [vmem:[%s5 + $0x960] sm:$0xff]
        %v7504 = vld [vmem:[%s5 + $0x968] sm:$0xff]
        %v7505 = vld [vmem:[%s5 + $0x970] sm:$0xff]
        %v7506 = vld [vmem:[%s5 + $0x978] sm:$0xff]
        %v7507 = vld [vmem:[%s5 + $0x980] sm:$0xff]
        %v7508 = vld [vmem:[%s5 + $0x988] sm:$0xff]
        %v7509 = vld [vmem:[%s5 + $0x990] sm:$0xff]
        %v7510 = vld [vmem:[%s5 + $0x998] sm:$0xff]
        %v7511 = vld [vmem:[%s5 + $0x9a0] sm:$0xff]
        %v7512 = vld [vmem:[%s5 + $0x9a8] sm:$0xff]
        %v7513 = vld [vmem:[%s5 + $0x9b0] sm:$0xff]
        %v7514 = vld [vmem:[%s5 + $0x9b8] sm:$0xff]
        %v7515 = vld [vmem:[%s5 + $0x9c0] sm:$0xff]
        %v7516 = vld [vmem:[%s5 + $0x9c8] sm:$0xff]
        %v7517 = vld [vmem:[%s5 + $0x9d0] sm:$0xff]
        %v7518 = vld [vmem:[%s5 + $0x9d8] sm:$0xff]
        %v7519 = vld [vmem:[%s5 + $0x9e0] sm:$0xff]
        %v7520 = vld [vmem:[%s5 + $0x9e8] sm:$0xff]
        %v7521 = vld [vmem:[%s5 + $0x9f0] sm:$0xff]
        %v7522 = vld [vmem:[%s5 + $0x9f8] sm:$0xff]
        %v7523 = vld [vmem:[%s5 + $0xa00] sm:$0xff]
        %v7524 = vld [vmem:[%s5 + $0xa08] sm:$0xff]
        %v7525 = vld [vmem:[%s5 + $0xa10] sm:$0xff]
        %v7526 = vld [vmem:[%s5 + $0xa18] sm:$0xff]
        %v7527 = vld [vmem:[%s5 + $0xa20] sm:$0xff]
        %v7528 = vld [vmem:[%s5 + $0xa28] sm:$0xff]
        %v7529 = vld [vmem:[%s5 + $0xa30] sm:$0xff]
        %v7530 = vld [vmem:[%s5 + $0xa38] sm:$0xff]
        %v7531 = vld [vmem:[%s5 + $0xa40] sm:$0xff]
        %v7532 = vld [vmem:[%s5 + $0xa48] sm:$0xff]
        %v7533 = vld [vmem:[%s5 + $0xa50] sm:$0xff]
        %v7534 = vld [vmem:[%s5 + $0xa58] sm:$0xff]
        %v7535 = vld [vmem:[%s5 + $0xa60] sm:$0xff]
        %v7536 = vld [vmem:[%s5 + $0xa68] sm:$0xff]
        %v7537 = vld [vmem:[%s5 + $0xa70] sm:$0xff]
        %v7538 = vld [vmem:[%s5 + $0xa78] sm:$0xff]
        %v7539 = vld [vmem:[%s5 + $0xa80] sm:$0xff]
        %v7540 = vld [vmem:[%s5 + $0xa88] sm:$0xff]
        %v7541 = vld [vmem:[%s5 + $0xa90] sm:$0xff]
        %v7542 = vld [vmem:[%s5 + $0xa98] sm:$0xff]
        %v7543 = vld [vmem:[%s5 + $0xaa0] sm:$0xff]
        %v7544 = vld [vmem:[%s5 + $0xaa8] sm:$0xff]
        %v7545 = vld [vmem:[%s5 + $0xab0] sm:$0xff]
        %v7546 = vld [vmem:[%s5 + $0xab8] sm:$0xff]
        %v7547 = vld [vmem:[%s5 + $0xac0] sm:$0xff]
        %v7548 = vld [vmem:[%s5 + $0xac8] sm:$0xff]
        %v7549 = vld [vmem:[%s5 + $0xad0] sm:$0xff]
        %v7550 = vld [vmem:[%s5 + $0xad8] sm:$0xff]
        %v7551 = vld [vmem:[%s5 + $0xae0] sm:$0xff]
        %v7552 = vld [vmem:[%s5 + $0xae8] sm:$0xff]
        %v7553 = vld [vmem:[%s5 + $0xaf0] sm:$0xff]
        %v7554 = vld [vmem:[%s5 + $0xaf8] sm:$0xff]
        %v7555 = vld [vmem:[%s5 + $0xb00] sm:$0xff]
        %v7556 = vld [vmem:[%s5 + $0xb08] sm:$0xff]
        %v7557 = vld [vmem:[%s5 + $0xb10] sm:$0xff]
        %v7558 = vld [vmem:[%s5 + $0xb18] sm:$0xff]
        %v7559 = vld [vmem:[%s5 + $0xb20] sm:$0xff]
        %v7560 = vld [vmem:[%s5 + $0xb28] sm:$0xff]
        %v7561 = vld [vmem:[%s5 + $0xb30] sm:$0xff]
        %v7562 = vld [vmem:[%s5 + $0xb38] sm:$0xff]
        %v7563 = vld [vmem:[%s5 + $0xb40] sm:$0xff]
        %v7564 = vld [vmem:[%s5 + $0xb48] sm:$0xff]
        %v7565 = vld [vmem:[%s5 + $0xb50] sm:$0xff]
        %v7566 = vld [vmem:[%s5 + $0xb58] sm:$0xff]
        %v7567 = vld [vmem:[%s5 + $0xb60] sm:$0xff]
        %v7568 = vld [vmem:[%s5 + $0xb68] sm:$0xff]
        %v7569 = vld [vmem:[%s5 + $0xb70] sm:$0xff]
        %v7570 = vld [vmem:[%s5 + $0xb78] sm:$0xff]
        %v7571 = vld [vmem:[%s5 + $0xb80] sm:$0xff]
        %v7572 = vld [vmem:[%s5 + $0xb88] sm:$0xff]
        %v7573 = vld [vmem:[%s5 + $0xb90] sm:$0xff]
        %v7574 = vld [vmem:[%s5 + $0xb98] sm:$0xff]
        %v7575 = vld [vmem:[%s5 + $0xba0] sm:$0xff]
        %v7576 = vld [vmem:[%s5 + $0xba8] sm:$0xff]
        %v7577 = vld [vmem:[%s5 + $0xbb0] sm:$0xff]
        %v7578 = vld [vmem:[%s5 + $0xbb8] sm:$0xff]
        %v7579 = vld [vmem:[%s5 + $0xbc0] sm:$0xff]
        %v7580 = vld [vmem:[%s5 + $0xbc8] sm:$0xff]
        %v7581 = vld [vmem:[%s5 + $0xbd0] sm:$0xff]
        %v7582 = vld [vmem:[%s5 + $0xbd8] sm:$0xff]
        %v7583 = vld [vmem:[%s5 + $0xbe0] sm:$0xff]
        %v7584 = vld [vmem:[%s5 + $0xbe8] sm:$0xff]
        %v7585 = vld [vmem:[%s5 + $0xbf0] sm:$0xff]
        %v7586 = vld [vmem:[%s5 + $0xbf8] sm:$0xff]
        %v7587 = vld [vmem:[%s5 + $0xc00] sm:$0xff]
        %v7588 = vld [vmem:[%s5 + $0xc08] sm:$0xff]
        %v7589 = vld [vmem:[%s5 + $0xc10] sm:$0xff]
        %v7590 = vld [vmem:[%s5 + $0xc18] sm:$0xff]
        %v7591 = vld [vmem:[%s5 + $0xc20] sm:$0xff]
        %v7592 = vld [vmem:[%s5 + $0xc28] sm:$0xff]
        %v7593 = vld [vmem:[%s5 + $0xc30] sm:$0xff]
        %v7594 = vld [vmem:[%s5 + $0xc38] sm:$0xff]
        %v7595 = vld [vmem:[%s5 + $0xc40] sm:$0xff]
        %v7596 = vld [vmem:[%s5 + $0xc48] sm:$0xff]
        %v7597 = vld [vmem:[%s5 + $0xc50] sm:$0xff]
        %v7598 = vld [vmem:[%s5 + $0xc58] sm:$0xff]
        %v7599 = vld [vmem:[%s5 + $0xc60] sm:$0xff]
        %v7600 = vld [vmem:[%s5 + $0xc68] sm:$0xff]
        %v7601 = vld [vmem:[%s5 + $0xc70] sm:$0xff]
        %v7602 = vld [vmem:[%s5 + $0xc78] sm:$0xff]
        %v7603 = vld [vmem:[%s5 + $0xc80] sm:$0xff]
        %v7604 = vld [vmem:[%s5 + $0xc88] sm:$0xff]
        %v7605 = vld [vmem:[%s5 + $0xc90] sm:$0xff]
        %v7606 = vld [vmem:[%s5 + $0xc98] sm:$0xff]
        %v7607 = vld [vmem:[%s5 + $0xca0] sm:$0xff]
        %v7608 = vld [vmem:[%s5 + $0xca8] sm:$0xff]
        %v7609 = vld [vmem:[%s5 + $0xcb0] sm:$0xff]
        %v7610 = vld [vmem:[%s5 + $0xcb8] sm:$0xff]
        %v7611 = vld [vmem:[%s5 + $0xcc0] sm:$0xff]
        %v7612 = vld [vmem:[%s5 + $0xcc8] sm:$0xff]
        %v7613 = vld [vmem:[%s5 + $0xcd0] sm:$0xff]
        %v7614 = vld [vmem:[%s5 + $0xcd8] sm:$0xff]
        %v7615 = vld [vmem:[%s5 + $0xce0] sm:$0xff]
        %v7616 = vld [vmem:[%s5 + $0xce8] sm:$0xff]
        %v7617 = vld [vmem:[%s5 + $0xcf0] sm:$0xff]
        %v7618 = vld [vmem:[%s5 + $0xcf8] sm:$0xff]
        %v7619 = vld [vmem:[%s5 + $0xd00] sm:$0xff]
        %v7620 = vld [vmem:[%s5 + $0xd08] sm:$0xff]
        %v7621 = vld [vmem:[%s5 + $0xd10] sm:$0xff]
        %v7622 = vld [vmem:[%s5 + $0xd18] sm:$0xff]
        %v7623 = vld [vmem:[%s5 + $0xd20] sm:$0xff]
        %v7624 = vld [vmem:[%s5 + $0xd28] sm:$0xff]
        %v7625 = vld [vmem:[%s5 + $0xd30] sm:$0xff]
        %v7626 = vld [vmem:[%s5 + $0xd38] sm:$0xff]
        %v7627 = vld [vmem:[%s5 + $0xd40] sm:$0xff]
        %v7628 = vld [vmem:[%s5 + $0xd48] sm:$0xff]
        %v7629 = vld [vmem:[%s5 + $0xd50] sm:$0xff]
        %v7630 = vld [vmem:[%s5 + $0xd58] sm:$0xff]
        %v7631 = vld [vmem:[%s5 + $0xd60] sm:$0xff]
        %v7632 = vld [vmem:[%s5 + $0xd68] sm:$0xff]
        %v7633 = vld [vmem:[%s5 + $0xd70] sm:$0xff]
        %v7634 = vld [vmem:[%s5 + $0xd78] sm:$0xff]
        %v7635 = vld [vmem:[%s5 + $0xd80] sm:$0xff]
        %v7636 = vld [vmem:[%s5 + $0xd88] sm:$0xff]
        %v7637 = vld [vmem:[%s5 + $0xd90] sm:$0xff]
        %v7638 = vld [vmem:[%s5 + $0xd98] sm:$0xff]
        %v7639 = vld [vmem:[%s5 + $0xda0] sm:$0xff]
        %v7640 = vld [vmem:[%s5 + $0xda8] sm:$0xff]
        %v7641 = vld [vmem:[%s5 + $0xdb0] sm:$0xff]
        %v7642 = vld [vmem:[%s5 + $0xdb8] sm:$0xff]
        %v7643 = vld [vmem:[%s5 + $0xdc0] sm:$0xff]
        %v7644 = vld [vmem:[%s5 + $0xdc8] sm:$0xff]
        %v7645 = vld [vmem:[%s5 + $0xdd0] sm:$0xff]
        %v7646 = vld [vmem:[%s5 + $0xdd8] sm:$0xff]
        %v7647 = vld [vmem:[%s5 + $0xde0] sm:$0xff]
        %v7648 = vld [vmem:[%s5 + $0xde8] sm:$0xff]
        %v7649 = vld [vmem:[%s5 + $0xdf0] sm:$0xff]
        %v7650 = vld [vmem:[%s5 + $0xdf8] sm:$0xff]
        %v7651 = vld [vmem:[%s5 + $0xe00] sm:$0xff]
        %v7652 = vld [vmem:[%s5 + $0xe08] sm:$0xff]
        %v7653 = vld [vmem:[%s5 + $0xe10] sm:$0xff]
        %v7654 = vld [vmem:[%s5 + $0xe18] sm:$0xff]
        %v7655 = vld [vmem:[%s5 + $0xe20] sm:$0xff]
        %v7656 = vld [vmem:[%s5 + $0xe28] sm:$0xff]
        %v7657 = vld [vmem:[%s5 + $0xe30] sm:$0xff]
        %v7658 = vld [vmem:[%s5 + $0xe38] sm:$0xff]
        %v7659 = vld [vmem:[%s5 + $0xe40] sm:$0xff]
        %v7660 = vld [vmem:[%s5 + $0xe48] sm:$0xff]
        %v7661 = vld [vmem:[%s5 + $0xe50] sm:$0xff]
        %v7662 = vld [vmem:[%s5 + $0xe58] sm:$0xff]
        %v7663 = vld [vmem:[%s5 + $0xe60] sm:$0xff]
        %v7664 = vld [vmem:[%s5 + $0xe68] sm:$0xff]
        %v7665 = vld [vmem:[%s5 + $0xe70] sm:$0xff]
        %v7666 = vld [vmem:[%s5 + $0xe78] sm:$0xff]
        %v7667 = vld [vmem:[%s5 + $0xe80] sm:$0xff]
        %v7668 = vld [vmem:[%s5 + $0xe88] sm:$0xff]
        %v7669 = vld [vmem:[%s5 + $0xe90] sm:$0xff]
        %v7670 = vld [vmem:[%s5 + $0xe98] sm:$0xff]
        %v7671 = vld [vmem:[%s5 + $0xea0] sm:$0xff]
        %v7672 = vld [vmem:[%s5 + $0xea8] sm:$0xff]
        %v7673 = vld [vmem:[%s5 + $0xeb0] sm:$0xff]
        %v7674 = vld [vmem:[%s5 + $0xeb8] sm:$0xff]
        %v7675 = vld [vmem:[%s5 + $0xec0] sm:$0xff]
        %v7676 = vld [vmem:[%s5 + $0xec8] sm:$0xff]
        %v7677 = vld [vmem:[%s5 + $0xed0] sm:$0xff]
        %v7678 = vld [vmem:[%s5 + $0xed8] sm:$0xff]
        %v7679 = vld [vmem:[%s5 + $0xee0] sm:$0xff]
        %v7680 = vld [vmem:[%s5 + $0xee8] sm:$0xff]
        %v7681 = vld [vmem:[%s5 + $0xef0] sm:$0xff]
        %v7682 = vld [vmem:[%s5 + $0xef8] sm:$0xff]
        %v7683 = vld [vmem:[%s5 + $0xf00] sm:$0xff]
        %v7684 = vld [vmem:[%s5 + $0xf08] sm:$0xff]
        %v7685 = vld [vmem:[%s5 + $0xf10] sm:$0xff]
        %v7686 = vld [vmem:[%s5 + $0xf18] sm:$0xff]
        %v7687 = vld [vmem:[%s5 + $0xf20] sm:$0xff]
        %v7688 = vld [vmem:[%s5 + $0xf28] sm:$0xff]
        %v7689 = vld [vmem:[%s5 + $0xf30] sm:$0xff]
        %v7690 = vld [vmem:[%s5 + $0xf38] sm:$0xff]
        %v7691 = vld [vmem:[%s5 + $0xf40] sm:$0xff]
        %v7692 = vld [vmem:[%s5 + $0xf48] sm:$0xff]
        %v7693 = vld [vmem:[%s5 + $0xf50] sm:$0xff]
        %v7694 = vld [vmem:[%s5 + $0xf58] sm:$0xff]
        %v7695 = vld [vmem:[%s5 + $0xf60] sm:$0xff]
        %v7696 = vld [vmem:[%s5 + $0xf68] sm:$0xff]
        %v7697 = vld [vmem:[%s5 + $0xf70] sm:$0xff]
        %v7698 = vld [vmem:[%s5 + $0xf78] sm:$0xff]
        %v7699 = vld [vmem:[%s5 + $0xf80] sm:$0xff]
        %v7700 = vld [vmem:[%s5 + $0xf88] sm:$0xff]
        %v7701 = vld [vmem:[%s5 + $0xf90] sm:$0xff]
        %v7702 = vld [vmem:[%s5 + $0xf98] sm:$0xff]
        %v7703 = vld [vmem:[%s5 + $0xfa0] sm:$0xff]
        %v7704 = vld [vmem:[%s5 + $0xfa8] sm:$0xff]
        %v7705 = vld [vmem:[%s5 + $0xfb0] sm:$0xff]
        %v7706 = vld [vmem:[%s5 + $0xfb8] sm:$0xff]
        %v7707 = vld [vmem:[%s5 + $0xfc0] sm:$0xff]
        %v7708 = vld [vmem:[%s5 + $0xfc8] sm:$0xff]
        %v7709 = vld [vmem:[%s5 + $0xfd0] sm:$0xff]
        %v7710 = vld [vmem:[%s5 + $0xfd8] sm:$0xff]
        %v7711 = vld [vmem:[%s5 + $0xfe0] sm:$0xff]
        %v7712 = vld [vmem:[%s5 + $0xfe8] sm:$0xff]
        %v7713 = vld [vmem:[%s5 + $0xff0] sm:$0xff]
        %v7714 = vld [vmem:[%s5 + $0xff8] sm:$0xff]
        %v7715 = vld [vmem:[%s5 + $0x1000] sm:$0xff]
        %v7716 = vld [vmem:[%s5 + $0x1008] sm:$0xff]
        %v7717 = vld [vmem:[%s5 + $0x1010] sm:$0xff]
        %v7718 = vld [vmem:[%s5 + $0x1018] sm:$0xff]
        %v7719 = vld [vmem:[%s5 + $0x1020] sm:$0xff]
        %v7720 = vld [vmem:[%s5 + $0x1028] sm:$0xff]
        %v7721 = vld [vmem:[%s5 + $0x1030] sm:$0xff]
        %v7722 = vld [vmem:[%s5 + $0x1038] sm:$0xff]
        %v7723 = vld [vmem:[%s5 + $0x1040] sm:$0xff]
        %v7724 = vld [vmem:[%s5 + $0x1048] sm:$0xff]
        %v7725 = vld [vmem:[%s5 + $0x1050] sm:$0xff]
        %v7726 = vld [vmem:[%s5 + $0x1058] sm:$0xff]
        %v7727 = vld [vmem:[%s5 + $0x1060] sm:$0xff]
        %v7728 = vld [vmem:[%s5 + $0x1068] sm:$0xff]
        %v7729 = vld [vmem:[%s5 + $0x1070] sm:$0xff]
        %v7730 = vld [vmem:[%s5 + $0x1078] sm:$0xff]
        %v7731 = vld [vmem:[%s5 + $0x1080] sm:$0xff]
        %v7732 = vld [vmem:[%s5 + $0x1088] sm:$0xff]
        %v7733 = vld [vmem:[%s5 + $0x1090] sm:$0xff]
        %v7734 = vld [vmem:[%s5 + $0x1098] sm:$0xff]
        %v7735 = vld [vmem:[%s5 + $0x10a0] sm:$0xff]
        %v7736 = vld [vmem:[%s5 + $0x10a8] sm:$0xff]
        %v7737 = vld [vmem:[%s5 + $0x10b0] sm:$0xff]
        %v7738 = vld [vmem:[%s5 + $0x10b8] sm:$0xff]
        %v7739 = vld [vmem:[%s5 + $0x10c0] sm:$0xff]
        %v7740 = vld [vmem:[%s5 + $0x10c8] sm:$0xff]
        %v7741 = vld [vmem:[%s5 + $0x10d0] sm:$0xff]
        %v7742 = vld [vmem:[%s5 + $0x10d8] sm:$0xff]
        %v7743 = vld [vmem:[%s5 + $0x10e0] sm:$0xff]
        %v7744 = vld [vmem:[%s5 + $0x10e8] sm:$0xff]
        %v7745 = vld [vmem:[%s5 + $0x10f0] sm:$0xff]
        %v7746 = vld [vmem:[%s5 + $0x10f8] sm:$0xff]
        %v7747 = vld [vmem:[%s5 + $0x1100] sm:$0xff]
        %v7748 = vld [vmem:[%s5 + $0x1108] sm:$0xff]
        %v7749 = vld [vmem:[%s5 + $0x1110] sm:$0xff]
        %v7750 = vld [vmem:[%s5 + $0x1118] sm:$0xff]
        %v7751 = vld [vmem:[%s5 + $0x1120] sm:$0xff]
        %v7752 = vld [vmem:[%s5 + $0x1128] sm:$0xff]
        %v7753 = vld [vmem:[%s5 + $0x1130] sm:$0xff]
        %v7754 = vld [vmem:[%s5 + $0x1138] sm:$0xff]
        %v7755 = vld [vmem:[%s5 + $0x1140] sm:$0xff]
        %v7756 = vld [vmem:[%s5 + $0x1148] sm:$0xff]
        %v7757 = vld [vmem:[%s5 + $0x1150] sm:$0xff]
        %v7758 = vld [vmem:[%s5 + $0x1158] sm:$0xff]
        %v7759 = vld [vmem:[%s5 + $0x1160] sm:$0xff]
        %v7760 = vld [vmem:[%s5 + $0x1168] sm:$0xff]
        %v7761 = vld [vmem:[%s5 + $0x1170] sm:$0xff]
        %v7762 = vld [vmem:[%s5 + $0x1178] sm:$0xff]
        %v7763 = vld [vmem:[%s5 + $0x1180] sm:$0xff]
        %v7764 = vld [vmem:[%s5 + $0x1188] sm:$0xff]
        %v7765 = vld [vmem:[%s5 + $0x1190] sm:$0xff]
        %v7766 = vld [vmem:[%s5 + $0x1198] sm:$0xff]
        %v7767 = vld [vmem:[%s5 + $0x11a0] sm:$0xff]
        %v7768 = vld [vmem:[%s5 + $0x11a8] sm:$0xff]
        %v7769 = vld [vmem:[%s5 + $0x11b0] sm:$0xff]
        %v7770 = vld [vmem:[%s5 + $0x11b8] sm:$0xff]
        %v7771 = vld [vmem:[%s5 + $0x11c0] sm:$0xff]
        %v7772 = vld [vmem:[%s5 + $0x11c8] sm:$0xff]
        %v7773 = vld [vmem:[%s5 + $0x11d0] sm:$0xff]
        %v7774 = vld [vmem:[%s5 + $0x11d8] sm:$0xff]
        %v7775 = vld [vmem:[%s5 + $0x11e0] sm:$0xff]
        %v7776 = vld [vmem:[%s5 + $0x11e8] sm:$0xff]
        %v7777 = vld [vmem:[%s5 + $0x11f0] sm:$0xff]
        %v7778 = vld [vmem:[%s5 + $0x11f8] sm:$0xff]
        %v7779 = vld [vmem:[%s5 + $0x1200] sm:$0xff]
        %v7780 = vld [vmem:[%s5 + $0x1208] sm:$0xff]
        %v7781 = vld [vmem:[%s5 + $0x1210] sm:$0xff]
        %v7782 = vld [vmem:[%s5 + $0x1218] sm:$0xff]
        %v7783 = vld [vmem:[%s5 + $0x1220] sm:$0xff]
        %v7784 = vld [vmem:[%s5 + $0x1228] sm:$0xff]
        %v7785 = vld [vmem:[%s5 + $0x1230] sm:$0xff]
        %v7786 = vld [vmem:[%s5 + $0x1238] sm:$0xff]
        %v7787 = vld [vmem:[%s5 + $0x1240] sm:$0xff]
        %v7788 = vld [vmem:[%s5 + $0x1248] sm:$0xff]
        %v7789 = vld [vmem:[%s5 + $0x1250] sm:$0xff]
        %v7790 = vld [vmem:[%s5 + $0x1258] sm:$0xff]
        %v7791 = vld [vmem:[%s5 + $0x1260] sm:$0xff]
        %v7792 = vld [vmem:[%s5 + $0x1268] sm:$0xff]
        %v7793 = vld [vmem:[%s5 + $0x1270] sm:$0xff]
        %v7794 = vld [vmem:[%s5 + $0x1278] sm:$0xff]
        %v7795 = vld [vmem:[%s5 + $0x1280] sm:$0xff]
        %v7796 = vld [vmem:[%s5 + $0x1288] sm:$0xff]
        %v7797 = vld [vmem:[%s5 + $0x1290] sm:$0xff]
        %v7798 = vld [vmem:[%s5 + $0x1298] sm:$0xff]
        %v7799 = vld [vmem:[%s5 + $0x12a0] sm:$0xff]
        %v7800 = vld [vmem:[%s5 + $0x12a8] sm:$0xff]
        %v7801 = vld [vmem:[%s5 + $0x12b0] sm:$0xff]
        %v7802 = vld [vmem:[%s5 + $0x12b8] sm:$0xff]
        %v7803 = vld [vmem:[%s5 + $0x12c0] sm:$0xff]
        %v7804 = vld [vmem:[%s5 + $0x12c8] sm:$0xff]
        %v7805 = vld [vmem:[%s5 + $0x12d0] sm:$0xff]
        %v7806 = vld [vmem:[%s5 + $0x12d8] sm:$0xff]
        %v7807 = vld [vmem:[%s5 + $0x12e0] sm:$0xff]
        %v7808 = vld [vmem:[%s5 + $0x12e8] sm:$0xff]
        %v7809 = vld [vmem:[%s5 + $0x12f0] sm:$0xff]
        %v7810 = vld [vmem:[%s5 + $0x12f8] sm:$0xff]
        %v7811 = vld [vmem:[%s5 + $0x1300] sm:$0xff]
        %v7812 = vld [vmem:[%s5 + $0x1308] sm:$0xff]
        %v7813 = vld [vmem:[%s5 + $0x1310] sm:$0xff]
        %v7814 = vld [vmem:[%s5 + $0x1318] sm:$0xff]
        %v7815 = vld [vmem:[%s5 + $0x1320] sm:$0xff]
        %v7816 = vld [vmem:[%s5 + $0x1328] sm:$0xff]
        %v7817 = vld [vmem:[%s5 + $0x1330] sm:$0xff]
        %v7818 = vld [vmem:[%s5 + $0x1338] sm:$0xff]
        %v7819 = vld [vmem:[%s5 + $0x1340] sm:$0xff]
        %v7820 = vld [vmem:[%s5 + $0x1348] sm:$0xff]
        %v7821 = vld [vmem:[%s5 + $0x1350] sm:$0xff]
        %v7822 = vld [vmem:[%s5 + $0x1358] sm:$0xff]
        %v7823 = vld [vmem:[%s5 + $0x1360] sm:$0xff]
        %v7824 = vld [vmem:[%s5 + $0x1368] sm:$0xff]
        %v7825 = vld [vmem:[%s5 + $0x1370] sm:$0xff]
        %v7826 = vld [vmem:[%s5 + $0x1378] sm:$0xff]
        %v7827 = vld [vmem:[%s5 + $0x1380] sm:$0xff]
        %v7828 = vld [vmem:[%s5 + $0x1388] sm:$0xff]
        %v7829 = vld [vmem:[%s5 + $0x1390] sm:$0xff]
        %v7830 = vld [vmem:[%s5 + $0x1398] sm:$0xff]
        %v7831 = vld [vmem:[%s5 + $0x13a0] sm:$0xff]
        %v7832 = vld [vmem:[%s5 + $0x13a8] sm:$0xff]
        %v7833 = vld [vmem:[%s5 + $0x13b0] sm:$0xff]
        %v7834 = vld [vmem:[%s5 + $0x13b8] sm:$0xff]
        %v7835 = vld [vmem:[%s5 + $0x13c0] sm:$0xff]
        %v7836 = vld [vmem:[%s5 + $0x13c8] sm:$0xff]
        %v7837 = vld [vmem:[%s5 + $0x13d0] sm:$0xff]
        %v7838 = vld [vmem:[%s5 + $0x13d8] sm:$0xff]
        %v7839 = vld [vmem:[%s5 + $0x13e0] sm:$0xff]
        %v7840 = vld [vmem:[%s5 + $0x13e8] sm:$0xff]
        %v7841 = vld [vmem:[%s5 + $0x13f0] sm:$0xff]
        %v7842 = vld [vmem:[%s5 + $0x13f8] sm:$0xff]
        %v7843 = vld [vmem:[%s5 + $0x1400] sm:$0xff]
        %v7844 = vld [vmem:[%s5 + $0x1408] sm:$0xff]
        %v7845 = vld [vmem:[%s5 + $0x1410] sm:$0xff]
        %v7846 = vld [vmem:[%s5 + $0x1418] sm:$0xff]
        %v7847 = vld [vmem:[%s5 + $0x1420] sm:$0xff]
        %v7848 = vld [vmem:[%s5 + $0x1428] sm:$0xff]
        %v7849 = vld [vmem:[%s5 + $0x1430] sm:$0xff]
        %v7850 = vld [vmem:[%s5 + $0x1438] sm:$0xff]
        %v7851 = vld [vmem:[%s5 + $0x1440] sm:$0xff]
        %v7852 = vld [vmem:[%s5 + $0x1448] sm:$0xff]
        %v7853 = vld [vmem:[%s5 + $0x1450] sm:$0xff]
        %v7854 = vld [vmem:[%s5 + $0x1458] sm:$0xff]
        %v7855 = vld [vmem:[%s5 + $0x1460] sm:$0xff]
        %v7856 = vld [vmem:[%s5 + $0x1468] sm:$0xff]
        %v7857 = vld [vmem:[%s5 + $0x1470] sm:$0xff]
        %v7858 = vld [vmem:[%s5 + $0x1478] sm:$0xff]
        %v7859 = vld [vmem:[%s5 + $0x1480] sm:$0xff]
        %v7860 = vld [vmem:[%s5 + $0x1488] sm:$0xff]
        %v7861 = vld [vmem:[%s5 + $0x1490] sm:$0xff]
        %v7862 = vld [vmem:[%s5 + $0x1498] sm:$0xff]
        %v7863 = vld [vmem:[%s5 + $0x14a0] sm:$0xff]
        %v7864 = vld [vmem:[%s5 + $0x14a8] sm:$0xff]
        %v7865 = vld [vmem:[%s5 + $0x14b0] sm:$0xff]
        %v7866 = vld [vmem:[%s5 + $0x14b8] sm:$0xff]
        %v7867 = vld [vmem:[%s5 + $0x14c0] sm:$0xff]
        %v7868 = vld [vmem:[%s5 + $0x14c8] sm:$0xff]
        %v7869 = vld [vmem:[%s5 + $0x14d0] sm:$0xff]
        %v7870 = vld [vmem:[%s5 + $0x14d8] sm:$0xff]
        %v7871 = vld [vmem:[%s5 + $0x14e0] sm:$0xff]
        %v7872 = vld [vmem:[%s5 + $0x14e8] sm:$0xff]
        %v7873 = vld [vmem:[%s5 + $0x14f0] sm:$0xff]
        %v7874 = vld [vmem:[%s5 + $0x14f8] sm:$0xff]
        %v7875 = vld [vmem:[%s5 + $0x1500] sm:$0xff]
        %v7876 = vld [vmem:[%s5 + $0x1508] sm:$0xff]
        %v7877 = vld [vmem:[%s5 + $0x1510] sm:$0xff]
        %v7878 = vld [vmem:[%s5 + $0x1518] sm:$0xff]
        %v7879 = vld [vmem:[%s5 + $0x1520] sm:$0xff]
        %v7880 = vld [vmem:[%s5 + $0x1528] sm:$0xff]
        %v7881 = vld [vmem:[%s5 + $0x1530] sm:$0xff]
        %v7882 = vld [vmem:[%s5 + $0x1538] sm:$0xff]
        %v7883 = vld [vmem:[%s5 + $0x1540] sm:$0xff]
        %v7884 = vld [vmem:[%s5 + $0x1548] sm:$0xff]
        %v7885 = vld [vmem:[%s5 + $0x1550] sm:$0xff]
        %v7886 = vld [vmem:[%s5 + $0x1558] sm:$0xff]
        %v7887 = vld [vmem:[%s5 + $0x1560] sm:$0xff]
        %v7888 = vld [vmem:[%s5 + $0x1568] sm:$0xff]
        %v7889 = vld [vmem:[%s5 + $0x1570] sm:$0xff]
        %v7890 = vld [vmem:[%s5 + $0x1578] sm:$0xff]
        %v7891 = vld [vmem:[%s5 + $0x1580] sm:$0xff]
        %v7892 = vld [vmem:[%s5 + $0x1588] sm:$0xff]
        %v7893 = vld [vmem:[%s5 + $0x1590] sm:$0xff]
        %v7894 = vld [vmem:[%s5 + $0x1598] sm:$0xff]
        %v7895 = vld [vmem:[%s5 + $0x15a0] sm:$0xff]
        %v7896 = vld [vmem:[%s5 + $0x15a8] sm:$0xff]
        %v7897 = vld [vmem:[%s5 + $0x15b0] sm:$0xff]
        %v7898 = vld [vmem:[%s5 + $0x15b8] sm:$0xff]
        %v7899 = vld [vmem:[%s5 + $0x15c0] sm:$0xff]
        %v7900 = vld [vmem:[%s5 + $0x15c8] sm:$0xff]
        %v7901 = vld [vmem:[%s5 + $0x15d0] sm:$0xff]
        %v7902 = vld [vmem:[%s5 + $0x15d8] sm:$0xff]
        %v7903 = vld [vmem:[%s5 + $0x15e0] sm:$0xff]
        %v7904 = vld [vmem:[%s5 + $0x15e8] sm:$0xff]
        %v7905 = vld [vmem:[%s5 + $0x15f0] sm:$0xff]
        %v7906 = vld [vmem:[%s5 + $0x15f8] sm:$0xff]
        %v7907 = vld [vmem:[%s5 + $0x1600] sm:$0xff]
        %v7908 = vld [vmem:[%s5 + $0x1608] sm:$0xff]
        %v7909 = vld [vmem:[%s5 + $0x1610] sm:$0xff]
        %v7910 = vld [vmem:[%s5 + $0x1618] sm:$0xff]
        %v7911 = vld [vmem:[%s5 + $0x1620] sm:$0xff]
        %v7912 = vld [vmem:[%s5 + $0x1628] sm:$0xff]
        %v7913 = vld [vmem:[%s5 + $0x1630] sm:$0xff]
        %v7914 = vld [vmem:[%s5 + $0x1638] sm:$0xff]
        %v7915 = vld [vmem:[%s5 + $0x1640] sm:$0xff]
        %v7916 = vld [vmem:[%s5 + $0x1648] sm:$0xff]
        %v7917 = vld [vmem:[%s5 + $0x1650] sm:$0xff]
        %v7918 = vld [vmem:[%s5 + $0x1658] sm:$0xff]
        %v7919 = vld [vmem:[%s5 + $0x1660] sm:$0xff]
        %v7920 = vld [vmem:[%s5 + $0x1668] sm:$0xff]
        %v7921 = vld [vmem:[%s5 + $0x1670] sm:$0xff]
        %v7922 = vld [vmem:[%s5 + $0x1678] sm:$0xff]
        %v7923 = vld [vmem:[%s5 + $0x1680] sm:$0xff]
        %v7924 = vld [vmem:[%s5 + $0x1688] sm:$0xff]
        %v7925 = vld [vmem:[%s5 + $0x1690] sm:$0xff]
        %v7926 = vld [vmem:[%s5 + $0x1698] sm:$0xff]
        %v7927 = vld [vmem:[%s5 + $0x16a0] sm:$0xff]
        %v7928 = vld [vmem:[%s5 + $0x16a8] sm:$0xff]
        %v7929 = vld [vmem:[%s5 + $0x16b0] sm:$0xff]
        %v7930 = vld [vmem:[%s5 + $0x16b8] sm:$0xff]
        %v7931 = vld [vmem:[%s5 + $0x16c0] sm:$0xff]
        %v7932 = vld [vmem:[%s5 + $0x16c8] sm:$0xff]
        %v7933 = vld [vmem:[%s5 + $0x16d0] sm:$0xff]
        %v7934 = vld [vmem:[%s5 + $0x16d8] sm:$0xff]
        %v7935 = vld [vmem:[%s5 + $0x16e0] sm:$0xff]
        %v7936 = vld [vmem:[%s5 + $0x16e8] sm:$0xff]
        %v7937 = vld [vmem:[%s5 + $0x16f0] sm:$0xff]
        %v7938 = vld [vmem:[%s5 + $0x16f8] sm:$0xff]
        %v7939 = vld [vmem:[%s5 + $0x1700] sm:$0xff]
        %v7940 = vld [vmem:[%s5 + $0x1708] sm:$0xff]
        %v7941 = vld [vmem:[%s5 + $0x1710] sm:$0xff]
        %v7942 = vld [vmem:[%s5 + $0x1718] sm:$0xff]
        %v7943 = vld [vmem:[%s5 + $0x1720] sm:$0xff]
        %v7944 = vld [vmem:[%s5 + $0x1728] sm:$0xff]
        %v7945 = vld [vmem:[%s5 + $0x1730] sm:$0xff]
        %v7946 = vld [vmem:[%s5 + $0x1738] sm:$0xff]
        %v7947 = vld [vmem:[%s5 + $0x1740] sm:$0xff]
        %v7948 = vld [vmem:[%s5 + $0x1748] sm:$0xff]
        %v7949 = vld [vmem:[%s5 + $0x1750] sm:$0xff]
        %v7950 = vld [vmem:[%s5 + $0x1758] sm:$0xff]
        %v7951 = vld [vmem:[%s5 + $0x1760] sm:$0xff]
        %v7952 = vld [vmem:[%s5 + $0x1768] sm:$0xff]
        %v7953 = vld [vmem:[%s5 + $0x1770] sm:$0xff]
        %v7954 = vld [vmem:[%s5 + $0x1778] sm:$0xff]
        %v7955 = vld [vmem:[%s5 + $0x1780] sm:$0xff]
        %v7956 = vld [vmem:[%s5 + $0x1788] sm:$0xff]
        %v7957 = vld [vmem:[%s5 + $0x1790] sm:$0xff]
        %v7958 = vld [vmem:[%s5 + $0x1798] sm:$0xff]
        %v7959 = vld [vmem:[%s5 + $0x17a0] sm:$0xff]
        %v7960 = vld [vmem:[%s5 + $0x17a8] sm:$0xff]
        %v7961 = vld [vmem:[%s5 + $0x17b0] sm:$0xff]
        %v7962 = vld [vmem:[%s5 + $0x17b8] sm:$0xff]
        %v7963 = vld [vmem:[%s5 + $0x17c0] sm:$0xff]
        %v7964 = vld [vmem:[%s5 + $0x17c8] sm:$0xff]
        %v7965 = vld [vmem:[%s5 + $0x17d0] sm:$0xff]
        %v7966 = vld [vmem:[%s5 + $0x17d8] sm:$0xff]
        %v7967 = vld [vmem:[%s5 + $0x17e0] sm:$0xff]
        %v7968 = vld [vmem:[%s5 + $0x17e8] sm:$0xff]
        %v7969 = vld [vmem:[%s5 + $0x17f0] sm:$0xff]
        %v7970 = vld [vmem:[%s5 + $0x17f8] sm:$0xff]
        %v7971 = vld [vmem:[%s5 + $0x1800] sm:$0xff]
        %v7972 = vld [vmem:[%s5 + $0x1808] sm:$0xff]
        %v7973 = vld [vmem:[%s5 + $0x1810] sm:$0xff]
        %v7974 = vld [vmem:[%s5 + $0x1818] sm:$0xff]
        %v7975 = vld [vmem:[%s5 + $0x1820] sm:$0xff]
        %v7976 = vld [vmem:[%s5 + $0x1828] sm:$0xff]
        %v7977 = vld [vmem:[%s5 + $0x1830] sm:$0xff]
        %v7978 = vld [vmem:[%s5 + $0x1838] sm:$0xff]
        %v7979 = vld [vmem:[%s5 + $0x1840] sm:$0xff]
        %v7980 = vld [vmem:[%s5 + $0x1848] sm:$0xff]
        %v7981 = vld [vmem:[%s5 + $0x1850] sm:$0xff]
        %v7982 = vld [vmem:[%s5 + $0x1858] sm:$0xff]
        %v7983 = vld [vmem:[%s5 + $0x1860] sm:$0xff]
        %v7984 = vld [vmem:[%s5 + $0x1868] sm:$0xff]
        %v7985 = vld [vmem:[%s5 + $0x1870] sm:$0xff]
        %v7986 = vld [vmem:[%s5 + $0x1878] sm:$0xff]
        %v7987 = vld [vmem:[%s5 + $0x1880] sm:$0xff]
        %v7988 = vld [vmem:[%s5 + $0x1888] sm:$0xff]
        %v7989 = vld [vmem:[%s5 + $0x1890] sm:$0xff]
        %v7990 = vld [vmem:[%s5 + $0x1898] sm:$0xff]
        %v7991 = vld [vmem:[%s5 + $0x18a0] sm:$0xff]
        %v7992 = vld [vmem:[%s5 + $0x18a8] sm:$0xff]
        %v7993 = vld [vmem:[%s5 + $0x18b0] sm:$0xff]
        %v7994 = vld [vmem:[%s5 + $0x18b8] sm:$0xff]
        %v7995 = vld [vmem:[%s5 + $0x18c0] sm:$0xff]
        %v7996 = vld [vmem:[%s5 + $0x18c8] sm:$0xff]
        %v7997 = vld [vmem:[%s5 + $0x18d0] sm:$0xff]
        %v7998 = vld [vmem:[%s5 + $0x18d8] sm:$0xff]
        %v7999 = vld [vmem:[%s5 + $0x18e0] sm:$0xff]
        %v8000 = vld [vmem:[%s5 + $0x18e8] sm:$0xff]
        %v8001 = vld [vmem:[%s5 + $0x18f0] sm:$0xff]
        %v8002 = vld [vmem:[%s5 + $0x18f8] sm:$0xff]
        %v8003 = vld [vmem:[%s6] sm:$0xf]
        %v8005 = vlaneseq
        %v8006 = vshrl.u32 %v8005, 7
        %v8007 = vsub.s32 0, %v8006
        %v8008 = vrot.slane %v8003, %v8007
        %v8009 = vlaneseq
        %v8010 = vshrl.u32 %v8009, 7
        %v8011 = vsub.s32 1, %v8010
        %v8012 = vrot.slane %v8003, %v8011
        %v8013 = vlaneseq
        %v8014 = vshrl.u32 %v8013, 7
        %v8015 = vsub.s32 2, %v8014
        %v8016 = vrot.slane %v8003, %v8015
        %v8017 = vlaneseq
        %v8018 = vshrl.u32 %v8017, 7
        %v8019 = vsub.s32 3, %v8018
        %v8020 = vrot.slane %v8003, %v8019
        %vm8025 = vcmask 523264
        %v8026 = vsel %vm8025, %v7195, 0
        %8028 = vmatprep.subr.mxu0 %v7264
        %8029 = vmatpush1.msra.mxu0 %v7263
        %8030 = vmatprep.subr.mxu0 %v7260
        %8031 = vmatpush1.msra.mxu0 %v7259
        %8032 = vmatprep.subr.mxu0 %v7256
        %8033 = vmatpush1.msra.mxu0 %v7255
        %8034 = vmatprep.subr.mxu0 %v7252
        %8035 = vmatpush1.msra.mxu0 %v7251
        %8036 = vmatprep.subr.mxu0 %v7248
        %8037 = vmatpush1.msra.mxu0 %v7247
        %8038 = vmatprep.subr.mxu0 %v7244
        %8039 = vmatpush1.msra.mxu0 %v7243
        %8040 = vmatprep.subr.mxu0 %v7240
        %8041 = vmatpush1.msra.mxu0 %v7239
        %8042 = vmatprep.subr.mxu0 %v7236
        %8043 = vmatpush1.msra.mxu0 %v7235
        %8044 = vmatprep.subr.mxu0 %v7232
        %8045 = vmatpush1.msra.mxu0 %v7231
        %8046 = vmatprep.subr.mxu0 %v7228
        %8047 = vmatpush1.msra.mxu0 %v7227
        %8048 = vmatprep.subr.mxu0 %v7224
        %8049 = vmatpush1.msra.mxu0 %v7223
        %8050 = vmatprep.subr.mxu0 %v7220
        %8051 = vmatpush1.msra.mxu0 %v7219
        %8052 = vmatprep.subr.mxu0 %v7216
        %8053 = vmatpush1.msra.mxu0 %v7215
        %8054 = vmatprep.subr.mxu0 %v7212
        %8055 = vmatpush1.msra.mxu0 %v7211
        %8056 = vmatprep.subr.mxu0 %v7208
        %8057 = vmatpush1.msra.mxu0 %v7207
        %8058 = vmatprep.subr.mxu0 %v7204
        %8059 = vmatpush1.msra.mxu0 %v7203
        %8060 = vmatprep.subr.mxu0 %v7328
        %8061 = vmatpush2.msra.mxu0 %v7327
        %8062 = vmatprep.subr.mxu0 %v7324
        %8063 = vmatpush2.msra.mxu0 %v7323
        %8064 = vmatprep.subr.mxu0 %v7320
        %8065 = vmatpush2.msra.mxu0 %v7319
        %8066 = vmatprep.subr.mxu0 %v7316
        %8067 = vmatpush2.msra.mxu0 %v7315
        %8068 = vmatprep.subr.mxu0 %v7312
        %8069 = vmatpush2.msra.mxu0 %v7311
        %8070 = vmatprep.subr.mxu0 %v7308
        %8071 = vmatpush2.msra.mxu0 %v7307
        %8072 = vmatprep.subr.mxu0 %v7304
        %8073 = vmatpush2.msra.mxu0 %v7303
        %8074 = vmatprep.subr.mxu0 %v7300
        %8075 = vmatpush2.msra.mxu0 %v7299
        %8076 = vmatprep.subr.mxu0 %v7296
        %8077 = vmatpush2.msra.mxu0 %v7295
        %8078 = vmatprep.subr.mxu0 %v7292
        %8079 = vmatpush2.msra.mxu0 %v7291
        %8080 = vmatprep.subr.mxu0 %v7288
        %8081 = vmatpush2.msra.mxu0 %v7287
        %8082 = vmatprep.subr.mxu0 %v7284
        %8083 = vmatpush2.msra.mxu0 %v7283
        %8084 = vmatprep.subr.mxu0 %v7280
        %8085 = vmatpush2.msra.mxu0 %v7279
        %8086 = vmatprep.subr.mxu0 %v7276
        %8087 = vmatpush2.msra.mxu0 %v7275
        %8088 = vmatprep.subr.mxu0 %v7272
        %8089 = vmatpush2.msra.mxu0 %v7271
        %8090 = vmatprep.subr.mxu0 %v7268
        %8091 = vmatpush2.msra.mxu0 %v7267
        %8092 = vmatprep.mubr.f32.mxu0 %v7072
        %8093 = vmatmul.mubr.f32.gmra.mxu0 %v7066
        %v8094 = vpop.f32.mrf.mxu0
        %v8095 = vadd.f32 %v8008, %v8094
        %v8096 = vpop.f32.mrf.mxu0
        %v8097 = vadd.f32 %v8012, %v8096
        %8098 = vdwg.mxu0
        %8099 = vmatprep.subr.mxu0 %v7392
        %8100 = vmatpush1.msra.mxu0 %v7391
        %8101 = vmatprep.subr.mxu0 %v7388
        %8102 = vmatpush1.msra.mxu0 %v7387
        %8103 = vmatprep.subr.mxu0 %v7384
        %8104 = vmatpush1.msra.mxu0 %v7383
        %8105 = vmatprep.subr.mxu0 %v7380
        %8106 = vmatpush1.msra.mxu0 %v7379
        %8107 = vmatprep.subr.mxu0 %v7376
        %8108 = vmatpush1.msra.mxu0 %v7375
        %8109 = vmatprep.subr.mxu0 %v7372
        %8110 = vmatpush1.msra.mxu0 %v7371
        %8111 = vmatprep.subr.mxu0 %v7368
        %8112 = vmatpush1.msra.mxu0 %v7367
        %8113 = vmatprep.subr.mxu0 %v7364
        %8114 = vmatpush1.msra.mxu0 %v7363
        %8115 = vmatprep.subr.mxu0 %v7360
        %8116 = vmatpush1.msra.mxu0 %v7359
        %8117 = vmatprep.subr.mxu0 %v7356
        %8118 = vmatpush1.msra.mxu0 %v7355
        %8119 = vmatprep.subr.mxu0 %v7352
        %8120 = vmatpush1.msra.mxu0 %v7351
        %8121 = vmatprep.subr.mxu0 %v7348
        %8122 = vmatpush1.msra.mxu0 %v7347
        %8123 = vmatprep.subr.mxu0 %v7344
        %8124 = vmatpush1.msra.mxu0 %v7343
        %8125 = vmatprep.subr.mxu0 %v7340
        %8126 = vmatpush1.msra.mxu0 %v7339
        %8127 = vmatprep.subr.mxu0 %v7336
        %8128 = vmatpush1.msra.mxu0 %v7335
        %8129 = vmatprep.subr.mxu0 %v7332
        %8130 = vmatpush1.msra.mxu0 %v7331
        %8131 = vmatprep.subr.mxu0 %v7456
        %8132 = vmatpush2.msra.mxu0 %v7455
        %8133 = vmatprep.subr.mxu0 %v7452
        %8134 = vmatpush2.msra.mxu0 %v7451
        %8135 = vmatprep.subr.mxu0 %v7448
        %8136 = vmatpush2.msra.mxu0 %v7447
        %8137 = vmatprep.subr.mxu0 %v7444
        %8138 = vmatpush2.msra.mxu0 %v7443
        %8139 = vmatprep.subr.mxu0 %v7440
        %8140 = vmatpush2.msra.mxu0 %v7439
        %8141 = vmatprep.subr.mxu0 %v7436
        %8142 = vmatpush2.msra.mxu0 %v7435
        %8143 = vmatprep.subr.mxu0 %v7432
        %8144 = vmatpush2.msra.mxu0 %v7431
        %8145 = vmatprep.subr.mxu0 %v7428
        %8146 = vmatpush2.msra.mxu0 %v7427
        %8147 = vmatprep.subr.mxu0 %v7424
        %8148 = vmatpush2.msra.mxu0 %v7423
        %8149 = vmatprep.subr.mxu0 %v7420
        %8150 = vmatpush2.msra.mxu0 %v7419
        %8151 = vmatprep.subr.mxu0 %v7416
        %8152 = vmatpush2.msra.mxu0 %v7415
        %8153 = vmatprep.subr.mxu0 %v7412
        %8154 = vmatpush2.msra.mxu0 %v7411
        %8155 = vmatprep.subr.mxu0 %v7408
        %8156 = vmatpush2.msra.mxu0 %v7407
        %8157 = vmatprep.subr.mxu0 %v7404
        %8158 = vmatpush2.msra.mxu0 %v7403
        %8159 = vmatprep.subr.mxu0 %v7400
        %8160 = vmatpush2.msra.mxu0 %v7399
        %8161 = vmatprep.subr.mxu0 %v7396
        %8162 = vmatpush2.msra.mxu0 %v7395
        %8163 = vmatprep.mubr.f32.mxu0 %v7082
        %8164 = vmatmul.mubr.f32.gmra.mxu0 %v7076
        %v8165 = vpop.f32.mrf.mxu0
        %v8166 = vadd.f32 %v8095, %v8165
        %v8167 = vpop.f32.mrf.mxu0
        %v8168 = vadd.f32 %v8097, %v8167
        %8169 = vdwg.mxu0
        %8170 = vmatprep.subr.mxu0 %v7520
        %8171 = vmatpush1.msra.mxu0 %v7519
        %8172 = vmatprep.subr.mxu0 %v7516
        %8173 = vmatpush1.msra.mxu0 %v7515
        %8174 = vmatprep.subr.mxu0 %v7512
        %8175 = vmatpush1.msra.mxu0 %v7511
        %8176 = vmatprep.subr.mxu0 %v7508
        %8177 = vmatpush1.msra.mxu0 %v7507
        %8178 = vmatprep.subr.mxu0 %v7504
        %8179 = vmatpush1.msra.mxu0 %v7503
        %8180 = vmatprep.subr.mxu0 %v7500
        %8181 = vmatpush1.msra.mxu0 %v7499
        %8182 = vmatprep.subr.mxu0 %v7496
        %8183 = vmatpush1.msra.mxu0 %v7495
        %8184 = vmatprep.subr.mxu0 %v7492
        %8185 = vmatpush1.msra.mxu0 %v7491
        %8186 = vmatprep.subr.mxu0 %v7488
        %8187 = vmatpush1.msra.mxu0 %v7487
        %8188 = vmatprep.subr.mxu0 %v7484
        %8189 = vmatpush1.msra.mxu0 %v7483
        %8190 = vmatprep.subr.mxu0 %v7480
        %8191 = vmatpush1.msra.mxu0 %v7479
        %8192 = vmatprep.subr.mxu0 %v7476
        %8193 = vmatpush1.msra.mxu0 %v7475
        %8194 = vmatprep.subr.mxu0 %v7472
        %8195 = vmatpush1.msra.mxu0 %v7471
        %8196 = vmatprep.subr.mxu0 %v7468
        %8197 = vmatpush1.msra.mxu0 %v7467
        %8198 = vmatprep.subr.mxu0 %v7464
        %8199 = vmatpush1.msra.mxu0 %v7463
        %8200 = vmatprep.subr.mxu0 %v7460
        %8201 = vmatpush1.msra.mxu0 %v7459
        %8202 = vmatprep.subr.mxu0 %v7584
        %8203 = vmatpush2.msra.mxu0 %v7583
        %8204 = vmatprep.subr.mxu0 %v7580
        %8205 = vmatpush2.msra.mxu0 %v7579
        %8206 = vmatprep.subr.mxu0 %v7576
        %8207 = vmatpush2.msra.mxu0 %v7575
        %8208 = vmatprep.subr.mxu0 %v7572
        %8209 = vmatpush2.msra.mxu0 %v7571
        %8210 = vmatprep.subr.mxu0 %v7568
        %8211 = vmatpush2.msra.mxu0 %v7567
        %8212 = vmatprep.subr.mxu0 %v7564
        %8213 = vmatpush2.msra.mxu0 %v7563
        %8214 = vmatprep.subr.mxu0 %v7560
        %8215 = vmatpush2.msra.mxu0 %v7559
        %8216 = vmatprep.subr.mxu0 %v7556
        %8217 = vmatpush2.msra.mxu0 %v7555
        %8218 = vmatprep.subr.mxu0 %v7552
        %8219 = vmatpush2.msra.mxu0 %v7551
        %8220 = vmatprep.subr.mxu0 %v7548
        %8221 = vmatpush2.msra.mxu0 %v7547
        %8222 = vmatprep.subr.mxu0 %v7544
        %8223 = vmatpush2.msra.mxu0 %v7543
        %8224 = vmatprep.subr.mxu0 %v7540
        %8225 = vmatpush2.msra.mxu0 %v7539
        %8226 = vmatprep.subr.mxu0 %v7536
        %8227 = vmatpush2.msra.mxu0 %v7535
        %8228 = vmatprep.subr.mxu0 %v7532
        %8229 = vmatpush2.msra.mxu0 %v7531
        %8230 = vmatprep.subr.mxu0 %v7528
        %8231 = vmatpush2.msra.mxu0 %v7527
        %8232 = vmatprep.subr.mxu0 %v7524
        %8233 = vmatpush2.msra.mxu0 %v7523
        %8234 = vmatprep.mubr.f32.mxu0 %v7092
        %8235 = vmatmul.mubr.f32.gmra.mxu0 %v7086
        %v8236 = vpop.f32.mrf.mxu0
        %v8237 = vadd.f32 %v8166, %v8236
        %v8238 = vpop.f32.mrf.mxu0
        %v8239 = vadd.f32 %v8168, %v8238
        %8240 = vdwg.mxu0
        %8241 = vmatprep.subr.mxu0 %v7648
        %8242 = vmatpush1.msra.mxu0 %v7647
        %8243 = vmatprep.subr.mxu0 %v7644
        %8244 = vmatpush1.msra.mxu0 %v7643
        %8245 = vmatprep.subr.mxu0 %v7640
        %8246 = vmatpush1.msra.mxu0 %v7639
        %8247 = vmatprep.subr.mxu0 %v7636
        %8248 = vmatpush1.msra.mxu0 %v7635
        %8249 = vmatprep.subr.mxu0 %v7632
        %8250 = vmatpush1.msra.mxu0 %v7631
        %8251 = vmatprep.subr.mxu0 %v7628
        %8252 = vmatpush1.msra.mxu0 %v7627
        %8253 = vmatprep.subr.mxu0 %v7624
        %8254 = vmatpush1.msra.mxu0 %v7623
        %8255 = vmatprep.subr.mxu0 %v7620
        %8256 = vmatpush1.msra.mxu0 %v7619
        %8257 = vmatprep.subr.mxu0 %v7616
        %8258 = vmatpush1.msra.mxu0 %v7615
        %8259 = vmatprep.subr.mxu0 %v7612
        %8260 = vmatpush1.msra.mxu0 %v7611
        %8261 = vmatprep.subr.mxu0 %v7608
        %8262 = vmatpush1.msra.mxu0 %v7607
        %8263 = vmatprep.subr.mxu0 %v7604
        %8264 = vmatpush1.msra.mxu0 %v7603
        %8265 = vmatprep.subr.mxu0 %v7600
        %8266 = vmatpush1.msra.mxu0 %v7599
        %8267 = vmatprep.subr.mxu0 %v7596
        %8268 = vmatpush1.msra.mxu0 %v7595
        %8269 = vmatprep.subr.mxu0 %v7592
        %8270 = vmatpush1.msra.mxu0 %v7591
        %8271 = vmatprep.subr.mxu0 %v7588
        %8272 = vmatpush1.msra.mxu0 %v7587
        %8273 = vmatprep.subr.mxu0 %v7712
        %8274 = vmatpush2.msra.mxu0 %v7711
        %8275 = vmatprep.subr.mxu0 %v7708
        %8276 = vmatpush2.msra.mxu0 %v7707
        %8277 = vmatprep.subr.mxu0 %v7704
        %8278 = vmatpush2.msra.mxu0 %v7703
        %8279 = vmatprep.subr.mxu0 %v7700
        %8280 = vmatpush2.msra.mxu0 %v7699
        %8281 = vmatprep.subr.mxu0 %v7696
        %8282 = vmatpush2.msra.mxu0 %v7695
        %8283 = vmatprep.subr.mxu0 %v7692
        %8284 = vmatpush2.msra.mxu0 %v7691
        %8285 = vmatprep.subr.mxu0 %v7688
        %8286 = vmatpush2.msra.mxu0 %v7687
        %8287 = vmatprep.subr.mxu0 %v7684
        %8288 = vmatpush2.msra.mxu0 %v7683
        %8289 = vmatprep.subr.mxu0 %v7680
        %8290 = vmatpush2.msra.mxu0 %v7679
        %8291 = vmatprep.subr.mxu0 %v7676
        %8292 = vmatpush2.msra.mxu0 %v7675
        %8293 = vmatprep.subr.mxu0 %v7672
        %8294 = vmatpush2.msra.mxu0 %v7671
        %8295 = vmatprep.subr.mxu0 %v7668
        %8296 = vmatpush2.msra.mxu0 %v7667
        %8297 = vmatprep.subr.mxu0 %v7664
        %8298 = vmatpush2.msra.mxu0 %v7663
        %8299 = vmatprep.subr.mxu0 %v7660
        %8300 = vmatpush2.msra.mxu0 %v7659
        %8301 = vmatprep.subr.mxu0 %v7656
        %8302 = vmatpush2.msra.mxu0 %v7655
        %8303 = vmatprep.subr.mxu0 %v7652
        %8304 = vmatpush2.msra.mxu0 %v7651
        %8305 = vmatprep.mubr.f32.mxu0 %v7190
        %8306 = vmatmul.mubr.f32.gmra.mxu0 %v7202
        %v8307 = vpop.f32.mrf.mxu0
        %v8308 = vadd.f32 %v8237, %v8307
        %v8309 = vpop.f32.mrf.mxu0
        %v8310 = vadd.f32 %v8239, %v8309
        %8311 = vdwg.mxu0
        %8312 = vmatprep.subr.mxu0 %v7776
        %8313 = vmatpush1.msra.mxu0 %v7775
        %8314 = vmatprep.subr.mxu0 %v7772
        %8315 = vmatpush1.msra.mxu0 %v7771
        %8316 = vmatprep.subr.mxu0 %v7768
        %8317 = vmatpush1.msra.mxu0 %v7767
        %8318 = vmatprep.subr.mxu0 %v7764
        %8319 = vmatpush1.msra.mxu0 %v7763
        %8320 = vmatprep.subr.mxu0 %v7760
        %8321 = vmatpush1.msra.mxu0 %v7759
        %8322 = vmatprep.subr.mxu0 %v7756
        %8323 = vmatpush1.msra.mxu0 %v7755
        %8324 = vmatprep.subr.mxu0 %v7752
        %8325 = vmatpush1.msra.mxu0 %v7751
        %8326 = vmatprep.subr.mxu0 %v7748
        %8327 = vmatpush1.msra.mxu0 %v7747
        %8328 = vmatprep.subr.mxu0 %v7744
        %8329 = vmatpush1.msra.mxu0 %v7743
        %8330 = vmatprep.subr.mxu0 %v7740
        %8331 = vmatpush1.msra.mxu0 %v7739
        %8332 = vmatprep.subr.mxu0 %v7736
        %8333 = vmatpush1.msra.mxu0 %v7735
        %8334 = vmatprep.subr.mxu0 %v7732
        %8335 = vmatpush1.msra.mxu0 %v7731
        %8336 = vmatprep.subr.mxu0 %v7728
        %8337 = vmatpush1.msra.mxu0 %v7727
        %8338 = vmatprep.subr.mxu0 %v7724
        %8339 = vmatpush1.msra.mxu0 %v7723
        %8340 = vmatprep.subr.mxu0 %v7720
        %8341 = vmatpush1.msra.mxu0 %v7719
        %8342 = vmatprep.subr.mxu0 %v7716
        %8343 = vmatpush1.msra.mxu0 %v7715
        %8344 = vmatprep.subr.mxu0 %v7840
        %8345 = vmatpush2.msra.mxu0 %v7839
        %8346 = vmatprep.subr.mxu0 %v7836
        %8347 = vmatpush2.msra.mxu0 %v7835
        %8348 = vmatprep.subr.mxu0 %v7832
        %8349 = vmatpush2.msra.mxu0 %v7831
        %8350 = vmatprep.subr.mxu0 %v7828
        %8351 = vmatpush2.msra.mxu0 %v7827
        %8352 = vmatprep.subr.mxu0 %v7824
        %8353 = vmatpush2.msra.mxu0 %v7823
        %8354 = vmatprep.subr.mxu0 %v7820
        %8355 = vmatpush2.msra.mxu0 %v7819
        %8356 = vmatprep.subr.mxu0 %v7816
        %8357 = vmatpush2.msra.mxu0 %v7815
        %8358 = vmatprep.subr.mxu0 %v7812
        %8359 = vmatpush2.msra.mxu0 %v7811
        %8360 = vmatprep.subr.mxu0 %v7808
        %8361 = vmatpush2.msra.mxu0 %v7807
        %8362 = vmatprep.subr.mxu0 %v7804
        %8363 = vmatpush2.msra.mxu0 %v7803
        %8364 = vmatprep.subr.mxu0 %v7800
        %8365 = vmatpush2.msra.mxu0 %v7799
        %8366 = vmatprep.subr.mxu0 %v7796
        %8367 = vmatpush2.msra.mxu0 %v7795
        %8368 = vmatprep.subr.mxu0 %v7792
        %8369 = vmatpush2.msra.mxu0 %v7791
        %8370 = vmatprep.subr.mxu0 %v7788
        %8371 = vmatpush2.msra.mxu0 %v7787
        %8372 = vmatprep.subr.mxu0 %v7784
        %8373 = vmatpush2.msra.mxu0 %v7783
        %8374 = vmatprep.subr.mxu0 %v7780
        %8375 = vmatpush2.msra.mxu0 %v7779
        %8376 = vmatprep.mubr.f32.mxu0 %v7192
        %8377 = vmatmul.mubr.f32.gmra.mxu0 %v7191
        %v8378 = vpop.f32.mrf.mxu0
        %v8379 = vadd.f32 %v8308, %v8378
        %v8380 = vpop.f32.mrf.mxu0
        %v8381 = vadd.f32 %v8310, %v8380
        %8382 = vdwg.mxu0
        %8383 = vmatprep.subr.mxu0 %v7904
        %8384 = vmatpush1.msra.mxu0 %v7903
        %8385 = vmatprep.subr.mxu0 %v7900
        %8386 = vmatpush1.msra.mxu0 %v7899
        %8387 = vmatprep.subr.mxu0 %v7896
        %8388 = vmatpush1.msra.mxu0 %v7895
        %8389 = vmatprep.subr.mxu0 %v7892
        %8390 = vmatpush1.msra.mxu0 %v7891
        %8391 = vmatprep.subr.mxu0 %v7888
        %8392 = vmatpush1.msra.mxu0 %v7887
        %8393 = vmatprep.subr.mxu0 %v7884
        %8394 = vmatpush1.msra.mxu0 %v7883
        %8395 = vmatprep.subr.mxu0 %v7880
        %8396 = vmatpush1.msra.mxu0 %v7879
        %8397 = vmatprep.subr.mxu0 %v7876
        %8398 = vmatpush1.msra.mxu0 %v7875
        %8399 = vmatprep.subr.mxu0 %v7872
        %8400 = vmatpush1.msra.mxu0 %v7871
        %8401 = vmatprep.subr.mxu0 %v7868
        %8402 = vmatpush1.msra.mxu0 %v7867
        %8403 = vmatprep.subr.mxu0 %v7864
        %8404 = vmatpush1.msra.mxu0 %v7863
        %8405 = vmatprep.subr.mxu0 %v7860
        %8406 = vmatpush1.msra.mxu0 %v7859
        %8407 = vmatprep.subr.mxu0 %v7856
        %8408 = vmatpush1.msra.mxu0 %v7855
        %8409 = vmatprep.subr.mxu0 %v7852
        %8410 = vmatpush1.msra.mxu0 %v7851
        %8411 = vmatprep.subr.mxu0 %v7848
        %8412 = vmatpush1.msra.mxu0 %v7847
        %8413 = vmatprep.subr.mxu0 %v7844
        %8414 = vmatpush1.msra.mxu0 %v7843
        %8415 = vmatprep.subr.mxu0 %v7968
        %8416 = vmatpush2.msra.mxu0 %v7967
        %8417 = vmatprep.subr.mxu0 %v7964
        %8418 = vmatpush2.msra.mxu0 %v7963
        %8419 = vmatprep.subr.mxu0 %v7960
        %8420 = vmatpush2.msra.mxu0 %v7959
        %8421 = vmatprep.subr.mxu0 %v7956
        %8422 = vmatpush2.msra.mxu0 %v7955
        %8423 = vmatprep.subr.mxu0 %v7952
        %8424 = vmatpush2.msra.mxu0 %v7951
        %8425 = vmatprep.subr.mxu0 %v7948
        %8426 = vmatpush2.msra.mxu0 %v7947
        %8427 = vmatprep.subr.mxu0 %v7944
        %8428 = vmatpush2.msra.mxu0 %v7943
        %8429 = vmatprep.subr.mxu0 %v7940
        %8430 = vmatpush2.msra.mxu0 %v7939
        %8431 = vmatprep.subr.mxu0 %v7936
        %8432 = vmatpush2.msra.mxu0 %v7935
        %8433 = vmatprep.subr.mxu0 %v7932
        %8434 = vmatpush2.msra.mxu0 %v7931
        %8435 = vmatprep.subr.mxu0 %v7928
        %8436 = vmatpush2.msra.mxu0 %v7927
        %8437 = vmatprep.subr.mxu0 %v7924
        %8438 = vmatpush2.msra.mxu0 %v7923
        %8439 = vmatprep.subr.mxu0 %v7920
        %8440 = vmatpush2.msra.mxu0 %v7919
        %8441 = vmatprep.subr.mxu0 %v7916
        %8442 = vmatpush2.msra.mxu0 %v7915
        %8443 = vmatprep.subr.mxu0 %v7912
        %8444 = vmatpush2.msra.mxu0 %v7911
        %8445 = vmatprep.subr.mxu0 %v7908
        %8446 = vmatpush2.msra.mxu0 %v7907
        %8447 = vmatprep.mubr.f32.mxu0 %v7194
        %8448 = vmatmul.mubr.f32.gmra.mxu0 %v7193
        %v8449 = vpop.f32.mrf.mxu0
        %v8450 = vadd.f32 %v8379, %v8449
        %v8451 = vpop.f32.mrf.mxu0
        %v8452 = vadd.f32 %v8381, %v8451
        %8453 = vdwg.mxu0
        %8454 = vmatprep.subr.mxu0 0.0
        %8455 = vmatpush1.msra.mxu0 0.0
        %8456 = vmatprep.subr.mxu0 0.0
        %8457 = vmatpush1.msra.mxu0 0.0
        %8458 = vmatprep.subr.mxu0 0.0
        %8459 = vmatpush1.msra.mxu0 0.0
        %8460 = vmatprep.subr.mxu0 0.0
        %8461 = vmatpush1.msra.mxu0 0.0
        %8462 = vmatprep.subr.mxu0 0.0
        %8463 = vmatpush1.msra.mxu0 0.0
        %8464 = vmatprep.subr.mxu0 0.0
        %8465 = vmatpush1.msra.mxu0 0.0
        %8466 = vmatprep.subr.mxu0 0.0
        %8467 = vmatpush1.msra.mxu0 0.0
        %8468 = vmatprep.subr.mxu0 0.0
        %8469 = vmatpush1.msra.mxu0 0.0
        %8470 = vmatprep.subr.mxu0 %v8000
        %8471 = vmatpush1.msra.mxu0 %v7999
        %8472 = vmatprep.subr.mxu0 %v7996
        %8473 = vmatpush1.msra.mxu0 %v7995
        %8474 = vmatprep.subr.mxu0 %v7992
        %8475 = vmatpush1.msra.mxu0 %v7991
        %8476 = vmatprep.subr.mxu0 %v7988
        %8477 = vmatpush1.msra.mxu0 %v7987
        %8478 = vmatprep.subr.mxu0 %v7984
        %8479 = vmatpush1.msra.mxu0 %v7983
        %8480 = vmatprep.subr.mxu0 %v7980
        %8481 = vmatpush1.msra.mxu0 %v7979
        %8482 = vmatprep.subr.mxu0 %v7976
        %8483 = vmatpush1.msra.mxu0 %v7975
        %8484 = vmatprep.subr.mxu0 %v7972
        %8485 = vmatpush1.msra.mxu0 %v7971
        %8486 = vmatprep.subr.mxu0 0.0
        %8487 = vmatpush2.msra.mxu0 0.0
        %8488 = vmatprep.subr.mxu0 0.0
        %8489 = vmatpush2.msra.mxu0 0.0
        %8490 = vmatprep.subr.mxu0 0.0
        %8491 = vmatpush2.msra.mxu0 0.0
        %8492 = vmatprep.subr.mxu0 0.0
        %8493 = vmatpush2.msra.mxu0 0.0
        %8494 = vmatprep.subr.mxu0 0.0
        %8495 = vmatpush2.msra.mxu0 0.0
        %8496 = vmatprep.subr.mxu0 0.0
        %8497 = vmatpush2.msra.mxu0 0.0
        %8498 = vmatprep.subr.mxu0 0.0
        %8499 = vmatpush2.msra.mxu0 0.0
        %8500 = vmatprep.subr.mxu0 0.0
        %8501 = vmatpush2.msra.mxu0 0.0
        %8502 = vmatprep.subr.mxu0 0.0
        %8503 = vmatpush2.msra.mxu0 0.0
        %8504 = vmatprep.subr.mxu0 0.0
        %8505 = vmatpush2.msra.mxu0 0.0
        %8506 = vmatprep.subr.mxu0 0.0
        %8507 = vmatpush2.msra.mxu0 0.0
        %8508 = vmatprep.subr.mxu0 0.0
        %8509 = vmatpush2.msra.mxu0 0.0
        %8510 = vmatprep.subr.mxu0 0.0
        %8511 = vmatpush2.msra.mxu0 0.0
        %8512 = vmatprep.subr.mxu0 0.0
        %8513 = vmatpush2.msra.mxu0 0.0
        %8514 = vmatprep.subr.mxu0 0.0
        %8515 = vmatpush2.msra.mxu0 0.0
        %8516 = vmatprep.subr.mxu0 0.0
        %8517 = vmatpush2.msra.mxu0 0.0
        %8518 = vmatprep.mubr.f32.mxu0 0.0
        %8519 = vmatmul.mubr.f32.gmra.mxu0 %v8026
        %v8520 = vpop.f32.mrf.mxu0
        %v8521 = vadd.f32 %v8450, %v8520
        %v8522 = vpop.f32.mrf.mxu0
        %v8523 = vadd.f32 %v8452, %v8522
        %8524 = vdwg.mxu0
        %8525 = vmatprep.subr.mxu0 %v7266
        %8526 = vmatpush1.msra.mxu0 %v7265
        %8527 = vmatprep.subr.mxu0 %v7262
        %8528 = vmatpush1.msra.mxu0 %v7261
        %8529 = vmatprep.subr.mxu0 %v7258
        %8530 = vmatpush1.msra.mxu0 %v7257
        %8531 = vmatprep.subr.mxu0 %v7254
        %8532 = vmatpush1.msra.mxu0 %v7253
        %8533 = vmatprep.subr.mxu0 %v7250
        %8534 = vmatpush1.msra.mxu0 %v7249
        %8535 = vmatprep.subr.mxu0 %v7246
        %8536 = vmatpush1.msra.mxu0 %v7245
        %8537 = vmatprep.subr.mxu0 %v7242
        %8538 = vmatpush1.msra.mxu0 %v7241
        %8539 = vmatprep.subr.mxu0 %v7238
        %8540 = vmatpush1.msra.mxu0 %v7237
        %8541 = vmatprep.subr.mxu0 %v7234
        %8542 = vmatpush1.msra.mxu0 %v7233
        %8543 = vmatprep.subr.mxu0 %v7230
        %8544 = vmatpush1.msra.mxu0 %v7229
        %8545 = vmatprep.subr.mxu0 %v7226
        %8546 = vmatpush1.msra.mxu0 %v7225
        %8547 = vmatprep.subr.mxu0 %v7222
        %8548 = vmatpush1.msra.mxu0 %v7221
        %8549 = vmatprep.subr.mxu0 %v7218
        %8550 = vmatpush1.msra.mxu0 %v7217
        %8551 = vmatprep.subr.mxu0 %v7214
        %8552 = vmatpush1.msra.mxu0 %v7213
        %8553 = vmatprep.subr.mxu0 %v7210
        %8554 = vmatpush1.msra.mxu0 %v7209
        %8555 = vmatprep.subr.mxu0 %v7206
        %8556 = vmatpush1.msra.mxu0 %v7205
        %8557 = vmatprep.subr.mxu0 %v7330
        %8558 = vmatpush2.msra.mxu0 %v7329
        %8559 = vmatprep.subr.mxu0 %v7326
        %8560 = vmatpush2.msra.mxu0 %v7325
        %8561 = vmatprep.subr.mxu0 %v7322
        %8562 = vmatpush2.msra.mxu0 %v7321
        %8563 = vmatprep.subr.mxu0 %v7318
        %8564 = vmatpush2.msra.mxu0 %v7317
        %8565 = vmatprep.subr.mxu0 %v7314
        %8566 = vmatpush2.msra.mxu0 %v7313
        %8567 = vmatprep.subr.mxu0 %v7310
        %8568 = vmatpush2.msra.mxu0 %v7309
        %8569 = vmatprep.subr.mxu0 %v7306
        %8570 = vmatpush2.msra.mxu0 %v7305
        %8571 = vmatprep.subr.mxu0 %v7302
        %8572 = vmatpush2.msra.mxu0 %v7301
        %8573 = vmatprep.subr.mxu0 %v7298
        %8574 = vmatpush2.msra.mxu0 %v7297
        %8575 = vmatprep.subr.mxu0 %v7294
        %8576 = vmatpush2.msra.mxu0 %v7293
        %8577 = vmatprep.subr.mxu0 %v7290
        %8578 = vmatpush2.msra.mxu0 %v7289
        %8579 = vmatprep.subr.mxu0 %v7286
        %8580 = vmatpush2.msra.mxu0 %v7285
        %8581 = vmatprep.subr.mxu0 %v7282
        %8582 = vmatpush2.msra.mxu0 %v7281
        %8583 = vmatprep.subr.mxu0 %v7278
        %8584 = vmatpush2.msra.mxu0 %v7277
        %8585 = vmatprep.subr.mxu0 %v7274
        %8586 = vmatpush2.msra.mxu0 %v7273
        %8587 = vmatprep.subr.mxu0 %v7270
        %8588 = vmatpush2.msra.mxu0 %v7269
        %8589 = vmatprep.mubr.f32.mxu0 %v7072
        %8590 = vmatmul.mubr.f32.gmra.mxu0 %v7066
        %v8591 = vpop.f32.mrf.mxu0
        %v8592 = vadd.f32 %v8016, %v8591
        %v8593 = vpop.f32.mrf.mxu0
        %v8594 = vadd.f32 %v8020, %v8593
        %8595 = vdwg.mxu0
        %8596 = vmatprep.subr.mxu0 %v7394
        %8597 = vmatpush1.msra.mxu0 %v7393
        %8598 = vmatprep.subr.mxu0 %v7390
        %8599 = vmatpush1.msra.mxu0 %v7389
        %8600 = vmatprep.subr.mxu0 %v7386
        %8601 = vmatpush1.msra.mxu0 %v7385
        %8602 = vmatprep.subr.mxu0 %v7382
        %8603 = vmatpush1.msra.mxu0 %v7381
        %8604 = vmatprep.subr.mxu0 %v7378
        %8605 = vmatpush1.msra.mxu0 %v7377
        %8606 = vmatprep.subr.mxu0 %v7374
        %8607 = vmatpush1.msra.mxu0 %v7373
        %8608 = vmatprep.subr.mxu0 %v7370
        %8609 = vmatpush1.msra.mxu0 %v7369
        %8610 = vmatprep.subr.mxu0 %v7366
        %8611 = vmatpush1.msra.mxu0 %v7365
        %8612 = vmatprep.subr.mxu0 %v7362
        %8613 = vmatpush1.msra.mxu0 %v7361
        %8614 = vmatprep.subr.mxu0 %v7358
        %8615 = vmatpush1.msra.mxu0 %v7357
        %8616 = vmatprep.subr.mxu0 %v7354
        %8617 = vmatpush1.msra.mxu0 %v7353
        %8618 = vmatprep.subr.mxu0 %v7350
        %8619 = vmatpush1.msra.mxu0 %v7349
        %8620 = vmatprep.subr.mxu0 %v7346
        %8621 = vmatpush1.msra.mxu0 %v7345
        %8622 = vmatprep.subr.mxu0 %v7342
        %8623 = vmatpush1.msra.mxu0 %v7341
        %8624 = vmatprep.subr.mxu0 %v7338
        %8625 = vmatpush1.msra.mxu0 %v7337
        %8626 = vmatprep.subr.mxu0 %v7334
        %8627 = vmatpush1.msra.mxu0 %v7333
        %8628 = vmatprep.subr.mxu0 %v7458
        %8629 = vmatpush2.msra.mxu0 %v7457
        %8630 = vmatprep.subr.mxu0 %v7454
        %8631 = vmatpush2.msra.mxu0 %v7453
        %8632 = vmatprep.subr.mxu0 %v7450
        %8633 = vmatpush2.msra.mxu0 %v7449
        %8634 = vmatprep.subr.mxu0 %v7446
        %8635 = vmatpush2.msra.mxu0 %v7445
        %8636 = vmatprep.subr.mxu0 %v7442
        %8637 = vmatpush2.msra.mxu0 %v7441
        %8638 = vmatprep.subr.mxu0 %v7438
        %8639 = vmatpush2.msra.mxu0 %v7437
        %8640 = vmatprep.subr.mxu0 %v7434
        %8641 = vmatpush2.msra.mxu0 %v7433
        %8642 = vmatprep.subr.mxu0 %v7430
        %8643 = vmatpush2.msra.mxu0 %v7429
        %8644 = vmatprep.subr.mxu0 %v7426
        %8645 = vmatpush2.msra.mxu0 %v7425
        %8646 = vmatprep.subr.mxu0 %v7422
        %8647 = vmatpush2.msra.mxu0 %v7421
        %8648 = vmatprep.subr.mxu0 %v7418
        %8649 = vmatpush2.msra.mxu0 %v7417
        %8650 = vmatprep.subr.mxu0 %v7414
        %8651 = vmatpush2.msra.mxu0 %v7413
        %8652 = vmatprep.subr.mxu0 %v7410
        %8653 = vmatpush2.msra.mxu0 %v7409
        %8654 = vmatprep.subr.mxu0 %v7406
        %8655 = vmatpush2.msra.mxu0 %v7405
        %8656 = vmatprep.subr.mxu0 %v7402
        %8657 = vmatpush2.msra.mxu0 %v7401
        %8658 = vmatprep.subr.mxu0 %v7398
        %8659 = vmatpush2.msra.mxu0 %v7397
        %8660 = vmatprep.mubr.f32.mxu0 %v7082
        %8661 = vmatmul.mubr.f32.gmra.mxu0 %v7076
        %v8662 = vpop.f32.mrf.mxu0
        %v8663 = vadd.f32 %v8592, %v8662
        %v8664 = vpop.f32.mrf.mxu0
        %v8665 = vadd.f32 %v8594, %v8664
        %8666 = vdwg.mxu0
        %8667 = vmatprep.subr.mxu0 %v7522
        %8668 = vmatpush1.msra.mxu0 %v7521
        %8669 = vmatprep.subr.mxu0 %v7518
        %8670 = vmatpush1.msra.mxu0 %v7517
        %8671 = vmatprep.subr.mxu0 %v7514
        %8672 = vmatpush1.msra.mxu0 %v7513
        %8673 = vmatprep.subr.mxu0 %v7510
        %8674 = vmatpush1.msra.mxu0 %v7509
        %8675 = vmatprep.subr.mxu0 %v7506
        %8676 = vmatpush1.msra.mxu0 %v7505
        %8677 = vmatprep.subr.mxu0 %v7502
        %8678 = vmatpush1.msra.mxu0 %v7501
        %8679 = vmatprep.subr.mxu0 %v7498
        %8680 = vmatpush1.msra.mxu0 %v7497
        %8681 = vmatprep.subr.mxu0 %v7494
        %8682 = vmatpush1.msra.mxu0 %v7493
        %8683 = vmatprep.subr.mxu0 %v7490
        %8684 = vmatpush1.msra.mxu0 %v7489
        %8685 = vmatprep.subr.mxu0 %v7486
        %8686 = vmatpush1.msra.mxu0 %v7485
        %8687 = vmatprep.subr.mxu0 %v7482
        %8688 = vmatpush1.msra.mxu0 %v7481
        %8689 = vmatprep.subr.mxu0 %v7478
        %8690 = vmatpush1.msra.mxu0 %v7477
        %8691 = vmatprep.subr.mxu0 %v7474
        %8692 = vmatpush1.msra.mxu0 %v7473
        %8693 = vmatprep.subr.mxu0 %v7470
        %8694 = vmatpush1.msra.mxu0 %v7469
        %8695 = vmatprep.subr.mxu0 %v7466
        %8696 = vmatpush1.msra.mxu0 %v7465
        %8697 = vmatprep.subr.mxu0 %v7462
        %8698 = vmatpush1.msra.mxu0 %v7461
        %8699 = vmatprep.subr.mxu0 %v7586
        %8700 = vmatpush2.msra.mxu0 %v7585
        %8701 = vmatprep.subr.mxu0 %v7582
        %8702 = vmatpush2.msra.mxu0 %v7581
        %8703 = vmatprep.subr.mxu0 %v7578
        %8704 = vmatpush2.msra.mxu0 %v7577
        %8705 = vmatprep.subr.mxu0 %v7574
        %8706 = vmatpush2.msra.mxu0 %v7573
        %8707 = vmatprep.subr.mxu0 %v7570
        %8708 = vmatpush2.msra.mxu0 %v7569
        %8709 = vmatprep.subr.mxu0 %v7566
        %8710 = vmatpush2.msra.mxu0 %v7565
        %8711 = vmatprep.subr.mxu0 %v7562
        %8712 = vmatpush2.msra.mxu0 %v7561
        %8713 = vmatprep.subr.mxu0 %v7558
        %8714 = vmatpush2.msra.mxu0 %v7557
        %8715 = vmatprep.subr.mxu0 %v7554
        %8716 = vmatpush2.msra.mxu0 %v7553
        %8717 = vmatprep.subr.mxu0 %v7550
        %8718 = vmatpush2.msra.mxu0 %v7549
        %8719 = vmatprep.subr.mxu0 %v7546
        %8720 = vmatpush2.msra.mxu0 %v7545
        %8721 = vmatprep.subr.mxu0 %v7542
        %8722 = vmatpush2.msra.mxu0 %v7541
        %8723 = vmatprep.subr.mxu0 %v7538
        %8724 = vmatpush2.msra.mxu0 %v7537
        %8725 = vmatprep.subr.mxu0 %v7534
        %8726 = vmatpush2.msra.mxu0 %v7533
        %8727 = vmatprep.subr.mxu0 %v7530
        %8728 = vmatpush2.msra.mxu0 %v7529
        %8729 = vmatprep.subr.mxu0 %v7526
        %8730 = vmatpush2.msra.mxu0 %v7525
        %8731 = vmatprep.mubr.f32.mxu0 %v7092
        %8732 = vmatmul.mubr.f32.gmra.mxu0 %v7086
        %v8733 = vpop.f32.mrf.mxu0
        %v8734 = vadd.f32 %v8663, %v8733
        %v8735 = vpop.f32.mrf.mxu0
        %v8736 = vadd.f32 %v8665, %v8735
        %8737 = vdwg.mxu0
        %8738 = vmatprep.subr.mxu0 %v7650
        %8739 = vmatpush1.msra.mxu0 %v7649
        %8740 = vmatprep.subr.mxu0 %v7646
        %8741 = vmatpush1.msra.mxu0 %v7645
        %8742 = vmatprep.subr.mxu0 %v7642
        %8743 = vmatpush1.msra.mxu0 %v7641
        %8744 = vmatprep.subr.mxu0 %v7638
        %8745 = vmatpush1.msra.mxu0 %v7637
        %8746 = vmatprep.subr.mxu0 %v7634
        %8747 = vmatpush1.msra.mxu0 %v7633
        %8748 = vmatprep.subr.mxu0 %v7630
        %8749 = vmatpush1.msra.mxu0 %v7629
        %8750 = vmatprep.subr.mxu0 %v7626
        %8751 = vmatpush1.msra.mxu0 %v7625
        %8752 = vmatprep.subr.mxu0 %v7622
        %8753 = vmatpush1.msra.mxu0 %v7621
        %8754 = vmatprep.subr.mxu0 %v7618
        %8755 = vmatpush1.msra.mxu0 %v7617
        %8756 = vmatprep.subr.mxu0 %v7614
        %8757 = vmatpush1.msra.mxu0 %v7613
        %8758 = vmatprep.subr.mxu0 %v7610
        %8759 = vmatpush1.msra.mxu0 %v7609
        %8760 = vmatprep.subr.mxu0 %v7606
        %8761 = vmatpush1.msra.mxu0 %v7605
        %8762 = vmatprep.subr.mxu0 %v7602
        %8763 = vmatpush1.msra.mxu0 %v7601
        %8764 = vmatprep.subr.mxu0 %v7598
        %8765 = vmatpush1.msra.mxu0 %v7597
        %8766 = vmatprep.subr.mxu0 %v7594
        %8767 = vmatpush1.msra.mxu0 %v7593
        %8768 = vmatprep.subr.mxu0 %v7590
        %8769 = vmatpush1.msra.mxu0 %v7589
        %8770 = vmatprep.subr.mxu0 %v7714
        %8771 = vmatpush2.msra.mxu0 %v7713
        %8772 = vmatprep.subr.mxu0 %v7710
        %8773 = vmatpush2.msra.mxu0 %v7709
        %8774 = vmatprep.subr.mxu0 %v7706
        %8775 = vmatpush2.msra.mxu0 %v7705
        %8776 = vmatprep.subr.mxu0 %v7702
        %8777 = vmatpush2.msra.mxu0 %v7701
        %8778 = vmatprep.subr.mxu0 %v7698
        %8779 = vmatpush2.msra.mxu0 %v7697
        %8780 = vmatprep.subr.mxu0 %v7694
        %8781 = vmatpush2.msra.mxu0 %v7693
        %8782 = vmatprep.subr.mxu0 %v7690
        %8783 = vmatpush2.msra.mxu0 %v7689
        %8784 = vmatprep.subr.mxu0 %v7686
        %8785 = vmatpush2.msra.mxu0 %v7685
        %8786 = vmatprep.subr.mxu0 %v7682
        %8787 = vmatpush2.msra.mxu0 %v7681
        %8788 = vmatprep.subr.mxu0 %v7678
        %8789 = vmatpush2.msra.mxu0 %v7677
        %8790 = vmatprep.subr.mxu0 %v7674
        %8791 = vmatpush2.msra.mxu0 %v7673
        %8792 = vmatprep.subr.mxu0 %v7670
        %8793 = vmatpush2.msra.mxu0 %v7669
        %8794 = vmatprep.subr.mxu0 %v7666
        %8795 = vmatpush2.msra.mxu0 %v7665
        %8796 = vmatprep.subr.mxu0 %v7662
        %8797 = vmatpush2.msra.mxu0 %v7661
        %8798 = vmatprep.subr.mxu0 %v7658
        %8799 = vmatpush2.msra.mxu0 %v7657
        %8800 = vmatprep.subr.mxu0 %v7654
        %8801 = vmatpush2.msra.mxu0 %v7653
        %8802 = vmatprep.mubr.f32.mxu0 %v7190
        %8803 = vmatmul.mubr.f32.gmra.mxu0 %v7202
        %v8804 = vpop.f32.mrf.mxu0
        %v8805 = vadd.f32 %v8734, %v8804
        %v8806 = vpop.f32.mrf.mxu0
        %v8807 = vadd.f32 %v8736, %v8806
        %8808 = vdwg.mxu0
        %8809 = vmatprep.subr.mxu0 %v7778
        %8810 = vmatpush1.msra.mxu0 %v7777
        %8811 = vmatprep.subr.mxu0 %v7774
        %8812 = vmatpush1.msra.mxu0 %v7773
        %8813 = vmatprep.subr.mxu0 %v7770
        %8814 = vmatpush1.msra.mxu0 %v7769
        %8815 = vmatprep.subr.mxu0 %v7766
        %8816 = vmatpush1.msra.mxu0 %v7765
        %8817 = vmatprep.subr.mxu0 %v7762
        %8818 = vmatpush1.msra.mxu0 %v7761
        %8819 = vmatprep.subr.mxu0 %v7758
        %8820 = vmatpush1.msra.mxu0 %v7757
        %8821 = vmatprep.subr.mxu0 %v7754
        %8822 = vmatpush1.msra.mxu0 %v7753
        %8823 = vmatprep.subr.mxu0 %v7750
        %8824 = vmatpush1.msra.mxu0 %v7749
        %8825 = vmatprep.subr.mxu0 %v7746
        %8826 = vmatpush1.msra.mxu0 %v7745
        %8827 = vmatprep.subr.mxu0 %v7742
        %8828 = vmatpush1.msra.mxu0 %v7741
        %8829 = vmatprep.subr.mxu0 %v7738
        %8830 = vmatpush1.msra.mxu0 %v7737
        %8831 = vmatprep.subr.mxu0 %v7734
        %8832 = vmatpush1.msra.mxu0 %v7733
        %8833 = vmatprep.subr.mxu0 %v7730
        %8834 = vmatpush1.msra.mxu0 %v7729
        %8835 = vmatprep.subr.mxu0 %v7726
        %8836 = vmatpush1.msra.mxu0 %v7725
        %8837 = vmatprep.subr.mxu0 %v7722
        %8838 = vmatpush1.msra.mxu0 %v7721
        %8839 = vmatprep.subr.mxu0 %v7718
        %8840 = vmatpush1.msra.mxu0 %v7717
        %8841 = vmatprep.subr.mxu0 %v7842
        %8842 = vmatpush2.msra.mxu0 %v7841
        %8843 = vmatprep.subr.mxu0 %v7838
        %8844 = vmatpush2.msra.mxu0 %v7837
        %8845 = vmatprep.subr.mxu0 %v7834
        %8846 = vmatpush2.msra.mxu0 %v7833
        %8847 = vmatprep.subr.mxu0 %v7830
        %8848 = vmatpush2.msra.mxu0 %v7829
        %8849 = vmatprep.subr.mxu0 %v7826
        %8850 = vmatpush2.msra.mxu0 %v7825
        %8851 = vmatprep.subr.mxu0 %v7822
        %8852 = vmatpush2.msra.mxu0 %v7821
        %8853 = vmatprep.subr.mxu0 %v7818
        %8854 = vmatpush2.msra.mxu0 %v7817
        %8855 = vmatprep.subr.mxu0 %v7814
        %8856 = vmatpush2.msra.mxu0 %v7813
        %8857 = vmatprep.subr.mxu0 %v7810
        %8858 = vmatpush2.msra.mxu0 %v7809
        %8859 = vmatprep.subr.mxu0 %v7806
        %8860 = vmatpush2.msra.mxu0 %v7805
        %8861 = vmatprep.subr.mxu0 %v7802
        %8862 = vmatpush2.msra.mxu0 %v7801
        %8863 = vmatprep.subr.mxu0 %v7798
        %8864 = vmatpush2.msra.mxu0 %v7797
        %8865 = vmatprep.subr.mxu0 %v7794
        %8866 = vmatpush2.msra.mxu0 %v7793
        %8867 = vmatprep.subr.mxu0 %v7790
        %8868 = vmatpush2.msra.mxu0 %v7789
        %8869 = vmatprep.subr.mxu0 %v7786
        %8870 = vmatpush2.msra.mxu0 %v7785
        %8871 = vmatprep.subr.mxu0 %v7782
        %8872 = vmatpush2.msra.mxu0 %v7781
        %8873 = vmatprep.mubr.f32.mxu0 %v7192
        %8874 = vmatmul.mubr.f32.gmra.mxu0 %v7191
        %v8875 = vpop.f32.mrf.mxu0
        %v8876 = vadd.f32 %v8805, %v8875
        %v8877 = vpop.f32.mrf.mxu0
        %v8878 = vadd.f32 %v8807, %v8877
        %8879 = vdwg.mxu0
        %8880 = vmatprep.subr.mxu0 %v7906
        %8881 = vmatpush1.msra.mxu0 %v7905
        %8882 = vmatprep.subr.mxu0 %v7902
        %8883 = vmatpush1.msra.mxu0 %v7901
        %8884 = vmatprep.subr.mxu0 %v7898
        %8885 = vmatpush1.msra.mxu0 %v7897
        %8886 = vmatprep.subr.mxu0 %v7894
        %8887 = vmatpush1.msra.mxu0 %v7893
        %8888 = vmatprep.subr.mxu0 %v7890
        %8889 = vmatpush1.msra.mxu0 %v7889
        %8890 = vmatprep.subr.mxu0 %v7886
        %8891 = vmatpush1.msra.mxu0 %v7885
        %8892 = vmatprep.subr.mxu0 %v7882
        %8893 = vmatpush1.msra.mxu0 %v7881
        %8894 = vmatprep.subr.mxu0 %v7878
        %8895 = vmatpush1.msra.mxu0 %v7877
        %8896 = vmatprep.subr.mxu0 %v7874
        %8897 = vmatpush1.msra.mxu0 %v7873
        %8898 = vmatprep.subr.mxu0 %v7870
        %8899 = vmatpush1.msra.mxu0 %v7869
        %8900 = vmatprep.subr.mxu0 %v7866
        %8901 = vmatpush1.msra.mxu0 %v7865
        %8902 = vmatprep.subr.mxu0 %v7862
        %8903 = vmatpush1.msra.mxu0 %v7861
        %8904 = vmatprep.subr.mxu0 %v7858
        %8905 = vmatpush1.msra.mxu0 %v7857
        %8906 = vmatprep.subr.mxu0 %v7854
        %8907 = vmatpush1.msra.mxu0 %v7853
        %8908 = vmatprep.subr.mxu0 %v7850
        %8909 = vmatpush1.msra.mxu0 %v7849
        %8910 = vmatprep.subr.mxu0 %v7846
        %8911 = vmatpush1.msra.mxu0 %v7845
        %8912 = vmatprep.subr.mxu0 %v7970
        %8913 = vmatpush2.msra.mxu0 %v7969
        %8914 = vmatprep.subr.mxu0 %v7966
        %8915 = vmatpush2.msra.mxu0 %v7965
        %8916 = vmatprep.subr.mxu0 %v7962
        %8917 = vmatpush2.msra.mxu0 %v7961
        %8918 = vmatprep.subr.mxu0 %v7958
        %8919 = vmatpush2.msra.mxu0 %v7957
        %8920 = vmatprep.subr.mxu0 %v7954
        %8921 = vmatpush2.msra.mxu0 %v7953
        %8922 = vmatprep.subr.mxu0 %v7950
        %8923 = vmatpush2.msra.mxu0 %v7949
        %8924 = vmatprep.subr.mxu0 %v7946
        %8925 = vmatpush2.msra.mxu0 %v7945
        %8926 = vmatprep.subr.mxu0 %v7942
        %8927 = vmatpush2.msra.mxu0 %v7941
        %8928 = vmatprep.subr.mxu0 %v7938
        %8929 = vmatpush2.msra.mxu0 %v7937
        %8930 = vmatprep.subr.mxu0 %v7934
        %8931 = vmatpush2.msra.mxu0 %v7933
        %8932 = vmatprep.subr.mxu0 %v7930
        %8933 = vmatpush2.msra.mxu0 %v7929
        %8934 = vmatprep.subr.mxu0 %v7926
        %8935 = vmatpush2.msra.mxu0 %v7925
        %8936 = vmatprep.subr.mxu0 %v7922
        %8937 = vmatpush2.msra.mxu0 %v7921
        %8938 = vmatprep.subr.mxu0 %v7918
        %8939 = vmatpush2.msra.mxu0 %v7917
        %8940 = vmatprep.subr.mxu0 %v7914
        %8941 = vmatpush2.msra.mxu0 %v7913
        %8942 = vmatprep.subr.mxu0 %v7910
        %8943 = vmatpush2.msra.mxu0 %v7909
        %8944 = vmatprep.mubr.f32.mxu0 %v7194
        %8945 = vmatmul.mubr.f32.gmra.mxu0 %v7193
        %v8946 = vpop.f32.mrf.mxu0
        %v8947 = vadd.f32 %v8876, %v8946
        %v8948 = vpop.f32.mrf.mxu0
        %v8949 = vadd.f32 %v8878, %v8948
        %8950 = vdwg.mxu0
        %8951 = vmatprep.subr.mxu0 0.0
        %8952 = vmatpush1.msra.mxu0 0.0
        %8953 = vmatprep.subr.mxu0 0.0
        %8954 = vmatpush1.msra.mxu0 0.0
        %8955 = vmatprep.subr.mxu0 0.0
        %8956 = vmatpush1.msra.mxu0 0.0
        %8957 = vmatprep.subr.mxu0 0.0
        %8958 = vmatpush1.msra.mxu0 0.0
        %8959 = vmatprep.subr.mxu0 0.0
        %8960 = vmatpush1.msra.mxu0 0.0
        %8961 = vmatprep.subr.mxu0 0.0
        %8962 = vmatpush1.msra.mxu0 0.0
        %8963 = vmatprep.subr.mxu0 0.0
        %8964 = vmatpush1.msra.mxu0 0.0
        %8965 = vmatprep.subr.mxu0 0.0
        %8966 = vmatpush1.msra.mxu0 0.0
        %8967 = vmatprep.subr.mxu0 %v8002
        %8968 = vmatpush1.msra.mxu0 %v8001
        %8969 = vmatprep.subr.mxu0 %v7998
        %8970 = vmatpush1.msra.mxu0 %v7997
        %8971 = vmatprep.subr.mxu0 %v7994
        %8972 = vmatpush1.msra.mxu0 %v7993
        %8973 = vmatprep.subr.mxu0 %v7990
        %8974 = vmatpush1.msra.mxu0 %v7989
        %8975 = vmatprep.subr.mxu0 %v7986
        %8976 = vmatpush1.msra.mxu0 %v7985
        %8977 = vmatprep.subr.mxu0 %v7982
        %8978 = vmatpush1.msra.mxu0 %v7981
        %8979 = vmatprep.subr.mxu0 %v7978
        %8980 = vmatpush1.msra.mxu0 %v7977
        %8981 = vmatprep.subr.mxu0 %v7974
        %8982 = vmatpush1.msra.mxu0 %v7973
        %8983 = vmatprep.subr.mxu0 0.0
        %8984 = vmatpush2.msra.mxu0 0.0
        %8985 = vmatprep.subr.mxu0 0.0
        %8986 = vmatpush2.msra.mxu0 0.0
        %8987 = vmatprep.subr.mxu0 0.0
        %8988 = vmatpush2.msra.mxu0 0.0
        %8989 = vmatprep.subr.mxu0 0.0
        %8990 = vmatpush2.msra.mxu0 0.0
        %8991 = vmatprep.subr.mxu0 0.0
        %8992 = vmatpush2.msra.mxu0 0.0
        %8993 = vmatprep.subr.mxu0 0.0
        %8994 = vmatpush2.msra.mxu0 0.0
        %8995 = vmatprep.subr.mxu0 0.0
        %8996 = vmatpush2.msra.mxu0 0.0
        %8997 = vmatprep.subr.mxu0 0.0
        %8998 = vmatpush2.msra.mxu0 0.0
        %8999 = vmatprep.subr.mxu0 0.0
        %9000 = vmatpush2.msra.mxu0 0.0
        %9001 = vmatprep.subr.mxu0 0.0
        %9002 = vmatpush2.msra.mxu0 0.0
        %9003 = vmatprep.subr.mxu0 0.0
        %9004 = vmatpush2.msra.mxu0 0.0
        %9005 = vmatprep.subr.mxu0 0.0
        %9006 = vmatpush2.msra.mxu0 0.0
        %9007 = vmatprep.subr.mxu0 0.0
        %9008 = vmatpush2.msra.mxu0 0.0
        %9009 = vmatprep.subr.mxu0 0.0
        %9010 = vmatpush2.msra.mxu0 0.0
        %9011 = vmatprep.subr.mxu0 0.0
        %9012 = vmatpush2.msra.mxu0 0.0
        %9013 = vmatprep.subr.mxu0 0.0
        %9014 = vmatpush2.msra.mxu0 0.0
        %9015 = vmatprep.mubr.f32.mxu0 0.0
        %9016 = vmatmul.mubr.f32.gmra.mxu0 %v8026
        %v9017 = vpop.f32.mrf.mxu0
        %v9018 = vadd.f32 %v8947, %v9017
        %v9019 = vpop.f32.mrf.mxu0
        %v9020 = vadd.f32 %v8949, %v9019
        %9021 = vdwg.mxu0
        %v9022 = vmax.f32 %v8521, 0.0
        %v9023 = vmax.f32 %v8523, 0.0
        %v9024 = vmax.f32 %v9018, 0.0
        %v9025 = vmax.f32 %v9020, 0.0
        %v9026 = vld [vmem:[%s7] sm:$0xff]
        %v9027 = vld [vmem:[%s7 + $0x8] sm:$0xff]
        %v9028 = vld [vmem:[%s7 + $0x10] sm:$0xff]
        %v9029 = vld [vmem:[%s7 + $0x18] sm:$0xff]
        %v9030 = vld [vmem:[%s7 + $0x20] sm:$0xff]
        %v9031 = vld [vmem:[%s7 + $0x28] sm:$0xff]
        %v9032 = vld [vmem:[%s7 + $0x30] sm:$0xff]
        %v9033 = vld [vmem:[%s7 + $0x38] sm:$0xff]
        %v9034 = vld [vmem:[%s7 + $0x40] sm:$0xff]
        %v9035 = vld [vmem:[%s7 + $0x48] sm:$0xff]
        %v9036 = vld [vmem:[%s7 + $0x50] sm:$0xff]
        %v9037 = vld [vmem:[%s7 + $0x58] sm:$0xff]
        %v9038 = vld [vmem:[%s7 + $0x60] sm:$0xff]
        %v9039 = vld [vmem:[%s7 + $0x68] sm:$0xff]
        %v9040 = vld [vmem:[%s7 + $0x70] sm:$0xff]
        %v9041 = vld [vmem:[%s7 + $0x78] sm:$0xff]
        %v9042 = vld [vmem:[%s7 + $0x80] sm:$0xff]
        %v9043 = vld [vmem:[%s7 + $0x88] sm:$0xff]
        %v9044 = vld [vmem:[%s7 + $0x90] sm:$0xff]
        %v9045 = vld [vmem:[%s7 + $0x98] sm:$0xff]
        %v9046 = vld [vmem:[%s7 + $0xa0] sm:$0xff]
        %v9047 = vld [vmem:[%s7 + $0xa8] sm:$0xff]
        %v9048 = vld [vmem:[%s7 + $0xb0] sm:$0xff]
        %v9049 = vld [vmem:[%s7 + $0xb8] sm:$0xff]
        %v9050 = vld [vmem:[%s7 + $0xc0] sm:$0xff]
        %v9051 = vld [vmem:[%s7 + $0xc8] sm:$0xff]
        %v9052 = vld [vmem:[%s7 + $0xd0] sm:$0xff]
        %v9053 = vld [vmem:[%s7 + $0xd8] sm:$0xff]
        %v9054 = vld [vmem:[%s7 + $0xe0] sm:$0xff]
        %v9055 = vld [vmem:[%s7 + $0xe8] sm:$0xff]
        %v9056 = vld [vmem:[%s7 + $0xf0] sm:$0xff]
        %v9057 = vld [vmem:[%s7 + $0xf8] sm:$0xff]
        %v9058 = vld [vmem:[%s7 + $0x100] sm:$0xff]
        %v9059 = vld [vmem:[%s7 + $0x108] sm:$0xff]
        %v9060 = vld [vmem:[%s7 + $0x110] sm:$0xff]
        %v9061 = vld [vmem:[%s7 + $0x118] sm:$0xff]
        %v9062 = vld [vmem:[%s7 + $0x120] sm:$0xff]
        %v9063 = vld [vmem:[%s7 + $0x128] sm:$0xff]
        %v9064 = vld [vmem:[%s7 + $0x130] sm:$0xff]
        %v9065 = vld [vmem:[%s7 + $0x138] sm:$0xff]
        %v9066 = vld [vmem:[%s7 + $0x140] sm:$0xff]
        %v9067 = vld [vmem:[%s7 + $0x148] sm:$0xff]
        %v9068 = vld [vmem:[%s7 + $0x150] sm:$0xff]
        %v9069 = vld [vmem:[%s7 + $0x158] sm:$0xff]
        %v9070 = vld [vmem:[%s7 + $0x160] sm:$0xff]
        %v9071 = vld [vmem:[%s7 + $0x168] sm:$0xff]
        %v9072 = vld [vmem:[%s7 + $0x170] sm:$0xff]
        %v9073 = vld [vmem:[%s7 + $0x178] sm:$0xff]
        %v9074 = vld [vmem:[%s7 + $0x180] sm:$0xff]
        %v9075 = vld [vmem:[%s7 + $0x188] sm:$0xff]
        %v9076 = vld [vmem:[%s7 + $0x190] sm:$0xff]
        %v9077 = vld [vmem:[%s7 + $0x198] sm:$0xff]
        %v9078 = vld [vmem:[%s7 + $0x1a0] sm:$0xff]
        %v9079 = vld [vmem:[%s7 + $0x1a8] sm:$0xff]
        %v9080 = vld [vmem:[%s7 + $0x1b0] sm:$0xff]
        %v9081 = vld [vmem:[%s7 + $0x1b8] sm:$0xff]
        %v9082 = vld [vmem:[%s7 + $0x1c0] sm:$0xff]
        %v9083 = vld [vmem:[%s7 + $0x1c8] sm:$0xff]
        %v9084 = vld [vmem:[%s7 + $0x1d0] sm:$0xff]
        %v9085 = vld [vmem:[%s7 + $0x1d8] sm:$0xff]
        %v9086 = vld [vmem:[%s7 + $0x1e0] sm:$0xff]
        %v9087 = vld [vmem:[%s7 + $0x1e8] sm:$0xff]
        %v9088 = vld [vmem:[%s7 + $0x1f0] sm:$0xf]
        %v9089 = vld [vmem:[%s8] sm:$0x1]
        %v9091 = vsel %vm7081, %v9025, 0
        %v9094 = vsel %vm2321, %v9088, 0
        %9096 = vmatprep.subr.mxu0 0.0
        %9097 = vmatpush1.msra.mxu0 %v9041
        %9098 = vmatprep.subr.mxu0 0.0
        %9099 = vmatpush1.msra.mxu0 %v9040
        %9100 = vmatprep.subr.mxu0 0.0
        %9101 = vmatpush1.msra.mxu0 %v9039
        %9102 = vmatprep.subr.mxu0 0.0
        %9103 = vmatpush1.msra.mxu0 %v9038
        %9104 = vmatprep.subr.mxu0 0.0
        %9105 = vmatpush1.msra.mxu0 %v9037
        %9106 = vmatprep.subr.mxu0 0.0
        %9107 = vmatpush1.msra.mxu0 %v9036
        %9108 = vmatprep.subr.mxu0 0.0
        %9109 = vmatpush1.msra.mxu0 %v9035
        %9110 = vmatprep.subr.mxu0 0.0
        %9111 = vmatpush1.msra.mxu0 %v9034
        %9112 = vmatprep.subr.mxu0 0.0
        %9113 = vmatpush1.msra.mxu0 %v9033
        %9114 = vmatprep.subr.mxu0 0.0
        %9115 = vmatpush1.msra.mxu0 %v9032
        %9116 = vmatprep.subr.mxu0 0.0
        %9117 = vmatpush1.msra.mxu0 %v9031
        %9118 = vmatprep.subr.mxu0 0.0
        %9119 = vmatpush1.msra.mxu0 %v9030
        %9120 = vmatprep.subr.mxu0 0.0
        %9121 = vmatpush1.msra.mxu0 %v9029
        %9122 = vmatprep.subr.mxu0 0.0
        %9123 = vmatpush1.msra.mxu0 %v9028
        %9124 = vmatprep.subr.mxu0 0.0
        %9125 = vmatpush1.msra.mxu0 %v9027
        %9126 = vmatprep.subr.mxu0 0.0
        %9127 = vmatpush1.msra.mxu0 %v9026
        %9128 = vmatprep.subr.mxu0 0.0
        %9129 = vmatpush2.msra.mxu0 %v9057
        %9130 = vmatprep.subr.mxu0 0.0
        %9131 = vmatpush2.msra.mxu0 %v9056
        %9132 = vmatprep.subr.mxu0 0.0
        %9133 = vmatpush2.msra.mxu0 %v9055
        %9134 = vmatprep.subr.mxu0 0.0
        %9135 = vmatpush2.msra.mxu0 %v9054
        %9136 = vmatprep.subr.mxu0 0.0
        %9137 = vmatpush2.msra.mxu0 %v9053
        %9138 = vmatprep.subr.mxu0 0.0
        %9139 = vmatpush2.msra.mxu0 %v9052
        %9140 = vmatprep.subr.mxu0 0.0
        %9141 = vmatpush2.msra.mxu0 %v9051
        %9142 = vmatprep.subr.mxu0 0.0
        %9143 = vmatpush2.msra.mxu0 %v9050
        %9144 = vmatprep.subr.mxu0 0.0
        %9145 = vmatpush2.msra.mxu0 %v9049
        %9146 = vmatprep.subr.mxu0 0.0
        %9147 = vmatpush2.msra.mxu0 %v9048
        %9148 = vmatprep.subr.mxu0 0.0
        %9149 = vmatpush2.msra.mxu0 %v9047
        %9150 = vmatprep.subr.mxu0 0.0
        %9151 = vmatpush2.msra.mxu0 %v9046
        %9152 = vmatprep.subr.mxu0 0.0
        %9153 = vmatpush2.msra.mxu0 %v9045
        %9154 = vmatprep.subr.mxu0 0.0
        %9155 = vmatpush2.msra.mxu0 %v9044
        %9156 = vmatprep.subr.mxu0 0.0
        %9157 = vmatpush2.msra.mxu0 %v9043
        %9158 = vmatprep.subr.mxu0 0.0
        %9159 = vmatpush2.msra.mxu0 %v9042
        %9160 = vmatprep.mubr.f32.mxu0 %v9023
        %9161 = vmatmul.mubr.f32.gmra.mxu0 %v9022
        %v9162 = vpop.f32.mrf.mxu0
        %v9163 = vadd.f32 %v9089, %v9162
        %v9164 = vpop.f32.mrf.mxu0
        %9165 = vdwg.mxu0
        %9166 = vmatprep.subr.mxu0 0.0
        %9167 = vmatpush1.msra.mxu0 %v9073
        %9168 = vmatprep.subr.mxu0 0.0
        %9169 = vmatpush1.msra.mxu0 %v9072
        %9170 = vmatprep.subr.mxu0 0.0
        %9171 = vmatpush1.msra.mxu0 %v9071
        %9172 = vmatprep.subr.mxu0 0.0
        %9173 = vmatpush1.msra.mxu0 %v9070
        %9174 = vmatprep.subr.mxu0 0.0
        %9175 = vmatpush1.msra.mxu0 %v9069
        %9176 = vmatprep.subr.mxu0 0.0
        %9177 = vmatpush1.msra.mxu0 %v9068
        %9178 = vmatprep.subr.mxu0 0.0
        %9179 = vmatpush1.msra.mxu0 %v9067
        %9180 = vmatprep.subr.mxu0 0.0
        %9181 = vmatpush1.msra.mxu0 %v9066
        %9182 = vmatprep.subr.mxu0 0.0
        %9183 = vmatpush1.msra.mxu0 %v9065
        %9184 = vmatprep.subr.mxu0 0.0
        %9185 = vmatpush1.msra.mxu0 %v9064
        %9186 = vmatprep.subr.mxu0 0.0
        %9187 = vmatpush1.msra.mxu0 %v9063
        %9188 = vmatprep.subr.mxu0 0.0
        %9189 = vmatpush1.msra.mxu0 %v9062
        %9190 = vmatprep.subr.mxu0 0.0
        %9191 = vmatpush1.msra.mxu0 %v9061
        %9192 = vmatprep.subr.mxu0 0.0
        %9193 = vmatpush1.msra.mxu0 %v9060
        %9194 = vmatprep.subr.mxu0 0.0
        %9195 = vmatpush1.msra.mxu0 %v9059
        %9196 = vmatprep.subr.mxu0 0.0
        %9197 = vmatpush1.msra.mxu0 %v9058
        %9198 = vmatprep.subr.mxu0 0.0
        %9199 = vmatpush2.msra.mxu0 0.0
        %9200 = vmatprep.subr.mxu0 0.0
        %9201 = vmatpush2.msra.mxu0 %v9094
        %9202 = vmatprep.subr.mxu0 0.0
        %9203 = vmatpush2.msra.mxu0 %v9087
        %9204 = vmatprep.subr.mxu0 0.0
        %9205 = vmatpush2.msra.mxu0 %v9086
        %9206 = vmatprep.subr.mxu0 0.0
        %9207 = vmatpush2.msra.mxu0 %v9085
        %9208 = vmatprep.subr.mxu0 0.0
        %9209 = vmatpush2.msra.mxu0 %v9084
        %9210 = vmatprep.subr.mxu0 0.0
        %9211 = vmatpush2.msra.mxu0 %v9083
        %9212 = vmatprep.subr.mxu0 0.0
        %9213 = vmatpush2.msra.mxu0 %v9082
        %9214 = vmatprep.subr.mxu0 0.0
        %9215 = vmatpush2.msra.mxu0 %v9081
        %9216 = vmatprep.subr.mxu0 0.0
        %9217 = vmatpush2.msra.mxu0 %v9080
        %9218 = vmatprep.subr.mxu0 0.0
        %9219 = vmatpush2.msra.mxu0 %v9079
        %9220 = vmatprep.subr.mxu0 0.0
        %9221 = vmatpush2.msra.mxu0 %v9078
        %9222 = vmatprep.subr.mxu0 0.0
        %9223 = vmatpush2.msra.mxu0 %v9077
        %9224 = vmatprep.subr.mxu0 0.0
        %9225 = vmatpush2.msra.mxu0 %v9076
        %9226 = vmatprep.subr.mxu0 0.0
        %9227 = vmatpush2.msra.mxu0 %v9075
        %9228 = vmatprep.subr.mxu0 0.0
        %9229 = vmatpush2.msra.mxu0 %v9074
        %9230 = vmatprep.mubr.f32.mxu0 %v9091
        %9231 = vmatmul.mubr.f32.gmra.mxu0 %v9024
        %v9232 = vpop.f32.mrf.mxu0
        %v9233 = vadd.f32 %v9163, %v9232
        %v9234 = vpop.f32.mrf.mxu0
        %9235 = vdwg.mxu0
        %v9236 = vmax.f32 %v9233, 0.0
        %v9237 = vld [vmem:[%s9] sm:$0xff]
        %v9238 = vld [vmem:[%s9 + $0x8] sm:$0xff]
        %v9239 = vld [vmem:[%s9 + $0x10] sm:$0xff]
        %v9240 = vld [vmem:[%s9 + $0x18] sm:$0xff]
        %v9241 = vld [vmem:[%s9 + $0x20] sm:$0xff]
        %v9242 = vld [vmem:[%s9 + $0x28] sm:$0xff]
        %v9243 = vld [vmem:[%s9 + $0x30] sm:$0xff]
        %v9244 = vld [vmem:[%s9 + $0x38] sm:$0xff]
        %v9245 = vld [vmem:[%s9 + $0x40] sm:$0xff]
        %v9246 = vld [vmem:[%s9 + $0x48] sm:$0xff]
        %v9247 = vld [vmem:[%s9 + $0x50] sm:$0xff]
        %v9248 = vld [vmem:[%s9 + $0x58] sm:$0xff]
        %v9249 = vld [vmem:[%s9 + $0x60] sm:$0xff]
        %v9250 = vld [vmem:[%s9 + $0x68] sm:$0xff]
        %v9251 = vld [vmem:[%s9 + $0x70] sm:$0xff]
        %v9252 = vld [vmem:[%s9 + $0x78] sm:$0xff]
        %v9253 = vld [vmem:[%s10] sm:$0x1]
        %9254 = vmatprep.subr.mxu0 0.0
        %9255 = vmatpush1.msra.mxu0 %v9252
        %9256 = vmatprep.subr.mxu0 0.0
        %9257 = vmatpush1.msra.mxu0 %v9251
        %9258 = vmatprep.subr.mxu0 0.0
        %9259 = vmatpush1.msra.mxu0 %v9250
        %9260 = vmatprep.subr.mxu0 0.0
        %9261 = vmatpush1.msra.mxu0 %v9249
        %9262 = vmatprep.subr.mxu0 0.0
        %9263 = vmatpush1.msra.mxu0 %v9248
        %9264 = vmatprep.subr.mxu0 0.0
        %9265 = vmatpush1.msra.mxu0 %v9247
        %9266 = vmatprep.subr.mxu0 0.0
        %9267 = vmatpush1.msra.mxu0 %v9246
        %9268 = vmatprep.subr.mxu0 0.0
        %9269 = vmatpush1.msra.mxu0 %v9245
        %9270 = vmatprep.subr.mxu0 0.0
        %9271 = vmatpush1.msra.mxu0 %v9244
        %9272 = vmatprep.subr.mxu0 0.0
        %9273 = vmatpush1.msra.mxu0 %v9243
        %9274 = vmatprep.subr.mxu0 0.0
        %9275 = vmatpush1.msra.mxu0 %v9242
        %9276 = vmatprep.subr.mxu0 0.0
        %9277 = vmatpush1.msra.mxu0 %v9241
        %9278 = vmatprep.subr.mxu0 0.0
        %9279 = vmatpush1.msra.mxu0 %v9240
        %9280 = vmatprep.subr.mxu0 0.0
        %9281 = vmatpush1.msra.mxu0 %v9239
        %9282 = vmatprep.subr.mxu0 0.0
        %9283 = vmatpush1.msra.mxu0 %v9238
        %9284 = vmatprep.subr.mxu0 0.0
        %9285 = vmatpush1.msra.mxu0 %v9237
        %9286 = vmatprep.subr.mxu0 0.0
        %9287 = vmatpush2.msra.mxu0 0.0
        %9288 = vmatprep.subr.mxu0 0.0
        %9289 = vmatpush2.msra.mxu0 0.0
        %9290 = vmatprep.subr.mxu0 0.0
        %9291 = vmatpush2.msra.mxu0 0.0
        %9292 = vmatprep.subr.mxu0 0.0
        %9293 = vmatpush2.msra.mxu0 0.0
        %9294 = vmatprep.subr.mxu0 0.0
        %9295 = vmatpush2.msra.mxu0 0.0
        %9296 = vmatprep.subr.mxu0 0.0
        %9297 = vmatpush2.msra.mxu0 0.0
        %9298 = vmatprep.subr.mxu0 0.0
        %9299 = vmatpush2.msra.mxu0 0.0
        %9300 = vmatprep.subr.mxu0 0.0
        %9301 = vmatpush2.msra.mxu0 0.0
        %9302 = vmatprep.subr.mxu0 0.0
        %9303 = vmatpush2.msra.mxu0 0.0
        %9304 = vmatprep.subr.mxu0 0.0
        %9305 = vmatpush2.msra.mxu0 0.0
        %9306 = vmatprep.subr.mxu0 0.0
        %9307 = vmatpush2.msra.mxu0 0.0
        %9308 = vmatprep.subr.mxu0 0.0
        %9309 = vmatpush2.msra.mxu0 0.0
        %9310 = vmatprep.subr.mxu0 0.0
        %9311 = vmatpush2.msra.mxu0 0.0
        %9312 = vmatprep.subr.mxu0 0.0
        %9313 = vmatpush2.msra.mxu0 0.0
        %9314 = vmatprep.subr.mxu0 0.0
        %9315 = vmatpush2.msra.mxu0 0.0
        %9316 = vmatprep.subr.mxu0 0.0
        %9317 = vmatpush2.msra.mxu0 0.0
        %9318 = vmatprep.mubr.f32.mxu0 0.0
        %9319 = vmatmul.mubr.f32.gmra.mxu0 %v9236
        %v9320 = vpop.f32.mrf.mxu0
        %v9321 = vadd.f32 %v9253, %v9320
        %v9322 = vpop.f32.mrf.mxu0
        %9323 = vdwg.mxu0
        %vm9324 = vcmask 57344
        %v9325 = vsel %vm9324, %v9321, -inf
        %9326 = vmax.xlane.f32.xlu0 %v9325
        %v9327 = vpop.xlane.xlu0 %9326
        %v9328 = vsub.f32 %v9321, %v9327
        %v9329 = vmul.f32 %v9328, 1.442695
        %v9330 = vpow.pop %v9329
        %v9331 = vsel %vm9324, %v9330, 0.0
        %9332 = vadd.xlane.f32.xlu0 %v9331
        %v9333 = vpop.xlane.xlu0 %9332
        %v9334 = vrcp.pop %v9333
        %v9335 = vmul.f32 %v9333, %v9334
        %v9336 = vsub.f32 2.0, %v9335
        %v9337 = vmul.f32 %v9334, %v9336
        %v9338 = vmul.f32 %v9330, %v9337
        %9339 = vst.msk [vmem:[%s406] sm:$0x1] %vm9324, %v9338
        %9341 = vrot.lane.b32.xlu0 %v9321, 120
        %v9342 = vpop.permute.xlu0 %9341
        %vm9344 = vcmask 0
        %9345 = vst.msk [vmem:[%s419] sm:$0x1] %vm9344, %v9342
        %s9346 = sand.u32 %s271, 1
        %s9347 = scalar_lea.sflag [#allocation5], %s9346
        %s9348 = sand.u32 %s271, 1
        %s9349 = scalar_lea.vmem [#allocation4], %s9348
        %p9350 = scmp.lt.s32.totalorder %s27, 1
        %s9351 = scalar_select %p9350, %s27, 1
        %s9352 = scalar_lea.vmem %s12, %s9351
        // Predicated region
        $region65: #{a2c_forward.1} parent=63 // pred_check
          %p9353 = pneg %p281
        $region66: #{a2c_forward.1} parent=63 // pred_check_branch
          %9355 = sbr.rel (%p9353) target = $region68
        $region67: #{a2c_forward.1} parent=63 // pred_region
          %s9357 = ssub.s32 16, 16
          %9358 = vsyncadd %s9347, %s9357
          %s9359 = smul.addr %s27, 16
          %s9360 = scalar_lea.hbm %s11, %s9359
          %s9362 = sshll.u32 %s9349, 4
          %s9363 = int_to_ptr.vmem [resolvable:$true] %s9362
          %9365 = dma.vmem_to_hbm [thread:$0]  %s9363, 16, %s9360, %s9347
        $region68: #{a2c_forward.1} parent=63 // pred_fallthru
          _
        // Predicated region
        $region69: #{a2c_forward.1} parent=63 // pred_check
          %p9366 = pneg %p307
        $region70: #{a2c_forward.1} parent=63 // pred_check_branch
          %9368 = sbr.rel (%p9366) target = $region72
        $region71: #{a2c_forward.1} parent=63 // pred_region
          _
        $region72: #{a2c_forward.1} parent=63 // pred_fallthru
          _
      $region64: #{a2c_forward.1} parent=5 // pred_fallthru
        _
      %p9369 = scmp.le.s32.totalorder 2, %s22
      // Predicated region
      $region73: #{a2c_forward.1} parent=5 // pred_check
        %p9370 = pneg %p9369
      $region74: #{a2c_forward.1} parent=5 // pred_check_branch
        %9372 = sbr.rel (%p9370) target = $region76
      $region75: #{a2c_forward.1} parent=5 // pred_region
        %s9373 = ssub.s32 %s22, 2
        // Predicated region
        $region77: #{a2c_forward.1} parent=75 // pred_check
          %p9374 = pneg %p287
        $region78: #{a2c_forward.1} parent=75 // pred_check_branch
          %9376 = sbr.rel (%p9374) target = $region80
        $region79: #{a2c_forward.1} parent=75 // pred_region
          %s9377 = sand.u32 %s272, 1
          %s9378 = scalar_lea.sflag [#allocation5], %s9377
          %s9379 = sand.u32 %s272, 1
          %s9380 = scalar_lea.vmem [#allocation4], %s9379
          %9381 = dma.done %s9378, 16
        $region80: #{a2c_forward.1} parent=75 // pred_fallthru
          _
        // Predicated region
        $region81: #{a2c_forward.1} parent=75 // pred_check
          %p9382 = pneg %p313
        $region82: #{a2c_forward.1} parent=75 // pred_check_branch
          %9384 = sbr.rel (%p9382) target = $region84
        $region83: #{a2c_forward.1} parent=75 // pred_region
          %p9385 = scmp.lt.s32.totalorder %s28, 1
          %s9386 = scalar_select %p9385, %s28, 1
          %s9387 = scalar_lea.vmem %s12, %s9386
        $region84: #{a2c_forward.1} parent=75 // pred_fallthru
          _
      $region76: #{a2c_forward.1} parent=5 // pred_fallthru
        _
    $region6: #{a2c_forward.1} parent=1 // loop_footer
      %s26 = sadd.s32 1, %s22
    $region7: #{a2c_forward.1} parent=1 // loop_footer_branch
      %21 = sbr.rel target = $region3
    $region8: #{a2c_forward.1} parent=1 // loop_exit
      _
    %9388 = vsyncpa [#allocation5], 1
    %s9389 = scalar_lea.sflag [#allocation5], 1
    %9390 = vsyncpa %s9389, 1

</llo_original>
